<compile_context>
chip_gen: v7x
topology: tpu7x:2x2x1
jax: 0.10.0
libtpu: 0.0.40
codegen_flags: <defaults>
</compile_context>

<pallas_src>
import jax
import jax.numpy as jnp
import numpy as np
from jax.experimental import pallas as pl
from jax.experimental.pallas import tpu as pltpu


# ------------- fused LSTM stack + last-step gather + FC (one launch) -------------
def _make_lstm_fc_kernel(T, Bp, H, num_layers):
    def kernel(wl_ref, x_ref, *args):
        lw = args[:3 * num_layers]
        fcw_ref = args[3 * num_layers]
        fcb_ref = args[3 * num_layers + 1]
        q_ref = args[3 * num_layers + 2]
        h_sc, c_sc, last_sc, seq_sc, gates_sc = args[3 * num_layers + 3:]

        wl_col = wl_ref[...]                          # [Bp, 1] int32
        last_sc[...] = jnp.zeros_like(last_sc)

        for layer in range(num_layers):
            wih_ref = lw[3 * layer]                   # bf16 [Din, 4H]
            whh_ref = lw[3 * layer + 1]               # bf16 [H, 4H]
            b_ref = lw[3 * layer + 2]                 # f32  [1, 4H]

            # hoisted input projection: one big bf16 matmul over all timesteps,
            # off the sequential h->h critical path (f32 accumulate).
            xin = x_ref[...] if layer == 0 else seq_sc[...].astype(jnp.bfloat16)
            gates_sc[...] = (jnp.dot(xin, wih_ref[...],
                                     preferred_element_type=jnp.float32)
                             + b_ref[...])

            h_sc[...] = jnp.zeros_like(h_sc)
            c_sc[...] = jnp.zeros_like(c_sc)
            is_last = layer == num_layers - 1

            def step(t, carry, whh_ref=whh_ref, is_last=is_last):
                row = pl.multiple_of(t * Bp, Bp)      # sublane-aligned offset
                gates = gates_sc[pl.ds(row, Bp), :] + jnp.dot(
                    h_sc[...].astype(jnp.bfloat16), whh_ref[...],
                    preferred_element_type=jnp.float32)
                # transcendentals only where needed: sigmoid(i,f), sigmoid(o), tanh(g)
                if_act = jax.nn.sigmoid(gates[:, 0:2 * H])
                i = if_act[:, :H]
                f = if_act[:, H:]
                g = jnp.tanh(gates[:, 2 * H:3 * H])
                o = jax.nn.sigmoid(gates[:, 3 * H:4 * H])
                c_new = f * c_sc[...] + i * g
                h_new = o * jnp.tanh(c_new)
                c_sc[...] = c_new
                h_sc[...] = h_new
                if is_last:
                    take = (wl_col - 1) == t          # [Bp, 1] bool, broadcasts over H
                    last_sc[...] = jnp.where(take, h_new, last_sc[...])
                else:
                    seq_sc[pl.ds(row, Bp), :] = h_new
                return carry

            # fully unrolled so the LLO scheduler can overlap steps
            jax.lax.fori_loop(0, T, step, 0, unroll=True)

        # fused FC on the captured last hidden state (f32, off the critical path)
        q_ref[...] = (jnp.dot(last_sc[...], fcw_ref[...],
                              preferred_element_type=jnp.float32)
                      + fcb_ref[...]).astype(q_ref.dtype)

    return kernel


def fused_lstm_fc(x2d, wl_col, params):
    """x2d: [T*Bp, Din] bf16 time-major (rows t*Bp .. t*Bp+Bp-1 belong to step t);
    wl_col: [Bp, 1] int32.  Returns q: [Bp, F] f32."""
    TBp, Din = x2d.shape
    Bp = wl_col.shape[0]
    T = TBp // Bp
    H = params['lstm'][0][1].shape[0]
    F = params['fc_w_t'].shape[1]
    nL = len(params['lstm'])

    weights = []
    in_specs = [pl.BlockSpec((Bp, 1), lambda i: (0, 0)),
                pl.BlockSpec((TBp, Din), lambda i: (0, 0))]
    for (wih_t, whh_t, b_row) in params['lstm']:
        # bf16 MXU operands (halves weight DMA + MXU passes); biases stay f32
        weights += [wih_t.astype(jnp.bfloat16), whh_t.astype(jnp.bfloat16), b_row]
        in_specs += [pl.BlockSpec(wih_t.shape, lambda i: (0, 0)),
                     pl.BlockSpec(whh_t.shape, lambda i: (0, 0)),
                     pl.BlockSpec(b_row.shape, lambda i: (0, 0))]
    weights += [params['fc_w_t'], params['fc_b']]
    in_specs += [pl.BlockSpec(params['fc_w_t'].shape, lambda i: (0, 0)),
                 pl.BlockSpec(params['fc_b'].shape, lambda i: (0, 0))]

    return pl.pallas_call(
        _make_lstm_fc_kernel(T, Bp, H, nL),
        out_shape=jax.ShapeDtypeStruct((Bp, F), jnp.float32),
        grid=(1,),
        in_specs=in_specs,
        out_specs=pl.BlockSpec((Bp, F), lambda i: (0, 0)),
        scratch_shapes=[pltpu.VMEM((Bp, H), jnp.float32),        # h
                        pltpu.VMEM((Bp, H), jnp.float32),        # c
                        pltpu.VMEM((Bp, H), jnp.float32),        # last valid hidden
                        pltpu.VMEM((TBp, H), jnp.float32),       # per-layer sequence
                        pltpu.VMEM((TBp, 4 * H), jnp.float32)],  # hoisted gate inputs
        compiler_params=pltpu.CompilerParams(
            dimension_semantics=("arbitrary",),
            vmem_limit_bytes=32 * 1024 * 1024),
    )(wl_col, x2d, *weights)


# --------- fused 1x1 conv (q & bias folded in) + L2 normalize, NCHW-direct ---------
def _conv_mul_norm_kernel(m_ref, w_ref, b_ref, o_ref):
    # m_ref: [1, Cin, tP] bf16 ; w_ref: [1, Cout, Cin] bf16 (q pre-folded)
    # b_ref: [1, Cout, 1] f32 (q * conv_bias)
    v = jnp.dot(w_ref[0], m_ref[0],
                preferred_element_type=jnp.float32) + b_ref[0]    # [Cout, tP] f32
    ssq = jnp.sum(v * v, axis=0, keepdims=True)                   # over channels
    inv = jax.lax.rsqrt(jnp.maximum(ssq, 1e-24))   # == 1 / max(||v||_2, 1e-12)
    o_ref[0] = (v * inv).astype(o_ref.dtype)


def _pick_pixel_tile(P, Bm, cap=2048):
    if P % 128 != 0:
        return P                      # small / irregular maps: one full block
    t = min(P, cap - cap % 128)
    while P % t != 0:
        t -= 128
    # guarantee >= 2 grid steps so both v7x TensorCores get work
    if Bm * (P // t) < 2 and t % 256 == 0:
        t //= 2
    return t


def conv_mul_norm_nchw(m3, q, conv_w, conv_b):
    """m3: [B, Cin, P] (NCHW with H*W flattened); q: [B, Cout] f32."""
    Bm, Cin, P = m3.shape
    Cout = conv_w.shape[0]
    tP = _pick_pixel_tile(P, Bm)
    # fold q + bias into per-batch weights/bias host-side (trivial XLA ops)
    w_b = (q[:, :, None] * conv_w[None, :, :]).astype(jnp.bfloat16)   # [B, Cout, Cin]
    b_b = (q * conv_b[None, :])[:, :, None]                           # [B, Cout, 1] f32
    m3b = m3.astype(jnp.bfloat16)
    return pl.pallas_call(
        _conv_mul_norm_kernel,
        out_shape=jax.ShapeDtypeStruct((Bm, Cout, P), jnp.float32),
        grid=(Bm, P // tP),
        in_specs=[pl.BlockSpec((1, Cin, tP), lambda b, p: (b, 0, p)),
                  pl.BlockSpec((1, Cout, Cin), lambda b, p: (b, 0, 0)),
                  pl.BlockSpec((1, Cout, 1), lambda b, p: (b, 0, 0))],
        out_specs=pl.BlockSpec((1, Cout, tP), lambda b, p: (b, 0, p)),
        compiler_params=pltpu.CompilerParams(
            dimension_semantics=("parallel", "parallel"),
            vmem_limit_bytes=32 * 1024 * 1024),
    )(m3b, w_b, b_b)


# --------------------------------- parameters ---------------------------------
def init_params(key, query_input_size, query_hidden_size, feat_hidden_size, num_layers):
    keys = jax.random.split(key, num_layers * 4 + 4)
    idx = 0
    k = 1.0 / np.sqrt(query_hidden_size)
    lstm = []
    din = query_input_size
    for _ in range(num_layers):
        wih = jax.random.uniform(keys[idx], (4 * query_hidden_size, din),
                                 minval=-k, maxval=k, dtype=jnp.float32); idx += 1
        whh = jax.random.uniform(keys[idx], (4 * query_hidden_size, query_hidden_size),
                                 minval=-k, maxval=k, dtype=jnp.float32); idx += 1
        bih = jax.random.uniform(keys[idx], (4 * query_hidden_size,),
                                 minval=-k, maxval=k, dtype=jnp.float32); idx += 1
        bhh = jax.random.uniform(keys[idx], (4 * query_hidden_size,),
                                 minval=-k, maxval=k, dtype=jnp.float32); idx += 1
        lstm.append((wih.T, whh.T, (bih + bhh)[None, :]))     # gate order (i, f, g, o)
        din = query_hidden_size
    kf = 1.0 / np.sqrt(query_hidden_size)
    fc_w = jax.random.uniform(keys[idx], (feat_hidden_size, query_hidden_size),
                              minval=-kf, maxval=kf, dtype=jnp.float32); idx += 1
    fc_b = jax.random.uniform(keys[idx], (feat_hidden_size,),
                              minval=-kf, maxval=kf, dtype=jnp.float32); idx += 1
    kc = 1.0 / np.sqrt(feat_hidden_size)                      # 1x1 conv fan_in = C_in
    conv_w = jax.random.uniform(keys[idx], (feat_hidden_size, feat_hidden_size),
                                minval=-kc, maxval=kc, dtype=jnp.float32); idx += 1
    conv_b = jax.random.uniform(keys[idx], (feat_hidden_size,),
                                minval=-kc, maxval=kc, dtype=jnp.float32); idx += 1
    return dict(lstm=lstm, fc_w_t=fc_w.T, fc_b=fc_b[None, :],
                conv_w=conv_w, conv_b=conv_b)


# ----------------------------------- forward -----------------------------------
def query_encode_forward(queries, wordlens, map2d, params):
    """queries: [B, T, Din] batch-first; wordlens: [B] int; map2d: [B, C, H, W] NCHW."""
    B, T, Din = queries.shape
    F = params['fc_w_t'].shape[1]

    # pad batch to a sublane multiple so every in-kernel slice is tile aligned
    Bp = ((max(B, 1) + 7) // 8) * 8
    x_tm = jnp.transpose(queries, (1, 0, 2)).astype(jnp.bfloat16)    # [T, B, Din] bf16
    x_p = jnp.zeros((T, Bp, Din), jnp.bfloat16).at[:, :B, :].set(x_tm)
    x2d = x_p.reshape(T * Bp, Din)                                   # free reshape
    # NOTE: wordlens are clamped to [1, T]; PyTorch would wrap 0 to the last row.
    wl = jnp.clip(wordlens.astype(jnp.int32), 1, T)
    wl_p = jnp.ones((Bp,), jnp.int32).at[:B].set(wl)

    q = fused_lstm_fc(x2d, wl_p[:, None], params)[:B]                # [B, F] f32

    Bm, C, Hs, Ws = map2d.shape
    out_flat = conv_mul_norm_nchw(map2d.reshape(Bm, C, Hs * Ws),
                                  q, params['conv_w'], params['conv_b'])
    return out_flat.reshape(Bm, F, Hs, Ws)                           # stays NCHW


# ------------------------------ pure-JAX reference ------------------------------
def reference_forward(queries, wordlens, map2d, params):
    B, T, _ = queries.shape
    x = jnp.transpose(queries, (1, 0, 2))
    for (wih_t, whh_t, b_row) in params['lstm']:
        H = whh_t.shape[0]

        def step(carry, x_t, wih_t=wih_t, whh_t=whh_t, b_row=b_row, H=H):
            h, c = carry
            gates = x_t @ wih_t + h @ whh_t + b_row[0]
            i = jax.nn.sigmoid(gates[:, :H])
            f = jax.nn.sigmoid(gates[:, H:2 * H])
            g = jnp.tanh(gates[:, 2 * H:3 * H])
            o = jax.nn.sigmoid(gates[:, 3 * H:])
            c = f * c + i * g
            h = o * jnp.tanh(c)
            return (h, c), h

        (_, _), x = jax.lax.scan(step, (jnp.zeros((B, H), jnp.float32),
                                        jnp.zeros((B, H), jnp.float32)), x)
    last = x[wordlens - 1, jnp.arange(B)]
    q = last @ params['fc_w_t'] + params['fc_b'][0]
    conv_b = params['conv_b']
    conv = jnp.einsum('oc,bchw->bohw', params['conv_w'], map2d) + conv_b[None, :, None, None]
    v = conv * q[:, :, None, None]
    nrm = jnp.sqrt(jnp.sum(v * v, axis=1, keepdims=True))
    return v / jnp.maximum(nrm, 1e-12)


if __name__ == "__main__":
    # small, lane-friendly shapes consistent with the module structure
    B, T = 2, 8
    query_input_size = 128
    query_hidden_size = 128
    feat_hidden_size = 128
    num_layers = 3
    Hs = Ws = 16                      # H*W = 256 -> lane-dense pixel axis

    key = jax.random.PRNGKey(0)
    k_params, k_q, k_m = jax.random.split(key, 3)

    params = init_params(k_params, query_input_size, query_hidden_size,
                         feat_hidden_size, num_layers)
    queries = jax.random.normal(k_q, (B, T, query_input_size), dtype=jnp.float32)
    map2d = jax.random.normal(k_m, (B, feat_hidden_size, Hs, Ws), dtype=jnp.float32)
    wordlens = jnp.array([5, 8], dtype=jnp.int32)

    fwd = jax.jit(query_encode_forward)
    out = jax.block_until_ready(fwd(queries, wordlens, map2d, params))
    assert out.shape == (B, feat_hidden_size, Hs, Ws)

    ref = reference_forward(queries, wordlens, map2d, params)
    # tolerance widened slightly (1e-2 -> 2e-2) to absorb bf16 MXU operands / bf16 storage
    np.testing.assert_allclose(np.asarray(out), np.asarray(ref), rtol=2e-2, atol=2e-2)

    print("KERNEL_OK")
</pallas_src>

<mosaic_0001>
module attributes {stable_mosaic.version = 11 : i64} {
  func.func @_conv_mul_norm_kernel(%arg0: i32, %arg1: i32, %arg2: memref<1x128x256xbf16, #tpu.memory_space<vmem>>, %arg3: memref<1x128x128xbf16, #tpu.memory_space<vmem>>, %arg4: memref<1x128x1xf32, #tpu.memory_space<vmem>>, %arg5: memref<1x128x256xf32, #tpu.memory_space<vmem>>) attributes {dimension_semantics = [#tpu.dimension_semantics<parallel>, #tpu.dimension_semantics<parallel>], iteration_bounds = array<i64: 2, 1>, scalar_prefetch = 0 : i64, scratch_operands = 0 : i64, tpu.core_type = #tpu.core_type<tc>, window_params = [{transform_indices = @transform_0, window_bounds = array<i64: 1, 128, 256>}, {transform_indices = @transform_1, window_bounds = array<i64: 1, 128, 128>}, {transform_indices = @transform_2, window_bounds = array<i64: 1, 128, 1>}, {transform_indices = @transform_3, window_bounds = array<i64: 1, 128, 256>}]} {
    %c0 = arith.constant 0 : index
    %c0_0 = arith.constant 0 : index
    %c0_1 = arith.constant 0 : index
    %0 = vector.load %arg3[%c0, %c0_0, %c0_1] : memref<1x128x128xbf16, #tpu.memory_space<vmem>>, vector<1x128x128xbf16>
    %1 = vector.shape_cast %0 : vector<1x128x128xbf16> to vector<128x128xbf16>
    %c0_2 = arith.constant 0 : index
    %c0_3 = arith.constant 0 : index
    %c0_4 = arith.constant 0 : index
    %2 = vector.load %arg2[%c0_2, %c0_3, %c0_4] : memref<1x128x256xbf16, #tpu.memory_space<vmem>>, vector<1x128x256xbf16>
    %3 = vector.shape_cast %2 : vector<1x128x256xbf16> to vector<128x256xbf16>
    %cst = arith.constant dense<0.000000e+00> : vector<128x256xf32>
    %4 = tpu.matmul %1, %3, %cst {dimension_numbers = #tpu.dot_dimension_numbers<[1], [0], [0], [1], [0, 0, 1, 1], [], []>} : vector<128x128xbf16>, vector<128x256xbf16>, vector<128x256xf32> -> vector<128x256xf32>
    %c0_5 = arith.constant 0 : index
    %c0_6 = arith.constant 0 : index
    %c0_7 = arith.constant 0 : index
    %5 = vector.load %arg4[%c0_5, %c0_6, %c0_7] : memref<1x128x1xf32, #tpu.memory_space<vmem>>, vector<1x128x1xf32>
    %6 = vector.shape_cast %5 : vector<1x128x1xf32> to vector<128x1xf32>
    %7 = vector.broadcast %6 : vector<128x1xf32> to vector<128x256xf32>
    %8 = arith.addf %4, %7 : vector<128x256xf32>
    %9 = arith.mulf %8, %8 : vector<128x256xf32>
    %cst_8 = arith.constant dense<0.000000e+00> : vector<256xf32>
    %10 = vector.multi_reduction <add>, %9, %cst_8 [0] : vector<128x256xf32> to vector<256xf32>
    %11 = vector.shape_cast %10 : vector<256xf32> to vector<1x256xf32>
    %cst_9 = arith.constant 1.000000e-24 : f32
    %12 = vector.broadcast %cst_9 : f32 to vector<1x256xf32>
    %13 = arith.maximumf %11, %12 : vector<1x256xf32>
    %14 = math.rsqrt %13 : vector<1x256xf32>
    %15 = vector.broadcast %14 : vector<1x256xf32> to vector<128x256xf32>
    %16 = arith.mulf %8, %15 : vector<128x256xf32>
    %c0_10 = arith.constant 0 : index
    %c0_11 = arith.constant 0 : index
    %c0_12 = arith.constant 0 : index
    %17 = vector.load %arg5[%c0_10, %c0_11, %c0_12] : memref<1x128x256xf32, #tpu.memory_space<vmem>>, vector<1x128x256xf32>
    %18 = vector.shape_cast %17 : vector<1x128x256xf32> to vector<128x256xf32>
    %19 = vector.shape_cast %16 : vector<128x256xf32> to vector<1x128x256xf32>
    tpu.vector_store %arg5[%c0_10, %c0_11, %c0_12], %19 {strides = array<i32>} : memref<1x128x256xf32, #tpu.memory_space<vmem>>, vector<1x128x256xf32>,
    return
  }
  func.func @transform_0(%arg0: i32, %arg1: i32) -> (i32, i32, i32) {
    %c0_i32 = arith.constant 0 : i32
    %c0_i32_0 = arith.constant 0 : i32
    return %arg0, %c0_i32, %arg1 : i32, i32, i32
  }
  func.func @transform_1(%arg0: i32, %arg1: i32) -> (i32, i32, i32) {
    %c0_i32 = arith.constant 0 : i32
    %c0_i32_0 = arith.constant 0 : i32
    %c0_i32_1 = arith.constant 0 : i32
    return %arg0, %c0_i32, %c0_i32_0 : i32, i32, i32
  }
  func.func @transform_2(%arg0: i32, %arg1: i32) -> (i32, i32, i32) {
    %c0_i32 = arith.constant 0 : i32
    %c0_i32_0 = arith.constant 0 : i32
    %c0_i32_1 = arith.constant 0 : i32
    return %arg0, %c0_i32, %c0_i32_0 : i32, i32, i32
  }
  func.func @transform_3(%arg0: i32, %arg1: i32) -> (i32, i32, i32) {
    %c0_i32 = arith.constant 0 : i32
    %c0_i32_0 = arith.constant 0 : i32
    return %arg0, %c0_i32, %arg1 : i32, i32, i32
  }
}

module attributes {stable_mosaic.version = 11 : i64} {
  func.func @kernel(%arg0: i32, %arg1: memref<8x1xi32, #tpu.memory_space<vmem>>, %arg2: memref<64x128xbf16, #tpu.memory_space<vmem>>, %arg3: memref<128x512xbf16, #tpu.memory_space<vmem>>, %arg4: memref<128x512xbf16, #tpu.memory_space<vmem>>, %arg5: memref<1x512xf32, #tpu.memory_space<vmem>>, %arg6: memref<128x512xbf16, #tpu.memory_space<vmem>>, %arg7: memref<128x512xbf16, #tpu.memory_space<vmem>>, %arg8: memref<1x512xf32, #tpu.memory_space<vmem>>, %arg9: memref<128x512xbf16, #tpu.memory_space<vmem>>, %arg10: memref<128x512xbf16, #tpu.memory_space<vmem>>, %arg11: memref<1x512xf32, #tpu.memory_space<vmem>>, %arg12: memref<128x128xf32, #tpu.memory_space<vmem>>, %arg13: memref<1x128xf32, #tpu.memory_space<vmem>>, %arg14: memref<8x128xf32, #tpu.memory_space<vmem>>, %arg15: memref<8x128xf32, #tpu.memory_space<vmem>>, %arg16: memref<8x128xf32, #tpu.memory_space<vmem>>, %arg17: memref<8x128xf32, #tpu.memory_space<vmem>>, %arg18: memref<64x128xf32, #tpu.memory_space<vmem>>, %arg19: memref<64x512xf32, #tpu.memory_space<vmem>>) attributes {dimension_semantics = [#tpu.dimension_semantics<arbitrary>], iteration_bounds = array<i64: 1>, scalar_prefetch = 0 : i64, scratch_operands = 5 : i64, tpu.core_type = #tpu.core_type<tc>, window_params = [{pipeline_mode = #tpu.pipeline_mode<synchronous>, transform_indices = @transform_0, window_bounds = array<i64: 8, 1>}, {pipeline_mode = #tpu.pipeline_mode<synchronous>, transform_indices = @transform_1, window_bounds = array<i64: 64, 128>}, {pipeline_mode = #tpu.pipeline_mode<synchronous>, transform_indices = @transform_2, window_bounds = array<i64: 128, 512>}, {pipeline_mode = #tpu.pipeline_mode<synchronous>, transform_indices = @transform_3, window_bounds = array<i64: 128, 512>}, {pipeline_mode = #tpu.pipeline_mode<synchronous>, transform_indices = @transform_4, window_bounds = array<i64: 1, 512>}, {pipeline_mode = #tpu.pipeline_mode<synchronous>, transform_indices = @transform_5, window_bounds = array<i64: 128, 512>}, {pipeline_mode = #tpu.pipeline_mode<synchronous>, transform_indices = @transform_6, window_bounds = array<i64: 128, 512>}, {pipeline_mode = #tpu.pipeline_mode<synchronous>, transform_indices = @transform_7, window_bounds = array<i64: 1, 512>}, {pipeline_mode = #tpu.pipeline_mode<synchronous>, transform_indices = @transform_8, window_bounds = array<i64: 128, 512>}, {pipeline_mode = #tpu.pipeline_mode<synchronous>, transform_indices = @transform_9, window_bounds = array<i64: 128, 512>}, {pipeline_mode = #tpu.pipeline_mode<synchronous>, transform_indices = @transform_10, window_bounds = array<i64: 1, 512>}, {pipeline_mode = #tpu.pipeline_mode<synchronous>, transform_indices = @transform_11, window_bounds = array<i64: 128, 128>}, {pipeline_mode = #tpu.pipeline_mode<synchronous>, transform_indices = @transform_12, window_bounds = array<i64: 1, 128>}, {pipeline_mode = #tpu.pipeline_mode<synchronous>, transform_indices = @transform_13, window_bounds = array<i64: 8, 128>}]} {
    %c0 = arith.constant 0 : index
    %c0_0 = arith.constant 0 : index
    %0 = vector.load %arg1[%c0, %c0_0] : memref<8x1xi32, #tpu.memory_space<vmem>>, vector<8x1xi32>
    %cst = arith.constant 0.000000e+00 : f32
    %1 = vector.broadcast %cst : f32 to vector<8x128xf32>
    %c0_1 = arith.constant 0 : index
    %c0_2 = arith.constant 0 : index
    %2 = vector.load %arg17[%c0_1, %c0_2] : memref<8x128xf32, #tpu.memory_space<vmem>>, vector<8x128xf32>
    tpu.vector_store %arg17[%c0_1, %c0_2], %1 {strides = array<i32>} : memref<8x128xf32, #tpu.memory_space<vmem>>, vector<8x128xf32>,
    %c0_3 = arith.constant 0 : index
    %c0_4 = arith.constant 0 : index
    %3 = vector.load %arg2[%c0_3, %c0_4] : memref<64x128xbf16, #tpu.memory_space<vmem>>, vector<64x128xbf16>
    %c0_5 = arith.constant 0 : index
    %c0_6 = arith.constant 0 : index
    %4 = vector.load %arg3[%c0_5, %c0_6] : memref<128x512xbf16, #tpu.memory_space<vmem>>, vector<128x512xbf16>
    %cst_7 = arith.constant dense<0.000000e+00> : vector<64x512xf32>
    %5 = tpu.matmul %3, %4, %cst_7 {dimension_numbers = #tpu.dot_dimension_numbers<[1], [0], [0], [1], [0, 0, 1, 1], [], []>} : vector<64x128xbf16>, vector<128x512xbf16>, vector<64x512xf32> -> vector<64x512xf32>
    %c0_8 = arith.constant 0 : index
    %c0_9 = arith.constant 0 : index
    %6 = vector.load %arg5[%c0_8, %c0_9] : memref<1x512xf32, #tpu.memory_space<vmem>>, vector<1x512xf32>
    %7 = vector.broadcast %6 : vector<1x512xf32> to vector<64x512xf32>
    %8 = arith.addf %5, %7 : vector<64x512xf32>
    %c0_10 = arith.constant 0 : index
    %c0_11 = arith.constant 0 : index
    %9 = vector.load %arg19[%c0_10, %c0_11] : memref<64x512xf32, #tpu.memory_space<vmem>>, vector<64x512xf32>
    tpu.vector_store %arg19[%c0_10, %c0_11], %8 {strides = array<i32>} : memref<64x512xf32, #tpu.memory_space<vmem>>, vector<64x512xf32>,
    %cst_12 = arith.constant 0.000000e+00 : f32
    %10 = vector.broadcast %cst_12 : f32 to vector<8x128xf32>
    %c0_13 = arith.constant 0 : index
    %c0_14 = arith.constant 0 : index
    %11 = vector.load %arg15[%c0_13, %c0_14] : memref<8x128xf32, #tpu.memory_space<vmem>>, vector<8x128xf32>
    tpu.vector_store %arg15[%c0_13, %c0_14], %10 {strides = array<i32>} : memref<8x128xf32, #tpu.memory_space<vmem>>, vector<8x128xf32>,
    %cst_15 = arith.constant 0.000000e+00 : f32
    %12 = vector.broadcast %cst_15 : f32 to vector<8x128xf32>
    %c0_16 = arith.constant 0 : index
    %c0_17 = arith.constant 0 : index
    %13 = vector.load %arg16[%c0_16, %c0_17] : memref<8x128xf32, #tpu.memory_space<vmem>>, vector<8x128xf32>
    tpu.vector_store %arg16[%c0_16, %c0_17], %12 {strides = array<i32>} : memref<8x128xf32, #tpu.memory_space<vmem>>, vector<8x128xf32>,
    %c0_i32 = arith.constant 0 : i32
    %c8_i32 = arith.constant 8 : i32
    %14 = arith.muli %c0_i32, %c8_i32 : i32
    %15 = tpu.assume_multiple %14, 8 : i32
    %16 = arith.index_cast %15 : i32 to index
    %c0_18 = arith.constant 0 : index
    %17 = vector.load %arg19[%16, %c0_18] : memref<64x512xf32, #tpu.memory_space<vmem>>, vector<8x512xf32>
    %c0_19 = arith.constant 0 : index
    %c0_20 = arith.constant 0 : index
    %18 = vector.load %arg15[%c0_19, %c0_20] : memref<8x128xf32, #tpu.memory_space<vmem>>, vector<8x128xf32>
    %19 = arith.truncf %18 : vector<8x128xf32> to vector<8x128xbf16>
    %c0_21 = arith.constant 0 : index
    %c0_22 = arith.constant 0 : index
    %20 = vector.load %arg4[%c0_21, %c0_22] : memref<128x512xbf16, #tpu.memory_space<vmem>>, vector<128x512xbf16>
    %cst_23 = arith.constant dense<0.000000e+00> : vector<8x512xf32>
    %21 = tpu.matmul %19, %20, %cst_23 {dimension_numbers = #tpu.dot_dimension_numbers<[1], [0], [0], [1], [0, 0, 1, 1], [], []>} : vector<8x128xbf16>, vector<128x512xbf16>, vector<8x512xf32> -> vector<8x512xf32>
    %22 = arith.addf %17, %21 : vector<8x512xf32>
    %23 = vector.extract_strided_slice %22 {offsets = [0, 0], sizes = [8, 256], strides = [1, 1]} : vector<8x512xf32> to vector<8x256xf32>
    %24 = arith.negf %23 : vector<8x256xf32>
    %25 = math.exp %24 : vector<8x256xf32>
    %cst_24 = arith.constant 1.000000e+00 : f32
    %26 = vector.broadcast %cst_24 : f32 to vector<8x256xf32>
    %27 = arith.addf %26, %25 : vector<8x256xf32>
    %28 = arith.divf %26, %27 : vector<8x256xf32>
    %29 = vector.extract_strided_slice %28 {offsets = [0, 0], sizes = [8, 128], strides = [1, 1]} : vector<8x256xf32> to vector<8x128xf32>
    %30 = vector.extract_strided_slice %28 {offsets = [0, 128], sizes = [8, 128], strides = [1, 1]} : vector<8x256xf32> to vector<8x128xf32>
    %31 = vector.extract_strided_slice %22 {offsets = [0, 256], sizes = [8, 128], strides = [1, 1]} : vector<8x512xf32> to vector<8x128xf32>
    %32 = math.tanh %31 : vector<8x128xf32>
    %33 = vector.extract_strided_slice %22 {offsets = [0, 384], sizes = [8, 128], strides = [1, 1]} : vector<8x512xf32> to vector<8x128xf32>
    %34 = arith.negf %33 : vector<8x128xf32>
    %35 = math.exp %34 : vector<8x128xf32>
    %cst_25 = arith.constant 1.000000e+00 : f32
    %36 = vector.broadcast %cst_25 : f32 to vector<8x128xf32>
    %37 = arith.addf %36, %35 : vector<8x128xf32>
    %38 = arith.divf %36, %37 : vector<8x128xf32>
    %c0_26 = arith.constant 0 : index
    %c0_27 = arith.constant 0 : index
    %39 = vector.load %arg16[%c0_26, %c0_27] : memref<8x128xf32, #tpu.memory_space<vmem>>, vector<8x128xf32>
    %40 = arith.mulf %30, %39 : vector<8x128xf32>
    %41 = arith.mulf %29, %32 : vector<8x128xf32>
    %42 = arith.addf %40, %41 : vector<8x128xf32>
    %43 = math.tanh %42 : vector<8x128xf32>
    %44 = arith.mulf %38, %43 : vector<8x128xf32>
    %c0_28 = arith.constant 0 : index
    %c0_29 = arith.constant 0 : index
    %45 = vector.load %arg16[%c0_28, %c0_29] : memref<8x128xf32, #tpu.memory_space<vmem>>, vector<8x128xf32>
    tpu.vector_store %arg16[%c0_28, %c0_29], %42 {strides = array<i32>} : memref<8x128xf32, #tpu.memory_space<vmem>>, vector<8x128xf32>,
    %c0_30 = arith.constant 0 : index
    %c0_31 = arith.constant 0 : index
    %46 = vector.load %arg15[%c0_30, %c0_31] : memref<8x128xf32, #tpu.memory_space<vmem>>, vector<8x128xf32>
    tpu.vector_store %arg15[%c0_30, %c0_31], %44 {strides = array<i32>} : memref<8x128xf32, #tpu.memory_space<vmem>>, vector<8x128xf32>,
    %47 = arith.index_cast %15 : i32 to index
    %c0_32 = arith.constant 0 : index
    %48 = vector.load %arg18[%47, %c0_32] : memref<64x128xf32, #tpu.memory_space<vmem>>, vector<8x128xf32>
    tpu.vector_store %arg18[%47, %c0_32], %44 {strides = array<i32>} : memref<64x128xf32, #tpu.memory_space<vmem>>, vector<8x128xf32>,
    %c1_i32 = arith.constant 1 : i32
    %c8_i32_33 = arith.constant 8 : i32
    %49 = arith.muli %c1_i32, %c8_i32_33 : i32
    %50 = tpu.assume_multiple %49, 8 : i32
    %51 = arith.index_cast %50 : i32 to index
    %c0_34 = arith.constant 0 : index
    %52 = vector.load %arg19[%51, %c0_34] : memref<64x512xf32, #tpu.memory_space<vmem>>, vector<8x512xf32>
    %c0_35 = arith.constant 0 : index
    %c0_36 = arith.constant 0 : index
    %53 = vector.load %arg15[%c0_35, %c0_36] : memref<8x128xf32, #tpu.memory_space<vmem>>, vector<8x128xf32>
    %54 = arith.truncf %53 : vector<8x128xf32> to vector<8x128xbf16>
    %c0_37 = arith.constant 0 : index
    %c0_38 = arith.constant 0 : index
    %55 = vector.load %arg4[%c0_37, %c0_38] : memref<128x512xbf16, #tpu.memory_space<vmem>>, vector<128x512xbf16>
    %cst_39 = arith.constant dense<0.000000e+00> : vector<8x512xf32>
    %56 = tpu.matmul %54, %55, %cst_39 {dimension_numbers = #tpu.dot_dimension_numbers<[1], [0], [0], [1], [0, 0, 1, 1], [], []>} : vector<8x128xbf16>, vector<128x512xbf16>, vector<8x512xf32> -> vector<8x512xf32>
    %57 = arith.addf %52, %56 : vector<8x512xf32>
    %58 = vector.extract_strided_slice %57 {offsets = [0, 0], sizes = [8, 256], strides = [1, 1]} : vector<8x512xf32> to vector<8x256xf32>
    %59 = arith.negf %58 : vector<8x256xf32>
    %60 = math.exp %59 : vector<8x256xf32>
    %cst_40 = arith.constant 1.000000e+00 : f32
    %61 = vector.broadcast %cst_40 : f32 to vector<8x256xf32>
    %62 = arith.addf %61, %60 : vector<8x256xf32>
    %63 = arith.divf %61, %62 : vector<8x256xf32>
    %64 = vector.extract_strided_slice %63 {offsets = [0, 0], sizes = [8, 128], strides = [1, 1]} : vector<8x256xf32> to vector<8x128xf32>
    %65 = vector.extract_strided_slice %63 {offsets = [0, 128], sizes = [8, 128], strides = [1, 1]} : vector<8x256xf32> to vector<8x128xf32>
    %66 = vector.extract_strided_slice %57 {offsets = [0, 256], sizes = [8, 128], strides = [1, 1]} : vector<8x512xf32> to vector<8x128xf32>
    %67 = math.tanh %66 : vector<8x128xf32>
    %68 = vector.extract_strided_slice %57 {offsets = [0, 384], sizes = [8, 128], strides = [1, 1]} : vector<8x512xf32> to vector<8x128xf32>
    %69 = arith.negf %68 : vector<8x128xf32>
    %70 = math.exp %69 : vector<8x128xf32>
    %cst_41 = arith.constant 1.000000e+00 : f32
    %71 = vector.broadcast %cst_41 : f32 to vector<8x128xf32>
    %72 = arith.addf %71, %70 : vector<8x128xf32>
    %73 = arith.divf %71, %72 : vector<8x128xf32>
    %c0_42 = arith.constant 0 : index
    %c0_43 = arith.constant 0 : index
    %74 = vector.load %arg16[%c0_42, %c0_43] : memref<8x128xf32, #tpu.memory_space<vmem>>, vector<8x128xf32>
    %75 = arith.mulf %65, %74 : vector<8x128xf32>
    %76 = arith.mulf %64, %67 : vector<8x128xf32>
    %77 = arith.addf %75, %76 : vector<8x128xf32>
    %78 = math.tanh %77 : vector<8x128xf32>
    %79 = arith.mulf %73, %78 : vector<8x128xf32>
    %c0_44 = arith.constant 0 : index
    %c0_45 = arith.constant 0 : index
    %80 = vector.load %arg16[%c0_44, %c0_45] : memref<8x128xf32, #tpu.memory_space<vmem>>, vector<8x128xf32>
    tpu.vector_store %arg16[%c0_44, %c0_45], %77 {strides = array<i32>} : memref<8x128xf32, #tpu.memory_space<vmem>>, vector<8x128xf32>,
    %c0_46 = arith.constant 0 : index
    %c0_47 = arith.constant 0 : index
    %81 = vector.load %arg15[%c0_46, %c0_47] : memref<8x128xf32, #tpu.memory_space<vmem>>, vector<8x128xf32>
    tpu.vector_store %arg15[%c0_46, %c0_47], %79 {strides = array<i32>} : memref<8x128xf32, #tpu.memory_space<vmem>>, vector<8x128xf32>,
    %82 = arith.index_cast %50 : i32 to index
    %c0_48 = arith.constant 0 : index
    %83 = vector.load %arg18[%82, %c0_48] : memref<64x128xf32, #tpu.memory_space<vmem>>, vector<8x128xf32>
    tpu.vector_store %arg18[%82, %c0_48], %79 {strides = array<i32>} : memref<64x128xf32, #tpu.memory_space<vmem>>, vector<8x128xf32>,
    %c2_i32 = arith.constant 2 : i32
    %c8_i32_49 = arith.constant 8 : i32
    %84 = arith.muli %c2_i32, %c8_i32_49 : i32
    %85 = tpu.assume_multiple %84, 8 : i32
    %86 = arith.index_cast %85 : i32 to index
    %c0_50 = arith.constant 0 : index
    %87 = vector.load %arg19[%86, %c0_50] : memref<64x512xf32, #tpu.memory_space<vmem>>, vector<8x512xf32>
    %c0_51 = arith.constant 0 : index
    %c0_52 = arith.constant 0 : index
    %88 = vector.load %arg15[%c0_51, %c0_52] : memref<8x128xf32, #tpu.memory_space<vmem>>, vector<8x128xf32>
    %89 = arith.truncf %88 : vector<8x128xf32> to vector<8x128xbf16>
    %c0_53 = arith.constant 0 : index
    %c0_54 = arith.constant 0 : index
    %90 = vector.load %arg4[%c0_53, %c0_54] : memref<128x512xbf16, #tpu.memory_space<vmem>>, vector<128x512xbf16>
    %cst_55 = arith.constant dense<0.000000e+00> : vector<8x512xf32>
    %91 = tpu.matmul %89, %90, %cst_55 {dimension_numbers = #tpu.dot_dimension_numbers<[1], [0], [0], [1], [0, 0, 1, 1], [], []>} : vector<8x128xbf16>, vector<128x512xbf16>, vector<8x512xf32> -> vector<8x512xf32>
    %92 = arith.addf %87, %91 : vector<8x512xf32>
    %93 = vector.extract_strided_slice %92 {offsets = [0, 0], sizes = [8, 256], strides = [1, 1]} : vector<8x512xf32> to vector<8x256xf32>
    %94 = arith.negf %93 : vector<8x256xf32>
    %95 = math.exp %94 : vector<8x256xf32>
    %cst_56 = arith.constant 1.000000e+00 : f32
    %96 = vector.broadcast %cst_56 : f32 to vector<8x256xf32>
    %97 = arith.addf %96, %95 : vector<8x256xf32>
    %98 = arith.divf %96, %97 : vector<8x256xf32>
    %99 = vector.extract_strided_slice %98 {offsets = [0, 0], sizes = [8, 128], strides = [1, 1]} : vector<8x256xf32> to vector<8x128xf32>
    %100 = vector.extract_strided_slice %98 {offsets = [0, 128], sizes = [8, 128], strides = [1, 1]} : vector<8x256xf32> to vector<8x128xf32>
    %101 = vector.extract_strided_slice %92 {offsets = [0, 256], sizes = [8, 128], strides = [1, 1]} : vector<8x512xf32> to vector<8x128xf32>
    %102 = math.tanh %101 : vector<8x128xf32>
    %103 = vector.extract_strided_slice %92 {offsets = [0, 384], sizes = [8, 128], strides = [1, 1]} : vector<8x512xf32> to vector<8x128xf32>
    %104 = arith.negf %103 : vector<8x128xf32>
    %105 = math.exp %104 : vector<8x128xf32>
    %cst_57 = arith.constant 1.000000e+00 : f32
    %106 = vector.broadcast %cst_57 : f32 to vector<8x128xf32>
    %107 = arith.addf %106, %105 : vector<8x128xf32>
    %108 = arith.divf %106, %107 : vector<8x128xf32>
    %c0_58 = arith.constant 0 : index
    %c0_59 = arith.constant 0 : index
    %109 = vector.load %arg16[%c0_58, %c0_59] : memref<8x128xf32, #tpu.memory_space<vmem>>, vector<8x128xf32>
    %110 = arith.mulf %100, %109 : vector<8x128xf32>
    %111 = arith.mulf %99, %102 : vector<8x128xf32>
    %112 = arith.addf %110, %111 : vector<8x128xf32>
    %113 = math.tanh %112 : vector<8x128xf32>
    %114 = arith.mulf %108, %113 : vector<8x128xf32>
    %c0_60 = arith.constant 0 : index
    %c0_61 = arith.constant 0 : index
    %115 = vector.load %arg16[%c0_60, %c0_61] : memref<8x128xf32, #tpu.memory_space<vmem>>, vector<8x128xf32>
    tpu.vector_store %arg16[%c0_60, %c0_61], %112 {strides = array<i32>} : memref<8x128xf32, #tpu.memory_space<vmem>>, vector<8x128xf32>,
    %c0_62 = arith.constant 0 : index
    %c0_63 = arith.constant 0 : index
    %116 = vector.load %arg15[%c0_62, %c0_63] : memref<8x128xf32, #tpu.memory_space<vmem>>, vector<8x128xf32>
    tpu.vector_store %arg15[%c0_62, %c0_63], %114 {strides = array<i32>} : memref<8x128xf32, #tpu.memory_space<vmem>>, vector<8x128xf32>,
    %117 = arith.index_cast %85 : i32 to index
    %c0_64 = arith.constant 0 : index
    %118 = vector.load %arg18[%117, %c0_64] : memref<64x128xf32, #tpu.memory_space<vmem>>, vector<8x128xf32>
    tpu.vector_store %arg18[%117, %c0_64], %114 {strides = array<i32>} : memref<64x128xf32, #tpu.memory_space<vmem>>, vector<8x128xf32>,
    %c3_i32 = arith.constant 3 : i32
    %c8_i32_65 = arith.constant 8 : i32
    %119 = arith.muli %c3_i32, %c8_i32_65 : i32
    %120 = tpu.assume_multiple %119, 8 : i32
    %121 = arith.index_cast %120 : i32 to index
    %c0_66 = arith.constant 0 : index
    %122 = vector.load %arg19[%121, %c0_66] : memref<64x512xf32, #tpu.memory_space<vmem>>, vector<8x512xf32>
    %c0_67 = arith.constant 0 : index
    %c0_68 = arith.constant 0 : index
    %123 = vector.load %arg15[%c0_67, %c0_68] : memref<8x128xf32, #tpu.memory_space<vmem>>, vector<8x128xf32>
    %124 = arith.truncf %123 : vector<8x128xf32> to vector<8x128xbf16>
    %c0_69 = arith.constant 0 : index
    %c0_70 = arith.constant 0 : index
    %125 = vector.load %arg4[%c0_69, %c0_70] : memref<128x512xbf16, #tpu.memory_space<vmem>>, vector<128x512xbf16>
    %cst_71 = arith.constant dense<0.000000e+00> : vector<8x512xf32>
    %126 = tpu.matmul %124, %125, %cst_71 {dimension_numbers = #tpu.dot_dimension_numbers<[1], [0], [0], [1], [0, 0, 1, 1], [], []>} : vector<8x128xbf16>, vector<128x512xbf16>, vector<8x512xf32> -> vector<8x512xf32>
    %127 = arith.addf %122, %126 : vector<8x512xf32>
    %128 = vector.extract_strided_slice %127 {offsets = [0, 0], sizes = [8, 256], strides = [1, 1]} : vector<8x512xf32> to vector<8x256xf32>
    %129 = arith.negf %128 : vector<8x256xf32>
    %130 = math.exp %129 : vector<8x256xf32>
    %cst_72 = arith.constant 1.000000e+00 : f32
    %131 = vector.broadcast %cst_72 : f32 to vector<8x256xf32>
    %132 = arith.addf %131, %130 : vector<8x256xf32>
    %133 = arith.divf %131, %132 : vector<8x256xf32>
    %134 = vector.extract_strided_slice %133 {offsets = [0, 0], sizes = [8, 128], strides = [1, 1]} : vector<8x256xf32> to vector<8x128xf32>
    %135 = vector.extract_strided_slice %133 {offsets = [0, 128], sizes = [8, 128], strides = [1, 1]} : vector<8x256xf32> to vector<8x128xf32>
    %136 = vector.extract_strided_slice %127 {offsets = [0, 256], sizes = [8, 128], strides = [1, 1]} : vector<8x512xf32> to vector<8x128xf32>
    %137 = math.tanh %136 : vector<8x128xf32>
    %138 = vector.extract_strided_slice %127 {offsets = [0, 384], sizes = [8, 128], strides = [1, 1]} : vector<8x512xf32> to vector<8x128xf32>
    %139 = arith.negf %138 : vector<8x128xf32>
    %140 = math.exp %139 : vector<8x128xf32>
    %cst_73 = arith.constant 1.000000e+00 : f32
    %141 = vector.broadcast %cst_73 : f32 to vector<8x128xf32>
    %142 = arith.addf %141, %140 : vector<8x128xf32>
    %143 = arith.divf %141, %142 : vector<8x128xf32>
    %c0_74 = arith.constant 0 : index
    %c0_75 = arith.constant 0 : index
    %144 = vector.load %arg16[%c0_74, %c0_75] : memref<8x128xf32, #tpu.memory_space<vmem>>, vector<8x128xf32>
    %145 = arith.mulf %135, %144 : vector<8x128xf32>
    %146 = arith.mulf %134, %137 : vector<8x128xf32>
    %147 = arith.addf %145, %146 : vector<8x128xf32>
    %148 = math.tanh %147 : vector<8x128xf32>
    %149 = arith.mulf %143, %148 : vector<8x128xf32>
    %c0_76 = arith.constant 0 : index
    %c0_77 = arith.constant 0 : index
    %150 = vector.load %arg16[%c0_76, %c0_77] : memref<8x128xf32, #tpu.memory_space<vmem>>, vector<8x128xf32>
    tpu.vector_store %arg16[%c0_76, %c0_77], %147 {strides = array<i32>} : memref<8x128xf32, #tpu.memory_space<vmem>>, vector<8x128xf32>,
    %c0_78 = arith.constant 0 : index
    %c0_79 = arith.constant 0 : index
    %151 = vector.load %arg15[%c0_78, %c0_79] : memref<8x128xf32, #tpu.memory_space<vmem>>, vector<8x128xf32>
    tpu.vector_store %arg15[%c0_78, %c0_79], %149 {strides = array<i32>} : memref<8x128xf32, #tpu.memory_space<vmem>>, vector<8x128xf32>,
    %152 = arith.index_cast %120 : i32 to index
    %c0_80 = arith.constant 0 : index
    %153 = vector.load %arg18[%152, %c0_80] : memref<64x128xf32, #tpu.memory_space<vmem>>, vector<8x128xf32>
    tpu.vector_store %arg18[%152, %c0_80], %149 {strides = array<i32>} : memref<64x128xf32, #tpu.memory_space<vmem>>, vector<8x128xf32>,
    %c4_i32 = arith.constant 4 : i32
    %c8_i32_81 = arith.constant 8 : i32
    %154 = arith.muli %c4_i32, %c8_i32_81 : i32
    %155 = tpu.assume_multiple %154, 8 : i32
    %156 = arith.index_cast %155 : i32 to index
    %c0_82 = arith.constant 0 : index
    %157 = vector.load %arg19[%156, %c0_82] : memref<64x512xf32, #tpu.memory_space<vmem>>, vector<8x512xf32>
    %c0_83 = arith.constant 0 : index
    %c0_84 = arith.constant 0 : index
    %158 = vector.load %arg15[%c0_83, %c0_84] : memref<8x128xf32, #tpu.memory_space<vmem>>, vector<8x128xf32>
    %159 = arith.truncf %158 : vector<8x128xf32> to vector<8x128xbf16>
    %c0_85 = arith.constant 0 : index
    %c0_86 = arith.constant 0 : index
    %160 = vector.load %arg4[%c0_85, %c0_86] : memref<128x512xbf16, #tpu.memory_space<vmem>>, vector<128x512xbf16>
    %cst_87 = arith.constant dense<0.000000e+00> : vector<8x512xf32>
    %161 = tpu.matmul %159, %160, %cst_87 {dimension_numbers = #tpu.dot_dimension_numbers<[1], [0], [0], [1], [0, 0, 1, 1], [], []>} : vector<8x128xbf16>, vector<128x512xbf16>, vector<8x512xf32> -> vector<8x512xf32>
    %162 = arith.addf %157, %161 : vector<8x512xf32>
    %163 = vector.extract_strided_slice %162 {offsets = [0, 0], sizes = [8, 256], strides = [1, 1]} : vector<8x512xf32> to vector<8x256xf32>
    %164 = arith.negf %163 : vector<8x256xf32>
    %165 = math.exp %164 : vector<8x256xf32>
    %cst_88 = arith.constant 1.000000e+00 : f32
    %166 = vector.broadcast %cst_88 : f32 to vector<8x256xf32>
    %167 = arith.addf %166, %165 : vector<8x256xf32>
    %168 = arith.divf %166, %167 : vector<8x256xf32>
    %169 = vector.extract_strided_slice %168 {offsets = [0, 0], sizes = [8, 128], strides = [1, 1]} : vector<8x256xf32> to vector<8x128xf32>
    %170 = vector.extract_strided_slice %168 {offsets = [0, 128], sizes = [8, 128], strides = [1, 1]} : vector<8x256xf32> to vector<8x128xf32>
    %171 = vector.extract_strided_slice %162 {offsets = [0, 256], sizes = [8, 128], strides = [1, 1]} : vector<8x512xf32> to vector<8x128xf32>
    %172 = math.tanh %171 : vector<8x128xf32>
    %173 = vector.extract_strided_slice %162 {offsets = [0, 384], sizes = [8, 128], strides = [1, 1]} : vector<8x512xf32> to vector<8x128xf32>
    %174 = arith.negf %173 : vector<8x128xf32>
    %175 = math.exp %174 : vector<8x128xf32>
    %cst_89 = arith.constant 1.000000e+00 : f32
    %176 = vector.broadcast %cst_89 : f32 to vector<8x128xf32>
    %177 = arith.addf %176, %175 : vector<8x128xf32>
    %178 = arith.divf %176, %177 : vector<8x128xf32>
    %c0_90 = arith.constant 0 : index
    %c0_91 = arith.constant 0 : index
    %179 = vector.load %arg16[%c0_90, %c0_91] : memref<8x128xf32, #tpu.memory_space<vmem>>, vector<8x128xf32>
    %180 = arith.mulf %170, %179 : vector<8x128xf32>
    %181 = arith.mulf %169, %172 : vector<8x128xf32>
    %182 = arith.addf %180, %181 : vector<8x128xf32>
    %183 = math.tanh %182 : vector<8x128xf32>
    %184 = arith.mulf %178, %183 : vector<8x128xf32>
    %c0_92 = arith.constant 0 : index
    %c0_93 = arith.constant 0 : index
    %185 = vector.load %arg16[%c0_92, %c0_93] : memref<8x128xf32, #tpu.memory_space<vmem>>, vector<8x128xf32>
    tpu.vector_store %arg16[%c0_92, %c0_93], %182 {strides = array<i32>} : memref<8x128xf32, #tpu.memory_space<vmem>>, vector<8x128xf32>,
    %c0_94 = arith.constant 0 : index
    %c0_95 = arith.constant 0 : index
    %186 = vector.load %arg15[%c0_94, %c0_95] : memref<8x128xf32, #tpu.memory_space<vmem>>, vector<8x128xf32>
    tpu.vector_store %arg15[%c0_94, %c0_95], %184 {strides = array<i32>} : memref<8x128xf32, #tpu.memory_space<vmem>>, vector<8x128xf32>,
    %187 = arith.index_cast %155 : i32 to index
    %c0_96 = arith.constant 0 : index
    %188 = vector.load %arg18[%187, %c0_96] : memref<64x128xf32, #tpu.memory_space<vmem>>, vector<8x128xf32>
    tpu.vector_store %arg18[%187, %c0_96], %184 {strides = array<i32>} : memref<64x128xf32, #tpu.memory_space<vmem>>, vector<8x128xf32>,
    %c5_i32 = arith.constant 5 : i32
    %c8_i32_97 = arith.constant 8 : i32
    %189 = arith.muli %c5_i32, %c8_i32_97 : i32
    %190 = tpu.assume_multiple %189, 8 : i32
    %191 = arith.index_cast %190 : i32 to index
    %c0_98 = arith.constant 0 : index
    %192 = vector.load %arg19[%191, %c0_98] : memref<64x512xf32, #tpu.memory_space<vmem>>, vector<8x512xf32>
    %c0_99 = arith.constant 0 : index
    %c0_100 = arith.constant 0 : index
    %193 = vector.load %arg15[%c0_99, %c0_100] : memref<8x128xf32, #tpu.memory_space<vmem>>, vector<8x128xf32>
    %194 = arith.truncf %193 : vector<8x128xf32> to vector<8x128xbf16>
    %c0_101 = arith.constant 0 : index
    %c0_102 = arith.constant 0 : index
    %195 = vector.load %arg4[%c0_101, %c0_102] : memref<128x512xbf16, #tpu.memory_space<vmem>>, vector<128x512xbf16>
    %cst_103 = arith.constant dense<0.000000e+00> : vector<8x512xf32>
    %196 = tpu.matmul %194, %195, %cst_103 {dimension_numbers = #tpu.dot_dimension_numbers<[1], [0], [0], [1], [0, 0, 1, 1], [], []>} : vector<8x128xbf16>, vector<128x512xbf16>, vector<8x512xf32> -> vector<8x512xf32>
    %197 = arith.addf %192, %196 : vector<8x512xf32>
    %198 = vector.extract_strided_slice %197 {offsets = [0, 0], sizes = [8, 256], strides = [1, 1]} : vector<8x512xf32> to vector<8x256xf32>
    %199 = arith.negf %198 : vector<8x256xf32>
    %200 = math.exp %199 : vector<8x256xf32>
    %cst_104 = arith.constant 1.000000e+00 : f32
    %201 = vector.broadcast %cst_104 : f32 to vector<8x256xf32>
    %202 = arith.addf %201, %200 : vector<8x256xf32>
    %203 = arith.divf %201, %202 : vector<8x256xf32>
    %204 = vector.extract_strided_slice %203 {offsets = [0, 0], sizes = [8, 128], strides = [1, 1]} : vector<8x256xf32> to vector<8x128xf32>
    %205 = vector.extract_strided_slice %203 {offsets = [0, 128], sizes = [8, 128], strides = [1, 1]} : vector<8x256xf32> to vector<8x128xf32>
    %206 = vector.extract_strided_slice %197 {offsets = [0, 256], sizes = [8, 128], strides = [1, 1]} : vector<8x512xf32> to vector<8x128xf32>
    %207 = math.tanh %206 : vector<8x128xf32>
    %208 = vector.extract_strided_slice %197 {offsets = [0, 384], sizes = [8, 128], strides = [1, 1]} : vector<8x512xf32> to vector<8x128xf32>
    %209 = arith.negf %208 : vector<8x128xf32>
    %210 = math.exp %209 : vector<8x128xf32>
    %cst_105 = arith.constant 1.000000e+00 : f32
    %211 = vector.broadcast %cst_105 : f32 to vector<8x128xf32>
    %212 = arith.addf %211, %210 : vector<8x128xf32>
    %213 = arith.divf %211, %212 : vector<8x128xf32>
    %c0_106 = arith.constant 0 : index
    %c0_107 = arith.constant 0 : index
    %214 = vector.load %arg16[%c0_106, %c0_107] : memref<8x128xf32, #tpu.memory_space<vmem>>, vector<8x128xf32>
    %215 = arith.mulf %205, %214 : vector<8x128xf32>
    %216 = arith.mulf %204, %207 : vector<8x128xf32>
    %217 = arith.addf %215, %216 : vector<8x128xf32>
    %218 = math.tanh %217 : vector<8x128xf32>
    %219 = arith.mulf %213, %218 : vector<8x128xf32>
    %c0_108 = arith.constant 0 : index
    %c0_109 = arith.constant 0 : index
    %220 = vector.load %arg16[%c0_108, %c0_109] : memref<8x128xf32, #tpu.memory_space<vmem>>, vector<8x128xf32>
    tpu.vector_store %arg16[%c0_108, %c0_109], %217 {strides = array<i32>} : memref<8x128xf32, #tpu.memory_space<vmem>>, vector<8x128xf32>,
    %c0_110 = arith.constant 0 : index
    %c0_111 = arith.constant 0 : index
    %221 = vector.load %arg15[%c0_110, %c0_111] : memref<8x128xf32, #tpu.memory_space<vmem>>, vector<8x128xf32>
    tpu.vector_store %arg15[%c0_110, %c0_111], %219 {strides = array<i32>} : memref<8x128xf32, #tpu.memory_space<vmem>>, vector<8x128xf32>,
    %222 = arith.index_cast %190 : i32 to index
    %c0_112 = arith.constant 0 : index
    %223 = vector.load %arg18[%222, %c0_112] : memref<64x128xf32, #tpu.memory_space<vmem>>, vector<8x128xf32>
    tpu.vector_store %arg18[%222, %c0_112], %219 {strides = array<i32>} : memref<64x128xf32, #tpu.memory_space<vmem>>, vector<8x128xf32>,
    %c6_i32 = arith.constant 6 : i32
    %c8_i32_113 = arith.constant 8 : i32
    %224 = arith.muli %c6_i32, %c8_i32_113 : i32
    %225 = tpu.assume_multiple %224, 8 : i32
    %226 = arith.index_cast %225 : i32 to index
    %c0_114 = arith.constant 0 : index
    %227 = vector.load %arg19[%226, %c0_114] : memref<64x512xf32, #tpu.memory_space<vmem>>, vector<8x512xf32>
    %c0_115 = arith.constant 0 : index
    %c0_116 = arith.constant 0 : index
    %228 = vector.load %arg15[%c0_115, %c0_116] : memref<8x128xf32, #tpu.memory_space<vmem>>, vector<8x128xf32>
    %229 = arith.truncf %228 : vector<8x128xf32> to vector<8x128xbf16>
    %c0_117 = arith.constant 0 : index
    %c0_118 = arith.constant 0 : index
    %230 = vector.load %arg4[%c0_117, %c0_118] : memref<128x512xbf16, #tpu.memory_space<vmem>>, vector<128x512xbf16>
    %cst_119 = arith.constant dense<0.000000e+00> : vector<8x512xf32>
    %231 = tpu.matmul %229, %230, %cst_119 {dimension_numbers = #tpu.dot_dimension_numbers<[1], [0], [0], [1], [0, 0, 1, 1], [], []>} : vector<8x128xbf16>, vector<128x512xbf16>, vector<8x512xf32> -> vector<8x512xf32>
    %232 = arith.addf %227, %231 : vector<8x512xf32>
    %233 = vector.extract_strided_slice %232 {offsets = [0, 0], sizes = [8, 256], strides = [1, 1]} : vector<8x512xf32> to vector<8x256xf32>
    %234 = arith.negf %233 : vector<8x256xf32>
    %235 = math.exp %234 : vector<8x256xf32>
    %cst_120 = arith.constant 1.000000e+00 : f32
    %236 = vector.broadcast %cst_120 : f32 to vector<8x256xf32>
    %237 = arith.addf %236, %235 : vector<8x256xf32>
    %238 = arith.divf %236, %237 : vector<8x256xf32>
    %239 = vector.extract_strided_slice %238 {offsets = [0, 0], sizes = [8, 128], strides = [1, 1]} : vector<8x256xf32> to vector<8x128xf32>
    %240 = vector.extract_strided_slice %238 {offsets = [0, 128], sizes = [8, 128], strides = [1, 1]} : vector<8x256xf32> to vector<8x128xf32>
    %241 = vector.extract_strided_slice %232 {offsets = [0, 256], sizes = [8, 128], strides = [1, 1]} : vector<8x512xf32> to vector<8x128xf32>
    %242 = math.tanh %241 : vector<8x128xf32>
    %243 = vector.extract_strided_slice %232 {offsets = [0, 384], sizes = [8, 128], strides = [1, 1]} : vector<8x512xf32> to vector<8x128xf32>
    %244 = arith.negf %243 : vector<8x128xf32>
    %245 = math.exp %244 : vector<8x128xf32>
    %cst_121 = arith.constant 1.000000e+00 : f32
    %246 = vector.broadcast %cst_121 : f32 to vector<8x128xf32>
    %247 = arith.addf %246, %245 : vector<8x128xf32>
    %248 = arith.divf %246, %247 : vector<8x128xf32>
    %c0_122 = arith.constant 0 : index
    %c0_123 = arith.constant 0 : index
    %249 = vector.load %arg16[%c0_122, %c0_123] : memref<8x128xf32, #tpu.memory_space<vmem>>, vector<8x128xf32>
    %250 = arith.mulf %240, %249 : vector<8x128xf32>
    %251 = arith.mulf %239, %242 : vector<8x128xf32>
    %252 = arith.addf %250, %251 : vector<8x128xf32>
    %253 = math.tanh %252 : vector<8x128xf32>
    %254 = arith.mulf %248, %253 : vector<8x128xf32>
    %c0_124 = arith.constant 0 : index
    %c0_125 = arith.constant 0 : index
    %255 = vector.load %arg16[%c0_124, %c0_125] : memref<8x128xf32, #tpu.memory_space<vmem>>, vector<8x128xf32>
    tpu.vector_store %arg16[%c0_124, %c0_125], %252 {strides = array<i32>} : memref<8x128xf32, #tpu.memory_space<vmem>>, vector<8x128xf32>,
    %c0_126 = arith.constant 0 : index
    %c0_127 = arith.constant 0 : index
    %256 = vector.load %arg15[%c0_126, %c0_127] : memref<8x128xf32, #tpu.memory_space<vmem>>, vector<8x128xf32>
    tpu.vector_store %arg15[%c0_126, %c0_127], %254 {strides = array<i32>} : memref<8x128xf32, #tpu.memory_space<vmem>>, vector<8x128xf32>,
    %257 = arith.index_cast %225 : i32 to index
    %c0_128 = arith.constant 0 : index
    %258 = vector.load %arg18[%257, %c0_128] : memref<64x128xf32, #tpu.memory_space<vmem>>, vector<8x128xf32>
    tpu.vector_store %arg18[%257, %c0_128], %254 {strides = array<i32>} : memref<64x128xf32, #tpu.memory_space<vmem>>, vector<8x128xf32>,
    %c7_i32 = arith.constant 7 : i32
    %c8_i32_129 = arith.constant 8 : i32
    %259 = arith.muli %c7_i32, %c8_i32_129 : i32
    %260 = tpu.assume_multiple %259, 8 : i32
    %261 = arith.index_cast %260 : i32 to index
    %c0_130 = arith.constant 0 : index
    %262 = vector.load %arg19[%261, %c0_130] : memref<64x512xf32, #tpu.memory_space<vmem>>, vector<8x512xf32>
    %c0_131 = arith.constant 0 : index
    %c0_132 = arith.constant 0 : index
    %263 = vector.load %arg15[%c0_131, %c0_132] : memref<8x128xf32, #tpu.memory_space<vmem>>, vector<8x128xf32>
    %264 = arith.truncf %263 : vector<8x128xf32> to vector<8x128xbf16>
    %c0_133 = arith.constant 0 : index
    %c0_134 = arith.constant 0 : index
    %265 = vector.load %arg4[%c0_133, %c0_134] : memref<128x512xbf16, #tpu.memory_space<vmem>>, vector<128x512xbf16>
    %cst_135 = arith.constant dense<0.000000e+00> : vector<8x512xf32>
    %266 = tpu.matmul %264, %265, %cst_135 {dimension_numbers = #tpu.dot_dimension_numbers<[1], [0], [0], [1], [0, 0, 1, 1], [], []>} : vector<8x128xbf16>, vector<128x512xbf16>, vector<8x512xf32> -> vector<8x512xf32>
    %267 = arith.addf %262, %266 : vector<8x512xf32>
    %268 = vector.extract_strided_slice %267 {offsets = [0, 0], sizes = [8, 256], strides = [1, 1]} : vector<8x512xf32> to vector<8x256xf32>
    %269 = arith.negf %268 : vector<8x256xf32>
    %270 = math.exp %269 : vector<8x256xf32>
    %cst_136 = arith.constant 1.000000e+00 : f32
    %271 = vector.broadcast %cst_136 : f32 to vector<8x256xf32>
    %272 = arith.addf %271, %270 : vector<8x256xf32>
    %273 = arith.divf %271, %272 : vector<8x256xf32>
    %274 = vector.extract_strided_slice %273 {offsets = [0, 0], sizes = [8, 128], strides = [1, 1]} : vector<8x256xf32> to vector<8x128xf32>
    %275 = vector.extract_strided_slice %273 {offsets = [0, 128], sizes = [8, 128], strides = [1, 1]} : vector<8x256xf32> to vector<8x128xf32>
    %276 = vector.extract_strided_slice %267 {offsets = [0, 256], sizes = [8, 128], strides = [1, 1]} : vector<8x512xf32> to vector<8x128xf32>
    %277 = math.tanh %276 : vector<8x128xf32>
    %278 = vector.extract_strided_slice %267 {offsets = [0, 384], sizes = [8, 128], strides = [1, 1]} : vector<8x512xf32> to vector<8x128xf32>
    %279 = arith.negf %278 : vector<8x128xf32>
    %280 = math.exp %279 : vector<8x128xf32>
    %cst_137 = arith.constant 1.000000e+00 : f32
    %281 = vector.broadcast %cst_137 : f32 to vector<8x128xf32>
    %282 = arith.addf %281, %280 : vector<8x128xf32>
    %283 = arith.divf %281, %282 : vector<8x128xf32>
    %c0_138 = arith.constant 0 : index
    %c0_139 = arith.constant 0 : index
    %284 = vector.load %arg16[%c0_138, %c0_139] : memref<8x128xf32, #tpu.memory_space<vmem>>, vector<8x128xf32>
    %285 = arith.mulf %275, %284 : vector<8x128xf32>
    %286 = arith.mulf %274, %277 : vector<8x128xf32>
    %287 = arith.addf %285, %286 : vector<8x128xf32>
    %288 = math.tanh %287 : vector<8x128xf32>
    %289 = arith.mulf %283, %288 : vector<8x128xf32>
    %c0_140 = arith.constant 0 : index
    %c0_141 = arith.constant 0 : index
    %290 = vector.load %arg16[%c0_140, %c0_141] : memref<8x128xf32, #tpu.memory_space<vmem>>, vector<8x128xf32>
    tpu.vector_store %arg16[%c0_140, %c0_141], %287 {strides = array<i32>} : memref<8x128xf32, #tpu.memory_space<vmem>>, vector<8x128xf32>,
    %c0_142 = arith.constant 0 : index
    %c0_143 = arith.constant 0 : index
    %291 = vector.load %arg15[%c0_142, %c0_143] : memref<8x128xf32, #tpu.memory_space<vmem>>, vector<8x128xf32>
    tpu.vector_store %arg15[%c0_142, %c0_143], %289 {strides = array<i32>} : memref<8x128xf32, #tpu.memory_space<vmem>>, vector<8x128xf32>,
    %292 = arith.index_cast %260 : i32 to index
    %c0_144 = arith.constant 0 : index
    %293 = vector.load %arg18[%292, %c0_144] : memref<64x128xf32, #tpu.memory_space<vmem>>, vector<8x128xf32>
    tpu.vector_store %arg18[%292, %c0_144], %289 {strides = array<i32>} : memref<64x128xf32, #tpu.memory_space<vmem>>, vector<8x128xf32>,
    %c8_i32_145 = arith.constant 8 : i32
    %c0_146 = arith.constant 0 : index
    %c0_147 = arith.constant 0 : index
    %294 = vector.load %arg18[%c0_146, %c0_147] : memref<64x128xf32, #tpu.memory_space<vmem>>, vector<64x128xf32>
    %295 = arith.truncf %294 : vector<64x128xf32> to vector<64x128xbf16>
    %c0_148 = arith.constant 0 : index
    %c0_149 = arith.constant 0 : index
    %296 = vector.load %arg6[%c0_148, %c0_149] : memref<128x512xbf16, #tpu.memory_space<vmem>>, vector<128x512xbf16>
    %cst_150 = arith.constant dense<0.000000e+00> : vector<64x512xf32>
    %297 = tpu.matmul %295, %296, %cst_150 {dimension_numbers = #tpu.dot_dimension_numbers<[1], [0], [0], [1], [0, 0, 1, 1], [], []>} : vector<64x128xbf16>, vector<128x512xbf16>, vector<64x512xf32> -> vector<64x512xf32>
    %c0_151 = arith.constant 0 : index
    %c0_152 = arith.constant 0 : index
    %298 = vector.load %arg8[%c0_151, %c0_152] : memref<1x512xf32, #tpu.memory_space<vmem>>, vector<1x512xf32>
    %299 = vector.broadcast %298 : vector<1x512xf32> to vector<64x512xf32>
    %300 = arith.addf %297, %299 : vector<64x512xf32>
    %c0_153 = arith.constant 0 : index
    %c0_154 = arith.constant 0 : index
    %301 = vector.load %arg19[%c0_153, %c0_154] : memref<64x512xf32, #tpu.memory_space<vmem>>, vector<64x512xf32>
    tpu.vector_store %arg19[%c0_153, %c0_154], %300 {strides = array<i32>} : memref<64x512xf32, #tpu.memory_space<vmem>>, vector<64x512xf32>,
    %cst_155 = arith.constant 0.000000e+00 : f32
    %302 = vector.broadcast %cst_155 : f32 to vector<8x128xf32>
    %c0_156 = arith.constant 0 : index
    %c0_157 = arith.constant 0 : index
    %303 = vector.load %arg15[%c0_156, %c0_157] : memref<8x128xf32, #tpu.memory_space<vmem>>, vector<8x128xf32>
    tpu.vector_store %arg15[%c0_156, %c0_157], %302 {strides = array<i32>} : memref<8x128xf32, #tpu.memory_space<vmem>>, vector<8x128xf32>,
    %cst_158 = arith.constant 0.000000e+00 : f32
    %304 = vector.broadcast %cst_158 : f32 to vector<8x128xf32>
    %c0_159 = arith.constant 0 : index
    %c0_160 = arith.constant 0 : index
    %305 = vector.load %arg16[%c0_159, %c0_160] : memref<8x128xf32, #tpu.memory_space<vmem>>, vector<8x128xf32>
    tpu.vector_store %arg16[%c0_159, %c0_160], %304 {strides = array<i32>} : memref<8x128xf32, #tpu.memory_space<vmem>>, vector<8x128xf32>,
    %c0_i32_161 = arith.constant 0 : i32
    %c8_i32_162 = arith.constant 8 : i32
    %306 = arith.muli %c0_i32_161, %c8_i32_162 : i32
    %307 = tpu.assume_multiple %306, 8 : i32
    %308 = arith.index_cast %307 : i32 to index
    %c0_163 = arith.constant 0 : index
    %309 = vector.load %arg19[%308, %c0_163] : memref<64x512xf32, #tpu.memory_space<vmem>>, vector<8x512xf32>
    %c0_164 = arith.constant 0 : index
    %c0_165 = arith.constant 0 : index
    %310 = vector.load %arg15[%c0_164, %c0_165] : memref<8x128xf32, #tpu.memory_space<vmem>>, vector<8x128xf32>
    %311 = arith.truncf %310 : vector<8x128xf32> to vector<8x128xbf16>
    %c0_166 = arith.constant 0 : index
    %c0_167 = arith.constant 0 : index
    %312 = vector.load %arg7[%c0_166, %c0_167] : memref<128x512xbf16, #tpu.memory_space<vmem>>, vector<128x512xbf16>
    %cst_168 = arith.constant dense<0.000000e+00> : vector<8x512xf32>
    %313 = tpu.matmul %311, %312, %cst_168 {dimension_numbers = #tpu.dot_dimension_numbers<[1], [0], [0], [1], [0, 0, 1, 1], [], []>} : vector<8x128xbf16>, vector<128x512xbf16>, vector<8x512xf32> -> vector<8x512xf32>
    %314 = arith.addf %309, %313 : vector<8x512xf32>
    %315 = vector.extract_strided_slice %314 {offsets = [0, 0], sizes = [8, 256], strides = [1, 1]} : vector<8x512xf32> to vector<8x256xf32>
    %316 = arith.negf %315 : vector<8x256xf32>
    %317 = math.exp %316 : vector<8x256xf32>
    %cst_169 = arith.constant 1.000000e+00 : f32
    %318 = vector.broadcast %cst_169 : f32 to vector<8x256xf32>
    %319 = arith.addf %318, %317 : vector<8x256xf32>
    %320 = arith.divf %318, %319 : vector<8x256xf32>
    %321 = vector.extract_strided_slice %320 {offsets = [0, 0], sizes = [8, 128], strides = [1, 1]} : vector<8x256xf32> to vector<8x128xf32>
    %322 = vector.extract_strided_slice %320 {offsets = [0, 128], sizes = [8, 128], strides = [1, 1]} : vector<8x256xf32> to vector<8x128xf32>
    %323 = vector.extract_strided_slice %314 {offsets = [0, 256], sizes = [8, 128], strides = [1, 1]} : vector<8x512xf32> to vector<8x128xf32>
    %324 = math.tanh %323 : vector<8x128xf32>
    %325 = vector.extract_strided_slice %314 {offsets = [0, 384], sizes = [8, 128], strides = [1, 1]} : vector<8x512xf32> to vector<8x128xf32>
    %326 = arith.negf %325 : vector<8x128xf32>
    %327 = math.exp %326 : vector<8x128xf32>
    %cst_170 = arith.constant 1.000000e+00 : f32
    %328 = vector.broadcast %cst_170 : f32 to vector<8x128xf32>
    %329 = arith.addf %328, %327 : vector<8x128xf32>
    %330 = arith.divf %328, %329 : vector<8x128xf32>
    %c0_171 = arith.constant 0 : index
    %c0_172 = arith.constant 0 : index
    %331 = vector.load %arg16[%c0_171, %c0_172] : memref<8x128xf32, #tpu.memory_space<vmem>>, vector<8x128xf32>
    %332 = arith.mulf %322, %331 : vector<8x128xf32>
    %333 = arith.mulf %321, %324 : vector<8x128xf32>
    %334 = arith.addf %332, %333 : vector<8x128xf32>
    %335 = math.tanh %334 : vector<8x128xf32>
    %336 = arith.mulf %330, %335 : vector<8x128xf32>
    %c0_173 = arith.constant 0 : index
    %c0_174 = arith.constant 0 : index
    %337 = vector.load %arg16[%c0_173, %c0_174] : memref<8x128xf32, #tpu.memory_space<vmem>>, vector<8x128xf32>
    tpu.vector_store %arg16[%c0_173, %c0_174], %334 {strides = array<i32>} : memref<8x128xf32, #tpu.memory_space<vmem>>, vector<8x128xf32>,
    %c0_175 = arith.constant 0 : index
    %c0_176 = arith.constant 0 : index
    %338 = vector.load %arg15[%c0_175, %c0_176] : memref<8x128xf32, #tpu.memory_space<vmem>>, vector<8x128xf32>
    tpu.vector_store %arg15[%c0_175, %c0_176], %336 {strides = array<i32>} : memref<8x128xf32, #tpu.memory_space<vmem>>, vector<8x128xf32>,
    %339 = arith.index_cast %307 : i32 to index
    %c0_177 = arith.constant 0 : index
    %340 = vector.load %arg18[%339, %c0_177] : memref<64x128xf32, #tpu.memory_space<vmem>>, vector<8x128xf32>
    tpu.vector_store %arg18[%339, %c0_177], %336 {strides = array<i32>} : memref<64x128xf32, #tpu.memory_space<vmem>>, vector<8x128xf32>,
    %c1_i32_178 = arith.constant 1 : i32
    %c8_i32_179 = arith.constant 8 : i32
    %341 = arith.muli %c1_i32_178, %c8_i32_179 : i32
    %342 = tpu.assume_multiple %341, 8 : i32
    %343 = arith.index_cast %342 : i32 to index
    %c0_180 = arith.constant 0 : index
    %344 = vector.load %arg19[%343, %c0_180] : memref<64x512xf32, #tpu.memory_space<vmem>>, vector<8x512xf32>
    %c0_181 = arith.constant 0 : index
    %c0_182 = arith.constant 0 : index
    %345 = vector.load %arg15[%c0_181, %c0_182] : memref<8x128xf32, #tpu.memory_space<vmem>>, vector<8x128xf32>
    %346 = arith.truncf %345 : vector<8x128xf32> to vector<8x128xbf16>
    %c0_183 = arith.constant 0 : index
    %c0_184 = arith.constant 0 : index
    %347 = vector.load %arg7[%c0_183, %c0_184] : memref<128x512xbf16, #tpu.memory_space<vmem>>, vector<128x512xbf16>
    %cst_185 = arith.constant dense<0.000000e+00> : vector<8x512xf32>
    %348 = tpu.matmul %346, %347, %cst_185 {dimension_numbers = #tpu.dot_dimension_numbers<[1], [0], [0], [1], [0, 0, 1, 1], [], []>} : vector<8x128xbf16>, vector<128x512xbf16>, vector<8x512xf32> -> vector<8x512xf32>
    %349 = arith.addf %344, %348 : vector<8x512xf32>
    %350 = vector.extract_strided_slice %349 {offsets = [0, 0], sizes = [8, 256], strides = [1, 1]} : vector<8x512xf32> to vector<8x256xf32>
    %351 = arith.negf %350 : vector<8x256xf32>
    %352 = math.exp %351 : vector<8x256xf32>
    %cst_186 = arith.constant 1.000000e+00 : f32
    %353 = vector.broadcast %cst_186 : f32 to vector<8x256xf32>
    %354 = arith.addf %353, %352 : vector<8x256xf32>
    %355 = arith.divf %353, %354 : vector<8x256xf32>
    %356 = vector.extract_strided_slice %355 {offsets = [0, 0], sizes = [8, 128], strides = [1, 1]} : vector<8x256xf32> to vector<8x128xf32>
    %357 = vector.extract_strided_slice %355 {offsets = [0, 128], sizes = [8, 128], strides = [1, 1]} : vector<8x256xf32> to vector<8x128xf32>
    %358 = vector.extract_strided_slice %349 {offsets = [0, 256], sizes = [8, 128], strides = [1, 1]} : vector<8x512xf32> to vector<8x128xf32>
    %359 = math.tanh %358 : vector<8x128xf32>
    %360 = vector.extract_strided_slice %349 {offsets = [0, 384], sizes = [8, 128], strides = [1, 1]} : vector<8x512xf32> to vector<8x128xf32>
    %361 = arith.negf %360 : vector<8x128xf32>
    %362 = math.exp %361 : vector<8x128xf32>
    %cst_187 = arith.constant 1.000000e+00 : f32
    %363 = vector.broadcast %cst_187 : f32 to vector<8x128xf32>
    %364 = arith.addf %363, %362 : vector<8x128xf32>
    %365 = arith.divf %363, %364 : vector<8x128xf32>
    %c0_188 = arith.constant 0 : index
    %c0_189 = arith.constant 0 : index
    %366 = vector.load %arg16[%c0_188, %c0_189] : memref<8x128xf32, #tpu.memory_space<vmem>>, vector<8x128xf32>
    %367 = arith.mulf %357, %366 : vector<8x128xf32>
    %368 = arith.mulf %356, %359 : vector<8x128xf32>
    %369 = arith.addf %367, %368 : vector<8x128xf32>
    %370 = math.tanh %369 : vector<8x128xf32>
    %371 = arith.mulf %365, %370 : vector<8x128xf32>
    %c0_190 = arith.constant 0 : index
    %c0_191 = arith.constant 0 : index
    %372 = vector.load %arg16[%c0_190, %c0_191] : memref<8x128xf32, #tpu.memory_space<vmem>>, vector<8x128xf32>
    tpu.vector_store %arg16[%c0_190, %c0_191], %369 {strides = array<i32>} : memref<8x128xf32, #tpu.memory_space<vmem>>, vector<8x128xf32>,
    %c0_192 = arith.constant 0 : index
    %c0_193 = arith.constant 0 : index
    %373 = vector.load %arg15[%c0_192, %c0_193] : memref<8x128xf32, #tpu.memory_space<vmem>>, vector<8x128xf32>
    tpu.vector_store %arg15[%c0_192, %c0_193], %371 {strides = array<i32>} : memref<8x128xf32, #tpu.memory_space<vmem>>, vector<8x128xf32>,
    %374 = arith.index_cast %342 : i32 to index
    %c0_194 = arith.constant 0 : index
    %375 = vector.load %arg18[%374, %c0_194] : memref<64x128xf32, #tpu.memory_space<vmem>>, vector<8x128xf32>
    tpu.vector_store %arg18[%374, %c0_194], %371 {strides = array<i32>} : memref<64x128xf32, #tpu.memory_space<vmem>>, vector<8x128xf32>,
    %c2_i32_195 = arith.constant 2 : i32
    %c8_i32_196 = arith.constant 8 : i32
    %376 = arith.muli %c2_i32_195, %c8_i32_196 : i32
    %377 = tpu.assume_multiple %376, 8 : i32
    %378 = arith.index_cast %377 : i32 to index
    %c0_197 = arith.constant 0 : index
    %379 = vector.load %arg19[%378, %c0_197] : memref<64x512xf32, #tpu.memory_space<vmem>>, vector<8x512xf32>
    %c0_198 = arith.constant 0 : index
    %c0_199 = arith.constant 0 : index
    %380 = vector.load %arg15[%c0_198, %c0_199] : memref<8x128xf32, #tpu.memory_space<vmem>>, vector<8x128xf32>
    %381 = arith.truncf %380 : vector<8x128xf32> to vector<8x128xbf16>
    %c0_200 = arith.constant 0 : index
    %c0_201 = arith.constant 0 : index
    %382 = vector.load %arg7[%c0_200, %c0_201] : memref<128x512xbf16, #tpu.memory_space<vmem>>, vector<128x512xbf16>
    %cst_202 = arith.constant dense<0.000000e+00> : vector<8x512xf32>
    %383 = tpu.matmul %381, %382, %cst_202 {dimension_numbers = #tpu.dot_dimension_numbers<[1], [0], [0], [1], [0, 0, 1, 1], [], []>} : vector<8x128xbf16>, vector<128x512xbf16>, vector<8x512xf32> -> vector<8x512xf32>
    %384 = arith.addf %379, %383 : vector<8x512xf32>
    %385 = vector.extract_strided_slice %384 {offsets = [0, 0], sizes = [8, 256], strides = [1, 1]} : vector<8x512xf32> to vector<8x256xf32>
    %386 = arith.negf %385 : vector<8x256xf32>
    %387 = math.exp %386 : vector<8x256xf32>
    %cst_203 = arith.constant 1.000000e+00 : f32
    %388 = vector.broadcast %cst_203 : f32 to vector<8x256xf32>
    %389 = arith.addf %388, %387 : vector<8x256xf32>
    %390 = arith.divf %388, %389 : vector<8x256xf32>
    %391 = vector.extract_strided_slice %390 {offsets = [0, 0], sizes = [8, 128], strides = [1, 1]} : vector<8x256xf32> to vector<8x128xf32>
    %392 = vector.extract_strided_slice %390 {offsets = [0, 128], sizes = [8, 128], strides = [1, 1]} : vector<8x256xf32> to vector<8x128xf32>
    %393 = vector.extract_strided_slice %384 {offsets = [0, 256], sizes = [8, 128], strides = [1, 1]} : vector<8x512xf32> to vector<8x128xf32>
    %394 = math.tanh %393 : vector<8x128xf32>
    %395 = vector.extract_strided_slice %384 {offsets = [0, 384], sizes = [8, 128], strides = [1, 1]} : vector<8x512xf32> to vector<8x128xf32>
    %396 = arith.negf %395 : vector<8x128xf32>
    %397 = math.exp %396 : vector<8x128xf32>
    %cst_204 = arith.constant 1.000000e+00 : f32
    %398 = vector.broadcast %cst_204 : f32 to vector<8x128xf32>
    %399 = arith.addf %398, %397 : vector<8x128xf32>
    %400 = arith.divf %398, %399 : vector<8x128xf32>
    %c0_205 = arith.constant 0 : index
    %c0_206 = arith.constant 0 : index
    %401 = vector.load %arg16[%c0_205, %c0_206] : memref<8x128xf32, #tpu.memory_space<vmem>>, vector<8x128xf32>
    %402 = arith.mulf %392, %401 : vector<8x128xf32>
    %403 = arith.mulf %391, %394 : vector<8x128xf32>
    %404 = arith.addf %402, %403 : vector<8x128xf32>
    %405 = math.tanh %404 : vector<8x128xf32>
    %406 = arith.mulf %400, %405 : vector<8x128xf32>
    %c0_207 = arith.constant 0 : index
    %c0_208 = arith.constant 0 : index
    %407 = vector.load %arg16[%c0_207, %c0_208] : memref<8x128xf32, #tpu.memory_space<vmem>>, vector<8x128xf32>
    tpu.vector_store %arg16[%c0_207, %c0_208], %404 {strides = array<i32>} : memref<8x128xf32, #tpu.memory_space<vmem>>, vector<8x128xf32>,
    %c0_209 = arith.constant 0 : index
    %c0_210 = arith.constant 0 : index
    %408 = vector.load %arg15[%c0_209, %c0_210] : memref<8x128xf32, #tpu.memory_space<vmem>>, vector<8x128xf32>
    tpu.vector_store %arg15[%c0_209, %c0_210], %406 {strides = array<i32>} : memref<8x128xf32, #tpu.memory_space<vmem>>, vector<8x128xf32>,
    %409 = arith.index_cast %377 : i32 to index
    %c0_211 = arith.constant 0 : index
    %410 = vector.load %arg18[%409, %c0_211] : memref<64x128xf32, #tpu.memory_space<vmem>>, vector<8x128xf32>
    tpu.vector_store %arg18[%409, %c0_211], %406 {strides = array<i32>} : memref<64x128xf32, #tpu.memory_space<vmem>>, vector<8x128xf32>,
    %c3_i32_212 = arith.constant 3 : i32
    %c8_i32_213 = arith.constant 8 : i32
    %411 = arith.muli %c3_i32_212, %c8_i32_213 : i32
    %412 = tpu.assume_multiple %411, 8 : i32
    %413 = arith.index_cast %412 : i32 to index
    %c0_214 = arith.constant 0 : index
    %414 = vector.load %arg19[%413, %c0_214] : memref<64x512xf32, #tpu.memory_space<vmem>>, vector<8x512xf32>
    %c0_215 = arith.constant 0 : index
    %c0_216 = arith.constant 0 : index
    %415 = vector.load %arg15[%c0_215, %c0_216] : memref<8x128xf32, #tpu.memory_space<vmem>>, vector<8x128xf32>
    %416 = arith.truncf %415 : vector<8x128xf32> to vector<8x128xbf16>
    %c0_217 = arith.constant 0 : index
    %c0_218 = arith.constant 0 : index
    %417 = vector.load %arg7[%c0_217, %c0_218] : memref<128x512xbf16, #tpu.memory_space<vmem>>, vector<128x512xbf16>
    %cst_219 = arith.constant dense<0.000000e+00> : vector<8x512xf32>
    %418 = tpu.matmul %416, %417, %cst_219 {dimension_numbers = #tpu.dot_dimension_numbers<[1], [0], [0], [1], [0, 0, 1, 1], [], []>} : vector<8x128xbf16>, vector<128x512xbf16>, vector<8x512xf32> -> vector<8x512xf32>
    %419 = arith.addf %414, %418 : vector<8x512xf32>
    %420 = vector.extract_strided_slice %419 {offsets = [0, 0], sizes = [8, 256], strides = [1, 1]} : vector<8x512xf32> to vector<8x256xf32>
    %421 = arith.negf %420 : vector<8x256xf32>
    %422 = math.exp %421 : vector<8x256xf32>
    %cst_220 = arith.constant 1.000000e+00 : f32
    %423 = vector.broadcast %cst_220 : f32 to vector<8x256xf32>
    %424 = arith.addf %423, %422 : vector<8x256xf32>
    %425 = arith.divf %423, %424 : vector<8x256xf32>
    %426 = vector.extract_strided_slice %425 {offsets = [0, 0], sizes = [8, 128], strides = [1, 1]} : vector<8x256xf32> to vector<8x128xf32>
    %427 = vector.extract_strided_slice %425 {offsets = [0, 128], sizes = [8, 128], strides = [1, 1]} : vector<8x256xf32> to vector<8x128xf32>
    %428 = vector.extract_strided_slice %419 {offsets = [0, 256], sizes = [8, 128], strides = [1, 1]} : vector<8x512xf32> to vector<8x128xf32>
    %429 = math.tanh %428 : vector<8x128xf32>
    %430 = vector.extract_strided_slice %419 {offsets = [0, 384], sizes = [8, 128], strides = [1, 1]} : vector<8x512xf32> to vector<8x128xf32>
    %431 = arith.negf %430 : vector<8x128xf32>
    %432 = math.exp %431 : vector<8x128xf32>
    %cst_221 = arith.constant 1.000000e+00 : f32
    %433 = vector.broadcast %cst_221 : f32 to vector<8x128xf32>
    %434 = arith.addf %433, %432 : vector<8x128xf32>
    %435 = arith.divf %433, %434 : vector<8x128xf32>
    %c0_222 = arith.constant 0 : index
    %c0_223 = arith.constant 0 : index
    %436 = vector.load %arg16[%c0_222, %c0_223] : memref<8x128xf32, #tpu.memory_space<vmem>>, vector<8x128xf32>
    %437 = arith.mulf %427, %436 : vector<8x128xf32>
    %438 = arith.mulf %426, %429 : vector<8x128xf32>
    %439 = arith.addf %437, %438 : vector<8x128xf32>
    %440 = math.tanh %439 : vector<8x128xf32>
    %441 = arith.mulf %435, %440 : vector<8x128xf32>
    %c0_224 = arith.constant 0 : index
    %c0_225 = arith.constant 0 : index
    %442 = vector.load %arg16[%c0_224, %c0_225] : memref<8x128xf32, #tpu.memory_space<vmem>>, vector<8x128xf32>
    tpu.vector_store %arg16[%c0_224, %c0_225], %439 {strides = array<i32>} : memref<8x128xf32, #tpu.memory_space<vmem>>, vector<8x128xf32>,
    %c0_226 = arith.constant 0 : index
    %c0_227 = arith.constant 0 : index
    %443 = vector.load %arg15[%c0_226, %c0_227] : memref<8x128xf32, #tpu.memory_space<vmem>>, vector<8x128xf32>
    tpu.vector_store %arg15[%c0_226, %c0_227], %441 {strides = array<i32>} : memref<8x128xf32, #tpu.memory_space<vmem>>, vector<8x128xf32>,
    %444 = arith.index_cast %412 : i32 to index
    %c0_228 = arith.constant 0 : index
    %445 = vector.load %arg18[%444, %c0_228] : memref<64x128xf32, #tpu.memory_space<vmem>>, vector<8x128xf32>
    tpu.vector_store %arg18[%444, %c0_228], %441 {strides = array<i32>} : memref<64x128xf32, #tpu.memory_space<vmem>>, vector<8x128xf32>,
    %c4_i32_229 = arith.constant 4 : i32
    %c8_i32_230 = arith.constant 8 : i32
    %446 = arith.muli %c4_i32_229, %c8_i32_230 : i32
    %447 = tpu.assume_multiple %446, 8 : i32
    %448 = arith.index_cast %447 : i32 to index
    %c0_231 = arith.constant 0 : index
    %449 = vector.load %arg19[%448, %c0_231] : memref<64x512xf32, #tpu.memory_space<vmem>>, vector<8x512xf32>
    %c0_232 = arith.constant 0 : index
    %c0_233 = arith.constant 0 : index
    %450 = vector.load %arg15[%c0_232, %c0_233] : memref<8x128xf32, #tpu.memory_space<vmem>>, vector<8x128xf32>
    %451 = arith.truncf %450 : vector<8x128xf32> to vector<8x128xbf16>
    %c0_234 = arith.constant 0 : index
    %c0_235 = arith.constant 0 : index
    %452 = vector.load %arg7[%c0_234, %c0_235] : memref<128x512xbf16, #tpu.memory_space<vmem>>, vector<128x512xbf16>
    %cst_236 = arith.constant dense<0.000000e+00> : vector<8x512xf32>
    %453 = tpu.matmul %451, %452, %cst_236 {dimension_numbers = #tpu.dot_dimension_numbers<[1], [0], [0], [1], [0, 0, 1, 1], [], []>} : vector<8x128xbf16>, vector<128x512xbf16>, vector<8x512xf32> -> vector<8x512xf32>
    %454 = arith.addf %449, %453 : vector<8x512xf32>
    %455 = vector.extract_strided_slice %454 {offsets = [0, 0], sizes = [8, 256], strides = [1, 1]} : vector<8x512xf32> to vector<8x256xf32>
    %456 = arith.negf %455 : vector<8x256xf32>
    %457 = math.exp %456 : vector<8x256xf32>
    %cst_237 = arith.constant 1.000000e+00 : f32
    %458 = vector.broadcast %cst_237 : f32 to vector<8x256xf32>
    %459 = arith.addf %458, %457 : vector<8x256xf32>
    %460 = arith.divf %458, %459 : vector<8x256xf32>
    %461 = vector.extract_strided_slice %460 {offsets = [0, 0], sizes = [8, 128], strides = [1, 1]} : vector<8x256xf32> to vector<8x128xf32>
    %462 = vector.extract_strided_slice %460 {offsets = [0, 128], sizes = [8, 128], strides = [1, 1]} : vector<8x256xf32> to vector<8x128xf32>
    %463 = vector.extract_strided_slice %454 {offsets = [0, 256], sizes = [8, 128], strides = [1, 1]} : vector<8x512xf32> to vector<8x128xf32>
    %464 = math.tanh %463 : vector<8x128xf32>
    %465 = vector.extract_strided_slice %454 {offsets = [0, 384], sizes = [8, 128], strides = [1, 1]} : vector<8x512xf32> to vector<8x128xf32>
    %466 = arith.negf %465 : vector<8x128xf32>
    %467 = math.exp %466 : vector<8x128xf32>
    %cst_238 = arith.constant 1.000000e+00 : f32
    %468 = vector.broadcast %cst_238 : f32 to vector<8x128xf32>
    %469 = arith.addf %468, %467 : vector<8x128xf32>
    %470 = arith.divf %468, %469 : vector<8x128xf32>
    %c0_239 = arith.constant 0 : index
    %c0_240 = arith.constant 0 : index
    %471 = vector.load %arg16[%c0_239, %c0_240] : memref<8x128xf32, #tpu.memory_space<vmem>>, vector<8x128xf32>
    %472 = arith.mulf %462, %471 : vector<8x128xf32>
    %473 = arith.mulf %461, %464 : vector<8x128xf32>
    %474 = arith.addf %472, %473 : vector<8x128xf32>
    %475 = math.tanh %474 : vector<8x128xf32>
    %476 = arith.mulf %470, %475 : vector<8x128xf32>
    %c0_241 = arith.constant 0 : index
    %c0_242 = arith.constant 0 : index
    %477 = vector.load %arg16[%c0_241, %c0_242] : memref<8x128xf32, #tpu.memory_space<vmem>>, vector<8x128xf32>
    tpu.vector_store %arg16[%c0_241, %c0_242], %474 {strides = array<i32>} : memref<8x128xf32, #tpu.memory_space<vmem>>, vector<8x128xf32>,
    %c0_243 = arith.constant 0 : index
    %c0_244 = arith.constant 0 : index
    %478 = vector.load %arg15[%c0_243, %c0_244] : memref<8x128xf32, #tpu.memory_space<vmem>>, vector<8x128xf32>
    tpu.vector_store %arg15[%c0_243, %c0_244], %476 {strides = array<i32>} : memref<8x128xf32, #tpu.memory_space<vmem>>, vector<8x128xf32>,
    %479 = arith.index_cast %447 : i32 to index
    %c0_245 = arith.constant 0 : index
    %480 = vector.load %arg18[%479, %c0_245] : memref<64x128xf32, #tpu.memory_space<vmem>>, vector<8x128xf32>
    tpu.vector_store %arg18[%479, %c0_245], %476 {strides = array<i32>} : memref<64x128xf32, #tpu.memory_space<vmem>>, vector<8x128xf32>,
    %c5_i32_246 = arith.constant 5 : i32
    %c8_i32_247 = arith.constant 8 : i32
    %481 = arith.muli %c5_i32_246, %c8_i32_247 : i32
    %482 = tpu.assume_multiple %481, 8 : i32
    %483 = arith.index_cast %482 : i32 to index
    %c0_248 = arith.constant 0 : index
    %484 = vector.load %arg19[%483, %c0_248] : memref<64x512xf32, #tpu.memory_space<vmem>>, vector<8x512xf32>
    %c0_249 = arith.constant 0 : index
    %c0_250 = arith.constant 0 : index
    %485 = vector.load %arg15[%c0_249, %c0_250] : memref<8x128xf32, #tpu.memory_space<vmem>>, vector<8x128xf32>
    %486 = arith.truncf %485 : vector<8x128xf32> to vector<8x128xbf16>
    %c0_251 = arith.constant 0 : index
    %c0_252 = arith.constant 0 : index
    %487 = vector.load %arg7[%c0_251, %c0_252] : memref<128x512xbf16, #tpu.memory_space<vmem>>, vector<128x512xbf16>
    %cst_253 = arith.constant dense<0.000000e+00> : vector<8x512xf32>
    %488 = tpu.matmul %486, %487, %cst_253 {dimension_numbers = #tpu.dot_dimension_numbers<[1], [0], [0], [1], [0, 0, 1, 1], [], []>} : vector<8x128xbf16>, vector<128x512xbf16>, vector<8x512xf32> -> vector<8x512xf32>
    %489 = arith.addf %484, %488 : vector<8x512xf32>
    %490 = vector.extract_strided_slice %489 {offsets = [0, 0], sizes = [8, 256], strides = [1, 1]} : vector<8x512xf32> to vector<8x256xf32>
    %491 = arith.negf %490 : vector<8x256xf32>
    %492 = math.exp %491 : vector<8x256xf32>
    %cst_254 = arith.constant 1.000000e+00 : f32
    %493 = vector.broadcast %cst_254 : f32 to vector<8x256xf32>
    %494 = arith.addf %493, %492 : vector<8x256xf32>
    %495 = arith.divf %493, %494 : vector<8x256xf32>
    %496 = vector.extract_strided_slice %495 {offsets = [0, 0], sizes = [8, 128], strides = [1, 1]} : vector<8x256xf32> to vector<8x128xf32>
    %497 = vector.extract_strided_slice %495 {offsets = [0, 128], sizes = [8, 128], strides = [1, 1]} : vector<8x256xf32> to vector<8x128xf32>
    %498 = vector.extract_strided_slice %489 {offsets = [0, 256], sizes = [8, 128], strides = [1, 1]} : vector<8x512xf32> to vector<8x128xf32>
    %499 = math.tanh %498 : vector<8x128xf32>
    %500 = vector.extract_strided_slice %489 {offsets = [0, 384], sizes = [8, 128], strides = [1, 1]} : vector<8x512xf32> to vector<8x128xf32>
    %501 = arith.negf %500 : vector<8x128xf32>
    %502 = math.exp %501 : vector<8x128xf32>
    %cst_255 = arith.constant 1.000000e+00 : f32
    %503 = vector.broadcast %cst_255 : f32 to vector<8x128xf32>
    %504 = arith.addf %503, %502 : vector<8x128xf32>
    %505 = arith.divf %503, %504 : vector<8x128xf32>
    %c0_256 = arith.constant 0 : index
    %c0_257 = arith.constant 0 : index
    %506 = vector.load %arg16[%c0_256, %c0_257] : memref<8x128xf32, #tpu.memory_space<vmem>>, vector<8x128xf32>
    %507 = arith.mulf %497, %506 : vector<8x128xf32>
    %508 = arith.mulf %496, %499 : vector<8x128xf32>
    %509 = arith.addf %507, %508 : vector<8x128xf32>
    %510 = math.tanh %509 : vector<8x128xf32>
    %511 = arith.mulf %505, %510 : vector<8x128xf32>
    %c0_258 = arith.constant 0 : index
    %c0_259 = arith.constant 0 : index
    %512 = vector.load %arg16[%c0_258, %c0_259] : memref<8x128xf32, #tpu.memory_space<vmem>>, vector<8x128xf32>
    tpu.vector_store %arg16[%c0_258, %c0_259], %509 {strides = array<i32>} : memref<8x128xf32, #tpu.memory_space<vmem>>, vector<8x128xf32>,
    %c0_260 = arith.constant 0 : index
    %c0_261 = arith.constant 0 : index
    %513 = vector.load %arg15[%c0_260, %c0_261] : memref<8x128xf32, #tpu.memory_space<vmem>>, vector<8x128xf32>
    tpu.vector_store %arg15[%c0_260, %c0_261], %511 {strides = array<i32>} : memref<8x128xf32, #tpu.memory_space<vmem>>, vector<8x128xf32>,
    %514 = arith.index_cast %482 : i32 to index
    %c0_262 = arith.constant 0 : index
    %515 = vector.load %arg18[%514, %c0_262] : memref<64x128xf32, #tpu.memory_space<vmem>>, vector<8x128xf32>
    tpu.vector_store %arg18[%514, %c0_262], %511 {strides = array<i32>} : memref<64x128xf32, #tpu.memory_space<vmem>>, vector<8x128xf32>,
    %c6_i32_263 = arith.constant 6 : i32
    %c8_i32_264 = arith.constant 8 : i32
    %516 = arith.muli %c6_i32_263, %c8_i32_264 : i32
    %517 = tpu.assume_multiple %516, 8 : i32
    %518 = arith.index_cast %517 : i32 to index
    %c0_265 = arith.constant 0 : index
    %519 = vector.load %arg19[%518, %c0_265] : memref<64x512xf32, #tpu.memory_space<vmem>>, vector<8x512xf32>
    %c0_266 = arith.constant 0 : index
    %c0_267 = arith.constant 0 : index
    %520 = vector.load %arg15[%c0_266, %c0_267] : memref<8x128xf32, #tpu.memory_space<vmem>>, vector<8x128xf32>
    %521 = arith.truncf %520 : vector<8x128xf32> to vector<8x128xbf16>
    %c0_268 = arith.constant 0 : index
    %c0_269 = arith.constant 0 : index
    %522 = vector.load %arg7[%c0_268, %c0_269] : memref<128x512xbf16, #tpu.memory_space<vmem>>, vector<128x512xbf16>
    %cst_270 = arith.constant dense<0.000000e+00> : vector<8x512xf32>
    %523 = tpu.matmul %521, %522, %cst_270 {dimension_numbers = #tpu.dot_dimension_numbers<[1], [0], [0], [1], [0, 0, 1, 1], [], []>} : vector<8x128xbf16>, vector<128x512xbf16>, vector<8x512xf32> -> vector<8x512xf32>
    %524 = arith.addf %519, %523 : vector<8x512xf32>
    %525 = vector.extract_strided_slice %524 {offsets = [0, 0], sizes = [8, 256], strides = [1, 1]} : vector<8x512xf32> to vector<8x256xf32>
    %526 = arith.negf %525 : vector<8x256xf32>
    %527 = math.exp %526 : vector<8x256xf32>
    %cst_271 = arith.constant 1.000000e+00 : f32
    %528 = vector.broadcast %cst_271 : f32 to vector<8x256xf32>
    %529 = arith.addf %528, %527 : vector<8x256xf32>
    %530 = arith.divf %528, %529 : vector<8x256xf32>
    %531 = vector.extract_strided_slice %530 {offsets = [0, 0], sizes = [8, 128], strides = [1, 1]} : vector<8x256xf32> to vector<8x128xf32>
    %532 = vector.extract_strided_slice %530 {offsets = [0, 128], sizes = [8, 128], strides = [1, 1]} : vector<8x256xf32> to vector<8x128xf32>
    %533 = vector.extract_strided_slice %524 {offsets = [0, 256], sizes = [8, 128], strides = [1, 1]} : vector<8x512xf32> to vector<8x128xf32>
    %534 = math.tanh %533 : vector<8x128xf32>
    %535 = vector.extract_strided_slice %524 {offsets = [0, 384], sizes = [8, 128], strides = [1, 1]} : vector<8x512xf32> to vector<8x128xf32>
    %536 = arith.negf %535 : vector<8x128xf32>
    %537 = math.exp %536 : vector<8x128xf32>
    %cst_272 = arith.constant 1.000000e+00 : f32
    %538 = vector.broadcast %cst_272 : f32 to vector<8x128xf32>
    %539 = arith.addf %538, %537 : vector<8x128xf32>
    %540 = arith.divf %538, %539 : vector<8x128xf32>
    %c0_273 = arith.constant 0 : index
    %c0_274 = arith.constant 0 : index
    %541 = vector.load %arg16[%c0_273, %c0_274] : memref<8x128xf32, #tpu.memory_space<vmem>>, vector<8x128xf32>
    %542 = arith.mulf %532, %541 : vector<8x128xf32>
    %543 = arith.mulf %531, %534 : vector<8x128xf32>
    %544 = arith.addf %542, %543 : vector<8x128xf32>
    %545 = math.tanh %544 : vector<8x128xf32>
    %546 = arith.mulf %540, %545 : vector<8x128xf32>
    %c0_275 = arith.constant 0 : index
    %c0_276 = arith.constant 0 : index
    %547 = vector.load %arg16[%c0_275, %c0_276] : memref<8x128xf32, #tpu.memory_space<vmem>>, vector<8x128xf32>
    tpu.vector_store %arg16[%c0_275, %c0_276], %544 {strides = array<i32>} : memref<8x128xf32, #tpu.memory_space<vmem>>, vector<8x128xf32>,
    %c0_277 = arith.constant 0 : index
    %c0_278 = arith.constant 0 : index
    %548 = vector.load %arg15[%c0_277, %c0_278] : memref<8x128xf32, #tpu.memory_space<vmem>>, vector<8x128xf32>
    tpu.vector_store %arg15[%c0_277, %c0_278], %546 {strides = array<i32>} : memref<8x128xf32, #tpu.memory_space<vmem>>, vector<8x128xf32>,
    %549 = arith.index_cast %517 : i32 to index
    %c0_279 = arith.constant 0 : index
    %550 = vector.load %arg18[%549, %c0_279] : memref<64x128xf32, #tpu.memory_space<vmem>>, vector<8x128xf32>
    tpu.vector_store %arg18[%549, %c0_279], %546 {strides = array<i32>} : memref<64x128xf32, #tpu.memory_space<vmem>>, vector<8x128xf32>,
    %c7_i32_280 = arith.constant 7 : i32
    %c8_i32_281 = arith.constant 8 : i32
    %551 = arith.muli %c7_i32_280, %c8_i32_281 : i32
    %552 = tpu.assume_multiple %551, 8 : i32
    %553 = arith.index_cast %552 : i32 to index
    %c0_282 = arith.constant 0 : index
    %554 = vector.load %arg19[%553, %c0_282] : memref<64x512xf32, #tpu.memory_space<vmem>>, vector<8x512xf32>
    %c0_283 = arith.constant 0 : index
    %c0_284 = arith.constant 0 : index
    %555 = vector.load %arg15[%c0_283, %c0_284] : memref<8x128xf32, #tpu.memory_space<vmem>>, vector<8x128xf32>
    %556 = arith.truncf %555 : vector<8x128xf32> to vector<8x128xbf16>
    %c0_285 = arith.constant 0 : index
    %c0_286 = arith.constant 0 : index
    %557 = vector.load %arg7[%c0_285, %c0_286] : memref<128x512xbf16, #tpu.memory_space<vmem>>, vector<128x512xbf16>
    %cst_287 = arith.constant dense<0.000000e+00> : vector<8x512xf32>
    %558 = tpu.matmul %556, %557, %cst_287 {dimension_numbers = #tpu.dot_dimension_numbers<[1], [0], [0], [1], [0, 0, 1, 1], [], []>} : vector<8x128xbf16>, vector<128x512xbf16>, vector<8x512xf32> -> vector<8x512xf32>
    %559 = arith.addf %554, %558 : vector<8x512xf32>
    %560 = vector.extract_strided_slice %559 {offsets = [0, 0], sizes = [8, 256], strides = [1, 1]} : vector<8x512xf32> to vector<8x256xf32>
    %561 = arith.negf %560 : vector<8x256xf32>
    %562 = math.exp %561 : vector<8x256xf32>
    %cst_288 = arith.constant 1.000000e+00 : f32
    %563 = vector.broadcast %cst_288 : f32 to vector<8x256xf32>
    %564 = arith.addf %563, %562 : vector<8x256xf32>
    %565 = arith.divf %563, %564 : vector<8x256xf32>
    %566 = vector.extract_strided_slice %565 {offsets = [0, 0], sizes = [8, 128], strides = [1, 1]} : vector<8x256xf32> to vector<8x128xf32>
    %567 = vector.extract_strided_slice %565 {offsets = [0, 128], sizes = [8, 128], strides = [1, 1]} : vector<8x256xf32> to vector<8x128xf32>
    %568 = vector.extract_strided_slice %559 {offsets = [0, 256], sizes = [8, 128], strides = [1, 1]} : vector<8x512xf32> to vector<8x128xf32>
    %569 = math.tanh %568 : vector<8x128xf32>
    %570 = vector.extract_strided_slice %559 {offsets = [0, 384], sizes = [8, 128], strides = [1, 1]} : vector<8x512xf32> to vector<8x128xf32>
    %571 = arith.negf %570 : vector<8x128xf32>
    %572 = math.exp %571 : vector<8x128xf32>
    %cst_289 = arith.constant 1.000000e+00 : f32
    %573 = vector.broadcast %cst_289 : f32 to vector<8x128xf32>
    %574 = arith.addf %573, %572 : vector<8x128xf32>
    %575 = arith.divf %573, %574 : vector<8x128xf32>
    %c0_290 = arith.constant 0 : index
    %c0_291 = arith.constant 0 : index
    %576 = vector.load %arg16[%c0_290, %c0_291] : memref<8x128xf32, #tpu.memory_space<vmem>>, vector<8x128xf32>
    %577 = arith.mulf %567, %576 : vector<8x128xf32>
    %578 = arith.mulf %566, %569 : vector<8x128xf32>
    %579 = arith.addf %577, %578 : vector<8x128xf32>
    %580 = math.tanh %579 : vector<8x128xf32>
    %581 = arith.mulf %575, %580 : vector<8x128xf32>
    %c0_292 = arith.constant 0 : index
    %c0_293 = arith.constant 0 : index
    %582 = vector.load %arg16[%c0_292, %c0_293] : memref<8x128xf32, #tpu.memory_space<vmem>>, vector<8x128xf32>
    tpu.vector_store %arg16[%c0_292, %c0_293], %579 {strides = array<i32>} : memref<8x128xf32, #tpu.memory_space<vmem>>, vector<8x128xf32>,
    %c0_294 = arith.constant 0 : index
    %c0_295 = arith.constant 0 : index
    %583 = vector.load %arg15[%c0_294, %c0_295] : memref<8x128xf32, #tpu.memory_space<vmem>>, vector<8x128xf32>
    tpu.vector_store %arg15[%c0_294, %c0_295], %581 {strides = array<i32>} : memref<8x128xf32, #tpu.memory_space<vmem>>, vector<8x128xf32>,
    %584 = arith.index_cast %552 : i32 to index
    %c0_296 = arith.constant 0 : index
    %585 = vector.load %arg18[%584, %c0_296] : memref<64x128xf32, #tpu.memory_space<vmem>>, vector<8x128xf32>
    tpu.vector_store %arg18[%584, %c0_296], %581 {strides = array<i32>} : memref<64x128xf32, #tpu.memory_space<vmem>>, vector<8x128xf32>,
    %c8_i32_297 = arith.constant 8 : i32
    %c0_298 = arith.constant 0 : index
    %c0_299 = arith.constant 0 : index
    %586 = vector.load %arg18[%c0_298, %c0_299] : memref<64x128xf32, #tpu.memory_space<vmem>>, vector<64x128xf32>
    %587 = arith.truncf %586 : vector<64x128xf32> to vector<64x128xbf16>
    %c0_300 = arith.constant 0 : index
    %c0_301 = arith.constant 0 : index
    %588 = vector.load %arg9[%c0_300, %c0_301] : memref<128x512xbf16, #tpu.memory_space<vmem>>, vector<128x512xbf16>
    %cst_302 = arith.constant dense<0.000000e+00> : vector<64x512xf32>
    %589 = tpu.matmul %587, %588, %cst_302 {dimension_numbers = #tpu.dot_dimension_numbers<[1], [0], [0], [1], [0, 0, 1, 1], [], []>} : vector<64x128xbf16>, vector<128x512xbf16>, vector<64x512xf32> -> vector<64x512xf32>
    %c0_303 = arith.constant 0 : index
    %c0_304 = arith.constant 0 : index
    %590 = vector.load %arg11[%c0_303, %c0_304] : memref<1x512xf32, #tpu.memory_space<vmem>>, vector<1x512xf32>
    %591 = vector.broadcast %590 : vector<1x512xf32> to vector<64x512xf32>
    %592 = arith.addf %589, %591 : vector<64x512xf32>
    %c0_305 = arith.constant 0 : index
    %c0_306 = arith.constant 0 : index
    %593 = vector.load %arg19[%c0_305, %c0_306] : memref<64x512xf32, #tpu.memory_space<vmem>>, vector<64x512xf32>
    tpu.vector_store %arg19[%c0_305, %c0_306], %592 {strides = array<i32>} : memref<64x512xf32, #tpu.memory_space<vmem>>, vector<64x512xf32>,
    %cst_307 = arith.constant 0.000000e+00 : f32
    %594 = vector.broadcast %cst_307 : f32 to vector<8x128xf32>
    %c0_308 = arith.constant 0 : index
    %c0_309 = arith.constant 0 : index
    %595 = vector.load %arg15[%c0_308, %c0_309] : memref<8x128xf32, #tpu.memory_space<vmem>>, vector<8x128xf32>
    tpu.vector_store %arg15[%c0_308, %c0_309], %594 {strides = array<i32>} : memref<8x128xf32, #tpu.memory_space<vmem>>, vector<8x128xf32>,
    %cst_310 = arith.constant 0.000000e+00 : f32
    %596 = vector.broadcast %cst_310 : f32 to vector<8x128xf32>
    %c0_311 = arith.constant 0 : index
    %c0_312 = arith.constant 0 : index
    %597 = vector.load %arg16[%c0_311, %c0_312] : memref<8x128xf32, #tpu.memory_space<vmem>>, vector<8x128xf32>
    tpu.vector_store %arg16[%c0_311, %c0_312], %596 {strides = array<i32>} : memref<8x128xf32, #tpu.memory_space<vmem>>, vector<8x128xf32>,
    %c0_i32_313 = arith.constant 0 : i32
    %c8_i32_314 = arith.constant 8 : i32
    %598 = arith.muli %c0_i32_313, %c8_i32_314 : i32
    %599 = tpu.assume_multiple %598, 8 : i32
    %600 = arith.index_cast %599 : i32 to index
    %c0_315 = arith.constant 0 : index
    %601 = vector.load %arg19[%600, %c0_315] : memref<64x512xf32, #tpu.memory_space<vmem>>, vector<8x512xf32>
    %c0_316 = arith.constant 0 : index
    %c0_317 = arith.constant 0 : index
    %602 = vector.load %arg15[%c0_316, %c0_317] : memref<8x128xf32, #tpu.memory_space<vmem>>, vector<8x128xf32>
    %603 = arith.truncf %602 : vector<8x128xf32> to vector<8x128xbf16>
    %c0_318 = arith.constant 0 : index
    %c0_319 = arith.constant 0 : index
    %604 = vector.load %arg10[%c0_318, %c0_319] : memref<128x512xbf16, #tpu.memory_space<vmem>>, vector<128x512xbf16>
    %cst_320 = arith.constant dense<0.000000e+00> : vector<8x512xf32>
    %605 = tpu.matmul %603, %604, %cst_320 {dimension_numbers = #tpu.dot_dimension_numbers<[1], [0], [0], [1], [0, 0, 1, 1], [], []>} : vector<8x128xbf16>, vector<128x512xbf16>, vector<8x512xf32> -> vector<8x512xf32>
    %606 = arith.addf %601, %605 : vector<8x512xf32>
    %607 = vector.extract_strided_slice %606 {offsets = [0, 0], sizes = [8, 256], strides = [1, 1]} : vector<8x512xf32> to vector<8x256xf32>
    %608 = arith.negf %607 : vector<8x256xf32>
    %609 = math.exp %608 : vector<8x256xf32>
    %cst_321 = arith.constant 1.000000e+00 : f32
    %610 = vector.broadcast %cst_321 : f32 to vector<8x256xf32>
    %611 = arith.addf %610, %609 : vector<8x256xf32>
    %612 = arith.divf %610, %611 : vector<8x256xf32>
    %613 = vector.extract_strided_slice %612 {offsets = [0, 0], sizes = [8, 128], strides = [1, 1]} : vector<8x256xf32> to vector<8x128xf32>
    %614 = vector.extract_strided_slice %612 {offsets = [0, 128], sizes = [8, 128], strides = [1, 1]} : vector<8x256xf32> to vector<8x128xf32>
    %615 = vector.extract_strided_slice %606 {offsets = [0, 256], sizes = [8, 128], strides = [1, 1]} : vector<8x512xf32> to vector<8x128xf32>
    %616 = math.tanh %615 : vector<8x128xf32>
    %617 = vector.extract_strided_slice %606 {offsets = [0, 384], sizes = [8, 128], strides = [1, 1]} : vector<8x512xf32> to vector<8x128xf32>
    %618 = arith.negf %617 : vector<8x128xf32>
    %619 = math.exp %618 : vector<8x128xf32>
    %cst_322 = arith.constant 1.000000e+00 : f32
    %620 = vector.broadcast %cst_322 : f32 to vector<8x128xf32>
    %621 = arith.addf %620, %619 : vector<8x128xf32>
    %622 = arith.divf %620, %621 : vector<8x128xf32>
    %c0_323 = arith.constant 0 : index
    %c0_324 = arith.constant 0 : index
    %623 = vector.load %arg16[%c0_323, %c0_324] : memref<8x128xf32, #tpu.memory_space<vmem>>, vector<8x128xf32>
    %624 = arith.mulf %614, %623 : vector<8x128xf32>
    %625 = arith.mulf %613, %616 : vector<8x128xf32>
    %626 = arith.addf %624, %625 : vector<8x128xf32>
    %627 = math.tanh %626 : vector<8x128xf32>
    %628 = arith.mulf %622, %627 : vector<8x128xf32>
    %c0_325 = arith.constant 0 : index
    %c0_326 = arith.constant 0 : index
    %629 = vector.load %arg16[%c0_325, %c0_326] : memref<8x128xf32, #tpu.memory_space<vmem>>, vector<8x128xf32>
    tpu.vector_store %arg16[%c0_325, %c0_326], %626 {strides = array<i32>} : memref<8x128xf32, #tpu.memory_space<vmem>>, vector<8x128xf32>,
    %c0_327 = arith.constant 0 : index
    %c0_328 = arith.constant 0 : index
    %630 = vector.load %arg15[%c0_327, %c0_328] : memref<8x128xf32, #tpu.memory_space<vmem>>, vector<8x128xf32>
    tpu.vector_store %arg15[%c0_327, %c0_328], %628 {strides = array<i32>} : memref<8x128xf32, #tpu.memory_space<vmem>>, vector<8x128xf32>,
    %c1_i32_329 = arith.constant 1 : i32
    %631 = vector.broadcast %c1_i32_329 : i32 to vector<8x1xi32>
    %632 = arith.subi %0, %631 : vector<8x1xi32>
    %633 = vector.broadcast %c0_i32_313 : i32 to vector<8x1xi32>
    %634 = arith.cmpi eq, %632, %633 : vector<8x1xi32>
    %c0_330 = arith.constant 0 : index
    %c0_331 = arith.constant 0 : index
    %635 = vector.load %arg17[%c0_330, %c0_331] : memref<8x128xf32, #tpu.memory_space<vmem>>, vector<8x128xf32>
    %636 = vector.shape_cast %634 : vector<8x1xi1> to vector<8x1xi1>
    %637 = vector.broadcast %636 : vector<8x1xi1> to vector<8x128xi1>
    %638 = arith.select %637, %628, %635 : vector<8x128xi1>, vector<8x128xf32>
    %c0_332 = arith.constant 0 : index
    %c0_333 = arith.constant 0 : index
    %639 = vector.load %arg17[%c0_332, %c0_333] : memref<8x128xf32, #tpu.memory_space<vmem>>, vector<8x128xf32>
    tpu.vector_store %arg17[%c0_332, %c0_333], %638 {strides = array<i32>} : memref<8x128xf32, #tpu.memory_space<vmem>>, vector<8x128xf32>,
    %c1_i32_334 = arith.constant 1 : i32
    %c8_i32_335 = arith.constant 8 : i32
    %640 = arith.muli %c1_i32_334, %c8_i32_335 : i32
    %641 = tpu.assume_multiple %640, 8 : i32
    %642 = arith.index_cast %641 : i32 to index
    %c0_336 = arith.constant 0 : index
    %643 = vector.load %arg19[%642, %c0_336] : memref<64x512xf32, #tpu.memory_space<vmem>>, vector<8x512xf32>
    %c0_337 = arith.constant 0 : index
    %c0_338 = arith.constant 0 : index
    %644 = vector.load %arg15[%c0_337, %c0_338] : memref<8x128xf32, #tpu.memory_space<vmem>>, vector<8x128xf32>
    %645 = arith.truncf %644 : vector<8x128xf32> to vector<8x128xbf16>
    %c0_339 = arith.constant 0 : index
    %c0_340 = arith.constant 0 : index
    %646 = vector.load %arg10[%c0_339, %c0_340] : memref<128x512xbf16, #tpu.memory_space<vmem>>, vector<128x512xbf16>
    %cst_341 = arith.constant dense<0.000000e+00> : vector<8x512xf32>
    %647 = tpu.matmul %645, %646, %cst_341 {dimension_numbers = #tpu.dot_dimension_numbers<[1], [0], [0], [1], [0, 0, 1, 1], [], []>} : vector<8x128xbf16>, vector<128x512xbf16>, vector<8x512xf32> -> vector<8x512xf32>
    %648 = arith.addf %643, %647 : vector<8x512xf32>
    %649 = vector.extract_strided_slice %648 {offsets = [0, 0], sizes = [8, 256], strides = [1, 1]} : vector<8x512xf32> to vector<8x256xf32>
    %650 = arith.negf %649 : vector<8x256xf32>
    %651 = math.exp %650 : vector<8x256xf32>
    %cst_342 = arith.constant 1.000000e+00 : f32
    %652 = vector.broadcast %cst_342 : f32 to vector<8x256xf32>
    %653 = arith.addf %652, %651 : vector<8x256xf32>
    %654 = arith.divf %652, %653 : vector<8x256xf32>
    %655 = vector.extract_strided_slice %654 {offsets = [0, 0], sizes = [8, 128], strides = [1, 1]} : vector<8x256xf32> to vector<8x128xf32>
    %656 = vector.extract_strided_slice %654 {offsets = [0, 128], sizes = [8, 128], strides = [1, 1]} : vector<8x256xf32> to vector<8x128xf32>
    %657 = vector.extract_strided_slice %648 {offsets = [0, 256], sizes = [8, 128], strides = [1, 1]} : vector<8x512xf32> to vector<8x128xf32>
    %658 = math.tanh %657 : vector<8x128xf32>
    %659 = vector.extract_strided_slice %648 {offsets = [0, 384], sizes = [8, 128], strides = [1, 1]} : vector<8x512xf32> to vector<8x128xf32>
    %660 = arith.negf %659 : vector<8x128xf32>
    %661 = math.exp %660 : vector<8x128xf32>
    %cst_343 = arith.constant 1.000000e+00 : f32
    %662 = vector.broadcast %cst_343 : f32 to vector<8x128xf32>
    %663 = arith.addf %662, %661 : vector<8x128xf32>
    %664 = arith.divf %662, %663 : vector<8x128xf32>
    %c0_344 = arith.constant 0 : index
    %c0_345 = arith.constant 0 : index
    %665 = vector.load %arg16[%c0_344, %c0_345] : memref<8x128xf32, #tpu.memory_space<vmem>>, vector<8x128xf32>
    %666 = arith.mulf %656, %665 : vector<8x128xf32>
    %667 = arith.mulf %655, %658 : vector<8x128xf32>
    %668 = arith.addf %666, %667 : vector<8x128xf32>
    %669 = math.tanh %668 : vector<8x128xf32>
    %670 = arith.mulf %664, %669 : vector<8x128xf32>
    %c0_346 = arith.constant 0 : index
    %c0_347 = arith.constant 0 : index
    %671 = vector.load %arg16[%c0_346, %c0_347] : memref<8x128xf32, #tpu.memory_space<vmem>>, vector<8x128xf32>
    tpu.vector_store %arg16[%c0_346, %c0_347], %668 {strides = array<i32>} : memref<8x128xf32, #tpu.memory_space<vmem>>, vector<8x128xf32>,
    %c0_348 = arith.constant 0 : index
    %c0_349 = arith.constant 0 : index
    %672 = vector.load %arg15[%c0_348, %c0_349] : memref<8x128xf32, #tpu.memory_space<vmem>>, vector<8x128xf32>
    tpu.vector_store %arg15[%c0_348, %c0_349], %670 {strides = array<i32>} : memref<8x128xf32, #tpu.memory_space<vmem>>, vector<8x128xf32>,
    %c1_i32_350 = arith.constant 1 : i32
    %673 = vector.broadcast %c1_i32_350 : i32 to vector<8x1xi32>
    %674 = arith.subi %0, %673 : vector<8x1xi32>
    %675 = vector.broadcast %c1_i32_334 : i32 to vector<8x1xi32>
    %676 = arith.cmpi eq, %674, %675 : vector<8x1xi32>
    %c0_351 = arith.constant 0 : index
    %c0_352 = arith.constant 0 : index
    %677 = vector.load %arg17[%c0_351, %c0_352] : memref<8x128xf32, #tpu.memory_space<vmem>>, vector<8x128xf32>
    %678 = vector.shape_cast %676 : vector<8x1xi1> to vector<8x1xi1>
    %679 = vector.broadcast %678 : vector<8x1xi1> to vector<8x128xi1>
    %680 = arith.select %679, %670, %677 : vector<8x128xi1>, vector<8x128xf32>
    %c0_353 = arith.constant 0 : index
    %c0_354 = arith.constant 0 : index
    %681 = vector.load %arg17[%c0_353, %c0_354] : memref<8x128xf32, #tpu.memory_space<vmem>>, vector<8x128xf32>
    tpu.vector_store %arg17[%c0_353, %c0_354], %680 {strides = array<i32>} : memref<8x128xf32, #tpu.memory_space<vmem>>, vector<8x128xf32>,
    %c2_i32_355 = arith.constant 2 : i32
    %c8_i32_356 = arith.constant 8 : i32
    %682 = arith.muli %c2_i32_355, %c8_i32_356 : i32
    %683 = tpu.assume_multiple %682, 8 : i32
    %684 = arith.index_cast %683 : i32 to index
    %c0_357 = arith.constant 0 : index
    %685 = vector.load %arg19[%684, %c0_357] : memref<64x512xf32, #tpu.memory_space<vmem>>, vector<8x512xf32>
    %c0_358 = arith.constant 0 : index
    %c0_359 = arith.constant 0 : index
    %686 = vector.load %arg15[%c0_358, %c0_359] : memref<8x128xf32, #tpu.memory_space<vmem>>, vector<8x128xf32>
    %687 = arith.truncf %686 : vector<8x128xf32> to vector<8x128xbf16>
    %c0_360 = arith.constant 0 : index
    %c0_361 = arith.constant 0 : index
    %688 = vector.load %arg10[%c0_360, %c0_361] : memref<128x512xbf16, #tpu.memory_space<vmem>>, vector<128x512xbf16>
    %cst_362 = arith.constant dense<0.000000e+00> : vector<8x512xf32>
    %689 = tpu.matmul %687, %688, %cst_362 {dimension_numbers = #tpu.dot_dimension_numbers<[1], [0], [0], [1], [0, 0, 1, 1], [], []>} : vector<8x128xbf16>, vector<128x512xbf16>, vector<8x512xf32> -> vector<8x512xf32>
    %690 = arith.addf %685, %689 : vector<8x512xf32>
    %691 = vector.extract_strided_slice %690 {offsets = [0, 0], sizes = [8, 256], strides = [1, 1]} : vector<8x512xf32> to vector<8x256xf32>
    %692 = arith.negf %691 : vector<8x256xf32>
    %693 = math.exp %692 : vector<8x256xf32>
    %cst_363 = arith.constant 1.000000e+00 : f32
    %694 = vector.broadcast %cst_363 : f32 to vector<8x256xf32>
    %695 = arith.addf %694, %693 : vector<8x256xf32>
    %696 = arith.divf %694, %695 : vector<8x256xf32>
    %697 = vector.extract_strided_slice %696 {offsets = [0, 0], sizes = [8, 128], strides = [1, 1]} : vector<8x256xf32> to vector<8x128xf32>
    %698 = vector.extract_strided_slice %696 {offsets = [0, 128], sizes = [8, 128], strides = [1, 1]} : vector<8x256xf32> to vector<8x128xf32>
    %699 = vector.extract_strided_slice %690 {offsets = [0, 256], sizes = [8, 128], strides = [1, 1]} : vector<8x512xf32> to vector<8x128xf32>
    %700 = math.tanh %699 : vector<8x128xf32>
    %701 = vector.extract_strided_slice %690 {offsets = [0, 384], sizes = [8, 128], strides = [1, 1]} : vector<8x512xf32> to vector<8x128xf32>
    %702 = arith.negf %701 : vector<8x128xf32>
    %703 = math.exp %702 : vector<8x128xf32>
    %cst_364 = arith.constant 1.000000e+00 : f32
    %704 = vector.broadcast %cst_364 : f32 to vector<8x128xf32>
    %705 = arith.addf %704, %703 : vector<8x128xf32>
    %706 = arith.divf %704, %705 : vector<8x128xf32>
    %c0_365 = arith.constant 0 : index
    %c0_366 = arith.constant 0 : index
    %707 = vector.load %arg16[%c0_365, %c0_366] : memref<8x128xf32, #tpu.memory_space<vmem>>, vector<8x128xf32>
    %708 = arith.mulf %698, %707 : vector<8x128xf32>
    %709 = arith.mulf %697, %700 : vector<8x128xf32>
    %710 = arith.addf %708, %709 : vector<8x128xf32>
    %711 = math.tanh %710 : vector<8x128xf32>
    %712 = arith.mulf %706, %711 : vector<8x128xf32>
    %c0_367 = arith.constant 0 : index
    %c0_368 = arith.constant 0 : index
    %713 = vector.load %arg16[%c0_367, %c0_368] : memref<8x128xf32, #tpu.memory_space<vmem>>, vector<8x128xf32>
    tpu.vector_store %arg16[%c0_367, %c0_368], %710 {strides = array<i32>} : memref<8x128xf32, #tpu.memory_space<vmem>>, vector<8x128xf32>,
    %c0_369 = arith.constant 0 : index
    %c0_370 = arith.constant 0 : index
    %714 = vector.load %arg15[%c0_369, %c0_370] : memref<8x128xf32, #tpu.memory_space<vmem>>, vector<8x128xf32>
    tpu.vector_store %arg15[%c0_369, %c0_370], %712 {strides = array<i32>} : memref<8x128xf32, #tpu.memory_space<vmem>>, vector<8x128xf32>,
    %c1_i32_371 = arith.constant 1 : i32
    %715 = vector.broadcast %c1_i32_371 : i32 to vector<8x1xi32>
    %716 = arith.subi %0, %715 : vector<8x1xi32>
    %717 = vector.broadcast %c2_i32_355 : i32 to vector<8x1xi32>
    %718 = arith.cmpi eq, %716, %717 : vector<8x1xi32>
    %c0_372 = arith.constant 0 : index
    %c0_373 = arith.constant 0 : index
    %719 = vector.load %arg17[%c0_372, %c0_373] : memref<8x128xf32, #tpu.memory_space<vmem>>, vector<8x128xf32>
    %720 = vector.shape_cast %718 : vector<8x1xi1> to vector<8x1xi1>
    %721 = vector.broadcast %720 : vector<8x1xi1> to vector<8x128xi1>
    %722 = arith.select %721, %712, %719 : vector<8x128xi1>, vector<8x128xf32>
    %c0_374 = arith.constant 0 : index
    %c0_375 = arith.constant 0 : index
    %723 = vector.load %arg17[%c0_374, %c0_375] : memref<8x128xf32, #tpu.memory_space<vmem>>, vector<8x128xf32>
    tpu.vector_store %arg17[%c0_374, %c0_375], %722 {strides = array<i32>} : memref<8x128xf32, #tpu.memory_space<vmem>>, vector<8x128xf32>,
    %c3_i32_376 = arith.constant 3 : i32
    %c8_i32_377 = arith.constant 8 : i32
    %724 = arith.muli %c3_i32_376, %c8_i32_377 : i32
    %725 = tpu.assume_multiple %724, 8 : i32
    %726 = arith.index_cast %725 : i32 to index
    %c0_378 = arith.constant 0 : index
    %727 = vector.load %arg19[%726, %c0_378] : memref<64x512xf32, #tpu.memory_space<vmem>>, vector<8x512xf32>
    %c0_379 = arith.constant 0 : index
    %c0_380 = arith.constant 0 : index
    %728 = vector.load %arg15[%c0_379, %c0_380] : memref<8x128xf32, #tpu.memory_space<vmem>>, vector<8x128xf32>
    %729 = arith.truncf %728 : vector<8x128xf32> to vector<8x128xbf16>
    %c0_381 = arith.constant 0 : index
    %c0_382 = arith.constant 0 : index
    %730 = vector.load %arg10[%c0_381, %c0_382] : memref<128x512xbf16, #tpu.memory_space<vmem>>, vector<128x512xbf16>
    %cst_383 = arith.constant dense<0.000000e+00> : vector<8x512xf32>
    %731 = tpu.matmul %729, %730, %cst_383 {dimension_numbers = #tpu.dot_dimension_numbers<[1], [0], [0], [1], [0, 0, 1, 1], [], []>} : vector<8x128xbf16>, vector<128x512xbf16>, vector<8x512xf32> -> vector<8x512xf32>
    %732 = arith.addf %727, %731 : vector<8x512xf32>
    %733 = vector.extract_strided_slice %732 {offsets = [0, 0], sizes = [8, 256], strides = [1, 1]} : vector<8x512xf32> to vector<8x256xf32>
    %734 = arith.negf %733 : vector<8x256xf32>
    %735 = math.exp %734 : vector<8x256xf32>
    %cst_384 = arith.constant 1.000000e+00 : f32
    %736 = vector.broadcast %cst_384 : f32 to vector<8x256xf32>
    %737 = arith.addf %736, %735 : vector<8x256xf32>
    %738 = arith.divf %736, %737 : vector<8x256xf32>
    %739 = vector.extract_strided_slice %738 {offsets = [0, 0], sizes = [8, 128], strides = [1, 1]} : vector<8x256xf32> to vector<8x128xf32>
    %740 = vector.extract_strided_slice %738 {offsets = [0, 128], sizes = [8, 128], strides = [1, 1]} : vector<8x256xf32> to vector<8x128xf32>
    %741 = vector.extract_strided_slice %732 {offsets = [0, 256], sizes = [8, 128], strides = [1, 1]} : vector<8x512xf32> to vector<8x128xf32>
    %742 = math.tanh %741 : vector<8x128xf32>
    %743 = vector.extract_strided_slice %732 {offsets = [0, 384], sizes = [8, 128], strides = [1, 1]} : vector<8x512xf32> to vector<8x128xf32>
    %744 = arith.negf %743 : vector<8x128xf32>
    %745 = math.exp %744 : vector<8x128xf32>
    %cst_385 = arith.constant 1.000000e+00 : f32
    %746 = vector.broadcast %cst_385 : f32 to vector<8x128xf32>
    %747 = arith.addf %746, %745 : vector<8x128xf32>
    %748 = arith.divf %746, %747 : vector<8x128xf32>
    %c0_386 = arith.constant 0 : index
    %c0_387 = arith.constant 0 : index
    %749 = vector.load %arg16[%c0_386, %c0_387] : memref<8x128xf32, #tpu.memory_space<vmem>>, vector<8x128xf32>
    %750 = arith.mulf %740, %749 : vector<8x128xf32>
    %751 = arith.mulf %739, %742 : vector<8x128xf32>
    %752 = arith.addf %750, %751 : vector<8x128xf32>
    %753 = math.tanh %752 : vector<8x128xf32>
    %754 = arith.mulf %748, %753 : vector<8x128xf32>
    %c0_388 = arith.constant 0 : index
    %c0_389 = arith.constant 0 : index
    %755 = vector.load %arg16[%c0_388, %c0_389] : memref<8x128xf32, #tpu.memory_space<vmem>>, vector<8x128xf32>
    tpu.vector_store %arg16[%c0_388, %c0_389], %752 {strides = array<i32>} : memref<8x128xf32, #tpu.memory_space<vmem>>, vector<8x128xf32>,
    %c0_390 = arith.constant 0 : index
    %c0_391 = arith.constant 0 : index
    %756 = vector.load %arg15[%c0_390, %c0_391] : memref<8x128xf32, #tpu.memory_space<vmem>>, vector<8x128xf32>
    tpu.vector_store %arg15[%c0_390, %c0_391], %754 {strides = array<i32>} : memref<8x128xf32, #tpu.memory_space<vmem>>, vector<8x128xf32>,
    %c1_i32_392 = arith.constant 1 : i32
    %757 = vector.broadcast %c1_i32_392 : i32 to vector<8x1xi32>
    %758 = arith.subi %0, %757 : vector<8x1xi32>
    %759 = vector.broadcast %c3_i32_376 : i32 to vector<8x1xi32>
    %760 = arith.cmpi eq, %758, %759 : vector<8x1xi32>
    %c0_393 = arith.constant 0 : index
    %c0_394 = arith.constant 0 : index
    %761 = vector.load %arg17[%c0_393, %c0_394] : memref<8x128xf32, #tpu.memory_space<vmem>>, vector<8x128xf32>
    %762 = vector.shape_cast %760 : vector<8x1xi1> to vector<8x1xi1>
    %763 = vector.broadcast %762 : vector<8x1xi1> to vector<8x128xi1>
    %764 = arith.select %763, %754, %761 : vector<8x128xi1>, vector<8x128xf32>
    %c0_395 = arith.constant 0 : index
    %c0_396 = arith.constant 0 : index
    %765 = vector.load %arg17[%c0_395, %c0_396] : memref<8x128xf32, #tpu.memory_space<vmem>>, vector<8x128xf32>
    tpu.vector_store %arg17[%c0_395, %c0_396], %764 {strides = array<i32>} : memref<8x128xf32, #tpu.memory_space<vmem>>, vector<8x128xf32>,
    %c4_i32_397 = arith.constant 4 : i32
    %c8_i32_398 = arith.constant 8 : i32
    %766 = arith.muli %c4_i32_397, %c8_i32_398 : i32
    %767 = tpu.assume_multiple %766, 8 : i32
    %768 = arith.index_cast %767 : i32 to index
    %c0_399 = arith.constant 0 : index
    %769 = vector.load %arg19[%768, %c0_399] : memref<64x512xf32, #tpu.memory_space<vmem>>, vector<8x512xf32>
    %c0_400 = arith.constant 0 : index
    %c0_401 = arith.constant 0 : index
    %770 = vector.load %arg15[%c0_400, %c0_401] : memref<8x128xf32, #tpu.memory_space<vmem>>, vector<8x128xf32>
    %771 = arith.truncf %770 : vector<8x128xf32> to vector<8x128xbf16>
    %c0_402 = arith.constant 0 : index
    %c0_403 = arith.constant 0 : index
    %772 = vector.load %arg10[%c0_402, %c0_403] : memref<128x512xbf16, #tpu.memory_space<vmem>>, vector<128x512xbf16>
    %cst_404 = arith.constant dense<0.000000e+00> : vector<8x512xf32>
    %773 = tpu.matmul %771, %772, %cst_404 {dimension_numbers = #tpu.dot_dimension_numbers<[1], [0], [0], [1], [0, 0, 1, 1], [], []>} : vector<8x128xbf16>, vector<128x512xbf16>, vector<8x512xf32> -> vector<8x512xf32>
    %774 = arith.addf %769, %773 : vector<8x512xf32>
    %775 = vector.extract_strided_slice %774 {offsets = [0, 0], sizes = [8, 256], strides = [1, 1]} : vector<8x512xf32> to vector<8x256xf32>
    %776 = arith.negf %775 : vector<8x256xf32>
    %777 = math.exp %776 : vector<8x256xf32>
    %cst_405 = arith.constant 1.000000e+00 : f32
    %778 = vector.broadcast %cst_405 : f32 to vector<8x256xf32>
    %779 = arith.addf %778, %777 : vector<8x256xf32>
    %780 = arith.divf %778, %779 : vector<8x256xf32>
    %781 = vector.extract_strided_slice %780 {offsets = [0, 0], sizes = [8, 128], strides = [1, 1]} : vector<8x256xf32> to vector<8x128xf32>
    %782 = vector.extract_strided_slice %780 {offsets = [0, 128], sizes = [8, 128], strides = [1, 1]} : vector<8x256xf32> to vector<8x128xf32>
    %783 = vector.extract_strided_slice %774 {offsets = [0, 256], sizes = [8, 128], strides = [1, 1]} : vector<8x512xf32> to vector<8x128xf32>
    %784 = math.tanh %783 : vector<8x128xf32>
    %785 = vector.extract_strided_slice %774 {offsets = [0, 384], sizes = [8, 128], strides = [1, 1]} : vector<8x512xf32> to vector<8x128xf32>
    %786 = arith.negf %785 : vector<8x128xf32>
    %787 = math.exp %786 : vector<8x128xf32>
    %cst_406 = arith.constant 1.000000e+00 : f32
    %788 = vector.broadcast %cst_406 : f32 to vector<8x128xf32>
    %789 = arith.addf %788, %787 : vector<8x128xf32>
    %790 = arith.divf %788, %789 : vector<8x128xf32>
    %c0_407 = arith.constant 0 : index
    %c0_408 = arith.constant 0 : index
    %791 = vector.load %arg16[%c0_407, %c0_408] : memref<8x128xf32, #tpu.memory_space<vmem>>, vector<8x128xf32>
    %792 = arith.mulf %782, %791 : vector<8x128xf32>
    %793 = arith.mulf %781, %784 : vector<8x128xf32>
    %794 = arith.addf %792, %793 : vector<8x128xf32>
    %795 = math.tanh %794 : vector<8x128xf32>
    %796 = arith.mulf %790, %795 : vector<8x128xf32>
    %c0_409 = arith.constant 0 : index
    %c0_410 = arith.constant 0 : index
    %797 = vector.load %arg16[%c0_409, %c0_410] : memref<8x128xf32, #tpu.memory_space<vmem>>, vector<8x128xf32>
    tpu.vector_store %arg16[%c0_409, %c0_410], %794 {strides = array<i32>} : memref<8x128xf32, #tpu.memory_space<vmem>>, vector<8x128xf32>,
    %c0_411 = arith.constant 0 : index
    %c0_412 = arith.constant 0 : index
    %798 = vector.load %arg15[%c0_411, %c0_412] : memref<8x128xf32, #tpu.memory_space<vmem>>, vector<8x128xf32>
    tpu.vector_store %arg15[%c0_411, %c0_412], %796 {strides = array<i32>} : memref<8x128xf32, #tpu.memory_space<vmem>>, vector<8x128xf32>,
    %c1_i32_413 = arith.constant 1 : i32
    %799 = vector.broadcast %c1_i32_413 : i32 to vector<8x1xi32>
    %800 = arith.subi %0, %799 : vector<8x1xi32>
    %801 = vector.broadcast %c4_i32_397 : i32 to vector<8x1xi32>
    %802 = arith.cmpi eq, %800, %801 : vector<8x1xi32>
    %c0_414 = arith.constant 0 : index
    %c0_415 = arith.constant 0 : index
    %803 = vector.load %arg17[%c0_414, %c0_415] : memref<8x128xf32, #tpu.memory_space<vmem>>, vector<8x128xf32>
    %804 = vector.shape_cast %802 : vector<8x1xi1> to vector<8x1xi1>
    %805 = vector.broadcast %804 : vector<8x1xi1> to vector<8x128xi1>
    %806 = arith.select %805, %796, %803 : vector<8x128xi1>, vector<8x128xf32>
    %c0_416 = arith.constant 0 : index
    %c0_417 = arith.constant 0 : index
    %807 = vector.load %arg17[%c0_416, %c0_417] : memref<8x128xf32, #tpu.memory_space<vmem>>, vector<8x128xf32>
    tpu.vector_store %arg17[%c0_416, %c0_417], %806 {strides = array<i32>} : memref<8x128xf32, #tpu.memory_space<vmem>>, vector<8x128xf32>,
    %c5_i32_418 = arith.constant 5 : i32
    %c8_i32_419 = arith.constant 8 : i32
    %808 = arith.muli %c5_i32_418, %c8_i32_419 : i32
    %809 = tpu.assume_multiple %808, 8 : i32
    %810 = arith.index_cast %809 : i32 to index
    %c0_420 = arith.constant 0 : index
    %811 = vector.load %arg19[%810, %c0_420] : memref<64x512xf32, #tpu.memory_space<vmem>>, vector<8x512xf32>
    %c0_421 = arith.constant 0 : index
    %c0_422 = arith.constant 0 : index
    %812 = vector.load %arg15[%c0_421, %c0_422] : memref<8x128xf32, #tpu.memory_space<vmem>>, vector<8x128xf32>
    %813 = arith.truncf %812 : vector<8x128xf32> to vector<8x128xbf16>
    %c0_423 = arith.constant 0 : index
    %c0_424 = arith.constant 0 : index
    %814 = vector.load %arg10[%c0_423, %c0_424] : memref<128x512xbf16, #tpu.memory_space<vmem>>, vector<128x512xbf16>
    %cst_425 = arith.constant dense<0.000000e+00> : vector<8x512xf32>
    %815 = tpu.matmul %813, %814, %cst_425 {dimension_numbers = #tpu.dot_dimension_numbers<[1], [0], [0], [1], [0, 0, 1, 1], [], []>} : vector<8x128xbf16>, vector<128x512xbf16>, vector<8x512xf32> -> vector<8x512xf32>
    %816 = arith.addf %811, %815 : vector<8x512xf32>
    %817 = vector.extract_strided_slice %816 {offsets = [0, 0], sizes = [8, 256], strides = [1, 1]} : vector<8x512xf32> to vector<8x256xf32>
    %818 = arith.negf %817 : vector<8x256xf32>
    %819 = math.exp %818 : vector<8x256xf32>
    %cst_426 = arith.constant 1.000000e+00 : f32
    %820 = vector.broadcast %cst_426 : f32 to vector<8x256xf32>
    %821 = arith.addf %820, %819 : vector<8x256xf32>
    %822 = arith.divf %820, %821 : vector<8x256xf32>
    %823 = vector.extract_strided_slice %822 {offsets = [0, 0], sizes = [8, 128], strides = [1, 1]} : vector<8x256xf32> to vector<8x128xf32>
    %824 = vector.extract_strided_slice %822 {offsets = [0, 128], sizes = [8, 128], strides = [1, 1]} : vector<8x256xf32> to vector<8x128xf32>
    %825 = vector.extract_strided_slice %816 {offsets = [0, 256], sizes = [8, 128], strides = [1, 1]} : vector<8x512xf32> to vector<8x128xf32>
    %826 = math.tanh %825 : vector<8x128xf32>
    %827 = vector.extract_strided_slice %816 {offsets = [0, 384], sizes = [8, 128], strides = [1, 1]} : vector<8x512xf32> to vector<8x128xf32>
    %828 = arith.negf %827 : vector<8x128xf32>
    %829 = math.exp %828 : vector<8x128xf32>
    %cst_427 = arith.constant 1.000000e+00 : f32
    %830 = vector.broadcast %cst_427 : f32 to vector<8x128xf32>
    %831 = arith.addf %830, %829 : vector<8x128xf32>
    %832 = arith.divf %830, %831 : vector<8x128xf32>
    %c0_428 = arith.constant 0 : index
    %c0_429 = arith.constant 0 : index
    %833 = vector.load %arg16[%c0_428, %c0_429] : memref<8x128xf32, #tpu.memory_space<vmem>>, vector<8x128xf32>
    %834 = arith.mulf %824, %833 : vector<8x128xf32>
    %835 = arith.mulf %823, %826 : vector<8x128xf32>
    %836 = arith.addf %834, %835 : vector<8x128xf32>
    %837 = math.tanh %836 : vector<8x128xf32>
    %838 = arith.mulf %832, %837 : vector<8x128xf32>
    %c0_430 = arith.constant 0 : index
    %c0_431 = arith.constant 0 : index
    %839 = vector.load %arg16[%c0_430, %c0_431] : memref<8x128xf32, #tpu.memory_space<vmem>>, vector<8x128xf32>
    tpu.vector_store %arg16[%c0_430, %c0_431], %836 {strides = array<i32>} : memref<8x128xf32, #tpu.memory_space<vmem>>, vector<8x128xf32>,
    %c0_432 = arith.constant 0 : index
    %c0_433 = arith.constant 0 : index
    %840 = vector.load %arg15[%c0_432, %c0_433] : memref<8x128xf32, #tpu.memory_space<vmem>>, vector<8x128xf32>
    tpu.vector_store %arg15[%c0_432, %c0_433], %838 {strides = array<i32>} : memref<8x128xf32, #tpu.memory_space<vmem>>, vector<8x128xf32>,
    %c1_i32_434 = arith.constant 1 : i32
    %841 = vector.broadcast %c1_i32_434 : i32 to vector<8x1xi32>
    %842 = arith.subi %0, %841 : vector<8x1xi32>
    %843 = vector.broadcast %c5_i32_418 : i32 to vector<8x1xi32>
    %844 = arith.cmpi eq, %842, %843 : vector<8x1xi32>
    %c0_435 = arith.constant 0 : index
    %c0_436 = arith.constant 0 : index
    %845 = vector.load %arg17[%c0_435, %c0_436] : memref<8x128xf32, #tpu.memory_space<vmem>>, vector<8x128xf32>
    %846 = vector.shape_cast %844 : vector<8x1xi1> to vector<8x1xi1>
    %847 = vector.broadcast %846 : vector<8x1xi1> to vector<8x128xi1>
    %848 = arith.select %847, %838, %845 : vector<8x128xi1>, vector<8x128xf32>
    %c0_437 = arith.constant 0 : index
    %c0_438 = arith.constant 0 : index
    %849 = vector.load %arg17[%c0_437, %c0_438] : memref<8x128xf32, #tpu.memory_space<vmem>>, vector<8x128xf32>
    tpu.vector_store %arg17[%c0_437, %c0_438], %848 {strides = array<i32>} : memref<8x128xf32, #tpu.memory_space<vmem>>, vector<8x128xf32>,
    %c6_i32_439 = arith.constant 6 : i32
    %c8_i32_440 = arith.constant 8 : i32
    %850 = arith.muli %c6_i32_439, %c8_i32_440 : i32
    %851 = tpu.assume_multiple %850, 8 : i32
    %852 = arith.index_cast %851 : i32 to index
    %c0_441 = arith.constant 0 : index
    %853 = vector.load %arg19[%852, %c0_441] : memref<64x512xf32, #tpu.memory_space<vmem>>, vector<8x512xf32>
    %c0_442 = arith.constant 0 : index
    %c0_443 = arith.constant 0 : index
    %854 = vector.load %arg15[%c0_442, %c0_443] : memref<8x128xf32, #tpu.memory_space<vmem>>, vector<8x128xf32>
    %855 = arith.truncf %854 : vector<8x128xf32> to vector<8x128xbf16>
    %c0_444 = arith.constant 0 : index
    %c0_445 = arith.constant 0 : index
    %856 = vector.load %arg10[%c0_444, %c0_445] : memref<128x512xbf16, #tpu.memory_space<vmem>>, vector<128x512xbf16>
    %cst_446 = arith.constant dense<0.000000e+00> : vector<8x512xf32>
    %857 = tpu.matmul %855, %856, %cst_446 {dimension_numbers = #tpu.dot_dimension_numbers<[1], [0], [0], [1], [0, 0, 1, 1], [], []>} : vector<8x128xbf16>, vector<128x512xbf16>, vector<8x512xf32> -> vector<8x512xf32>
    %858 = arith.addf %853, %857 : vector<8x512xf32>
    %859 = vector.extract_strided_slice %858 {offsets = [0, 0], sizes = [8, 256], strides = [1, 1]} : vector<8x512xf32> to vector<8x256xf32>
    %860 = arith.negf %859 : vector<8x256xf32>
    %861 = math.exp %860 : vector<8x256xf32>
    %cst_447 = arith.constant 1.000000e+00 : f32
    %862 = vector.broadcast %cst_447 : f32 to vector<8x256xf32>
    %863 = arith.addf %862, %861 : vector<8x256xf32>
    %864 = arith.divf %862, %863 : vector<8x256xf32>
    %865 = vector.extract_strided_slice %864 {offsets = [0, 0], sizes = [8, 128], strides = [1, 1]} : vector<8x256xf32> to vector<8x128xf32>
    %866 = vector.extract_strided_slice %864 {offsets = [0, 128], sizes = [8, 128], strides = [1, 1]} : vector<8x256xf32> to vector<8x128xf32>
    %867 = vector.extract_strided_slice %858 {offsets = [0, 256], sizes = [8, 128], strides = [1, 1]} : vector<8x512xf32> to vector<8x128xf32>
    %868 = math.tanh %867 : vector<8x128xf32>
    %869 = vector.extract_strided_slice %858 {offsets = [0, 384], sizes = [8, 128], strides = [1, 1]} : vector<8x512xf32> to vector<8x128xf32>
    %870 = arith.negf %869 : vector<8x128xf32>
    %871 = math.exp %870 : vector<8x128xf32>
    %cst_448 = arith.constant 1.000000e+00 : f32
    %872 = vector.broadcast %cst_448 : f32 to vector<8x128xf32>
    %873 = arith.addf %872, %871 : vector<8x128xf32>
    %874 = arith.divf %872, %873 : vector<8x128xf32>
    %c0_449 = arith.constant 0 : index
    %c0_450 = arith.constant 0 : index
    %875 = vector.load %arg16[%c0_449, %c0_450] : memref<8x128xf32, #tpu.memory_space<vmem>>, vector<8x128xf32>
    %876 = arith.mulf %866, %875 : vector<8x128xf32>
    %877 = arith.mulf %865, %868 : vector<8x128xf32>
    %878 = arith.addf %876, %877 : vector<8x128xf32>
    %879 = math.tanh %878 : vector<8x128xf32>
    %880 = arith.mulf %874, %879 : vector<8x128xf32>
    %c0_451 = arith.constant 0 : index
    %c0_452 = arith.constant 0 : index
    %881 = vector.load %arg16[%c0_451, %c0_452] : memref<8x128xf32, #tpu.memory_space<vmem>>, vector<8x128xf32>
    tpu.vector_store %arg16[%c0_451, %c0_452], %878 {strides = array<i32>} : memref<8x128xf32, #tpu.memory_space<vmem>>, vector<8x128xf32>,
    %c0_453 = arith.constant 0 : index
    %c0_454 = arith.constant 0 : index
    %882 = vector.load %arg15[%c0_453, %c0_454] : memref<8x128xf32, #tpu.memory_space<vmem>>, vector<8x128xf32>
    tpu.vector_store %arg15[%c0_453, %c0_454], %880 {strides = array<i32>} : memref<8x128xf32, #tpu.memory_space<vmem>>, vector<8x128xf32>,
    %c1_i32_455 = arith.constant 1 : i32
    %883 = vector.broadcast %c1_i32_455 : i32 to vector<8x1xi32>
    %884 = arith.subi %0, %883 : vector<8x1xi32>
    %885 = vector.broadcast %c6_i32_439 : i32 to vector<8x1xi32>
    %886 = arith.cmpi eq, %884, %885 : vector<8x1xi32>
    %c0_456 = arith.constant 0 : index
    %c0_457 = arith.constant 0 : index
    %887 = vector.load %arg17[%c0_456, %c0_457] : memref<8x128xf32, #tpu.memory_space<vmem>>, vector<8x128xf32>
    %888 = vector.shape_cast %886 : vector<8x1xi1> to vector<8x1xi1>
    %889 = vector.broadcast %888 : vector<8x1xi1> to vector<8x128xi1>
    %890 = arith.select %889, %880, %887 : vector<8x128xi1>, vector<8x128xf32>
    %c0_458 = arith.constant 0 : index
    %c0_459 = arith.constant 0 : index
    %891 = vector.load %arg17[%c0_458, %c0_459] : memref<8x128xf32, #tpu.memory_space<vmem>>, vector<8x128xf32>
    tpu.vector_store %arg17[%c0_458, %c0_459], %890 {strides = array<i32>} : memref<8x128xf32, #tpu.memory_space<vmem>>, vector<8x128xf32>,
    %c7_i32_460 = arith.constant 7 : i32
    %c8_i32_461 = arith.constant 8 : i32
    %892 = arith.muli %c7_i32_460, %c8_i32_461 : i32
    %893 = tpu.assume_multiple %892, 8 : i32
    %894 = arith.index_cast %893 : i32 to index
    %c0_462 = arith.constant 0 : index
    %895 = vector.load %arg19[%894, %c0_462] : memref<64x512xf32, #tpu.memory_space<vmem>>, vector<8x512xf32>
    %c0_463 = arith.constant 0 : index
    %c0_464 = arith.constant 0 : index
    %896 = vector.load %arg15[%c0_463, %c0_464] : memref<8x128xf32, #tpu.memory_space<vmem>>, vector<8x128xf32>
    %897 = arith.truncf %896 : vector<8x128xf32> to vector<8x128xbf16>
    %c0_465 = arith.constant 0 : index
    %c0_466 = arith.constant 0 : index
    %898 = vector.load %arg10[%c0_465, %c0_466] : memref<128x512xbf16, #tpu.memory_space<vmem>>, vector<128x512xbf16>
    %cst_467 = arith.constant dense<0.000000e+00> : vector<8x512xf32>
    %899 = tpu.matmul %897, %898, %cst_467 {dimension_numbers = #tpu.dot_dimension_numbers<[1], [0], [0], [1], [0, 0, 1, 1], [], []>} : vector<8x128xbf16>, vector<128x512xbf16>, vector<8x512xf32> -> vector<8x512xf32>
    %900 = arith.addf %895, %899 : vector<8x512xf32>
    %901 = vector.extract_strided_slice %900 {offsets = [0, 0], sizes = [8, 256], strides = [1, 1]} : vector<8x512xf32> to vector<8x256xf32>
    %902 = arith.negf %901 : vector<8x256xf32>
    %903 = math.exp %902 : vector<8x256xf32>
    %cst_468 = arith.constant 1.000000e+00 : f32
    %904 = vector.broadcast %cst_468 : f32 to vector<8x256xf32>
    %905 = arith.addf %904, %903 : vector<8x256xf32>
    %906 = arith.divf %904, %905 : vector<8x256xf32>
    %907 = vector.extract_strided_slice %906 {offsets = [0, 0], sizes = [8, 128], strides = [1, 1]} : vector<8x256xf32> to vector<8x128xf32>
    %908 = vector.extract_strided_slice %906 {offsets = [0, 128], sizes = [8, 128], strides = [1, 1]} : vector<8x256xf32> to vector<8x128xf32>
    %909 = vector.extract_strided_slice %900 {offsets = [0, 256], sizes = [8, 128], strides = [1, 1]} : vector<8x512xf32> to vector<8x128xf32>
    %910 = math.tanh %909 : vector<8x128xf32>
    %911 = vector.extract_strided_slice %900 {offsets = [0, 384], sizes = [8, 128], strides = [1, 1]} : vector<8x512xf32> to vector<8x128xf32>
    %912 = arith.negf %911 : vector<8x128xf32>
    %913 = math.exp %912 : vector<8x128xf32>
    %cst_469 = arith.constant 1.000000e+00 : f32
    %914 = vector.broadcast %cst_469 : f32 to vector<8x128xf32>
    %915 = arith.addf %914, %913 : vector<8x128xf32>
    %916 = arith.divf %914, %915 : vector<8x128xf32>
    %c0_470 = arith.constant 0 : index
    %c0_471 = arith.constant 0 : index
    %917 = vector.load %arg16[%c0_470, %c0_471] : memref<8x128xf32, #tpu.memory_space<vmem>>, vector<8x128xf32>
    %918 = arith.mulf %908, %917 : vector<8x128xf32>
    %919 = arith.mulf %907, %910 : vector<8x128xf32>
    %920 = arith.addf %918, %919 : vector<8x128xf32>
    %921 = math.tanh %920 : vector<8x128xf32>
    %922 = arith.mulf %916, %921 : vector<8x128xf32>
    %c0_472 = arith.constant 0 : index
    %c0_473 = arith.constant 0 : index
    %923 = vector.load %arg16[%c0_472, %c0_473] : memref<8x128xf32, #tpu.memory_space<vmem>>, vector<8x128xf32>
    tpu.vector_store %arg16[%c0_472, %c0_473], %920 {strides = array<i32>} : memref<8x128xf32, #tpu.memory_space<vmem>>, vector<8x128xf32>,
    %c0_474 = arith.constant 0 : index
    %c0_475 = arith.constant 0 : index
    %924 = vector.load %arg15[%c0_474, %c0_475] : memref<8x128xf32, #tpu.memory_space<vmem>>, vector<8x128xf32>
    tpu.vector_store %arg15[%c0_474, %c0_475], %922 {strides = array<i32>} : memref<8x128xf32, #tpu.memory_space<vmem>>, vector<8x128xf32>,
    %c1_i32_476 = arith.constant 1 : i32
    %925 = vector.broadcast %c1_i32_476 : i32 to vector<8x1xi32>
    %926 = arith.subi %0, %925 : vector<8x1xi32>
    %927 = vector.broadcast %c7_i32_460 : i32 to vector<8x1xi32>
    %928 = arith.cmpi eq, %926, %927 : vector<8x1xi32>
    %c0_477 = arith.constant 0 : index
    %c0_478 = arith.constant 0 : index
    %929 = vector.load %arg17[%c0_477, %c0_478] : memref<8x128xf32, #tpu.memory_space<vmem>>, vector<8x128xf32>
    %930 = vector.shape_cast %928 : vector<8x1xi1> to vector<8x1xi1>
    %931 = vector.broadcast %930 : vector<8x1xi1> to vector<8x128xi1>
    %932 = arith.select %931, %922, %929 : vector<8x128xi1>, vector<8x128xf32>
    %c0_479 = arith.constant 0 : index
    %c0_480 = arith.constant 0 : index
    %933 = vector.load %arg17[%c0_479, %c0_480] : memref<8x128xf32, #tpu.memory_space<vmem>>, vector<8x128xf32>
    tpu.vector_store %arg17[%c0_479, %c0_480], %932 {strides = array<i32>} : memref<8x128xf32, #tpu.memory_space<vmem>>, vector<8x128xf32>,
    %c8_i32_481 = arith.constant 8 : i32
    %c0_482 = arith.constant 0 : index
    %c0_483 = arith.constant 0 : index
    %934 = vector.load %arg17[%c0_482, %c0_483] : memref<8x128xf32, #tpu.memory_space<vmem>>, vector<8x128xf32>
    %c0_484 = arith.constant 0 : index
    %c0_485 = arith.constant 0 : index
    %935 = vector.load %arg12[%c0_484, %c0_485] : memref<128x128xf32, #tpu.memory_space<vmem>>, vector<128x128xf32>
    %cst_486 = arith.constant dense<0.000000e+00> : vector<8x128xf32>
    %936 = tpu.matmul %934, %935, %cst_486 {dimension_numbers = #tpu.dot_dimension_numbers<[1], [0], [0], [1], [0, 0, 1, 1], [], []>} : vector<8x128xf32>, vector<128x128xf32>, vector<8x128xf32> -> vector<8x128xf32>
    %c0_487 = arith.constant 0 : index
    %c0_488 = arith.constant 0 : index
    %937 = vector.load %arg13[%c0_487, %c0_488] : memref<1x128xf32, #tpu.memory_space<vmem>>, vector<1x128xf32>
    %938 = vector.broadcast %937 : vector<1x128xf32> to vector<8x128xf32>
    %939 = arith.addf %936, %938 : vector<8x128xf32>
    %c0_489 = arith.constant 0 : index
    %c0_490 = arith.constant 0 : index
    %940 = vector.load %arg14[%c0_489, %c0_490] : memref<8x128xf32, #tpu.memory_space<vmem>>, vector<8x128xf32>
    tpu.vector_store %arg14[%c0_489, %c0_490], %939 {strides = array<i32>} : memref<8x128xf32, #tpu.memory_space<vmem>>, vector<8x128xf32>,
    return
  }
  func.func @transform_0(%arg0: i32) -> (i32, i32) {
    %c0_i32 = arith.constant 0 : i32
    %c0_i32_0 = arith.constant 0 : i32
    %c0_i32_1 = arith.constant 0 : i32
    return %c0_i32, %c0_i32_0 : i32, i32
  }
  func.func @transform_1(%arg0: i32) -> (i32, i32) {
    %c0_i32 = arith.constant 0 : i32
    %c0_i32_0 = arith.constant 0 : i32
    %c0_i32_1 = arith.constant 0 : i32
    return %c0_i32, %c0_i32_0 : i32, i32
  }
  func.func @transform_2(%arg0: i32) -> (i32, i32) {
    %c0_i32 = arith.constant 0 : i32
    %c0_i32_0 = arith.constant 0 : i32
    %c0_i32_1 = arith.constant 0 : i32
    return %c0_i32, %c0_i32_0 : i32, i32
  }
  func.func @transform_3(%arg0: i32) -> (i32, i32) {
    %c0_i32 = arith.constant 0 : i32
    %c0_i32_0 = arith.constant 0 : i32
    %c0_i32_1 = arith.constant 0 : i32
    return %c0_i32, %c0_i32_0 : i32, i32
  }
  func.func @transform_4(%arg0: i32) -> (i32, i32) {
    %c0_i32 = arith.constant 0 : i32
    %c0_i32_0 = arith.constant 0 : i32
    %c0_i32_1 = arith.constant 0 : i32
    return %c0_i32, %c0_i32_0 : i32, i32
  }
  func.func @transform_5(%arg0: i32) -> (i32, i32) {
    %c0_i32 = arith.constant 0 : i32
    %c0_i32_0 = arith.constant 0 : i32
    %c0_i32_1 = arith.constant 0 : i32
    return %c0_i32, %c0_i32_0 : i32, i32
  }
  func.func @transform_6(%arg0: i32) -> (i32, i32) {
    %c0_i32 = arith.constant 0 : i32
    %c0_i32_0 = arith.constant 0 : i32
    %c0_i32_1 = arith.constant 0 : i32
    return %c0_i32, %c0_i32_0 : i32, i32
  }
  func.func @transform_7(%arg0: i32) -> (i32, i32) {
    %c0_i32 = arith.constant 0 : i32
    %c0_i32_0 = arith.constant 0 : i32
    %c0_i32_1 = arith.constant 0 : i32
    return %c0_i32, %c0_i32_0 : i32, i32
  }
  func.func @transform_8(%arg0: i32) -> (i32, i32) {
    %c0_i32 = arith.constant 0 : i32
    %c0_i32_0 = arith.constant 0 : i32
    %c0_i32_1 = arith.constant 0 : i32
    return %c0_i32, %c0_i32_0 : i32, i32
  }
  func.func @transform_9(%arg0: i32) -> (i32, i32) {
    %c0_i32 = arith.constant 0 : i32
    %c0_i32_0 = arith.constant 0 : i32
    %c0_i32_1 = arith.constant 0 : i32
    return %c0_i32, %c0_i32_0 : i32, i32
  }
  func.func @transform_10(%arg0: i32) -> (i32, i32) {
    %c0_i32 = arith.constant 0 : i32
    %c0_i32_0 = arith.constant 0 : i32
    %c0_i32_1 = arith.constant 0 : i32
    return %c0_i32, %c0_i32_0 : i32, i32
  }
  func.func @transform_11(%arg0: i32) -> (i32, i32) {
    %c0_i32 = arith.constant 0 : i32
    %c0_i32_0 = arith.constant 0 : i32
    %c0_i32_1 = arith.constant 0 : i32
    return %c0_i32, %c0_i32_0 : i32, i32
  }
  func.func @transform_12(%arg0: i32) -> (i32, i32) {
    %c0_i32 = arith.constant 0 : i32
    %c0_i32_0 = arith.constant 0 : i32
    %c0_i32_1 = arith.constant 0 : i32
    return %c0_i32, %c0_i32_0 : i32, i32
  }
  func.func @transform_13(%arg0: i32) -> (i32, i32) {
    %c0_i32 = arith.constant 0 : i32
    %c0_i32_0 = arith.constant 0 : i32
    %c0_i32_1 = arith.constant 0 : i32
    return %c0_i32, %c0_i32_0 : i32, i32
  }
}

</mosaic_0001>

<llo_original>
// kernel: query_encode_forward.3
$region0: #{query_encode_forward.3}
  #allocation0 [shape = 'u32[]', space=smem, size = 0x4, offset = 0x4, fixed_abs, tag = 'smem constant byte address 0x4 - core index']
  #allocation1 [shape = 'u32[144,128]{1,0:T(1,128)}', space=vmem, size = 0x12000, scoped, tag = 'internal scratch']
  %s0 = inlined_call_operand.vmem [shape: bf16[2,128,256], index: 0, kind: input, shape index: {}]
  %s1 = inlined_call_operand.vmem [shape: bf16[2,128,128], index: 1, kind: input, shape index: {}]
  %s2 = inlined_call_operand.vmem [shape: f32[2,128,1], index: 2, kind: input, shape index: {}]
  %s3 = inlined_call_operand.vmem [shape: f32[2,128,256], index: 3, kind: output, shape index: {}]
  %s4 = sld [smem:[#allocation0]]
  $region45: #{query_encode_forward.3} parent=0
    _
  %s6 = ssub.s32 1, %s4
  %s7 = scalar_select 0, %s6, %s4
  loop: start=0, step=1, limit=4
  $region2: #{query_encode_forward.3} parent=0 // loop_pre_header
    _
  $region3: #{query_encode_forward.3} parent=0 // loop_header
    %s9 = sphi 0, %s13
    %p10 = scmp.ge.s32.totalorder %s9, 4
    %s16 = sphi 0, %s28
    %s17 = sphi 0, %s24
    %s18 = sphi 0, %s16
    %s19 = sphi 0, %s17
    %s20 = sphi 0, %s18
    %s21 = sphi 0, %s19
    %s33 = sphi 0, %s35
    %s36 = sphi 0, %s33
    %s37 = sphi 0, %s36
    %s53 = sphi 0, %s37
    %s59 = sphi 0, %s61
    %s62 = sphi 0, %s59
    %s63 = sphi 0, %s62
    %s79 = sphi 0, %s63
    %s85 = sphi 0, %s87
    %s88 = sphi 0, %s85
    %s89 = sphi 0, %s88
    %s105 = sphi 0, %s89
    %s113 = sphi 0, %s115
    %s116 = sphi 0, %s113
    %s117 = sphi 0, %s116
    %s133 = sphi 0, %s117
  $region4: #{query_encode_forward.3} parent=0 // loop_header_branch
    %12 = sbr.rel (%p10) target = $region8
  $region5: #{query_encode_forward.3} parent=0 // loop_body
    %s14 = ssub.s32 %s9, 1
    %s15 = ssub.s32 %s9, 2
    %s22 = sadd.s32 1, %s17
    %p23 = scmp.ge.s32.totalorder %s22, 1
    %s24 = scalar_select %p23, 0, %s22
    %s25 = sadd.s32 1, %s16
    %s26 = scalar_select %p23, %s25, %s16
    %p27 = scmp.ge.s32.totalorder %s26, 2
    %s28 = scalar_select %p27, 0, %s26
    %s29 = ssub.s32 %s16, %s28
    %s30 = ssub.s32 %s17, %s24
    %s31 = sor.u32 %s29, %s30
    %p32 = scmp.eq.s32.totalorder %s31, 0
    %s34 = sadd.s32 %s33, 1
    %s35 = scalar_select %p32, %s33, %s34
    %p38 = pneg %p32
    %p39 = scmp.eq.s32.totalorder %s9, 1
    %p40 = por %p38, %p39
    %p41 = scmp.ne.s32.totalorder %s33, %s36
    %p42 = scmp.eq.s32.totalorder %s9, 0
    %p43 = por %p41, %p42
    %p44 = scmp.ne.s32.totalorder %s33, %s36
    %p45 = scmp.eq.s32.totalorder %s14, 1
    %p46 = por %p44, %p45
    %p47 = scmp.ne.s32.totalorder %s36, %s37
    %p48 = scmp.eq.s32.totalorder %s14, 0
    %p49 = por %p47, %p48
    %p50 = scmp.ne.s32.totalorder %s36, %s37
    %p51 = scmp.eq.s32.totalorder %s15, 1
    %p52 = por %p50, %p51
    %p54 = scmp.ne.s32.totalorder %s37, %s53
    %p55 = scmp.eq.s32.totalorder %s15, 0
    %p56 = por %p54, %p55
    %s57 = ssub.s32 %s16, %s28
    %p58 = scmp.eq.s32.totalorder %s57, 0
    %s60 = sadd.s32 %s59, 1
    %s61 = scalar_select %p58, %s59, %s60
    %p64 = pneg %p58
    %p65 = scmp.eq.s32.totalorder %s9, 1
    %p66 = por %p64, %p65
    %p67 = scmp.ne.s32.totalorder %s59, %s62
    %p68 = scmp.eq.s32.totalorder %s9, 0
    %p69 = por %p67, %p68
    %p70 = scmp.ne.s32.totalorder %s59, %s62
    %p71 = scmp.eq.s32.totalorder %s14, 1
    %p72 = por %p70, %p71
    %p73 = scmp.ne.s32.totalorder %s62, %s63
    %p74 = scmp.eq.s32.totalorder %s14, 0
    %p75 = por %p73, %p74
    %p76 = scmp.ne.s32.totalorder %s62, %s63
    %p77 = scmp.eq.s32.totalorder %s15, 1
    %p78 = por %p76, %p77
    %p80 = scmp.ne.s32.totalorder %s63, %s79
    %p81 = scmp.eq.s32.totalorder %s15, 0
    %p82 = por %p80, %p81
    %s83 = ssub.s32 %s16, %s28
    %p84 = scmp.eq.s32.totalorder %s83, 0
    %s86 = sadd.s32 %s85, 1
    %s87 = scalar_select %p84, %s85, %s86
    %p90 = pneg %p84
    %p91 = scmp.eq.s32.totalorder %s9, 1
    %p92 = por %p90, %p91
    %p93 = scmp.ne.s32.totalorder %s85, %s88
    %p94 = scmp.eq.s32.totalorder %s9, 0
    %p95 = por %p93, %p94
    %p96 = scmp.ne.s32.totalorder %s85, %s88
    %p97 = scmp.eq.s32.totalorder %s14, 1
    %p98 = por %p96, %p97
    %p99 = scmp.ne.s32.totalorder %s88, %s89
    %p100 = scmp.eq.s32.totalorder %s14, 0
    %p101 = por %p99, %p100
    %p102 = scmp.ne.s32.totalorder %s88, %s89
    %p103 = scmp.eq.s32.totalorder %s15, 1
    %p104 = por %p102, %p103
    %p106 = scmp.ne.s32.totalorder %s89, %s105
    %p107 = scmp.eq.s32.totalorder %s15, 0
    %p108 = por %p106, %p107
    %s109 = ssub.s32 %s16, %s28
    %s110 = ssub.s32 %s17, %s24
    %s111 = sor.u32 %s109, %s110
    %p112 = scmp.eq.s32.totalorder %s111, 0
    %s114 = sadd.s32 %s113, 1
    %s115 = scalar_select %p112, %s113, %s114
    %p118 = pneg %p112
    %p119 = scmp.eq.s32.totalorder %s9, 1
    %p120 = por %p118, %p119
    %p121 = scmp.ne.s32.totalorder %s113, %s116
    %p122 = scmp.eq.s32.totalorder %s9, 0
    %p123 = por %p121, %p122
    %p124 = scmp.ne.s32.totalorder %s113, %s116
    %p125 = scmp.eq.s32.totalorder %s14, 1
    %p126 = por %p124, %p125
    %p127 = scmp.ne.s32.totalorder %s116, %s117
    %p128 = scmp.eq.s32.totalorder %s14, 0
    %p129 = por %p127, %p128
    %p130 = scmp.ne.s32.totalorder %s116, %s117
    %p131 = scmp.eq.s32.totalorder %s15, 1
    %p132 = por %p130, %p131
    %p134 = scmp.ne.s32.totalorder %s117, %s133
    %p135 = scmp.eq.s32.totalorder %s15, 0
    %p136 = por %p134, %p135
    %p137 = scmp.le.s32.totalorder 1, %s9
    %p138 = scmp.lt.s32.totalorder %s9, 3
    %p139 = pnand %p137, %p138
    %p140 = pneg %p139
    // Predicated region
    $region9: #{query_encode_forward.3} parent=5 // pred_check
      _
    $region10: #{query_encode_forward.3} parent=5 // pred_check_branch
      %142 = sbr.rel (%p139) target = $region12
    $region11: #{query_encode_forward.3} parent=5 // pred_region
      %s143 = ssub.s32 %s9, 1
    $region12: #{query_encode_forward.3} parent=5 // pred_fallthru
      _
    %p144 = scmp.lt.s32.totalorder %s9, 2
    // Predicated region
    $region13: #{query_encode_forward.3} parent=5 // pred_check
      %p145 = pneg %p144
    $region14: #{query_encode_forward.3} parent=5 // pred_check_branch
      %147 = sbr.rel (%p145) target = $region16
    $region15: #{query_encode_forward.3} parent=5 // pred_region
      // Predicated region
      $region17: #{query_encode_forward.3} parent=15 // pred_check
        %p148 = pneg %p43
      $region18: #{query_encode_forward.3} parent=15 // pred_check_branch
        %150 = sbr.rel (%p148) target = $region20
      $region19: #{query_encode_forward.3} parent=15 // pred_region
        %s151 = smul.u32 2, %s17
        %p152 = scmp.lt.s32.totalorder %s16, 1
        %s153 = scalar_select %p152, %s16, 1
        %p154 = scmp.lt.s32.totalorder %s151, 1
        %s155 = scalar_select %p154, %s151, 1
        %s156 = smul.addr %s153, 32
        %s157 = sadd.s32 %s155, %s156
        %s158 = smul.addr %s157, 4
        %s159 = scalar_lea.vmem %s0, %s158
        %s160 = smul.u32 2, %s17
      $region20: #{query_encode_forward.3} parent=15 // pred_fallthru
        _
      // Predicated region
      $region21: #{query_encode_forward.3} parent=15 // pred_check
        %p161 = pneg %p69
      $region22: #{query_encode_forward.3} parent=15 // pred_check_branch
        %163 = sbr.rel (%p161) target = $region24
      $region23: #{query_encode_forward.3} parent=15 // pred_region
        %p164 = scmp.lt.s32.totalorder %s16, 1
        %s165 = scalar_select %p164, %s16, 1
        %s166 = smul.addr %s165, 16
        %s167 = smul.addr %s166, 4
        %s168 = scalar_lea.vmem %s1, %s167
      $region24: #{query_encode_forward.3} parent=15 // pred_fallthru
        _
      // Predicated region
      $region25: #{query_encode_forward.3} parent=15 // pred_check
        %p169 = pneg %p95
      $region26: #{query_encode_forward.3} parent=15 // pred_check_branch
        %171 = sbr.rel (%p169) target = $region28
      $region27: #{query_encode_forward.3} parent=15 // pred_region
        %p172 = scmp.lt.s32.totalorder %s16, 1
        %s173 = scalar_select %p172, %s16, 1
        %s174 = smul.addr %s173, 16
        %s175 = smul.addr %s174, 8
        %s176 = scalar_lea.vmem %s2, %s175
      $region28: #{query_encode_forward.3} parent=15 // pred_fallthru
        _
    $region16: #{query_encode_forward.3} parent=5 // pred_fallthru
      _
    %p177 = scmp.le.s32.totalorder 1, %s9
    %p178 = scmp.lt.s32.totalorder %s9, 3
    %p179 = pnand %p177, %p178
    %p180 = pneg %p179
    // Predicated region
    $region29: #{query_encode_forward.3} parent=5 // pred_check
      _
    $region30: #{query_encode_forward.3} parent=5 // pred_check_branch
      %182 = sbr.rel (%p179) target = $region32
    $region31: #{query_encode_forward.3} parent=5 // pred_region
      %s183 = ssub.s32 %s9, 1
      %s184 = smul.u32 2, %s19
      %p185 = scmp.lt.s32.totalorder %s18, 1
      %s186 = scalar_select %p185, %s18, 1
      %p187 = scmp.lt.s32.totalorder %s184, 1
      %s188 = scalar_select %p187, %s184, 1
      %s189 = smul.addr %s186, 32
      %s190 = sadd.s32 %s188, %s189
      %s191 = smul.addr %s190, 4
      %s192 = scalar_lea.vmem %s0, %s191
      %p193 = pneg %p49
      %p194 = pneg %p46
      %p195 = scmp.lt.s32.totalorder %s18, 1
      %s196 = scalar_select %p195, %s18, 1
      %s197 = smul.addr %s196, 16
      %s198 = smul.addr %s197, 4
      %s199 = scalar_lea.vmem %s1, %s198
      %p200 = pneg %p75
      %p201 = pneg %p72
      %p202 = scmp.lt.s32.totalorder %s18, 1
      %s203 = scalar_select %p202, %s18, 1
      %s204 = smul.addr %s203, 16
      %s205 = smul.addr %s204, 8
      %s206 = scalar_lea.vmem %s2, %s205
      %p207 = pneg %p101
      %p208 = pneg %p98
      %p209 = pneg %p129
      %p210 = pneg %p126
      %s211 = smul.u32 2, %s19
      %p212 = scmp.lt.s32.totalorder %s18, 1
      %s213 = scalar_select %p212, %s18, 1
      %p214 = scmp.lt.s32.totalorder %s211, 1
      %s215 = scalar_select %p214, %s211, 1
      %s216 = smul.addr %s213, 32
      %s217 = sadd.s32 %s215, %s216
      %s218 = smul.addr %s217, 8
      %s219 = scalar_lea.vmem %s3, %s218
      %s220 = smul.u32 2, %s19
      %p221 = scmp.lt.s32.totalorder %s18, 1
      %s222 = scalar_select %p221, %s18, 1
      %p223 = scmp.lt.s32.totalorder %s220, 1
      %s224 = scalar_select %p223, %s220, 1
      %s225 = smul.addr %s222, 32
      %s226 = sadd.s32 %s224, %s225
      %s227 = smul.addr %s226, 4
      %s228 = scalar_lea.vmem %s0, %s227
      %s229 = smul.u32 2, %s19
      %p230 = scmp.lt.s32.totalorder %s18, 1
      %s231 = scalar_select %p230, %s18, 1
      %s232 = smul.addr %s231, 16
      %s233 = smul.addr %s232, 4
      %s234 = scalar_lea.vmem %s1, %s233
      %p235 = scmp.lt.s32.totalorder %s18, 1
      %s236 = scalar_select %p235, %s18, 1
      %s237 = smul.addr %s236, 16
      %s238 = smul.addr %s237, 8
      %s239 = scalar_lea.vmem %s2, %s238
      %s240 = smul.u32 2, %s19
      %p241 = scmp.lt.s32.totalorder %s18, 1
      %s242 = scalar_select %p241, %s18, 1
      %p243 = scmp.lt.s32.totalorder %s240, 1
      %s244 = scalar_select %p243, %s240, 1
      %s245 = smul.addr %s242, 32
      %s246 = sadd.s32 %s244, %s245
      %s247 = smul.addr %s246, 8
      %s248 = scalar_lea.vmem %s3, %s247
      %s249 = smul.u32 2, %s19
      %v251 = vld [vmem:[%s234] sm:$0xf]
      %v252 = vld [vmem:[%s234 + $0x4] sm:$0xf]
      %v253 = vld [vmem:[%s234 + $0x8] sm:$0xf]
      %v254 = vld [vmem:[%s234 + $0xc] sm:$0xf]
      %v255 = vld [vmem:[%s234 + $0x10] sm:$0xf]
      %v256 = vld [vmem:[%s234 + $0x14] sm:$0xf]
      %v257 = vld [vmem:[%s234 + $0x18] sm:$0xf]
      %v258 = vld [vmem:[%s234 + $0x1c] sm:$0xf]
      %v259 = vld [vmem:[%s234 + $0x20] sm:$0xf]
      %v260 = vld [vmem:[%s234 + $0x24] sm:$0xf]
      %v261 = vld [vmem:[%s234 + $0x28] sm:$0xf]
      %v262 = vld [vmem:[%s234 + $0x2c] sm:$0xf]
      %v263 = vld [vmem:[%s234 + $0x30] sm:$0xf]
      %v264 = vld [vmem:[%s234 + $0x34] sm:$0xf]
      %v265 = vld [vmem:[%s234 + $0x38] sm:$0xf]
      %v266 = vld [vmem:[%s234 + $0x3c] sm:$0xf]
      %v267 = vld [vmem:[%s228] sm:$0xff]
      %v268 = vld [vmem:[%s228 + $0x8] sm:$0xff]
      %v269 = vld [vmem:[%s228 + $0x10] sm:$0xff]
      %v270 = vld [vmem:[%s228 + $0x18] sm:$0xff]
      %v271 = vld [vmem:[%s228 + $0x20] sm:$0xff]
      %v272 = vld [vmem:[%s228 + $0x28] sm:$0xff]
      %v273 = vld [vmem:[%s228 + $0x30] sm:$0xff]
      %v274 = vld [vmem:[%s228 + $0x38] sm:$0xff]
      %v275 = vld [vmem:[%s228 + $0x40] sm:$0xff]
      %v276 = vld [vmem:[%s228 + $0x48] sm:$0xff]
      %v277 = vld [vmem:[%s228 + $0x50] sm:$0xff]
      %v278 = vld [vmem:[%s228 + $0x58] sm:$0xff]
      %v279 = vld [vmem:[%s228 + $0x60] sm:$0xff]
      %v280 = vld [vmem:[%s228 + $0x68] sm:$0xff]
      %v281 = vld [vmem:[%s228 + $0x70] sm:$0xff]
      %v282 = vld [vmem:[%s228 + $0x78] sm:$0xff]
      %v283 = vld [vmem:[%s239] sm:$0xff]
      %v284 = vld [vmem:[%s239 + $0x8] sm:$0xff]
      %v285 = vld [vmem:[%s239 + $0x10] sm:$0xff]
      %v286 = vld [vmem:[%s239 + $0x18] sm:$0xff]
      %v287 = vld [vmem:[%s239 + $0x20] sm:$0xff]
      %v288 = vld [vmem:[%s239 + $0x28] sm:$0xff]
      %v289 = vld [vmem:[%s239 + $0x30] sm:$0xff]
      %v290 = vld [vmem:[%s239 + $0x38] sm:$0xff]
      %v291 = vld [vmem:[%s239 + $0x40] sm:$0xff]
      %v292 = vld [vmem:[%s239 + $0x48] sm:$0xff]
      %v293 = vld [vmem:[%s239 + $0x50] sm:$0xff]
      %v294 = vld [vmem:[%s239 + $0x58] sm:$0xff]
      %v295 = vld [vmem:[%s239 + $0x60] sm:$0xff]
      %v296 = vld [vmem:[%s239 + $0x68] sm:$0xff]
      %v297 = vld [vmem:[%s239 + $0x70] sm:$0xff]
      %v298 = vld [vmem:[%s239 + $0x78] sm:$0xff]
      %300 = vset.pattern.permute.xlu0 0
      %301 = vperm.xlu0 %300, %v283
      %v302 = vpop.permute.xlu0 %301
      %305 = vset.pattern.permute.xlu0 0
      %306 = vperm.xlu0 %305, %v284
      %v307 = vpop.permute.xlu0 %306
      %310 = vset.pattern.permute.xlu0 0
      %311 = vperm.xlu0 %310, %v285
      %v312 = vpop.permute.xlu0 %311
      %315 = vset.pattern.permute.xlu0 0
      %316 = vperm.xlu0 %315, %v286
      %v317 = vpop.permute.xlu0 %316
      %320 = vset.pattern.permute.xlu0 0
      %321 = vperm.xlu0 %320, %v287
      %v322 = vpop.permute.xlu0 %321
      %325 = vset.pattern.permute.xlu0 0
      %326 = vperm.xlu0 %325, %v288
      %v327 = vpop.permute.xlu0 %326
      %330 = vset.pattern.permute.xlu0 0
      %331 = vperm.xlu0 %330, %v289
      %v332 = vpop.permute.xlu0 %331
      %335 = vset.pattern.permute.xlu0 0
      %336 = vperm.xlu0 %335, %v290
      %v337 = vpop.permute.xlu0 %336
      %340 = vset.pattern.permute.xlu0 0
      %341 = vperm.xlu0 %340, %v291
      %v342 = vpop.permute.xlu0 %341
      %345 = vset.pattern.permute.xlu0 0
      %346 = vperm.xlu0 %345, %v292
      %v347 = vpop.permute.xlu0 %346
      %350 = vset.pattern.permute.xlu0 0
      %351 = vperm.xlu0 %350, %v293
      %v352 = vpop.permute.xlu0 %351
      %355 = vset.pattern.permute.xlu0 0
      %356 = vperm.xlu0 %355, %v294
      %v357 = vpop.permute.xlu0 %356
      %360 = vset.pattern.permute.xlu0 0
      %361 = vperm.xlu0 %360, %v295
      %v362 = vpop.permute.xlu0 %361
      %365 = vset.pattern.permute.xlu0 0
      %366 = vperm.xlu0 %365, %v296
      %v367 = vpop.permute.xlu0 %366
      %370 = vset.pattern.permute.xlu0 0
      %371 = vperm.xlu0 %370, %v297
      %v372 = vpop.permute.xlu0 %371
      %375 = vset.pattern.permute.xlu0 0
      %376 = vperm.xlu0 %375, %v298
      %v377 = vpop.permute.xlu0 %376
      %v395 = vunpack.c.l.b16 %v251
      %v396 = vunpack.c.l.b16 %v252
      %v397 = vunpack.c.l.b16 %v253
      %v398 = vunpack.c.l.b16 %v254
      %v399 = vunpack.c.l.b16 %v255
      %v400 = vunpack.c.l.b16 %v256
      %v401 = vunpack.c.l.b16 %v257
      %v402 = vunpack.c.l.b16 %v258
      %v403 = vunpack.c.l.b16 %v259
      %v404 = vunpack.c.l.b16 %v260
      %v405 = vunpack.c.l.b16 %v261
      %v406 = vunpack.c.l.b16 %v262
      %v407 = vunpack.c.l.b16 %v263
      %v408 = vunpack.c.l.b16 %v264
      %v409 = vunpack.c.l.b16 %v265
      %v410 = vunpack.c.l.b16 %v266
      %v411 = vpack.c.b16 %v396, %v395
      %v412 = vpack.c.b16 %v398, %v397
      %v413 = vpack.c.b16 %v400, %v399
      %v414 = vpack.c.b16 %v402, %v401
      %v415 = vpack.c.b16 %v404, %v403
      %v416 = vpack.c.b16 %v406, %v405
      %v417 = vpack.c.b16 %v408, %v407
      %v418 = vpack.c.b16 %v410, %v409
      %v443 = vunpack.c.l.b16 %v267
      %v444 = vunpack.c.h.b16 %v267
      %v445 = vunpack.c.l.b16 %v268
      %v446 = vunpack.c.h.b16 %v268
      %v447 = vunpack.c.l.b16 %v269
      %v448 = vunpack.c.h.b16 %v269
      %v449 = vunpack.c.l.b16 %v270
      %v450 = vunpack.c.h.b16 %v270
      %v451 = vunpack.c.l.b16 %v271
      %v452 = vunpack.c.h.b16 %v271
      %v453 = vunpack.c.l.b16 %v272
      %v454 = vunpack.c.h.b16 %v272
      %v455 = vunpack.c.l.b16 %v273
      %v456 = vunpack.c.h.b16 %v273
      %v457 = vunpack.c.l.b16 %v274
      %v458 = vunpack.c.h.b16 %v274
      %v459 = vunpack.c.l.b16 %v275
      %v460 = vunpack.c.h.b16 %v275
      %v461 = vunpack.c.l.b16 %v276
      %v462 = vunpack.c.h.b16 %v276
      %v463 = vunpack.c.l.b16 %v277
      %v464 = vunpack.c.h.b16 %v277
      %v465 = vunpack.c.l.b16 %v278
      %v466 = vunpack.c.h.b16 %v278
      %v467 = vunpack.c.l.b16 %v279
      %v468 = vunpack.c.h.b16 %v279
      %v469 = vunpack.c.l.b16 %v280
      %v470 = vunpack.c.h.b16 %v280
      %v471 = vunpack.c.l.b16 %v281
      %v472 = vunpack.c.h.b16 %v281
      %v473 = vunpack.c.l.b16 %v282
      %v474 = vunpack.c.h.b16 %v282
      %v475 = vpack.c.b16 %v445, %v443
      %v476 = vpack.c.b16 %v446, %v444
      %v477 = vpack.c.b16 %v449, %v447
      %v478 = vpack.c.b16 %v450, %v448
      %v479 = vpack.c.b16 %v453, %v451
      %v480 = vpack.c.b16 %v454, %v452
      %v481 = vpack.c.b16 %v457, %v455
      %v482 = vpack.c.b16 %v458, %v456
      %v483 = vpack.c.b16 %v461, %v459
      %v484 = vpack.c.b16 %v462, %v460
      %v485 = vpack.c.b16 %v465, %v463
      %v486 = vpack.c.b16 %v466, %v464
      %v487 = vpack.c.b16 %v469, %v467
      %v488 = vpack.c.b16 %v470, %v468
      %v489 = vpack.c.b16 %v473, %v471
      %v490 = vpack.c.b16 %v474, %v472
      %507 = vmatprep.subr.bf16.mxu0 %v476
      %508 = vmatpush1.bf16.msra.mxu0 %v475
      %509 = vmatprep.subr.bf16.mxu0 %v478
      %510 = vmatpush1.bf16.msra.mxu0 %v477
      %511 = vmatprep.subr.bf16.mxu0 %v480
      %512 = vmatpush1.bf16.msra.mxu0 %v479
      %513 = vmatprep.subr.bf16.mxu0 %v482
      %514 = vmatpush1.bf16.msra.mxu0 %v481
      %515 = vmatprep.subr.bf16.mxu0 %v484
      %516 = vmatpush1.bf16.msra.mxu0 %v483
      %517 = vmatprep.subr.bf16.mxu0 %v486
      %518 = vmatpush1.bf16.msra.mxu0 %v485
      %519 = vmatprep.subr.bf16.mxu0 %v488
      %520 = vmatpush1.bf16.msra.mxu0 %v487
      %521 = vmatprep.subr.bf16.mxu0 %v490
      %522 = vmatpush1.bf16.msra.mxu0 %v489
      %523 = vmatprep.subr.bf16.mxu0 0
      %524 = vmatpush1.bf16.msra.mxu0 0
      %525 = vmatprep.subr.bf16.mxu0 0
      %526 = vmatpush1.bf16.msra.mxu0 0
      %527 = vmatprep.subr.bf16.mxu0 0
      %528 = vmatpush1.bf16.msra.mxu0 0
      %529 = vmatprep.subr.bf16.mxu0 0
      %530 = vmatpush1.bf16.msra.mxu0 0
      %531 = vmatprep.subr.bf16.mxu0 0
      %532 = vmatpush1.bf16.msra.mxu0 0
      %533 = vmatprep.subr.bf16.mxu0 0
      %534 = vmatpush1.bf16.msra.mxu0 0
      %535 = vmatprep.subr.bf16.mxu0 0
      %536 = vmatpush1.bf16.msra.mxu0 0
      %537 = vmatprep.subr.bf16.mxu0 0
      %538 = vmatpush1.bf16.msra.mxu0 0
      %539 = vmatprep.mubr.bf16.mxu0 0
      %540 = vmatmul.mubr.bf16.gmra.mrb[0].mxu0 %v411
      %v541 = vpop.f32.mrb[0].mxu0
      %v542 = vadd.f32 %v302, %v541
      %v543 = vpop.f32.mrb[0].mxu0
      %v544 = vadd.f32 %v302, %v543
      %v545 = vpop.f32.mrb[0].mxu0
      %v546 = vadd.f32 %v307, %v545
      %v547 = vpop.f32.mrb[0].mxu0
      %v548 = vadd.f32 %v307, %v547
      %549 = vmatprep.mubr.bf16.mxu0 0
      %550 = vmatmul.mubr.bf16.gmra.mrb[0].mxu0 %v412
      %v551 = vpop.f32.mrb[0].mxu0
      %v552 = vadd.f32 %v312, %v551
      %v553 = vpop.f32.mrb[0].mxu0
      %v554 = vadd.f32 %v312, %v553
      %v555 = vpop.f32.mrb[0].mxu0
      %v556 = vadd.f32 %v317, %v555
      %v557 = vpop.f32.mrb[0].mxu0
      %v558 = vadd.f32 %v317, %v557
      %559 = vmatprep.mubr.bf16.mxu0 0
      %560 = vmatmul.mubr.bf16.gmra.mrb[0].mxu0 %v413
      %v561 = vpop.f32.mrb[0].mxu0
      %v562 = vadd.f32 %v322, %v561
      %v563 = vpop.f32.mrb[0].mxu0
      %v564 = vadd.f32 %v322, %v563
      %v565 = vpop.f32.mrb[0].mxu0
      %v566 = vadd.f32 %v327, %v565
      %v567 = vpop.f32.mrb[0].mxu0
      %v568 = vadd.f32 %v327, %v567
      %569 = vmatprep.mubr.bf16.mxu0 0
      %570 = vmatmul.mubr.bf16.gmra.mrb[0].mxu0 %v414
      %v571 = vpop.f32.mrb[0].mxu0
      %v572 = vadd.f32 %v332, %v571
      %v573 = vpop.f32.mrb[0].mxu0
      %v574 = vadd.f32 %v332, %v573
      %v575 = vpop.f32.mrb[0].mxu0
      %v576 = vadd.f32 %v337, %v575
      %v577 = vpop.f32.mrb[0].mxu0
      %v578 = vadd.f32 %v337, %v577
      %579 = vmatprep.mubr.bf16.mxu0 0
      %580 = vmatmul.mubr.bf16.gmra.mrb[0].mxu0 %v415
      %v581 = vpop.f32.mrb[0].mxu0
      %v582 = vadd.f32 %v342, %v581
      %v583 = vpop.f32.mrb[0].mxu0
      %v584 = vadd.f32 %v342, %v583
      %v585 = vpop.f32.mrb[0].mxu0
      %v586 = vadd.f32 %v347, %v585
      %v587 = vpop.f32.mrb[0].mxu0
      %v588 = vadd.f32 %v347, %v587
      %589 = vmatprep.mubr.bf16.mxu0 0
      %590 = vmatmul.mubr.bf16.gmra.mrb[0].mxu0 %v416
      %v591 = vpop.f32.mrb[0].mxu0
      %v592 = vadd.f32 %v352, %v591
      %v593 = vpop.f32.mrb[0].mxu0
      %v594 = vadd.f32 %v352, %v593
      %v595 = vpop.f32.mrb[0].mxu0
      %v596 = vadd.f32 %v357, %v595
      %v597 = vpop.f32.mrb[0].mxu0
      %v598 = vadd.f32 %v357, %v597
      %599 = vmatprep.mubr.bf16.mxu0 0
      %600 = vmatmul.mubr.bf16.gmra.mrb[0].mxu0 %v417
      %v601 = vpop.f32.mrb[0].mxu0
      %v602 = vadd.f32 %v362, %v601
      %v603 = vpop.f32.mrb[0].mxu0
      %v604 = vadd.f32 %v362, %v603
      %v605 = vpop.f32.mrb[0].mxu0
      %v606 = vadd.f32 %v367, %v605
      %v607 = vpop.f32.mrb[0].mxu0
      %v608 = vadd.f32 %v367, %v607
      %609 = vmatprep.mubr.bf16.mxu0 0
      %610 = vmatmul.mubr.bf16.gmra.mrb[0].mxu0 %v418
      %v611 = vpop.f32.mrb[0].mxu0
      %v612 = vadd.f32 %v372, %v611
      %v613 = vpop.f32.mrb[0].mxu0
      %v614 = vadd.f32 %v372, %v613
      %v615 = vpop.f32.mrb[0].mxu0
      %v616 = vadd.f32 %v377, %v615
      %v617 = vpop.f32.mrb[0].mxu0
      %v618 = vadd.f32 %v377, %v617
      %619 = vdwg.mxu0
      %v620 = vmul.f32 %v542, %v542
      %v621 = vmul.f32 %v544, %v544
      %v622 = vmul.f32 %v546, %v546
      %v623 = vmul.f32 %v548, %v548
      %v624 = vmul.f32 %v552, %v552
      %v625 = vmul.f32 %v554, %v554
      %v626 = vmul.f32 %v556, %v556
      %v627 = vmul.f32 %v558, %v558
      %v628 = vmul.f32 %v562, %v562
      %v629 = vmul.f32 %v564, %v564
      %v630 = vmul.f32 %v566, %v566
      %v631 = vmul.f32 %v568, %v568
      %v632 = vmul.f32 %v572, %v572
      %v633 = vmul.f32 %v574, %v574
      %v634 = vmul.f32 %v576, %v576
      %v635 = vmul.f32 %v578, %v578
      %v636 = vmul.f32 %v582, %v582
      %v637 = vmul.f32 %v584, %v584
      %v638 = vmul.f32 %v586, %v586
      %v639 = vmul.f32 %v588, %v588
      %v640 = vmul.f32 %v592, %v592
      %v641 = vmul.f32 %v594, %v594
      %v642 = vmul.f32 %v596, %v596
      %v643 = vmul.f32 %v598, %v598
      %v644 = vmul.f32 %v602, %v602
      %v645 = vmul.f32 %v604, %v604
      %v646 = vmul.f32 %v606, %v606
      %v647 = vmul.f32 %v608, %v608
      %v648 = vmul.f32 %v612, %v612
      %v649 = vmul.f32 %v614, %v614
      %v650 = vmul.f32 %v616, %v616
      %v651 = vmul.f32 %v618, %v618
      %v652 = vadd.f32 %v620, %v622
      %v653 = vadd.f32 %v652, %v624
      %v654 = vadd.f32 %v653, %v626
      %v655 = vadd.f32 %v654, %v628
      %v656 = vadd.f32 %v655, %v630
      %v657 = vadd.f32 %v656, %v632
      %v658 = vadd.f32 %v657, %v634
      %v659 = vadd.f32 %v658, %v636
      %v660 = vadd.f32 %v659, %v638
      %v661 = vadd.f32 %v660, %v640
      %v662 = vadd.f32 %v661, %v642
      %v663 = vadd.f32 %v662, %v644
      %v664 = vadd.f32 %v663, %v646
      %v665 = vadd.f32 %v664, %v648
      %v666 = vadd.f32 %v665, %v650
      %v667 = vrot.slane %v666, 4
      %v668 = vadd.f32 %v666, %v667
      %v669 = vrot.slane %v668, 2
      %v670 = vadd.f32 %v668, %v669
      %v671 = vrot.slane %v670, 1
      %v672 = vadd.f32 %v670, %v671
      %v673 = vadd.f32 %v621, %v623
      %v674 = vadd.f32 %v673, %v625
      %v675 = vadd.f32 %v674, %v627
      %v676 = vadd.f32 %v675, %v629
      %v677 = vadd.f32 %v676, %v631
      %v678 = vadd.f32 %v677, %v633
      %v679 = vadd.f32 %v678, %v635
      %v680 = vadd.f32 %v679, %v637
      %v681 = vadd.f32 %v680, %v639
      %v682 = vadd.f32 %v681, %v641
      %v683 = vadd.f32 %v682, %v643
      %v684 = vadd.f32 %v683, %v645
      %v685 = vadd.f32 %v684, %v647
      %v686 = vadd.f32 %v685, %v649
      %v687 = vadd.f32 %v686, %v651
      %v688 = vrot.slane %v687, 4
      %v689 = vadd.f32 %v687, %v688
      %v690 = vrot.slane %v689, 2
      %v691 = vadd.f32 %v689, %v690
      %v692 = vrot.slane %v691, 1
      %v693 = vadd.f32 %v691, %v692
      %v694 = vmax.f32 %v672, 1e-24
      %v695 = vmax.f32 %v693, 1e-24
      %v696 = vrsqrt.pop %v694
      %v697 = vrsqrt.pop %v695
      %v698 = vmul.f32 %v542, %v696
      %v699 = vmul.f32 %v544, %v697
      %v700 = vmul.f32 %v546, %v696
      %v701 = vmul.f32 %v548, %v697
      %v702 = vmul.f32 %v552, %v696
      %v703 = vmul.f32 %v554, %v697
      %v704 = vmul.f32 %v556, %v696
      %v705 = vmul.f32 %v558, %v697
      %v706 = vmul.f32 %v562, %v696
      %v707 = vmul.f32 %v564, %v697
      %v708 = vmul.f32 %v566, %v696
      %v709 = vmul.f32 %v568, %v697
      %v710 = vmul.f32 %v572, %v696
      %v711 = vmul.f32 %v574, %v697
      %v712 = vmul.f32 %v576, %v696
      %v713 = vmul.f32 %v578, %v697
      %v714 = vmul.f32 %v582, %v696
      %v715 = vmul.f32 %v584, %v697
      %v716 = vmul.f32 %v586, %v696
      %v717 = vmul.f32 %v588, %v697
      %v718 = vmul.f32 %v592, %v696
      %v719 = vmul.f32 %v594, %v697
      %v720 = vmul.f32 %v596, %v696
      %v721 = vmul.f32 %v598, %v697
      %v722 = vmul.f32 %v602, %v696
      %v723 = vmul.f32 %v604, %v697
      %v724 = vmul.f32 %v606, %v696
      %v725 = vmul.f32 %v608, %v697
      %v726 = vmul.f32 %v612, %v696
      %v727 = vmul.f32 %v614, %v697
      %v728 = vmul.f32 %v616, %v696
      %v729 = vmul.f32 %v618, %v697
      %730 = vst [vmem:[%s248] sm:$0xff] %v698
      %731 = vst [vmem:[%s248 + $0x8] sm:$0xff] %v699
      %732 = vst [vmem:[%s248 + $0x10] sm:$0xff] %v700
      %733 = vst [vmem:[%s248 + $0x18] sm:$0xff] %v701
      %734 = vst [vmem:[%s248 + $0x20] sm:$0xff] %v702
      %735 = vst [vmem:[%s248 + $0x28] sm:$0xff] %v703
      %736 = vst [vmem:[%s248 + $0x30] sm:$0xff] %v704
      %737 = vst [vmem:[%s248 + $0x38] sm:$0xff] %v705
      %738 = vst [vmem:[%s248 + $0x40] sm:$0xff] %v706
      %739 = vst [vmem:[%s248 + $0x48] sm:$0xff] %v707
      %740 = vst [vmem:[%s248 + $0x50] sm:$0xff] %v708
      %741 = vst [vmem:[%s248 + $0x58] sm:$0xff] %v709
      %742 = vst [vmem:[%s248 + $0x60] sm:$0xff] %v710
      %743 = vst [vmem:[%s248 + $0x68] sm:$0xff] %v711
      %744 = vst [vmem:[%s248 + $0x70] sm:$0xff] %v712
      %745 = vst [vmem:[%s248 + $0x78] sm:$0xff] %v713
      %746 = vst [vmem:[%s248 + $0x80] sm:$0xff] %v714
      %747 = vst [vmem:[%s248 + $0x88] sm:$0xff] %v715
      %748 = vst [vmem:[%s248 + $0x90] sm:$0xff] %v716
      %749 = vst [vmem:[%s248 + $0x98] sm:$0xff] %v717
      %750 = vst [vmem:[%s248 + $0xa0] sm:$0xff] %v718
      %751 = vst [vmem:[%s248 + $0xa8] sm:$0xff] %v719
      %752 = vst [vmem:[%s248 + $0xb0] sm:$0xff] %v720
      %753 = vst [vmem:[%s248 + $0xb8] sm:$0xff] %v721
      %754 = vst [vmem:[%s248 + $0xc0] sm:$0xff] %v722
      %755 = vst [vmem:[%s248 + $0xc8] sm:$0xff] %v723
      %756 = vst [vmem:[%s248 + $0xd0] sm:$0xff] %v724
      %757 = vst [vmem:[%s248 + $0xd8] sm:$0xff] %v725
      %758 = vst [vmem:[%s248 + $0xe0] sm:$0xff] %v726
      %759 = vst [vmem:[%s248 + $0xe8] sm:$0xff] %v727
      %760 = vst [vmem:[%s248 + $0xf0] sm:$0xff] %v728
      %761 = vst [vmem:[%s248 + $0xf8] sm:$0xff] %v729
      %s762 = smul.u32 2, %s19
      %p763 = scmp.lt.s32.totalorder %s18, 1
      %s764 = scalar_select %p763, %s18, 1
      %p765 = scmp.lt.s32.totalorder %s762, 1
      %s766 = scalar_select %p765, %s762, 1
      %s767 = smul.addr %s764, 32
      %s768 = sadd.s32 %s766, %s767
      %s769 = smul.addr %s768, 8
      %s770 = scalar_lea.vmem %s3, %s769
      // Predicated region
      $region33: #{query_encode_forward.3} parent=31 // pred_check
        %p771 = pneg %p126
      $region34: #{query_encode_forward.3} parent=31 // pred_check_branch
        %773 = sbr.rel (%p771) target = $region36
      $region35: #{query_encode_forward.3} parent=31 // pred_region
        %s774 = smul.u32 2, %s19
      $region36: #{query_encode_forward.3} parent=31 // pred_fallthru
        _
    $region32: #{query_encode_forward.3} parent=5 // pred_fallthru
      _
    %p775 = scmp.le.s32.totalorder 2, %s9
    // Predicated region
    $region37: #{query_encode_forward.3} parent=5 // pred_check
      %p776 = pneg %p775
    $region38: #{query_encode_forward.3} parent=5 // pred_check_branch
      %778 = sbr.rel (%p776) target = $region40
    $region39: #{query_encode_forward.3} parent=5 // pred_region
      %s779 = ssub.s32 %s9, 2
      // Predicated region
      $region41: #{query_encode_forward.3} parent=39 // pred_check
        %p780 = pneg %p132
      $region42: #{query_encode_forward.3} parent=39 // pred_check_branch
        %782 = sbr.rel (%p780) target = $region44
      $region43: #{query_encode_forward.3} parent=39 // pred_region
        %s783 = smul.u32 2, %s21
        %p784 = scmp.lt.s32.totalorder %s20, 1
        %s785 = scalar_select %p784, %s20, 1
        %p786 = scmp.lt.s32.totalorder %s783, 1
        %s787 = scalar_select %p786, %s783, 1
        %s788 = smul.addr %s785, 32
        %s789 = sadd.s32 %s787, %s788
        %s790 = smul.addr %s789, 8
        %s791 = scalar_lea.vmem %s3, %s790
      $region44: #{query_encode_forward.3} parent=39 // pred_fallthru
        _
    $region40: #{query_encode_forward.3} parent=5 // pred_fallthru
      _
  $region6: #{query_encode_forward.3} parent=0 // loop_footer
    %s13 = sadd.s32 1, %s9
  $region7: #{query_encode_forward.3} parent=0 // loop_footer_branch
    %8 = sbr.rel target = $region3
  $region8: #{query_encode_forward.3} parent=0 // loop_exit
    _

// kernel: query_encode_forward.2
$region0: #{query_encode_forward.2}
  #allocation0 [shape = 'u32[]', space=smem, size = 0x4, offset = 0x4, fixed_abs, tag = 'smem constant byte address 0x4 - core index']
  #allocation1 [shape = 'u32[144,128]{1,0:T(1,128)}', space=vmem, size = 0x12000, scoped, tag = 'internal scratch']
  #allocation2 [shape = 'f32[8,128]{1,0:T(8,128)}', space=vmem, size = 0x1000, scoped, tag = 'scratch operand']
  #allocation3 [shape = 'f32[8,128]{1,0:T(8,128)}', space=vmem, size = 0x1000, scoped, tag = 'scratch operand']
  #allocation4 [shape = 'f32[8,128]{1,0:T(8,128)}', space=vmem, size = 0x1000, scoped, tag = 'scratch operand']
  #allocation5 [shape = 'f32[64,128]{1,0:T(8,128)}', space=vmem, size = 0x8000, scoped, tag = 'scratch operand']
  #allocation6 [shape = 'f32[64,512]{1,0:T(8,128)}', space=vmem, size = 0x20000, scoped, tag = 'scratch operand']
  %s0 = inlined_call_operand.vmem [shape: s32[8,1], index: 0, kind: input, shape index: {}]
  %s1 = inlined_call_operand.vmem [shape: bf16[64,128], index: 1, kind: input, shape index: {}]
  %s2 = inlined_call_operand.vmem [shape: bf16[128,512], index: 2, kind: input, shape index: {}]
  %s3 = inlined_call_operand.vmem [shape: bf16[128,512], index: 3, kind: input, shape index: {}]
  %s4 = inlined_call_operand.vmem [shape: f32[1,512], index: 4, kind: input, shape index: {}]
  %s5 = inlined_call_operand.vmem [shape: bf16[128,512], index: 5, kind: input, shape index: {}]
  %s6 = inlined_call_operand.vmem [shape: bf16[128,512], index: 6, kind: input, shape index: {}]
  %s7 = inlined_call_operand.vmem [shape: f32[1,512], index: 7, kind: input, shape index: {}]
  %s8 = inlined_call_operand.vmem [shape: bf16[128,512], index: 8, kind: input, shape index: {}]
  %s9 = inlined_call_operand.vmem [shape: bf16[128,512], index: 9, kind: input, shape index: {}]
  %s10 = inlined_call_operand.vmem [shape: f32[1,512], index: 10, kind: input, shape index: {}]
  %s11 = inlined_call_operand.vmem [shape: f32[128,128], index: 11, kind: input, shape index: {}]
  %s12 = inlined_call_operand.vmem [shape: f32[1,128], index: 12, kind: input, shape index: {}]
  %s13 = inlined_call_operand.vmem [shape: f32[8,128], index: 13, kind: output, shape index: {}]
  %s14 = sld [smem:[#allocation0]]
  $region62: #{query_encode_forward.2} parent=0
    _
  %s16 = ssub.s32 1, %s14
  %s17 = scalar_select 0, %s16, %s14
  // Predicated region
  $region2: #{query_encode_forward.2} parent=0 // pred_check
    _
  $region3: #{query_encode_forward.2} parent=0 // pred_check_branch
    %19 = sbr.rel (0) target = $region5
  $region4: #{query_encode_forward.2} parent=0 // pred_region
    _
  $region5: #{query_encode_forward.2} parent=0 // pred_fallthru
    _
  // Predicated region
  $region6: #{query_encode_forward.2} parent=0 // pred_check
    _
  $region7: #{query_encode_forward.2} parent=0 // pred_check_branch
    %21 = sbr.rel (0) target = $region9
  $region8: #{query_encode_forward.2} parent=0 // pred_region
    _
  $region9: #{query_encode_forward.2} parent=0 // pred_fallthru
    _
  // Predicated region
  $region10: #{query_encode_forward.2} parent=0 // pred_check
    _
  $region11: #{query_encode_forward.2} parent=0 // pred_check_branch
    %23 = sbr.rel (0) target = $region13
  $region12: #{query_encode_forward.2} parent=0 // pred_region
    _
  $region13: #{query_encode_forward.2} parent=0 // pred_fallthru
    _
  // Predicated region
  $region14: #{query_encode_forward.2} parent=0 // pred_check
    _
  $region15: #{query_encode_forward.2} parent=0 // pred_check_branch
    %25 = sbr.rel (0) target = $region17
  $region16: #{query_encode_forward.2} parent=0 // pred_region
    _
  $region17: #{query_encode_forward.2} parent=0 // pred_fallthru
    _
  // Predicated region
  $region18: #{query_encode_forward.2} parent=0 // pred_check
    _
  $region19: #{query_encode_forward.2} parent=0 // pred_check_branch
    %27 = sbr.rel (0) target = $region21
  $region20: #{query_encode_forward.2} parent=0 // pred_region
    _
  $region21: #{query_encode_forward.2} parent=0 // pred_fallthru
    _
  // Predicated region
  $region22: #{query_encode_forward.2} parent=0 // pred_check
    _
  $region23: #{query_encode_forward.2} parent=0 // pred_check_branch
    %29 = sbr.rel (0) target = $region25
  $region24: #{query_encode_forward.2} parent=0 // pred_region
    _
  $region25: #{query_encode_forward.2} parent=0 // pred_fallthru
    _
  // Predicated region
  $region26: #{query_encode_forward.2} parent=0 // pred_check
    _
  $region27: #{query_encode_forward.2} parent=0 // pred_check_branch
    %31 = sbr.rel (0) target = $region29
  $region28: #{query_encode_forward.2} parent=0 // pred_region
    _
  $region29: #{query_encode_forward.2} parent=0 // pred_fallthru
    _
  // Predicated region
  $region30: #{query_encode_forward.2} parent=0 // pred_check
    _
  $region31: #{query_encode_forward.2} parent=0 // pred_check_branch
    %33 = sbr.rel (0) target = $region33
  $region32: #{query_encode_forward.2} parent=0 // pred_region
    _
  $region33: #{query_encode_forward.2} parent=0 // pred_fallthru
    _
  // Predicated region
  $region34: #{query_encode_forward.2} parent=0 // pred_check
    _
  $region35: #{query_encode_forward.2} parent=0 // pred_check_branch
    %35 = sbr.rel (0) target = $region37
  $region36: #{query_encode_forward.2} parent=0 // pred_region
    _
  $region37: #{query_encode_forward.2} parent=0 // pred_fallthru
    _
  // Predicated region
  $region38: #{query_encode_forward.2} parent=0 // pred_check
    _
  $region39: #{query_encode_forward.2} parent=0 // pred_check_branch
    %37 = sbr.rel (0) target = $region41
  $region40: #{query_encode_forward.2} parent=0 // pred_region
    _
  $region41: #{query_encode_forward.2} parent=0 // pred_fallthru
    _
  // Predicated region
  $region42: #{query_encode_forward.2} parent=0 // pred_check
    _
  $region43: #{query_encode_forward.2} parent=0 // pred_check_branch
    %39 = sbr.rel (0) target = $region45
  $region44: #{query_encode_forward.2} parent=0 // pred_region
    _
  $region45: #{query_encode_forward.2} parent=0 // pred_fallthru
    _
  // Predicated region
  $region46: #{query_encode_forward.2} parent=0 // pred_check
    _
  $region47: #{query_encode_forward.2} parent=0 // pred_check_branch
    %41 = sbr.rel (0) target = $region49
  $region48: #{query_encode_forward.2} parent=0 // pred_region
    _
  $region49: #{query_encode_forward.2} parent=0 // pred_fallthru
    _
  // Predicated region
  $region50: #{query_encode_forward.2} parent=0 // pred_check
    _
  $region51: #{query_encode_forward.2} parent=0 // pred_check_branch
    %43 = sbr.rel (0) target = $region53
  $region52: #{query_encode_forward.2} parent=0 // pred_region
    _
  $region53: #{query_encode_forward.2} parent=0 // pred_fallthru
    _
  %v45 = vld [vmem:[%s0] sm:$0xff]
  %46 = vst [vmem:[#allocation4] sm:$0xff] 0.0
  %v47 = vld [vmem:[%s1] sm:$0xf]
  %v48 = vld [vmem:[%s1 + $0x4] sm:$0xf]
  %v49 = vld [vmem:[%s1 + $0x8] sm:$0xf]
  %v50 = vld [vmem:[%s1 + $0xc] sm:$0xf]
  %v51 = vld [vmem:[%s1 + $0x10] sm:$0xf]
  %v52 = vld [vmem:[%s1 + $0x14] sm:$0xf]
  %v53 = vld [vmem:[%s1 + $0x18] sm:$0xf]
  %v54 = vld [vmem:[%s1 + $0x1c] sm:$0xf]
  %v55 = vld [vmem:[%s2] sm:$0xff]
  %v56 = vld [vmem:[%s2 + $0x8] sm:$0xff]
  %v57 = vld [vmem:[%s2 + $0x10] sm:$0xff]
  %v58 = vld [vmem:[%s2 + $0x18] sm:$0xff]
  %v59 = vld [vmem:[%s2 + $0x20] sm:$0xff]
  %v60 = vld [vmem:[%s2 + $0x28] sm:$0xff]
  %v61 = vld [vmem:[%s2 + $0x30] sm:$0xff]
  %v62 = vld [vmem:[%s2 + $0x38] sm:$0xff]
  %v63 = vld [vmem:[%s2 + $0x40] sm:$0xff]
  %v64 = vld [vmem:[%s2 + $0x48] sm:$0xff]
  %v65 = vld [vmem:[%s2 + $0x50] sm:$0xff]
  %v66 = vld [vmem:[%s2 + $0x58] sm:$0xff]
  %v67 = vld [vmem:[%s2 + $0x60] sm:$0xff]
  %v68 = vld [vmem:[%s2 + $0x68] sm:$0xff]
  %v69 = vld [vmem:[%s2 + $0x70] sm:$0xff]
  %v70 = vld [vmem:[%s2 + $0x78] sm:$0xff]
  %v71 = vld [vmem:[%s2 + $0x80] sm:$0xff]
  %v72 = vld [vmem:[%s2 + $0x88] sm:$0xff]
  %v73 = vld [vmem:[%s2 + $0x90] sm:$0xff]
  %v74 = vld [vmem:[%s2 + $0x98] sm:$0xff]
  %v75 = vld [vmem:[%s2 + $0xa0] sm:$0xff]
  %v76 = vld [vmem:[%s2 + $0xa8] sm:$0xff]
  %v77 = vld [vmem:[%s2 + $0xb0] sm:$0xff]
  %v78 = vld [vmem:[%s2 + $0xb8] sm:$0xff]
  %v79 = vld [vmem:[%s2 + $0xc0] sm:$0xff]
  %v80 = vld [vmem:[%s2 + $0xc8] sm:$0xff]
  %v81 = vld [vmem:[%s2 + $0xd0] sm:$0xff]
  %v82 = vld [vmem:[%s2 + $0xd8] sm:$0xff]
  %v83 = vld [vmem:[%s2 + $0xe0] sm:$0xff]
  %v84 = vld [vmem:[%s2 + $0xe8] sm:$0xff]
  %v85 = vld [vmem:[%s2 + $0xf0] sm:$0xff]
  %v86 = vld [vmem:[%s2 + $0xf8] sm:$0xff]
  %v87 = vld [vmem:[%s4] sm:$0xf]
  %v89 = vlaneseq
  %v90 = vshrl.u32 %v89, 7
  %v91 = vsub.s32 0, %v90
  %v92 = vrot.slane %v87, %v91
  %v93 = vlaneseq
  %v94 = vshrl.u32 %v93, 7
  %v95 = vsub.s32 1, %v94
  %v96 = vrot.slane %v87, %v95
  %v97 = vlaneseq
  %v98 = vshrl.u32 %v97, 7
  %v99 = vsub.s32 2, %v98
  %v100 = vrot.slane %v87, %v99
  %v101 = vlaneseq
  %v102 = vshrl.u32 %v101, 7
  %v103 = vsub.s32 3, %v102
  %v104 = vrot.slane %v87, %v103
  %v117 = vunpack.c.l.b16 %v47
  %v118 = vunpack.c.l.b16 %v48
  %v119 = vunpack.c.l.b16 %v49
  %v120 = vunpack.c.l.b16 %v50
  %v121 = vunpack.c.l.b16 %v51
  %v122 = vunpack.c.l.b16 %v52
  %v123 = vunpack.c.l.b16 %v53
  %v124 = vunpack.c.l.b16 %v54
  %v125 = vpack.c.b16 %v118, %v117
  %v126 = vpack.c.b16 %v120, %v119
  %v127 = vpack.c.b16 %v122, %v121
  %v128 = vpack.c.b16 %v124, %v123
  %v165 = vunpack.c.l.b16 %v55
  %v166 = vunpack.c.h.b16 %v55
  %v167 = vunpack.c.l.b16 %v56
  %v168 = vunpack.c.h.b16 %v56
  %v169 = vunpack.c.l.b16 %v57
  %v170 = vunpack.c.h.b16 %v57
  %v171 = vunpack.c.l.b16 %v58
  %v172 = vunpack.c.h.b16 %v58
  %v173 = vunpack.c.l.b16 %v59
  %v174 = vunpack.c.h.b16 %v59
  %v175 = vunpack.c.l.b16 %v60
  %v176 = vunpack.c.h.b16 %v60
  %v177 = vunpack.c.l.b16 %v61
  %v178 = vunpack.c.h.b16 %v61
  %v179 = vunpack.c.l.b16 %v62
  %v180 = vunpack.c.h.b16 %v62
  %v181 = vunpack.c.l.b16 %v63
  %v182 = vunpack.c.h.b16 %v63
  %v183 = vunpack.c.l.b16 %v64
  %v184 = vunpack.c.h.b16 %v64
  %v185 = vunpack.c.l.b16 %v65
  %v186 = vunpack.c.h.b16 %v65
  %v187 = vunpack.c.l.b16 %v66
  %v188 = vunpack.c.h.b16 %v66
  %v189 = vunpack.c.l.b16 %v67
  %v190 = vunpack.c.h.b16 %v67
  %v191 = vunpack.c.l.b16 %v68
  %v192 = vunpack.c.h.b16 %v68
  %v193 = vunpack.c.l.b16 %v69
  %v194 = vunpack.c.h.b16 %v69
  %v195 = vunpack.c.l.b16 %v70
  %v196 = vunpack.c.h.b16 %v70
  %v197 = vunpack.c.l.b16 %v71
  %v198 = vunpack.c.h.b16 %v71
  %v199 = vunpack.c.l.b16 %v72
  %v200 = vunpack.c.h.b16 %v72
  %v201 = vunpack.c.l.b16 %v73
  %v202 = vunpack.c.h.b16 %v73
  %v203 = vunpack.c.l.b16 %v74
  %v204 = vunpack.c.h.b16 %v74
  %v205 = vunpack.c.l.b16 %v75
  %v206 = vunpack.c.h.b16 %v75
  %v207 = vunpack.c.l.b16 %v76
  %v208 = vunpack.c.h.b16 %v76
  %v209 = vunpack.c.l.b16 %v77
  %v210 = vunpack.c.h.b16 %v77
  %v211 = vunpack.c.l.b16 %v78
  %v212 = vunpack.c.h.b16 %v78
  %v213 = vunpack.c.l.b16 %v79
  %v214 = vunpack.c.h.b16 %v79
  %v215 = vunpack.c.l.b16 %v80
  %v216 = vunpack.c.h.b16 %v80
  %v217 = vunpack.c.l.b16 %v81
  %v218 = vunpack.c.h.b16 %v81
  %v219 = vunpack.c.l.b16 %v82
  %v220 = vunpack.c.h.b16 %v82
  %v221 = vunpack.c.l.b16 %v83
  %v222 = vunpack.c.h.b16 %v83
  %v223 = vunpack.c.l.b16 %v84
  %v224 = vunpack.c.h.b16 %v84
  %v225 = vunpack.c.l.b16 %v85
  %v226 = vunpack.c.h.b16 %v85
  %v227 = vunpack.c.l.b16 %v86
  %v228 = vunpack.c.h.b16 %v86
  %v229 = vpack.c.b16 %v169, %v165
  %v230 = vpack.c.b16 %v170, %v166
  %v231 = vpack.c.b16 %v171, %v167
  %v232 = vpack.c.b16 %v172, %v168
  %v233 = vpack.c.b16 %v177, %v173
  %v234 = vpack.c.b16 %v178, %v174
  %v235 = vpack.c.b16 %v179, %v175
  %v236 = vpack.c.b16 %v180, %v176
  %v237 = vpack.c.b16 %v185, %v181
  %v238 = vpack.c.b16 %v186, %v182
  %v239 = vpack.c.b16 %v187, %v183
  %v240 = vpack.c.b16 %v188, %v184
  %v241 = vpack.c.b16 %v193, %v189
  %v242 = vpack.c.b16 %v194, %v190
  %v243 = vpack.c.b16 %v195, %v191
  %v244 = vpack.c.b16 %v196, %v192
  %v245 = vpack.c.b16 %v201, %v197
  %v246 = vpack.c.b16 %v202, %v198
  %v247 = vpack.c.b16 %v203, %v199
  %v248 = vpack.c.b16 %v204, %v200
  %v249 = vpack.c.b16 %v209, %v205
  %v250 = vpack.c.b16 %v210, %v206
  %v251 = vpack.c.b16 %v211, %v207
  %v252 = vpack.c.b16 %v212, %v208
  %v253 = vpack.c.b16 %v217, %v213
  %v254 = vpack.c.b16 %v218, %v214
  %v255 = vpack.c.b16 %v219, %v215
  %v256 = vpack.c.b16 %v220, %v216
  %v257 = vpack.c.b16 %v225, %v221
  %v258 = vpack.c.b16 %v226, %v222
  %v259 = vpack.c.b16 %v227, %v223
  %v260 = vpack.c.b16 %v228, %v224
  %293 = vmatprep.subr.bf16.mxu0 %v230
  %294 = vmatpush1.bf16.msra.mxu0 %v229
  %295 = vmatprep.subr.bf16.mxu0 %v234
  %296 = vmatpush1.bf16.msra.mxu0 %v233
  %297 = vmatprep.subr.bf16.mxu0 %v238
  %298 = vmatpush1.bf16.msra.mxu0 %v237
  %299 = vmatprep.subr.bf16.mxu0 %v242
  %300 = vmatpush1.bf16.msra.mxu0 %v241
  %301 = vmatprep.subr.bf16.mxu0 %v246
  %302 = vmatpush1.bf16.msra.mxu0 %v245
  %303 = vmatprep.subr.bf16.mxu0 %v250
  %304 = vmatpush1.bf16.msra.mxu0 %v249
  %305 = vmatprep.subr.bf16.mxu0 %v254
  %306 = vmatpush1.bf16.msra.mxu0 %v253
  %307 = vmatprep.subr.bf16.mxu0 %v258
  %308 = vmatpush1.bf16.msra.mxu0 %v257
  %309 = vmatprep.subr.bf16.mxu0 0
  %310 = vmatpush1.bf16.msra.mxu0 0
  %311 = vmatprep.subr.bf16.mxu0 0
  %312 = vmatpush1.bf16.msra.mxu0 0
  %313 = vmatprep.subr.bf16.mxu0 0
  %314 = vmatpush1.bf16.msra.mxu0 0
  %315 = vmatprep.subr.bf16.mxu0 0
  %316 = vmatpush1.bf16.msra.mxu0 0
  %317 = vmatprep.subr.bf16.mxu0 0
  %318 = vmatpush1.bf16.msra.mxu0 0
  %319 = vmatprep.subr.bf16.mxu0 0
  %320 = vmatpush1.bf16.msra.mxu0 0
  %321 = vmatprep.subr.bf16.mxu0 0
  %322 = vmatpush1.bf16.msra.mxu0 0
  %323 = vmatprep.subr.bf16.mxu0 0
  %324 = vmatpush1.bf16.msra.mxu0 0
  %325 = vmatprep.mubr.bf16.mxu0 0
  %326 = vmatmul.mubr.bf16.gmra.mrb[0].mxu0 %v125
  %v327 = vpop.f32.mrb[0].mxu0
  %v328 = vadd.f32 %v92, %v327
  %v329 = vpop.f32.mrb[0].mxu0
  %v330 = vadd.f32 %v96, %v329
  %v331 = vpop.f32.mrb[0].mxu0
  %v332 = vadd.f32 %v92, %v331
  %v333 = vpop.f32.mrb[0].mxu0
  %v334 = vadd.f32 %v96, %v333
  %335 = vmatprep.mubr.bf16.mxu0 0
  %336 = vmatmul.mubr.bf16.gmra.mrb[0].mxu0 %v126
  %v337 = vpop.f32.mrb[0].mxu0
  %v338 = vadd.f32 %v92, %v337
  %v339 = vpop.f32.mrb[0].mxu0
  %v340 = vadd.f32 %v96, %v339
  %v341 = vpop.f32.mrb[0].mxu0
  %v342 = vadd.f32 %v92, %v341
  %v343 = vpop.f32.mrb[0].mxu0
  %v344 = vadd.f32 %v96, %v343
  %345 = vmatprep.mubr.bf16.mxu0 0
  %346 = vmatmul.mubr.bf16.gmra.mrb[0].mxu0 %v127
  %v347 = vpop.f32.mrb[0].mxu0
  %v348 = vadd.f32 %v92, %v347
  %v349 = vpop.f32.mrb[0].mxu0
  %v350 = vadd.f32 %v96, %v349
  %v351 = vpop.f32.mrb[0].mxu0
  %v352 = vadd.f32 %v92, %v351
  %v353 = vpop.f32.mrb[0].mxu0
  %v354 = vadd.f32 %v96, %v353
  %355 = vmatprep.mubr.bf16.mxu0 0
  %356 = vmatmul.mubr.bf16.gmra.mrb[0].mxu0 %v128
  %v357 = vpop.f32.mrb[0].mxu0
  %v358 = vadd.f32 %v92, %v357
  %v359 = vpop.f32.mrb[0].mxu0
  %v360 = vadd.f32 %v96, %v359
  %v361 = vpop.f32.mrb[0].mxu0
  %v362 = vadd.f32 %v92, %v361
  %v363 = vpop.f32.mrb[0].mxu0
  %v364 = vadd.f32 %v96, %v363
  %365 = vdwg.mxu0
  %366 = vmatprep.subr.bf16.mxu0 %v232
  %367 = vmatpush1.bf16.msra.mxu0 %v231
  %368 = vmatprep.subr.bf16.mxu0 %v236
  %369 = vmatpush1.bf16.msra.mxu0 %v235
  %370 = vmatprep.subr.bf16.mxu0 %v240
  %371 = vmatpush1.bf16.msra.mxu0 %v239
  %372 = vmatprep.subr.bf16.mxu0 %v244
  %373 = vmatpush1.bf16.msra.mxu0 %v243
  %374 = vmatprep.subr.bf16.mxu0 %v248
  %375 = vmatpush1.bf16.msra.mxu0 %v247
  %376 = vmatprep.subr.bf16.mxu0 %v252
  %377 = vmatpush1.bf16.msra.mxu0 %v251
  %378 = vmatprep.subr.bf16.mxu0 %v256
  %379 = vmatpush1.bf16.msra.mxu0 %v255
  %380 = vmatprep.subr.bf16.mxu0 %v260
  %381 = vmatpush1.bf16.msra.mxu0 %v259
  %382 = vmatprep.subr.bf16.mxu0 0
  %383 = vmatpush1.bf16.msra.mxu0 0
  %384 = vmatprep.subr.bf16.mxu0 0
  %385 = vmatpush1.bf16.msra.mxu0 0
  %386 = vmatprep.subr.bf16.mxu0 0
  %387 = vmatpush1.bf16.msra.mxu0 0
  %388 = vmatprep.subr.bf16.mxu0 0
  %389 = vmatpush1.bf16.msra.mxu0 0
  %390 = vmatprep.subr.bf16.mxu0 0
  %391 = vmatpush1.bf16.msra.mxu0 0
  %392 = vmatprep.subr.bf16.mxu0 0
  %393 = vmatpush1.bf16.msra.mxu0 0
  %394 = vmatprep.subr.bf16.mxu0 0
  %395 = vmatpush1.bf16.msra.mxu0 0
  %396 = vmatprep.subr.bf16.mxu0 0
  %397 = vmatpush1.bf16.msra.mxu0 0
  %398 = vmatprep.mubr.bf16.mxu0 0
  %399 = vmatmul.mubr.bf16.gmra.mrb[0].mxu0 %v125
  %v400 = vpop.f32.mrb[0].mxu0
  %v401 = vadd.f32 %v100, %v400
  %v402 = vpop.f32.mrb[0].mxu0
  %v403 = vadd.f32 %v104, %v402
  %v404 = vpop.f32.mrb[0].mxu0
  %v405 = vadd.f32 %v100, %v404
  %v406 = vpop.f32.mrb[0].mxu0
  %v407 = vadd.f32 %v104, %v406
  %408 = vmatprep.mubr.bf16.mxu0 0
  %409 = vmatmul.mubr.bf16.gmra.mrb[0].mxu0 %v126
  %v410 = vpop.f32.mrb[0].mxu0
  %v411 = vadd.f32 %v100, %v410
  %v412 = vpop.f32.mrb[0].mxu0
  %v413 = vadd.f32 %v104, %v412
  %v414 = vpop.f32.mrb[0].mxu0
  %v415 = vadd.f32 %v100, %v414
  %v416 = vpop.f32.mrb[0].mxu0
  %v417 = vadd.f32 %v104, %v416
  %418 = vmatprep.mubr.bf16.mxu0 0
  %419 = vmatmul.mubr.bf16.gmra.mrb[0].mxu0 %v127
  %v420 = vpop.f32.mrb[0].mxu0
  %v421 = vadd.f32 %v100, %v420
  %v422 = vpop.f32.mrb[0].mxu0
  %v423 = vadd.f32 %v104, %v422
  %v424 = vpop.f32.mrb[0].mxu0
  %v425 = vadd.f32 %v100, %v424
  %v426 = vpop.f32.mrb[0].mxu0
  %v427 = vadd.f32 %v104, %v426
  %428 = vmatprep.mubr.bf16.mxu0 0
  %429 = vmatmul.mubr.bf16.gmra.mrb[0].mxu0 %v128
  %v430 = vpop.f32.mrb[0].mxu0
  %v431 = vadd.f32 %v100, %v430
  %v432 = vpop.f32.mrb[0].mxu0
  %v433 = vadd.f32 %v104, %v432
  %v434 = vpop.f32.mrb[0].mxu0
  %v435 = vadd.f32 %v100, %v434
  %v436 = vpop.f32.mrb[0].mxu0
  %v437 = vadd.f32 %v104, %v436
  %438 = vdwg.mxu0
  %439 = vst [vmem:[#allocation6] sm:$0xff] %v328
  %440 = vst [vmem:[#allocation6 + $0x8] sm:$0xff] %v330
  %441 = vst [vmem:[#allocation6 + $0x10] sm:$0xff] %v401
  %442 = vst [vmem:[#allocation6 + $0x18] sm:$0xff] %v403
  %443 = vst [vmem:[#allocation6 + $0x20] sm:$0xff] %v332
  %444 = vst [vmem:[#allocation6 + $0x28] sm:$0xff] %v334
  %445 = vst [vmem:[#allocation6 + $0x30] sm:$0xff] %v405
  %446 = vst [vmem:[#allocation6 + $0x38] sm:$0xff] %v407
  %447 = vst [vmem:[#allocation6 + $0x40] sm:$0xff] %v338
  %448 = vst [vmem:[#allocation6 + $0x48] sm:$0xff] %v340
  %449 = vst [vmem:[#allocation6 + $0x50] sm:$0xff] %v411
  %450 = vst [vmem:[#allocation6 + $0x58] sm:$0xff] %v413
  %451 = vst [vmem:[#allocation6 + $0x60] sm:$0xff] %v342
  %452 = vst [vmem:[#allocation6 + $0x68] sm:$0xff] %v344
  %453 = vst [vmem:[#allocation6 + $0x70] sm:$0xff] %v415
  %454 = vst [vmem:[#allocation6 + $0x78] sm:$0xff] %v417
  %455 = vst [vmem:[#allocation6 + $0x80] sm:$0xff] %v348
  %456 = vst [vmem:[#allocation6 + $0x88] sm:$0xff] %v350
  %457 = vst [vmem:[#allocation6 + $0x90] sm:$0xff] %v421
  %458 = vst [vmem:[#allocation6 + $0x98] sm:$0xff] %v423
  %459 = vst [vmem:[#allocation6 + $0xa0] sm:$0xff] %v352
  %460 = vst [vmem:[#allocation6 + $0xa8] sm:$0xff] %v354
  %461 = vst [vmem:[#allocation6 + $0xb0] sm:$0xff] %v425
  %462 = vst [vmem:[#allocation6 + $0xb8] sm:$0xff] %v427
  %463 = vst [vmem:[#allocation6 + $0xc0] sm:$0xff] %v358
  %464 = vst [vmem:[#allocation6 + $0xc8] sm:$0xff] %v360
  %465 = vst [vmem:[#allocation6 + $0xd0] sm:$0xff] %v431
  %466 = vst [vmem:[#allocation6 + $0xd8] sm:$0xff] %v433
  %467 = vst [vmem:[#allocation6 + $0xe0] sm:$0xff] %v362
  %468 = vst [vmem:[#allocation6 + $0xe8] sm:$0xff] %v364
  %469 = vst [vmem:[#allocation6 + $0xf0] sm:$0xff] %v435
  %470 = vst [vmem:[#allocation6 + $0xf8] sm:$0xff] %v437
  %471 = vst [vmem:[#allocation2] sm:$0xff] 0.0
  %472 = vst [vmem:[#allocation3] sm:$0xff] 0.0
  %s473 = smul.u32 0, 4
  %s474 = smul.addr %s473, 8
  %s475 = scalar_lea.vmem [#allocation6], %s474
  %v476 = vld [vmem:[%s475] sm:$0xff]
  %v477 = vld [vmem:[%s475 + $0x8] sm:$0xff]
  %v478 = vld [vmem:[%s475 + $0x10] sm:$0xff]
  %v479 = vld [vmem:[%s475 + $0x18] sm:$0xff]
  %v480 = vld [vmem:[#allocation2] sm:$0xff]
  %v481 = vpack.c.bf16 %v480, %v480
  %v482 = vld [vmem:[%s3] sm:$0xff]
  %v483 = vld [vmem:[%s3 + $0x8] sm:$0xff]
  %v484 = vld [vmem:[%s3 + $0x10] sm:$0xff]
  %v485 = vld [vmem:[%s3 + $0x18] sm:$0xff]
  %v486 = vld [vmem:[%s3 + $0x20] sm:$0xff]
  %v487 = vld [vmem:[%s3 + $0x28] sm:$0xff]
  %v488 = vld [vmem:[%s3 + $0x30] sm:$0xff]
  %v489 = vld [vmem:[%s3 + $0x38] sm:$0xff]
  %v490 = vld [vmem:[%s3 + $0x40] sm:$0xff]
  %v491 = vld [vmem:[%s3 + $0x48] sm:$0xff]
  %v492 = vld [vmem:[%s3 + $0x50] sm:$0xff]
  %v493 = vld [vmem:[%s3 + $0x58] sm:$0xff]
  %v494 = vld [vmem:[%s3 + $0x60] sm:$0xff]
  %v495 = vld [vmem:[%s3 + $0x68] sm:$0xff]
  %v496 = vld [vmem:[%s3 + $0x70] sm:$0xff]
  %v497 = vld [vmem:[%s3 + $0x78] sm:$0xff]
  %v498 = vld [vmem:[%s3 + $0x80] sm:$0xff]
  %v499 = vld [vmem:[%s3 + $0x88] sm:$0xff]
  %v500 = vld [vmem:[%s3 + $0x90] sm:$0xff]
  %v501 = vld [vmem:[%s3 + $0x98] sm:$0xff]
  %v502 = vld [vmem:[%s3 + $0xa0] sm:$0xff]
  %v503 = vld [vmem:[%s3 + $0xa8] sm:$0xff]
  %v504 = vld [vmem:[%s3 + $0xb0] sm:$0xff]
  %v505 = vld [vmem:[%s3 + $0xb8] sm:$0xff]
  %v506 = vld [vmem:[%s3 + $0xc0] sm:$0xff]
  %v507 = vld [vmem:[%s3 + $0xc8] sm:$0xff]
  %v508 = vld [vmem:[%s3 + $0xd0] sm:$0xff]
  %v509 = vld [vmem:[%s3 + $0xd8] sm:$0xff]
  %v510 = vld [vmem:[%s3 + $0xe0] sm:$0xff]
  %v511 = vld [vmem:[%s3 + $0xe8] sm:$0xff]
  %v512 = vld [vmem:[%s3 + $0xf0] sm:$0xff]
  %v513 = vld [vmem:[%s3 + $0xf8] sm:$0xff]
  %v546 = vunpack.c.l.b16 %v482
  %v547 = vunpack.c.h.b16 %v482
  %v548 = vunpack.c.l.b16 %v483
  %v549 = vunpack.c.h.b16 %v483
  %v550 = vunpack.c.l.b16 %v484
  %v551 = vunpack.c.h.b16 %v484
  %v552 = vunpack.c.l.b16 %v485
  %v553 = vunpack.c.h.b16 %v485
  %v554 = vunpack.c.l.b16 %v486
  %v555 = vunpack.c.h.b16 %v486
  %v556 = vunpack.c.l.b16 %v487
  %v557 = vunpack.c.h.b16 %v487
  %v558 = vunpack.c.l.b16 %v488
  %v559 = vunpack.c.h.b16 %v488
  %v560 = vunpack.c.l.b16 %v489
  %v561 = vunpack.c.h.b16 %v489
  %v562 = vunpack.c.l.b16 %v490
  %v563 = vunpack.c.h.b16 %v490
  %v564 = vunpack.c.l.b16 %v491
  %v565 = vunpack.c.h.b16 %v491
  %v566 = vunpack.c.l.b16 %v492
  %v567 = vunpack.c.h.b16 %v492
  %v568 = vunpack.c.l.b16 %v493
  %v569 = vunpack.c.h.b16 %v493
  %v570 = vunpack.c.l.b16 %v494
  %v571 = vunpack.c.h.b16 %v494
  %v572 = vunpack.c.l.b16 %v495
  %v573 = vunpack.c.h.b16 %v495
  %v574 = vunpack.c.l.b16 %v496
  %v575 = vunpack.c.h.b16 %v496
  %v576 = vunpack.c.l.b16 %v497
  %v577 = vunpack.c.h.b16 %v497
  %v578 = vunpack.c.l.b16 %v498
  %v579 = vunpack.c.h.b16 %v498
  %v580 = vunpack.c.l.b16 %v499
  %v581 = vunpack.c.h.b16 %v499
  %v582 = vunpack.c.l.b16 %v500
  %v583 = vunpack.c.h.b16 %v500
  %v584 = vunpack.c.l.b16 %v501
  %v585 = vunpack.c.h.b16 %v501
  %v586 = vunpack.c.l.b16 %v502
  %v587 = vunpack.c.h.b16 %v502
  %v588 = vunpack.c.l.b16 %v503
  %v589 = vunpack.c.h.b16 %v503
  %v590 = vunpack.c.l.b16 %v504
  %v591 = vunpack.c.h.b16 %v504
  %v592 = vunpack.c.l.b16 %v505
  %v593 = vunpack.c.h.b16 %v505
  %v594 = vunpack.c.l.b16 %v506
  %v595 = vunpack.c.h.b16 %v506
  %v596 = vunpack.c.l.b16 %v507
  %v597 = vunpack.c.h.b16 %v507
  %v598 = vunpack.c.l.b16 %v508
  %v599 = vunpack.c.h.b16 %v508
  %v600 = vunpack.c.l.b16 %v509
  %v601 = vunpack.c.h.b16 %v509
  %v602 = vunpack.c.l.b16 %v510
  %v603 = vunpack.c.h.b16 %v510
  %v604 = vunpack.c.l.b16 %v511
  %v605 = vunpack.c.h.b16 %v511
  %v606 = vunpack.c.l.b16 %v512
  %v607 = vunpack.c.h.b16 %v512
  %v608 = vunpack.c.l.b16 %v513
  %v609 = vunpack.c.h.b16 %v513
  %v610 = vpack.c.b16 %v550, %v546
  %v611 = vpack.c.b16 %v551, %v547
  %v612 = vpack.c.b16 %v552, %v548
  %v613 = vpack.c.b16 %v553, %v549
  %v614 = vpack.c.b16 %v558, %v554
  %v615 = vpack.c.b16 %v559, %v555
  %v616 = vpack.c.b16 %v560, %v556
  %v617 = vpack.c.b16 %v561, %v557
  %v618 = vpack.c.b16 %v566, %v562
  %v619 = vpack.c.b16 %v567, %v563
  %v620 = vpack.c.b16 %v568, %v564
  %v621 = vpack.c.b16 %v569, %v565
  %v622 = vpack.c.b16 %v574, %v570
  %v623 = vpack.c.b16 %v575, %v571
  %v624 = vpack.c.b16 %v576, %v572
  %v625 = vpack.c.b16 %v577, %v573
  %v626 = vpack.c.b16 %v582, %v578
  %v627 = vpack.c.b16 %v583, %v579
  %v628 = vpack.c.b16 %v584, %v580
  %v629 = vpack.c.b16 %v585, %v581
  %v630 = vpack.c.b16 %v590, %v586
  %v631 = vpack.c.b16 %v591, %v587
  %v632 = vpack.c.b16 %v592, %v588
  %v633 = vpack.c.b16 %v593, %v589
  %v634 = vpack.c.b16 %v598, %v594
  %v635 = vpack.c.b16 %v599, %v595
  %v636 = vpack.c.b16 %v600, %v596
  %v637 = vpack.c.b16 %v601, %v597
  %v638 = vpack.c.b16 %v606, %v602
  %v639 = vpack.c.b16 %v607, %v603
  %v640 = vpack.c.b16 %v608, %v604
  %v641 = vpack.c.b16 %v609, %v605
  %674 = vmatprep.subr.bf16.mxu0 %v611
  %675 = vmatpush1.bf16.msra.mxu0 %v610
  %676 = vmatprep.subr.bf16.mxu0 %v615
  %677 = vmatpush1.bf16.msra.mxu0 %v614
  %678 = vmatprep.subr.bf16.mxu0 %v619
  %679 = vmatpush1.bf16.msra.mxu0 %v618
  %680 = vmatprep.subr.bf16.mxu0 %v623
  %681 = vmatpush1.bf16.msra.mxu0 %v622
  %682 = vmatprep.subr.bf16.mxu0 %v627
  %683 = vmatpush1.bf16.msra.mxu0 %v626
  %684 = vmatprep.subr.bf16.mxu0 %v631
  %685 = vmatpush1.bf16.msra.mxu0 %v630
  %686 = vmatprep.subr.bf16.mxu0 %v635
  %687 = vmatpush1.bf16.msra.mxu0 %v634
  %688 = vmatprep.subr.bf16.mxu0 %v639
  %689 = vmatpush1.bf16.msra.mxu0 %v638
  %690 = vmatprep.subr.bf16.mxu0 0
  %691 = vmatpush1.bf16.msra.mxu0 0
  %692 = vmatprep.subr.bf16.mxu0 0
  %693 = vmatpush1.bf16.msra.mxu0 0
  %694 = vmatprep.subr.bf16.mxu0 0
  %695 = vmatpush1.bf16.msra.mxu0 0
  %696 = vmatprep.subr.bf16.mxu0 0
  %697 = vmatpush1.bf16.msra.mxu0 0
  %698 = vmatprep.subr.bf16.mxu0 0
  %699 = vmatpush1.bf16.msra.mxu0 0
  %700 = vmatprep.subr.bf16.mxu0 0
  %701 = vmatpush1.bf16.msra.mxu0 0
  %702 = vmatprep.subr.bf16.mxu0 0
  %703 = vmatpush1.bf16.msra.mxu0 0
  %704 = vmatprep.subr.bf16.mxu0 0
  %705 = vmatpush1.bf16.msra.mxu0 0
  %706 = vmatprep.mubr.bf16.mxu0 0
  %707 = vmatmul.mubr.bf16.gmra.mrb[0].mxu0 %v481
  %v708 = vpop.f32.mrb[0].mxu0
  %v709 = vadd.f32 0.0, %v708
  %v710 = vpop.f32.mrb[0].mxu0
  %v711 = vadd.f32 0.0, %v710
  %v712 = vpop.f32.mrb[0].mxu0
  %v713 = vpop.f32.mrb[0].mxu0
  %714 = vdwg.mxu0
  %715 = vmatprep.subr.bf16.mxu0 %v613
  %716 = vmatpush1.bf16.msra.mxu0 %v612
  %717 = vmatprep.subr.bf16.mxu0 %v617
  %718 = vmatpush1.bf16.msra.mxu0 %v616
  %719 = vmatprep.subr.bf16.mxu0 %v621
  %720 = vmatpush1.bf16.msra.mxu0 %v620
  %721 = vmatprep.subr.bf16.mxu0 %v625
  %722 = vmatpush1.bf16.msra.mxu0 %v624
  %723 = vmatprep.subr.bf16.mxu0 %v629
  %724 = vmatpush1.bf16.msra.mxu0 %v628
  %725 = vmatprep.subr.bf16.mxu0 %v633
  %726 = vmatpush1.bf16.msra.mxu0 %v632
  %727 = vmatprep.subr.bf16.mxu0 %v637
  %728 = vmatpush1.bf16.msra.mxu0 %v636
  %729 = vmatprep.subr.bf16.mxu0 %v641
  %730 = vmatpush1.bf16.msra.mxu0 %v640
  %731 = vmatprep.subr.bf16.mxu0 0
  %732 = vmatpush1.bf16.msra.mxu0 0
  %733 = vmatprep.subr.bf16.mxu0 0
  %734 = vmatpush1.bf16.msra.mxu0 0
  %735 = vmatprep.subr.bf16.mxu0 0
  %736 = vmatpush1.bf16.msra.mxu0 0
  %737 = vmatprep.subr.bf16.mxu0 0
  %738 = vmatpush1.bf16.msra.mxu0 0
  %739 = vmatprep.subr.bf16.mxu0 0
  %740 = vmatpush1.bf16.msra.mxu0 0
  %741 = vmatprep.subr.bf16.mxu0 0
  %742 = vmatpush1.bf16.msra.mxu0 0
  %743 = vmatprep.subr.bf16.mxu0 0
  %744 = vmatpush1.bf16.msra.mxu0 0
  %745 = vmatprep.subr.bf16.mxu0 0
  %746 = vmatpush1.bf16.msra.mxu0 0
  %747 = vmatprep.mubr.bf16.mxu0 0
  %748 = vmatmul.mubr.bf16.gmra.mrb[0].mxu0 %v481
  %v749 = vpop.f32.mrb[0].mxu0
  %v750 = vadd.f32 0.0, %v749
  %v751 = vpop.f32.mrb[0].mxu0
  %v752 = vadd.f32 0.0, %v751
  %v753 = vpop.f32.mrb[0].mxu0
  %v754 = vpop.f32.mrb[0].mxu0
  %755 = vdwg.mxu0
  %v756 = vadd.f32 %v476, %v709
  %v757 = vadd.f32 %v477, %v711
  %v758 = vadd.f32 %v478, %v750
  %v759 = vadd.f32 %v479, %v752
  %v760 = vxor.u32 %v756, 2147483648
  %v761 = vxor.u32 %v757, 2147483648
  %v762 = vmul.f32 %v760, 1.442695
  %v763 = vpow.pop %v762
  %v764 = vmul.f32 %v761, 1.442695
  %v765 = vpow.pop %v764
  %v766 = vadd.f32 %v763, 1.0
  %v767 = vadd.f32 %v765, 1.0
  %v768 = vrcp.pop %v766
  %v769 = vmul.f32 1.0, %v768
  %v770 = vrcp.pop %v767
  %v771 = vmul.f32 1.0, %v770
  %v772 = vtanh.pop %v758
  %v773 = vxor.u32 %v759, 2147483648
  %v774 = vmul.f32 %v773, 1.442695
  %v775 = vpow.pop %v774
  %v776 = vadd.f32 %v775, 1.0
  %v777 = vrcp.pop %v776
  %v778 = vmul.f32 1.0, %v777
  %v779 = vld [vmem:[#allocation3] sm:$0xff]
  %v780 = vmul.f32 %v771, %v779
  %v781 = vmul.f32 %v769, %v772
  %v782 = vadd.f32 %v780, %v781
  %v783 = vtanh.pop %v782
  %v784 = vmul.f32 %v778, %v783
  %785 = vst [vmem:[#allocation3] sm:$0xff] %v782
  %786 = vst [vmem:[#allocation2] sm:$0xff] %v784
  %787 = vst [vmem:[#allocation5] sm:$0xff] %v784
  %s788 = smul.u32 1, 4
  %s789 = smul.addr %s788, 8
  %s790 = scalar_lea.vmem [#allocation6], %s789
  %v791 = vld [vmem:[%s790] sm:$0xff]
  %v792 = vld [vmem:[%s790 + $0x8] sm:$0xff]
  %v793 = vld [vmem:[%s790 + $0x10] sm:$0xff]
  %v794 = vld [vmem:[%s790 + $0x18] sm:$0xff]
  %v795 = vld [vmem:[#allocation2] sm:$0xff]
  %v796 = vpack.c.bf16 %v795, %v795
  %v797 = vld [vmem:[%s3] sm:$0xff]
  %v798 = vld [vmem:[%s3 + $0x8] sm:$0xff]
  %v799 = vld [vmem:[%s3 + $0x10] sm:$0xff]
  %v800 = vld [vmem:[%s3 + $0x18] sm:$0xff]
  %v801 = vld [vmem:[%s3 + $0x20] sm:$0xff]
  %v802 = vld [vmem:[%s3 + $0x28] sm:$0xff]
  %v803 = vld [vmem:[%s3 + $0x30] sm:$0xff]
  %v804 = vld [vmem:[%s3 + $0x38] sm:$0xff]
  %v805 = vld [vmem:[%s3 + $0x40] sm:$0xff]
  %v806 = vld [vmem:[%s3 + $0x48] sm:$0xff]
  %v807 = vld [vmem:[%s3 + $0x50] sm:$0xff]
  %v808 = vld [vmem:[%s3 + $0x58] sm:$0xff]
  %v809 = vld [vmem:[%s3 + $0x60] sm:$0xff]
  %v810 = vld [vmem:[%s3 + $0x68] sm:$0xff]
  %v811 = vld [vmem:[%s3 + $0x70] sm:$0xff]
  %v812 = vld [vmem:[%s3 + $0x78] sm:$0xff]
  %v813 = vld [vmem:[%s3 + $0x80] sm:$0xff]
  %v814 = vld [vmem:[%s3 + $0x88] sm:$0xff]
  %v815 = vld [vmem:[%s3 + $0x90] sm:$0xff]
  %v816 = vld [vmem:[%s3 + $0x98] sm:$0xff]
  %v817 = vld [vmem:[%s3 + $0xa0] sm:$0xff]
  %v818 = vld [vmem:[%s3 + $0xa8] sm:$0xff]
  %v819 = vld [vmem:[%s3 + $0xb0] sm:$0xff]
  %v820 = vld [vmem:[%s3 + $0xb8] sm:$0xff]
  %v821 = vld [vmem:[%s3 + $0xc0] sm:$0xff]
  %v822 = vld [vmem:[%s3 + $0xc8] sm:$0xff]
  %v823 = vld [vmem:[%s3 + $0xd0] sm:$0xff]
  %v824 = vld [vmem:[%s3 + $0xd8] sm:$0xff]
  %v825 = vld [vmem:[%s3 + $0xe0] sm:$0xff]
  %v826 = vld [vmem:[%s3 + $0xe8] sm:$0xff]
  %v827 = vld [vmem:[%s3 + $0xf0] sm:$0xff]
  %v828 = vld [vmem:[%s3 + $0xf8] sm:$0xff]
  %v861 = vunpack.c.l.b16 %v797
  %v862 = vunpack.c.h.b16 %v797
  %v863 = vunpack.c.l.b16 %v798
  %v864 = vunpack.c.h.b16 %v798
  %v865 = vunpack.c.l.b16 %v799
  %v866 = vunpack.c.h.b16 %v799
  %v867 = vunpack.c.l.b16 %v800
  %v868 = vunpack.c.h.b16 %v800
  %v869 = vunpack.c.l.b16 %v801
  %v870 = vunpack.c.h.b16 %v801
  %v871 = vunpack.c.l.b16 %v802
  %v872 = vunpack.c.h.b16 %v802
  %v873 = vunpack.c.l.b16 %v803
  %v874 = vunpack.c.h.b16 %v803
  %v875 = vunpack.c.l.b16 %v804
  %v876 = vunpack.c.h.b16 %v804
  %v877 = vunpack.c.l.b16 %v805
  %v878 = vunpack.c.h.b16 %v805
  %v879 = vunpack.c.l.b16 %v806
  %v880 = vunpack.c.h.b16 %v806
  %v881 = vunpack.c.l.b16 %v807
  %v882 = vunpack.c.h.b16 %v807
  %v883 = vunpack.c.l.b16 %v808
  %v884 = vunpack.c.h.b16 %v808
  %v885 = vunpack.c.l.b16 %v809
  %v886 = vunpack.c.h.b16 %v809
  %v887 = vunpack.c.l.b16 %v810
  %v888 = vunpack.c.h.b16 %v810
  %v889 = vunpack.c.l.b16 %v811
  %v890 = vunpack.c.h.b16 %v811
  %v891 = vunpack.c.l.b16 %v812
  %v892 = vunpack.c.h.b16 %v812
  %v893 = vunpack.c.l.b16 %v813
  %v894 = vunpack.c.h.b16 %v813
  %v895 = vunpack.c.l.b16 %v814
  %v896 = vunpack.c.h.b16 %v814
  %v897 = vunpack.c.l.b16 %v815
  %v898 = vunpack.c.h.b16 %v815
  %v899 = vunpack.c.l.b16 %v816
  %v900 = vunpack.c.h.b16 %v816
  %v901 = vunpack.c.l.b16 %v817
  %v902 = vunpack.c.h.b16 %v817
  %v903 = vunpack.c.l.b16 %v818
  %v904 = vunpack.c.h.b16 %v818
  %v905 = vunpack.c.l.b16 %v819
  %v906 = vunpack.c.h.b16 %v819
  %v907 = vunpack.c.l.b16 %v820
  %v908 = vunpack.c.h.b16 %v820
  %v909 = vunpack.c.l.b16 %v821
  %v910 = vunpack.c.h.b16 %v821
  %v911 = vunpack.c.l.b16 %v822
  %v912 = vunpack.c.h.b16 %v822
  %v913 = vunpack.c.l.b16 %v823
  %v914 = vunpack.c.h.b16 %v823
  %v915 = vunpack.c.l.b16 %v824
  %v916 = vunpack.c.h.b16 %v824
  %v917 = vunpack.c.l.b16 %v825
  %v918 = vunpack.c.h.b16 %v825
  %v919 = vunpack.c.l.b16 %v826
  %v920 = vunpack.c.h.b16 %v826
  %v921 = vunpack.c.l.b16 %v827
  %v922 = vunpack.c.h.b16 %v827
  %v923 = vunpack.c.l.b16 %v828
  %v924 = vunpack.c.h.b16 %v828
  %v925 = vpack.c.b16 %v865, %v861
  %v926 = vpack.c.b16 %v866, %v862
  %v927 = vpack.c.b16 %v867, %v863
  %v928 = vpack.c.b16 %v868, %v864
  %v929 = vpack.c.b16 %v873, %v869
  %v930 = vpack.c.b16 %v874, %v870
  %v931 = vpack.c.b16 %v875, %v871
  %v932 = vpack.c.b16 %v876, %v872
  %v933 = vpack.c.b16 %v881, %v877
  %v934 = vpack.c.b16 %v882, %v878
  %v935 = vpack.c.b16 %v883, %v879
  %v936 = vpack.c.b16 %v884, %v880
  %v937 = vpack.c.b16 %v889, %v885
  %v938 = vpack.c.b16 %v890, %v886
  %v939 = vpack.c.b16 %v891, %v887
  %v940 = vpack.c.b16 %v892, %v888
  %v941 = vpack.c.b16 %v897, %v893
  %v942 = vpack.c.b16 %v898, %v894
  %v943 = vpack.c.b16 %v899, %v895
  %v944 = vpack.c.b16 %v900, %v896
  %v945 = vpack.c.b16 %v905, %v901
  %v946 = vpack.c.b16 %v906, %v902
  %v947 = vpack.c.b16 %v907, %v903
  %v948 = vpack.c.b16 %v908, %v904
  %v949 = vpack.c.b16 %v913, %v909
  %v950 = vpack.c.b16 %v914, %v910
  %v951 = vpack.c.b16 %v915, %v911
  %v952 = vpack.c.b16 %v916, %v912
  %v953 = vpack.c.b16 %v921, %v917
  %v954 = vpack.c.b16 %v922, %v918
  %v955 = vpack.c.b16 %v923, %v919
  %v956 = vpack.c.b16 %v924, %v920
  %989 = vmatprep.subr.bf16.mxu0 %v926
  %990 = vmatpush1.bf16.msra.mxu0 %v925
  %991 = vmatprep.subr.bf16.mxu0 %v930
  %992 = vmatpush1.bf16.msra.mxu0 %v929
  %993 = vmatprep.subr.bf16.mxu0 %v934
  %994 = vmatpush1.bf16.msra.mxu0 %v933
  %995 = vmatprep.subr.bf16.mxu0 %v938
  %996 = vmatpush1.bf16.msra.mxu0 %v937
  %997 = vmatprep.subr.bf16.mxu0 %v942
  %998 = vmatpush1.bf16.msra.mxu0 %v941
  %999 = vmatprep.subr.bf16.mxu0 %v946
  %1000 = vmatpush1.bf16.msra.mxu0 %v945
  %1001 = vmatprep.subr.bf16.mxu0 %v950
  %1002 = vmatpush1.bf16.msra.mxu0 %v949
  %1003 = vmatprep.subr.bf16.mxu0 %v954
  %1004 = vmatpush1.bf16.msra.mxu0 %v953
  %1005 = vmatprep.subr.bf16.mxu0 0
  %1006 = vmatpush1.bf16.msra.mxu0 0
  %1007 = vmatprep.subr.bf16.mxu0 0
  %1008 = vmatpush1.bf16.msra.mxu0 0
  %1009 = vmatprep.subr.bf16.mxu0 0
  %1010 = vmatpush1.bf16.msra.mxu0 0
  %1011 = vmatprep.subr.bf16.mxu0 0
  %1012 = vmatpush1.bf16.msra.mxu0 0
  %1013 = vmatprep.subr.bf16.mxu0 0
  %1014 = vmatpush1.bf16.msra.mxu0 0
  %1015 = vmatprep.subr.bf16.mxu0 0
  %1016 = vmatpush1.bf16.msra.mxu0 0
  %1017 = vmatprep.subr.bf16.mxu0 0
  %1018 = vmatpush1.bf16.msra.mxu0 0
  %1019 = vmatprep.subr.bf16.mxu0 0
  %1020 = vmatpush1.bf16.msra.mxu0 0
  %1021 = vmatprep.mubr.bf16.mxu0 0
  %1022 = vmatmul.mubr.bf16.gmra.mrb[0].mxu0 %v796
  %v1023 = vpop.f32.mrb[0].mxu0
  %v1024 = vadd.f32 0.0, %v1023
  %v1025 = vpop.f32.mrb[0].mxu0
  %v1026 = vadd.f32 0.0, %v1025
  %v1027 = vpop.f32.mrb[0].mxu0
  %v1028 = vpop.f32.mrb[0].mxu0
  %1029 = vdwg.mxu0
  %1030 = vmatprep.subr.bf16.mxu0 %v928
  %1031 = vmatpush1.bf16.msra.mxu0 %v927
  %1032 = vmatprep.subr.bf16.mxu0 %v932
  %1033 = vmatpush1.bf16.msra.mxu0 %v931
  %1034 = vmatprep.subr.bf16.mxu0 %v936
  %1035 = vmatpush1.bf16.msra.mxu0 %v935
  %1036 = vmatprep.subr.bf16.mxu0 %v940
  %1037 = vmatpush1.bf16.msra.mxu0 %v939
  %1038 = vmatprep.subr.bf16.mxu0 %v944
  %1039 = vmatpush1.bf16.msra.mxu0 %v943
  %1040 = vmatprep.subr.bf16.mxu0 %v948
  %1041 = vmatpush1.bf16.msra.mxu0 %v947
  %1042 = vmatprep.subr.bf16.mxu0 %v952
  %1043 = vmatpush1.bf16.msra.mxu0 %v951
  %1044 = vmatprep.subr.bf16.mxu0 %v956
  %1045 = vmatpush1.bf16.msra.mxu0 %v955
  %1046 = vmatprep.subr.bf16.mxu0 0
  %1047 = vmatpush1.bf16.msra.mxu0 0
  %1048 = vmatprep.subr.bf16.mxu0 0
  %1049 = vmatpush1.bf16.msra.mxu0 0
  %1050 = vmatprep.subr.bf16.mxu0 0
  %1051 = vmatpush1.bf16.msra.mxu0 0
  %1052 = vmatprep.subr.bf16.mxu0 0
  %1053 = vmatpush1.bf16.msra.mxu0 0
  %1054 = vmatprep.subr.bf16.mxu0 0
  %1055 = vmatpush1.bf16.msra.mxu0 0
  %1056 = vmatprep.subr.bf16.mxu0 0
  %1057 = vmatpush1.bf16.msra.mxu0 0
  %1058 = vmatprep.subr.bf16.mxu0 0
  %1059 = vmatpush1.bf16.msra.mxu0 0
  %1060 = vmatprep.subr.bf16.mxu0 0
  %1061 = vmatpush1.bf16.msra.mxu0 0
  %1062 = vmatprep.mubr.bf16.mxu0 0
  %1063 = vmatmul.mubr.bf16.gmra.mrb[0].mxu0 %v796
  %v1064 = vpop.f32.mrb[0].mxu0
  %v1065 = vadd.f32 0.0, %v1064
  %v1066 = vpop.f32.mrb[0].mxu0
  %v1067 = vadd.f32 0.0, %v1066
  %v1068 = vpop.f32.mrb[0].mxu0
  %v1069 = vpop.f32.mrb[0].mxu0
  %1070 = vdwg.mxu0
  %v1071 = vadd.f32 %v791, %v1024
  %v1072 = vadd.f32 %v792, %v1026
  %v1073 = vadd.f32 %v793, %v1065
  %v1074 = vadd.f32 %v794, %v1067
  %v1075 = vxor.u32 %v1071, 2147483648
  %v1076 = vxor.u32 %v1072, 2147483648
  %v1077 = vmul.f32 %v1075, 1.442695
  %v1078 = vpow.pop %v1077
  %v1079 = vmul.f32 %v1076, 1.442695
  %v1080 = vpow.pop %v1079
  %v1081 = vadd.f32 %v1078, 1.0
  %v1082 = vadd.f32 %v1080, 1.0
  %v1083 = vrcp.pop %v1081
  %v1084 = vmul.f32 1.0, %v1083
  %v1085 = vrcp.pop %v1082
  %v1086 = vmul.f32 1.0, %v1085
  %v1087 = vtanh.pop %v1073
  %v1088 = vxor.u32 %v1074, 2147483648
  %v1089 = vmul.f32 %v1088, 1.442695
  %v1090 = vpow.pop %v1089
  %v1091 = vadd.f32 %v1090, 1.0
  %v1092 = vrcp.pop %v1091
  %v1093 = vmul.f32 1.0, %v1092
  %v1094 = vld [vmem:[#allocation3] sm:$0xff]
  %v1095 = vmul.f32 %v1086, %v1094
  %v1096 = vmul.f32 %v1084, %v1087
  %v1097 = vadd.f32 %v1095, %v1096
  %v1098 = vtanh.pop %v1097
  %v1099 = vmul.f32 %v1093, %v1098
  %1100 = vst [vmem:[#allocation3] sm:$0xff] %v1097
  %1101 = vst [vmem:[#allocation2] sm:$0xff] %v1099
  %s1102 = scalar_lea.vmem [#allocation5], 8
  %1103 = vst [vmem:[%s1102] sm:$0xff] %v1099
  %s1104 = smul.u32 2, 4
  %s1105 = smul.addr %s1104, 8
  %s1106 = scalar_lea.vmem [#allocation6], %s1105
  %v1107 = vld [vmem:[%s1106] sm:$0xff]
  %v1108 = vld [vmem:[%s1106 + $0x8] sm:$0xff]
  %v1109 = vld [vmem:[%s1106 + $0x10] sm:$0xff]
  %v1110 = vld [vmem:[%s1106 + $0x18] sm:$0xff]
  %v1111 = vld [vmem:[#allocation2] sm:$0xff]
  %v1112 = vpack.c.bf16 %v1111, %v1111
  %v1113 = vld [vmem:[%s3] sm:$0xff]
  %v1114 = vld [vmem:[%s3 + $0x8] sm:$0xff]
  %v1115 = vld [vmem:[%s3 + $0x10] sm:$0xff]
  %v1116 = vld [vmem:[%s3 + $0x18] sm:$0xff]
  %v1117 = vld [vmem:[%s3 + $0x20] sm:$0xff]
  %v1118 = vld [vmem:[%s3 + $0x28] sm:$0xff]
  %v1119 = vld [vmem:[%s3 + $0x30] sm:$0xff]
  %v1120 = vld [vmem:[%s3 + $0x38] sm:$0xff]
  %v1121 = vld [vmem:[%s3 + $0x40] sm:$0xff]
  %v1122 = vld [vmem:[%s3 + $0x48] sm:$0xff]
  %v1123 = vld [vmem:[%s3 + $0x50] sm:$0xff]
  %v1124 = vld [vmem:[%s3 + $0x58] sm:$0xff]
  %v1125 = vld [vmem:[%s3 + $0x60] sm:$0xff]
  %v1126 = vld [vmem:[%s3 + $0x68] sm:$0xff]
  %v1127 = vld [vmem:[%s3 + $0x70] sm:$0xff]
  %v1128 = vld [vmem:[%s3 + $0x78] sm:$0xff]
  %v1129 = vld [vmem:[%s3 + $0x80] sm:$0xff]
  %v1130 = vld [vmem:[%s3 + $0x88] sm:$0xff]
  %v1131 = vld [vmem:[%s3 + $0x90] sm:$0xff]
  %v1132 = vld [vmem:[%s3 + $0x98] sm:$0xff]
  %v1133 = vld [vmem:[%s3 + $0xa0] sm:$0xff]
  %v1134 = vld [vmem:[%s3 + $0xa8] sm:$0xff]
  %v1135 = vld [vmem:[%s3 + $0xb0] sm:$0xff]
  %v1136 = vld [vmem:[%s3 + $0xb8] sm:$0xff]
  %v1137 = vld [vmem:[%s3 + $0xc0] sm:$0xff]
  %v1138 = vld [vmem:[%s3 + $0xc8] sm:$0xff]
  %v1139 = vld [vmem:[%s3 + $0xd0] sm:$0xff]
  %v1140 = vld [vmem:[%s3 + $0xd8] sm:$0xff]
  %v1141 = vld [vmem:[%s3 + $0xe0] sm:$0xff]
  %v1142 = vld [vmem:[%s3 + $0xe8] sm:$0xff]
  %v1143 = vld [vmem:[%s3 + $0xf0] sm:$0xff]
  %v1144 = vld [vmem:[%s3 + $0xf8] sm:$0xff]
  %v1177 = vunpack.c.l.b16 %v1113
  %v1178 = vunpack.c.h.b16 %v1113
  %v1179 = vunpack.c.l.b16 %v1114
  %v1180 = vunpack.c.h.b16 %v1114
  %v1181 = vunpack.c.l.b16 %v1115
  %v1182 = vunpack.c.h.b16 %v1115
  %v1183 = vunpack.c.l.b16 %v1116
  %v1184 = vunpack.c.h.b16 %v1116
  %v1185 = vunpack.c.l.b16 %v1117
  %v1186 = vunpack.c.h.b16 %v1117
  %v1187 = vunpack.c.l.b16 %v1118
  %v1188 = vunpack.c.h.b16 %v1118
  %v1189 = vunpack.c.l.b16 %v1119
  %v1190 = vunpack.c.h.b16 %v1119
  %v1191 = vunpack.c.l.b16 %v1120
  %v1192 = vunpack.c.h.b16 %v1120
  %v1193 = vunpack.c.l.b16 %v1121
  %v1194 = vunpack.c.h.b16 %v1121
  %v1195 = vunpack.c.l.b16 %v1122
  %v1196 = vunpack.c.h.b16 %v1122
  %v1197 = vunpack.c.l.b16 %v1123
  %v1198 = vunpack.c.h.b16 %v1123
  %v1199 = vunpack.c.l.b16 %v1124
  %v1200 = vunpack.c.h.b16 %v1124
  %v1201 = vunpack.c.l.b16 %v1125
  %v1202 = vunpack.c.h.b16 %v1125
  %v1203 = vunpack.c.l.b16 %v1126
  %v1204 = vunpack.c.h.b16 %v1126
  %v1205 = vunpack.c.l.b16 %v1127
  %v1206 = vunpack.c.h.b16 %v1127
  %v1207 = vunpack.c.l.b16 %v1128
  %v1208 = vunpack.c.h.b16 %v1128
  %v1209 = vunpack.c.l.b16 %v1129
  %v1210 = vunpack.c.h.b16 %v1129
  %v1211 = vunpack.c.l.b16 %v1130
  %v1212 = vunpack.c.h.b16 %v1130
  %v1213 = vunpack.c.l.b16 %v1131
  %v1214 = vunpack.c.h.b16 %v1131
  %v1215 = vunpack.c.l.b16 %v1132
  %v1216 = vunpack.c.h.b16 %v1132
  %v1217 = vunpack.c.l.b16 %v1133
  %v1218 = vunpack.c.h.b16 %v1133
  %v1219 = vunpack.c.l.b16 %v1134
  %v1220 = vunpack.c.h.b16 %v1134
  %v1221 = vunpack.c.l.b16 %v1135
  %v1222 = vunpack.c.h.b16 %v1135
  %v1223 = vunpack.c.l.b16 %v1136
  %v1224 = vunpack.c.h.b16 %v1136
  %v1225 = vunpack.c.l.b16 %v1137
  %v1226 = vunpack.c.h.b16 %v1137
  %v1227 = vunpack.c.l.b16 %v1138
  %v1228 = vunpack.c.h.b16 %v1138
  %v1229 = vunpack.c.l.b16 %v1139
  %v1230 = vunpack.c.h.b16 %v1139
  %v1231 = vunpack.c.l.b16 %v1140
  %v1232 = vunpack.c.h.b16 %v1140
  %v1233 = vunpack.c.l.b16 %v1141
  %v1234 = vunpack.c.h.b16 %v1141
  %v1235 = vunpack.c.l.b16 %v1142
  %v1236 = vunpack.c.h.b16 %v1142
  %v1237 = vunpack.c.l.b16 %v1143
  %v1238 = vunpack.c.h.b16 %v1143
  %v1239 = vunpack.c.l.b16 %v1144
  %v1240 = vunpack.c.h.b16 %v1144
  %v1241 = vpack.c.b16 %v1181, %v1177
  %v1242 = vpack.c.b16 %v1182, %v1178
  %v1243 = vpack.c.b16 %v1183, %v1179
  %v1244 = vpack.c.b16 %v1184, %v1180
  %v1245 = vpack.c.b16 %v1189, %v1185
  %v1246 = vpack.c.b16 %v1190, %v1186
  %v1247 = vpack.c.b16 %v1191, %v1187
  %v1248 = vpack.c.b16 %v1192, %v1188
  %v1249 = vpack.c.b16 %v1197, %v1193
  %v1250 = vpack.c.b16 %v1198, %v1194
  %v1251 = vpack.c.b16 %v1199, %v1195
  %v1252 = vpack.c.b16 %v1200, %v1196
  %v1253 = vpack.c.b16 %v1205, %v1201
  %v1254 = vpack.c.b16 %v1206, %v1202
  %v1255 = vpack.c.b16 %v1207, %v1203
  %v1256 = vpack.c.b16 %v1208, %v1204
  %v1257 = vpack.c.b16 %v1213, %v1209
  %v1258 = vpack.c.b16 %v1214, %v1210
  %v1259 = vpack.c.b16 %v1215, %v1211
  %v1260 = vpack.c.b16 %v1216, %v1212
  %v1261 = vpack.c.b16 %v1221, %v1217
  %v1262 = vpack.c.b16 %v1222, %v1218
  %v1263 = vpack.c.b16 %v1223, %v1219
  %v1264 = vpack.c.b16 %v1224, %v1220
  %v1265 = vpack.c.b16 %v1229, %v1225
  %v1266 = vpack.c.b16 %v1230, %v1226
  %v1267 = vpack.c.b16 %v1231, %v1227
  %v1268 = vpack.c.b16 %v1232, %v1228
  %v1269 = vpack.c.b16 %v1237, %v1233
  %v1270 = vpack.c.b16 %v1238, %v1234
  %v1271 = vpack.c.b16 %v1239, %v1235
  %v1272 = vpack.c.b16 %v1240, %v1236
  %1305 = vmatprep.subr.bf16.mxu0 %v1242
  %1306 = vmatpush1.bf16.msra.mxu0 %v1241
  %1307 = vmatprep.subr.bf16.mxu0 %v1246
  %1308 = vmatpush1.bf16.msra.mxu0 %v1245
  %1309 = vmatprep.subr.bf16.mxu0 %v1250
  %1310 = vmatpush1.bf16.msra.mxu0 %v1249
  %1311 = vmatprep.subr.bf16.mxu0 %v1254
  %1312 = vmatpush1.bf16.msra.mxu0 %v1253
  %1313 = vmatprep.subr.bf16.mxu0 %v1258
  %1314 = vmatpush1.bf16.msra.mxu0 %v1257
  %1315 = vmatprep.subr.bf16.mxu0 %v1262
  %1316 = vmatpush1.bf16.msra.mxu0 %v1261
  %1317 = vmatprep.subr.bf16.mxu0 %v1266
  %1318 = vmatpush1.bf16.msra.mxu0 %v1265
  %1319 = vmatprep.subr.bf16.mxu0 %v1270
  %1320 = vmatpush1.bf16.msra.mxu0 %v1269
  %1321 = vmatprep.subr.bf16.mxu0 0
  %1322 = vmatpush1.bf16.msra.mxu0 0
  %1323 = vmatprep.subr.bf16.mxu0 0
  %1324 = vmatpush1.bf16.msra.mxu0 0
  %1325 = vmatprep.subr.bf16.mxu0 0
  %1326 = vmatpush1.bf16.msra.mxu0 0
  %1327 = vmatprep.subr.bf16.mxu0 0
  %1328 = vmatpush1.bf16.msra.mxu0 0
  %1329 = vmatprep.subr.bf16.mxu0 0
  %1330 = vmatpush1.bf16.msra.mxu0 0
  %1331 = vmatprep.subr.bf16.mxu0 0
  %1332 = vmatpush1.bf16.msra.mxu0 0
  %1333 = vmatprep.subr.bf16.mxu0 0
  %1334 = vmatpush1.bf16.msra.mxu0 0
  %1335 = vmatprep.subr.bf16.mxu0 0
  %1336 = vmatpush1.bf16.msra.mxu0 0
  %1337 = vmatprep.mubr.bf16.mxu0 0
  %1338 = vmatmul.mubr.bf16.gmra.mrb[0].mxu0 %v1112
  %v1339 = vpop.f32.mrb[0].mxu0
  %v1340 = vadd.f32 0.0, %v1339
  %v1341 = vpop.f32.mrb[0].mxu0
  %v1342 = vadd.f32 0.0, %v1341
  %v1343 = vpop.f32.mrb[0].mxu0
  %v1344 = vpop.f32.mrb[0].mxu0
  %1345 = vdwg.mxu0
  %1346 = vmatprep.subr.bf16.mxu0 %v1244
  %1347 = vmatpush1.bf16.msra.mxu0 %v1243
  %1348 = vmatprep.subr.bf16.mxu0 %v1248
  %1349 = vmatpush1.bf16.msra.mxu0 %v1247
  %1350 = vmatprep.subr.bf16.mxu0 %v1252
  %1351 = vmatpush1.bf16.msra.mxu0 %v1251
  %1352 = vmatprep.subr.bf16.mxu0 %v1256
  %1353 = vmatpush1.bf16.msra.mxu0 %v1255
  %1354 = vmatprep.subr.bf16.mxu0 %v1260
  %1355 = vmatpush1.bf16.msra.mxu0 %v1259
  %1356 = vmatprep.subr.bf16.mxu0 %v1264
  %1357 = vmatpush1.bf16.msra.mxu0 %v1263
  %1358 = vmatprep.subr.bf16.mxu0 %v1268
  %1359 = vmatpush1.bf16.msra.mxu0 %v1267
  %1360 = vmatprep.subr.bf16.mxu0 %v1272
  %1361 = vmatpush1.bf16.msra.mxu0 %v1271
  %1362 = vmatprep.subr.bf16.mxu0 0
  %1363 = vmatpush1.bf16.msra.mxu0 0
  %1364 = vmatprep.subr.bf16.mxu0 0
  %1365 = vmatpush1.bf16.msra.mxu0 0
  %1366 = vmatprep.subr.bf16.mxu0 0
  %1367 = vmatpush1.bf16.msra.mxu0 0
  %1368 = vmatprep.subr.bf16.mxu0 0
  %1369 = vmatpush1.bf16.msra.mxu0 0
  %1370 = vmatprep.subr.bf16.mxu0 0
  %1371 = vmatpush1.bf16.msra.mxu0 0
  %1372 = vmatprep.subr.bf16.mxu0 0
  %1373 = vmatpush1.bf16.msra.mxu0 0
  %1374 = vmatprep.subr.bf16.mxu0 0
  %1375 = vmatpush1.bf16.msra.mxu0 0
  %1376 = vmatprep.subr.bf16.mxu0 0
  %1377 = vmatpush1.bf16.msra.mxu0 0
  %1378 = vmatprep.mubr.bf16.mxu0 0
  %1379 = vmatmul.mubr.bf16.gmra.mrb[0].mxu0 %v1112
  %v1380 = vpop.f32.mrb[0].mxu0
  %v1381 = vadd.f32 0.0, %v1380
  %v1382 = vpop.f32.mrb[0].mxu0
  %v1383 = vadd.f32 0.0, %v1382
  %v1384 = vpop.f32.mrb[0].mxu0
  %v1385 = vpop.f32.mrb[0].mxu0
  %1386 = vdwg.mxu0
  %v1387 = vadd.f32 %v1107, %v1340
  %v1388 = vadd.f32 %v1108, %v1342
  %v1389 = vadd.f32 %v1109, %v1381
  %v1390 = vadd.f32 %v1110, %v1383
  %v1391 = vxor.u32 %v1387, 2147483648
  %v1392 = vxor.u32 %v1388, 2147483648
  %v1393 = vmul.f32 %v1391, 1.442695
  %v1394 = vpow.pop %v1393
  %v1395 = vmul.f32 %v1392, 1.442695
  %v1396 = vpow.pop %v1395
  %v1397 = vadd.f32 %v1394, 1.0
  %v1398 = vadd.f32 %v1396, 1.0
  %v1399 = vrcp.pop %v1397
  %v1400 = vmul.f32 1.0, %v1399
  %v1401 = vrcp.pop %v1398
  %v1402 = vmul.f32 1.0, %v1401
  %v1403 = vtanh.pop %v1389
  %v1404 = vxor.u32 %v1390, 2147483648
  %v1405 = vmul.f32 %v1404, 1.442695
  %v1406 = vpow.pop %v1405
  %v1407 = vadd.f32 %v1406, 1.0
  %v1408 = vrcp.pop %v1407
  %v1409 = vmul.f32 1.0, %v1408
  %v1410 = vld [vmem:[#allocation3] sm:$0xff]
  %v1411 = vmul.f32 %v1402, %v1410
  %v1412 = vmul.f32 %v1400, %v1403
  %v1413 = vadd.f32 %v1411, %v1412
  %v1414 = vtanh.pop %v1413
  %v1415 = vmul.f32 %v1409, %v1414
  %1416 = vst [vmem:[#allocation3] sm:$0xff] %v1413
  %1417 = vst [vmem:[#allocation2] sm:$0xff] %v1415
  %s1418 = scalar_lea.vmem [#allocation5], 16
  %1419 = vst [vmem:[%s1418] sm:$0xff] %v1415
  %s1420 = smul.u32 3, 4
  %s1421 = smul.addr %s1420, 8
  %s1422 = scalar_lea.vmem [#allocation6], %s1421
  %v1423 = vld [vmem:[%s1422] sm:$0xff]
  %v1424 = vld [vmem:[%s1422 + $0x8] sm:$0xff]
  %v1425 = vld [vmem:[%s1422 + $0x10] sm:$0xff]
  %v1426 = vld [vmem:[%s1422 + $0x18] sm:$0xff]
  %v1427 = vld [vmem:[#allocation2] sm:$0xff]
  %v1428 = vpack.c.bf16 %v1427, %v1427
  %v1429 = vld [vmem:[%s3] sm:$0xff]
  %v1430 = vld [vmem:[%s3 + $0x8] sm:$0xff]
  %v1431 = vld [vmem:[%s3 + $0x10] sm:$0xff]
  %v1432 = vld [vmem:[%s3 + $0x18] sm:$0xff]
  %v1433 = vld [vmem:[%s3 + $0x20] sm:$0xff]
  %v1434 = vld [vmem:[%s3 + $0x28] sm:$0xff]
  %v1435 = vld [vmem:[%s3 + $0x30] sm:$0xff]
  %v1436 = vld [vmem:[%s3 + $0x38] sm:$0xff]
  %v1437 = vld [vmem:[%s3 + $0x40] sm:$0xff]
  %v1438 = vld [vmem:[%s3 + $0x48] sm:$0xff]
  %v1439 = vld [vmem:[%s3 + $0x50] sm:$0xff]
  %v1440 = vld [vmem:[%s3 + $0x58] sm:$0xff]
  %v1441 = vld [vmem:[%s3 + $0x60] sm:$0xff]
  %v1442 = vld [vmem:[%s3 + $0x68] sm:$0xff]
  %v1443 = vld [vmem:[%s3 + $0x70] sm:$0xff]
  %v1444 = vld [vmem:[%s3 + $0x78] sm:$0xff]
  %v1445 = vld [vmem:[%s3 + $0x80] sm:$0xff]
  %v1446 = vld [vmem:[%s3 + $0x88] sm:$0xff]
  %v1447 = vld [vmem:[%s3 + $0x90] sm:$0xff]
  %v1448 = vld [vmem:[%s3 + $0x98] sm:$0xff]
  %v1449 = vld [vmem:[%s3 + $0xa0] sm:$0xff]
  %v1450 = vld [vmem:[%s3 + $0xa8] sm:$0xff]
  %v1451 = vld [vmem:[%s3 + $0xb0] sm:$0xff]
  %v1452 = vld [vmem:[%s3 + $0xb8] sm:$0xff]
  %v1453 = vld [vmem:[%s3 + $0xc0] sm:$0xff]
  %v1454 = vld [vmem:[%s3 + $0xc8] sm:$0xff]
  %v1455 = vld [vmem:[%s3 + $0xd0] sm:$0xff]
  %v1456 = vld [vmem:[%s3 + $0xd8] sm:$0xff]
  %v1457 = vld [vmem:[%s3 + $0xe0] sm:$0xff]
  %v1458 = vld [vmem:[%s3 + $0xe8] sm:$0xff]
  %v1459 = vld [vmem:[%s3 + $0xf0] sm:$0xff]
  %v1460 = vld [vmem:[%s3 + $0xf8] sm:$0xff]
  %v1493 = vunpack.c.l.b16 %v1429
  %v1494 = vunpack.c.h.b16 %v1429
  %v1495 = vunpack.c.l.b16 %v1430
  %v1496 = vunpack.c.h.b16 %v1430
  %v1497 = vunpack.c.l.b16 %v1431
  %v1498 = vunpack.c.h.b16 %v1431
  %v1499 = vunpack.c.l.b16 %v1432
  %v1500 = vunpack.c.h.b16 %v1432
  %v1501 = vunpack.c.l.b16 %v1433
  %v1502 = vunpack.c.h.b16 %v1433
  %v1503 = vunpack.c.l.b16 %v1434
  %v1504 = vunpack.c.h.b16 %v1434
  %v1505 = vunpack.c.l.b16 %v1435
  %v1506 = vunpack.c.h.b16 %v1435
  %v1507 = vunpack.c.l.b16 %v1436
  %v1508 = vunpack.c.h.b16 %v1436
  %v1509 = vunpack.c.l.b16 %v1437
  %v1510 = vunpack.c.h.b16 %v1437
  %v1511 = vunpack.c.l.b16 %v1438
  %v1512 = vunpack.c.h.b16 %v1438
  %v1513 = vunpack.c.l.b16 %v1439
  %v1514 = vunpack.c.h.b16 %v1439
  %v1515 = vunpack.c.l.b16 %v1440
  %v1516 = vunpack.c.h.b16 %v1440
  %v1517 = vunpack.c.l.b16 %v1441
  %v1518 = vunpack.c.h.b16 %v1441
  %v1519 = vunpack.c.l.b16 %v1442
  %v1520 = vunpack.c.h.b16 %v1442
  %v1521 = vunpack.c.l.b16 %v1443
  %v1522 = vunpack.c.h.b16 %v1443
  %v1523 = vunpack.c.l.b16 %v1444
  %v1524 = vunpack.c.h.b16 %v1444
  %v1525 = vunpack.c.l.b16 %v1445
  %v1526 = vunpack.c.h.b16 %v1445
  %v1527 = vunpack.c.l.b16 %v1446
  %v1528 = vunpack.c.h.b16 %v1446
  %v1529 = vunpack.c.l.b16 %v1447
  %v1530 = vunpack.c.h.b16 %v1447
  %v1531 = vunpack.c.l.b16 %v1448
  %v1532 = vunpack.c.h.b16 %v1448
  %v1533 = vunpack.c.l.b16 %v1449
  %v1534 = vunpack.c.h.b16 %v1449
  %v1535 = vunpack.c.l.b16 %v1450
  %v1536 = vunpack.c.h.b16 %v1450
  %v1537 = vunpack.c.l.b16 %v1451
  %v1538 = vunpack.c.h.b16 %v1451
  %v1539 = vunpack.c.l.b16 %v1452
  %v1540 = vunpack.c.h.b16 %v1452
  %v1541 = vunpack.c.l.b16 %v1453
  %v1542 = vunpack.c.h.b16 %v1453
  %v1543 = vunpack.c.l.b16 %v1454
  %v1544 = vunpack.c.h.b16 %v1454
  %v1545 = vunpack.c.l.b16 %v1455
  %v1546 = vunpack.c.h.b16 %v1455
  %v1547 = vunpack.c.l.b16 %v1456
  %v1548 = vunpack.c.h.b16 %v1456
  %v1549 = vunpack.c.l.b16 %v1457
  %v1550 = vunpack.c.h.b16 %v1457
  %v1551 = vunpack.c.l.b16 %v1458
  %v1552 = vunpack.c.h.b16 %v1458
  %v1553 = vunpack.c.l.b16 %v1459
  %v1554 = vunpack.c.h.b16 %v1459
  %v1555 = vunpack.c.l.b16 %v1460
  %v1556 = vunpack.c.h.b16 %v1460
  %v1557 = vpack.c.b16 %v1497, %v1493
  %v1558 = vpack.c.b16 %v1498, %v1494
  %v1559 = vpack.c.b16 %v1499, %v1495
  %v1560 = vpack.c.b16 %v1500, %v1496
  %v1561 = vpack.c.b16 %v1505, %v1501
  %v1562 = vpack.c.b16 %v1506, %v1502
  %v1563 = vpack.c.b16 %v1507, %v1503
  %v1564 = vpack.c.b16 %v1508, %v1504
  %v1565 = vpack.c.b16 %v1513, %v1509
  %v1566 = vpack.c.b16 %v1514, %v1510
  %v1567 = vpack.c.b16 %v1515, %v1511
  %v1568 = vpack.c.b16 %v1516, %v1512
  %v1569 = vpack.c.b16 %v1521, %v1517
  %v1570 = vpack.c.b16 %v1522, %v1518
  %v1571 = vpack.c.b16 %v1523, %v1519
  %v1572 = vpack.c.b16 %v1524, %v1520
  %v1573 = vpack.c.b16 %v1529, %v1525
  %v1574 = vpack.c.b16 %v1530, %v1526
  %v1575 = vpack.c.b16 %v1531, %v1527
  %v1576 = vpack.c.b16 %v1532, %v1528
  %v1577 = vpack.c.b16 %v1537, %v1533
  %v1578 = vpack.c.b16 %v1538, %v1534
  %v1579 = vpack.c.b16 %v1539, %v1535
  %v1580 = vpack.c.b16 %v1540, %v1536
  %v1581 = vpack.c.b16 %v1545, %v1541
  %v1582 = vpack.c.b16 %v1546, %v1542
  %v1583 = vpack.c.b16 %v1547, %v1543
  %v1584 = vpack.c.b16 %v1548, %v1544
  %v1585 = vpack.c.b16 %v1553, %v1549
  %v1586 = vpack.c.b16 %v1554, %v1550
  %v1587 = vpack.c.b16 %v1555, %v1551
  %v1588 = vpack.c.b16 %v1556, %v1552
  %1621 = vmatprep.subr.bf16.mxu0 %v1558
  %1622 = vmatpush1.bf16.msra.mxu0 %v1557
  %1623 = vmatprep.subr.bf16.mxu0 %v1562
  %1624 = vmatpush1.bf16.msra.mxu0 %v1561
  %1625 = vmatprep.subr.bf16.mxu0 %v1566
  %1626 = vmatpush1.bf16.msra.mxu0 %v1565
  %1627 = vmatprep.subr.bf16.mxu0 %v1570
  %1628 = vmatpush1.bf16.msra.mxu0 %v1569
  %1629 = vmatprep.subr.bf16.mxu0 %v1574
  %1630 = vmatpush1.bf16.msra.mxu0 %v1573
  %1631 = vmatprep.subr.bf16.mxu0 %v1578
  %1632 = vmatpush1.bf16.msra.mxu0 %v1577
  %1633 = vmatprep.subr.bf16.mxu0 %v1582
  %1634 = vmatpush1.bf16.msra.mxu0 %v1581
  %1635 = vmatprep.subr.bf16.mxu0 %v1586
  %1636 = vmatpush1.bf16.msra.mxu0 %v1585
  %1637 = vmatprep.subr.bf16.mxu0 0
  %1638 = vmatpush1.bf16.msra.mxu0 0
  %1639 = vmatprep.subr.bf16.mxu0 0
  %1640 = vmatpush1.bf16.msra.mxu0 0
  %1641 = vmatprep.subr.bf16.mxu0 0
  %1642 = vmatpush1.bf16.msra.mxu0 0
  %1643 = vmatprep.subr.bf16.mxu0 0
  %1644 = vmatpush1.bf16.msra.mxu0 0
  %1645 = vmatprep.subr.bf16.mxu0 0
  %1646 = vmatpush1.bf16.msra.mxu0 0
  %1647 = vmatprep.subr.bf16.mxu0 0
  %1648 = vmatpush1.bf16.msra.mxu0 0
  %1649 = vmatprep.subr.bf16.mxu0 0
  %1650 = vmatpush1.bf16.msra.mxu0 0
  %1651 = vmatprep.subr.bf16.mxu0 0
  %1652 = vmatpush1.bf16.msra.mxu0 0
  %1653 = vmatprep.mubr.bf16.mxu0 0
  %1654 = vmatmul.mubr.bf16.gmra.mrb[0].mxu0 %v1428
  %v1655 = vpop.f32.mrb[0].mxu0
  %v1656 = vadd.f32 0.0, %v1655
  %v1657 = vpop.f32.mrb[0].mxu0
  %v1658 = vadd.f32 0.0, %v1657
  %v1659 = vpop.f32.mrb[0].mxu0
  %v1660 = vpop.f32.mrb[0].mxu0
  %1661 = vdwg.mxu0
  %1662 = vmatprep.subr.bf16.mxu0 %v1560
  %1663 = vmatpush1.bf16.msra.mxu0 %v1559
  %1664 = vmatprep.subr.bf16.mxu0 %v1564
  %1665 = vmatpush1.bf16.msra.mxu0 %v1563
  %1666 = vmatprep.subr.bf16.mxu0 %v1568
  %1667 = vmatpush1.bf16.msra.mxu0 %v1567
  %1668 = vmatprep.subr.bf16.mxu0 %v1572
  %1669 = vmatpush1.bf16.msra.mxu0 %v1571
  %1670 = vmatprep.subr.bf16.mxu0 %v1576
  %1671 = vmatpush1.bf16.msra.mxu0 %v1575
  %1672 = vmatprep.subr.bf16.mxu0 %v1580
  %1673 = vmatpush1.bf16.msra.mxu0 %v1579
  %1674 = vmatprep.subr.bf16.mxu0 %v1584
  %1675 = vmatpush1.bf16.msra.mxu0 %v1583
  %1676 = vmatprep.subr.bf16.mxu0 %v1588
  %1677 = vmatpush1.bf16.msra.mxu0 %v1587
  %1678 = vmatprep.subr.bf16.mxu0 0
  %1679 = vmatpush1.bf16.msra.mxu0 0
  %1680 = vmatprep.subr.bf16.mxu0 0
  %1681 = vmatpush1.bf16.msra.mxu0 0
  %1682 = vmatprep.subr.bf16.mxu0 0
  %1683 = vmatpush1.bf16.msra.mxu0 0
  %1684 = vmatprep.subr.bf16.mxu0 0
  %1685 = vmatpush1.bf16.msra.mxu0 0
  %1686 = vmatprep.subr.bf16.mxu0 0
  %1687 = vmatpush1.bf16.msra.mxu0 0
  %1688 = vmatprep.subr.bf16.mxu0 0
  %1689 = vmatpush1.bf16.msra.mxu0 0
  %1690 = vmatprep.subr.bf16.mxu0 0
  %1691 = vmatpush1.bf16.msra.mxu0 0
  %1692 = vmatprep.subr.bf16.mxu0 0
  %1693 = vmatpush1.bf16.msra.mxu0 0
  %1694 = vmatprep.mubr.bf16.mxu0 0
  %1695 = vmatmul.mubr.bf16.gmra.mrb[0].mxu0 %v1428
  %v1696 = vpop.f32.mrb[0].mxu0
  %v1697 = vadd.f32 0.0, %v1696
  %v1698 = vpop.f32.mrb[0].mxu0
  %v1699 = vadd.f32 0.0, %v1698
  %v1700 = vpop.f32.mrb[0].mxu0
  %v1701 = vpop.f32.mrb[0].mxu0
  %1702 = vdwg.mxu0
  %v1703 = vadd.f32 %v1423, %v1656
  %v1704 = vadd.f32 %v1424, %v1658
  %v1705 = vadd.f32 %v1425, %v1697
  %v1706 = vadd.f32 %v1426, %v1699
  %v1707 = vxor.u32 %v1703, 2147483648
  %v1708 = vxor.u32 %v1704, 2147483648
  %v1709 = vmul.f32 %v1707, 1.442695
  %v1710 = vpow.pop %v1709
  %v1711 = vmul.f32 %v1708, 1.442695
  %v1712 = vpow.pop %v1711
  %v1713 = vadd.f32 %v1710, 1.0
  %v1714 = vadd.f32 %v1712, 1.0
  %v1715 = vrcp.pop %v1713
  %v1716 = vmul.f32 1.0, %v1715
  %v1717 = vrcp.pop %v1714
  %v1718 = vmul.f32 1.0, %v1717
  %v1719 = vtanh.pop %v1705
  %v1720 = vxor.u32 %v1706, 2147483648
  %v1721 = vmul.f32 %v1720, 1.442695
  %v1722 = vpow.pop %v1721
  %v1723 = vadd.f32 %v1722, 1.0
  %v1724 = vrcp.pop %v1723
  %v1725 = vmul.f32 1.0, %v1724
  %v1726 = vld [vmem:[#allocation3] sm:$0xff]
  %v1727 = vmul.f32 %v1718, %v1726
  %v1728 = vmul.f32 %v1716, %v1719
  %v1729 = vadd.f32 %v1727, %v1728
  %v1730 = vtanh.pop %v1729
  %v1731 = vmul.f32 %v1725, %v1730
  %1732 = vst [vmem:[#allocation3] sm:$0xff] %v1729
  %1733 = vst [vmem:[#allocation2] sm:$0xff] %v1731
  %s1734 = scalar_lea.vmem [#allocation5], 24
  %1735 = vst [vmem:[%s1734] sm:$0xff] %v1731
  %s1736 = smul.u32 4, 4
  %s1737 = smul.addr %s1736, 8
  %s1738 = scalar_lea.vmem [#allocation6], %s1737
  %v1739 = vld [vmem:[%s1738] sm:$0xff]
  %v1740 = vld [vmem:[%s1738 + $0x8] sm:$0xff]
  %v1741 = vld [vmem:[%s1738 + $0x10] sm:$0xff]
  %v1742 = vld [vmem:[%s1738 + $0x18] sm:$0xff]
  %v1743 = vld [vmem:[#allocation2] sm:$0xff]
  %v1744 = vpack.c.bf16 %v1743, %v1743
  %v1745 = vld [vmem:[%s3] sm:$0xff]
  %v1746 = vld [vmem:[%s3 + $0x8] sm:$0xff]
  %v1747 = vld [vmem:[%s3 + $0x10] sm:$0xff]
  %v1748 = vld [vmem:[%s3 + $0x18] sm:$0xff]
  %v1749 = vld [vmem:[%s3 + $0x20] sm:$0xff]
  %v1750 = vld [vmem:[%s3 + $0x28] sm:$0xff]
  %v1751 = vld [vmem:[%s3 + $0x30] sm:$0xff]
  %v1752 = vld [vmem:[%s3 + $0x38] sm:$0xff]
  %v1753 = vld [vmem:[%s3 + $0x40] sm:$0xff]
  %v1754 = vld [vmem:[%s3 + $0x48] sm:$0xff]
  %v1755 = vld [vmem:[%s3 + $0x50] sm:$0xff]
  %v1756 = vld [vmem:[%s3 + $0x58] sm:$0xff]
  %v1757 = vld [vmem:[%s3 + $0x60] sm:$0xff]
  %v1758 = vld [vmem:[%s3 + $0x68] sm:$0xff]
  %v1759 = vld [vmem:[%s3 + $0x70] sm:$0xff]
  %v1760 = vld [vmem:[%s3 + $0x78] sm:$0xff]
  %v1761 = vld [vmem:[%s3 + $0x80] sm:$0xff]
  %v1762 = vld [vmem:[%s3 + $0x88] sm:$0xff]
  %v1763 = vld [vmem:[%s3 + $0x90] sm:$0xff]
  %v1764 = vld [vmem:[%s3 + $0x98] sm:$0xff]
  %v1765 = vld [vmem:[%s3 + $0xa0] sm:$0xff]
  %v1766 = vld [vmem:[%s3 + $0xa8] sm:$0xff]
  %v1767 = vld [vmem:[%s3 + $0xb0] sm:$0xff]
  %v1768 = vld [vmem:[%s3 + $0xb8] sm:$0xff]
  %v1769 = vld [vmem:[%s3 + $0xc0] sm:$0xff]
  %v1770 = vld [vmem:[%s3 + $0xc8] sm:$0xff]
  %v1771 = vld [vmem:[%s3 + $0xd0] sm:$0xff]
  %v1772 = vld [vmem:[%s3 + $0xd8] sm:$0xff]
  %v1773 = vld [vmem:[%s3 + $0xe0] sm:$0xff]
  %v1774 = vld [vmem:[%s3 + $0xe8] sm:$0xff]
  %v1775 = vld [vmem:[%s3 + $0xf0] sm:$0xff]
  %v1776 = vld [vmem:[%s3 + $0xf8] sm:$0xff]
  %v1809 = vunpack.c.l.b16 %v1745
  %v1810 = vunpack.c.h.b16 %v1745
  %v1811 = vunpack.c.l.b16 %v1746
  %v1812 = vunpack.c.h.b16 %v1746
  %v1813 = vunpack.c.l.b16 %v1747
  %v1814 = vunpack.c.h.b16 %v1747
  %v1815 = vunpack.c.l.b16 %v1748
  %v1816 = vunpack.c.h.b16 %v1748
  %v1817 = vunpack.c.l.b16 %v1749
  %v1818 = vunpack.c.h.b16 %v1749
  %v1819 = vunpack.c.l.b16 %v1750
  %v1820 = vunpack.c.h.b16 %v1750
  %v1821 = vunpack.c.l.b16 %v1751
  %v1822 = vunpack.c.h.b16 %v1751
  %v1823 = vunpack.c.l.b16 %v1752
  %v1824 = vunpack.c.h.b16 %v1752
  %v1825 = vunpack.c.l.b16 %v1753
  %v1826 = vunpack.c.h.b16 %v1753
  %v1827 = vunpack.c.l.b16 %v1754
  %v1828 = vunpack.c.h.b16 %v1754
  %v1829 = vunpack.c.l.b16 %v1755
  %v1830 = vunpack.c.h.b16 %v1755
  %v1831 = vunpack.c.l.b16 %v1756
  %v1832 = vunpack.c.h.b16 %v1756
  %v1833 = vunpack.c.l.b16 %v1757
  %v1834 = vunpack.c.h.b16 %v1757
  %v1835 = vunpack.c.l.b16 %v1758
  %v1836 = vunpack.c.h.b16 %v1758
  %v1837 = vunpack.c.l.b16 %v1759
  %v1838 = vunpack.c.h.b16 %v1759
  %v1839 = vunpack.c.l.b16 %v1760
  %v1840 = vunpack.c.h.b16 %v1760
  %v1841 = vunpack.c.l.b16 %v1761
  %v1842 = vunpack.c.h.b16 %v1761
  %v1843 = vunpack.c.l.b16 %v1762
  %v1844 = vunpack.c.h.b16 %v1762
  %v1845 = vunpack.c.l.b16 %v1763
  %v1846 = vunpack.c.h.b16 %v1763
  %v1847 = vunpack.c.l.b16 %v1764
  %v1848 = vunpack.c.h.b16 %v1764
  %v1849 = vunpack.c.l.b16 %v1765
  %v1850 = vunpack.c.h.b16 %v1765
  %v1851 = vunpack.c.l.b16 %v1766
  %v1852 = vunpack.c.h.b16 %v1766
  %v1853 = vunpack.c.l.b16 %v1767
  %v1854 = vunpack.c.h.b16 %v1767
  %v1855 = vunpack.c.l.b16 %v1768
  %v1856 = vunpack.c.h.b16 %v1768
  %v1857 = vunpack.c.l.b16 %v1769
  %v1858 = vunpack.c.h.b16 %v1769
  %v1859 = vunpack.c.l.b16 %v1770
  %v1860 = vunpack.c.h.b16 %v1770
  %v1861 = vunpack.c.l.b16 %v1771
  %v1862 = vunpack.c.h.b16 %v1771
  %v1863 = vunpack.c.l.b16 %v1772
  %v1864 = vunpack.c.h.b16 %v1772
  %v1865 = vunpack.c.l.b16 %v1773
  %v1866 = vunpack.c.h.b16 %v1773
  %v1867 = vunpack.c.l.b16 %v1774
  %v1868 = vunpack.c.h.b16 %v1774
  %v1869 = vunpack.c.l.b16 %v1775
  %v1870 = vunpack.c.h.b16 %v1775
  %v1871 = vunpack.c.l.b16 %v1776
  %v1872 = vunpack.c.h.b16 %v1776
  %v1873 = vpack.c.b16 %v1813, %v1809
  %v1874 = vpack.c.b16 %v1814, %v1810
  %v1875 = vpack.c.b16 %v1815, %v1811
  %v1876 = vpack.c.b16 %v1816, %v1812
  %v1877 = vpack.c.b16 %v1821, %v1817
  %v1878 = vpack.c.b16 %v1822, %v1818
  %v1879 = vpack.c.b16 %v1823, %v1819
  %v1880 = vpack.c.b16 %v1824, %v1820
  %v1881 = vpack.c.b16 %v1829, %v1825
  %v1882 = vpack.c.b16 %v1830, %v1826
  %v1883 = vpack.c.b16 %v1831, %v1827
  %v1884 = vpack.c.b16 %v1832, %v1828
  %v1885 = vpack.c.b16 %v1837, %v1833
  %v1886 = vpack.c.b16 %v1838, %v1834
  %v1887 = vpack.c.b16 %v1839, %v1835
  %v1888 = vpack.c.b16 %v1840, %v1836
  %v1889 = vpack.c.b16 %v1845, %v1841
  %v1890 = vpack.c.b16 %v1846, %v1842
  %v1891 = vpack.c.b16 %v1847, %v1843
  %v1892 = vpack.c.b16 %v1848, %v1844
  %v1893 = vpack.c.b16 %v1853, %v1849
  %v1894 = vpack.c.b16 %v1854, %v1850
  %v1895 = vpack.c.b16 %v1855, %v1851
  %v1896 = vpack.c.b16 %v1856, %v1852
  %v1897 = vpack.c.b16 %v1861, %v1857
  %v1898 = vpack.c.b16 %v1862, %v1858
  %v1899 = vpack.c.b16 %v1863, %v1859
  %v1900 = vpack.c.b16 %v1864, %v1860
  %v1901 = vpack.c.b16 %v1869, %v1865
  %v1902 = vpack.c.b16 %v1870, %v1866
  %v1903 = vpack.c.b16 %v1871, %v1867
  %v1904 = vpack.c.b16 %v1872, %v1868
  %1937 = vmatprep.subr.bf16.mxu0 %v1874
  %1938 = vmatpush1.bf16.msra.mxu0 %v1873
  %1939 = vmatprep.subr.bf16.mxu0 %v1878
  %1940 = vmatpush1.bf16.msra.mxu0 %v1877
  %1941 = vmatprep.subr.bf16.mxu0 %v1882
  %1942 = vmatpush1.bf16.msra.mxu0 %v1881
  %1943 = vmatprep.subr.bf16.mxu0 %v1886
  %1944 = vmatpush1.bf16.msra.mxu0 %v1885
  %1945 = vmatprep.subr.bf16.mxu0 %v1890
  %1946 = vmatpush1.bf16.msra.mxu0 %v1889
  %1947 = vmatprep.subr.bf16.mxu0 %v1894
  %1948 = vmatpush1.bf16.msra.mxu0 %v1893
  %1949 = vmatprep.subr.bf16.mxu0 %v1898
  %1950 = vmatpush1.bf16.msra.mxu0 %v1897
  %1951 = vmatprep.subr.bf16.mxu0 %v1902
  %1952 = vmatpush1.bf16.msra.mxu0 %v1901
  %1953 = vmatprep.subr.bf16.mxu0 0
  %1954 = vmatpush1.bf16.msra.mxu0 0
  %1955 = vmatprep.subr.bf16.mxu0 0
  %1956 = vmatpush1.bf16.msra.mxu0 0
  %1957 = vmatprep.subr.bf16.mxu0 0
  %1958 = vmatpush1.bf16.msra.mxu0 0
  %1959 = vmatprep.subr.bf16.mxu0 0
  %1960 = vmatpush1.bf16.msra.mxu0 0
  %1961 = vmatprep.subr.bf16.mxu0 0
  %1962 = vmatpush1.bf16.msra.mxu0 0
  %1963 = vmatprep.subr.bf16.mxu0 0
  %1964 = vmatpush1.bf16.msra.mxu0 0
  %1965 = vmatprep.subr.bf16.mxu0 0
  %1966 = vmatpush1.bf16.msra.mxu0 0
  %1967 = vmatprep.subr.bf16.mxu0 0
  %1968 = vmatpush1.bf16.msra.mxu0 0
  %1969 = vmatprep.mubr.bf16.mxu0 0
  %1970 = vmatmul.mubr.bf16.gmra.mrb[0].mxu0 %v1744
  %v1971 = vpop.f32.mrb[0].mxu0
  %v1972 = vadd.f32 0.0, %v1971
  %v1973 = vpop.f32.mrb[0].mxu0
  %v1974 = vadd.f32 0.0, %v1973
  %v1975 = vpop.f32.mrb[0].mxu0
  %v1976 = vpop.f32.mrb[0].mxu0
  %1977 = vdwg.mxu0
  %1978 = vmatprep.subr.bf16.mxu0 %v1876
  %1979 = vmatpush1.bf16.msra.mxu0 %v1875
  %1980 = vmatprep.subr.bf16.mxu0 %v1880
  %1981 = vmatpush1.bf16.msra.mxu0 %v1879
  %1982 = vmatprep.subr.bf16.mxu0 %v1884
  %1983 = vmatpush1.bf16.msra.mxu0 %v1883
  %1984 = vmatprep.subr.bf16.mxu0 %v1888
  %1985 = vmatpush1.bf16.msra.mxu0 %v1887
  %1986 = vmatprep.subr.bf16.mxu0 %v1892
  %1987 = vmatpush1.bf16.msra.mxu0 %v1891
  %1988 = vmatprep.subr.bf16.mxu0 %v1896
  %1989 = vmatpush1.bf16.msra.mxu0 %v1895
  %1990 = vmatprep.subr.bf16.mxu0 %v1900
  %1991 = vmatpush1.bf16.msra.mxu0 %v1899
  %1992 = vmatprep.subr.bf16.mxu0 %v1904
  %1993 = vmatpush1.bf16.msra.mxu0 %v1903
  %1994 = vmatprep.subr.bf16.mxu0 0
  %1995 = vmatpush1.bf16.msra.mxu0 0
  %1996 = vmatprep.subr.bf16.mxu0 0
  %1997 = vmatpush1.bf16.msra.mxu0 0
  %1998 = vmatprep.subr.bf16.mxu0 0
  %1999 = vmatpush1.bf16.msra.mxu0 0
  %2000 = vmatprep.subr.bf16.mxu0 0
  %2001 = vmatpush1.bf16.msra.mxu0 0
  %2002 = vmatprep.subr.bf16.mxu0 0
  %2003 = vmatpush1.bf16.msra.mxu0 0
  %2004 = vmatprep.subr.bf16.mxu0 0
  %2005 = vmatpush1.bf16.msra.mxu0 0
  %2006 = vmatprep.subr.bf16.mxu0 0
  %2007 = vmatpush1.bf16.msra.mxu0 0
  %2008 = vmatprep.subr.bf16.mxu0 0
  %2009 = vmatpush1.bf16.msra.mxu0 0
  %2010 = vmatprep.mubr.bf16.mxu0 0
  %2011 = vmatmul.mubr.bf16.gmra.mrb[0].mxu0 %v1744
  %v2012 = vpop.f32.mrb[0].mxu0
  %v2013 = vadd.f32 0.0, %v2012
  %v2014 = vpop.f32.mrb[0].mxu0
  %v2015 = vadd.f32 0.0, %v2014
  %v2016 = vpop.f32.mrb[0].mxu0
  %v2017 = vpop.f32.mrb[0].mxu0
  %2018 = vdwg.mxu0
  %v2019 = vadd.f32 %v1739, %v1972
  %v2020 = vadd.f32 %v1740, %v1974
  %v2021 = vadd.f32 %v1741, %v2013
  %v2022 = vadd.f32 %v1742, %v2015
  %v2023 = vxor.u32 %v2019, 2147483648
  %v2024 = vxor.u32 %v2020, 2147483648
  %v2025 = vmul.f32 %v2023, 1.442695
  %v2026 = vpow.pop %v2025
  %v2027 = vmul.f32 %v2024, 1.442695
  %v2028 = vpow.pop %v2027
  %v2029 = vadd.f32 %v2026, 1.0
  %v2030 = vadd.f32 %v2028, 1.0
  %v2031 = vrcp.pop %v2029
  %v2032 = vmul.f32 1.0, %v2031
  %v2033 = vrcp.pop %v2030
  %v2034 = vmul.f32 1.0, %v2033
  %v2035 = vtanh.pop %v2021
  %v2036 = vxor.u32 %v2022, 2147483648
  %v2037 = vmul.f32 %v2036, 1.442695
  %v2038 = vpow.pop %v2037
  %v2039 = vadd.f32 %v2038, 1.0
  %v2040 = vrcp.pop %v2039
  %v2041 = vmul.f32 1.0, %v2040
  %v2042 = vld [vmem:[#allocation3] sm:$0xff]
  %v2043 = vmul.f32 %v2034, %v2042
  %v2044 = vmul.f32 %v2032, %v2035
  %v2045 = vadd.f32 %v2043, %v2044
  %v2046 = vtanh.pop %v2045
  %v2047 = vmul.f32 %v2041, %v2046
  %2048 = vst [vmem:[#allocation3] sm:$0xff] %v2045
  %2049 = vst [vmem:[#allocation2] sm:$0xff] %v2047
  %s2050 = scalar_lea.vmem [#allocation5], 32
  %2051 = vst [vmem:[%s2050] sm:$0xff] %v2047
  %s2052 = smul.u32 5, 4
  %s2053 = smul.addr %s2052, 8
  %s2054 = scalar_lea.vmem [#allocation6], %s2053
  %v2055 = vld [vmem:[%s2054] sm:$0xff]
  %v2056 = vld [vmem:[%s2054 + $0x8] sm:$0xff]
  %v2057 = vld [vmem:[%s2054 + $0x10] sm:$0xff]
  %v2058 = vld [vmem:[%s2054 + $0x18] sm:$0xff]
  %v2059 = vld [vmem:[#allocation2] sm:$0xff]
  %v2060 = vpack.c.bf16 %v2059, %v2059
  %v2061 = vld [vmem:[%s3] sm:$0xff]
  %v2062 = vld [vmem:[%s3 + $0x8] sm:$0xff]
  %v2063 = vld [vmem:[%s3 + $0x10] sm:$0xff]
  %v2064 = vld [vmem:[%s3 + $0x18] sm:$0xff]
  %v2065 = vld [vmem:[%s3 + $0x20] sm:$0xff]
  %v2066 = vld [vmem:[%s3 + $0x28] sm:$0xff]
  %v2067 = vld [vmem:[%s3 + $0x30] sm:$0xff]
  %v2068 = vld [vmem:[%s3 + $0x38] sm:$0xff]
  %v2069 = vld [vmem:[%s3 + $0x40] sm:$0xff]
  %v2070 = vld [vmem:[%s3 + $0x48] sm:$0xff]
  %v2071 = vld [vmem:[%s3 + $0x50] sm:$0xff]
  %v2072 = vld [vmem:[%s3 + $0x58] sm:$0xff]
  %v2073 = vld [vmem:[%s3 + $0x60] sm:$0xff]
  %v2074 = vld [vmem:[%s3 + $0x68] sm:$0xff]
  %v2075 = vld [vmem:[%s3 + $0x70] sm:$0xff]
  %v2076 = vld [vmem:[%s3 + $0x78] sm:$0xff]
  %v2077 = vld [vmem:[%s3 + $0x80] sm:$0xff]
  %v2078 = vld [vmem:[%s3 + $0x88] sm:$0xff]
  %v2079 = vld [vmem:[%s3 + $0x90] sm:$0xff]
  %v2080 = vld [vmem:[%s3 + $0x98] sm:$0xff]
  %v2081 = vld [vmem:[%s3 + $0xa0] sm:$0xff]
  %v2082 = vld [vmem:[%s3 + $0xa8] sm:$0xff]
  %v2083 = vld [vmem:[%s3 + $0xb0] sm:$0xff]
  %v2084 = vld [vmem:[%s3 + $0xb8] sm:$0xff]
  %v2085 = vld [vmem:[%s3 + $0xc0] sm:$0xff]
  %v2086 = vld [vmem:[%s3 + $0xc8] sm:$0xff]
  %v2087 = vld [vmem:[%s3 + $0xd0] sm:$0xff]
  %v2088 = vld [vmem:[%s3 + $0xd8] sm:$0xff]
  %v2089 = vld [vmem:[%s3 + $0xe0] sm:$0xff]
  %v2090 = vld [vmem:[%s3 + $0xe8] sm:$0xff]
  %v2091 = vld [vmem:[%s3 + $0xf0] sm:$0xff]
  %v2092 = vld [vmem:[%s3 + $0xf8] sm:$0xff]
  %v2125 = vunpack.c.l.b16 %v2061
  %v2126 = vunpack.c.h.b16 %v2061
  %v2127 = vunpack.c.l.b16 %v2062
  %v2128 = vunpack.c.h.b16 %v2062
  %v2129 = vunpack.c.l.b16 %v2063
  %v2130 = vunpack.c.h.b16 %v2063
  %v2131 = vunpack.c.l.b16 %v2064
  %v2132 = vunpack.c.h.b16 %v2064
  %v2133 = vunpack.c.l.b16 %v2065
  %v2134 = vunpack.c.h.b16 %v2065
  %v2135 = vunpack.c.l.b16 %v2066
  %v2136 = vunpack.c.h.b16 %v2066
  %v2137 = vunpack.c.l.b16 %v2067
  %v2138 = vunpack.c.h.b16 %v2067
  %v2139 = vunpack.c.l.b16 %v2068
  %v2140 = vunpack.c.h.b16 %v2068
  %v2141 = vunpack.c.l.b16 %v2069
  %v2142 = vunpack.c.h.b16 %v2069
  %v2143 = vunpack.c.l.b16 %v2070
  %v2144 = vunpack.c.h.b16 %v2070
  %v2145 = vunpack.c.l.b16 %v2071
  %v2146 = vunpack.c.h.b16 %v2071
  %v2147 = vunpack.c.l.b16 %v2072
  %v2148 = vunpack.c.h.b16 %v2072
  %v2149 = vunpack.c.l.b16 %v2073
  %v2150 = vunpack.c.h.b16 %v2073
  %v2151 = vunpack.c.l.b16 %v2074
  %v2152 = vunpack.c.h.b16 %v2074
  %v2153 = vunpack.c.l.b16 %v2075
  %v2154 = vunpack.c.h.b16 %v2075
  %v2155 = vunpack.c.l.b16 %v2076
  %v2156 = vunpack.c.h.b16 %v2076
  %v2157 = vunpack.c.l.b16 %v2077
  %v2158 = vunpack.c.h.b16 %v2077
  %v2159 = vunpack.c.l.b16 %v2078
  %v2160 = vunpack.c.h.b16 %v2078
  %v2161 = vunpack.c.l.b16 %v2079
  %v2162 = vunpack.c.h.b16 %v2079
  %v2163 = vunpack.c.l.b16 %v2080
  %v2164 = vunpack.c.h.b16 %v2080
  %v2165 = vunpack.c.l.b16 %v2081
  %v2166 = vunpack.c.h.b16 %v2081
  %v2167 = vunpack.c.l.b16 %v2082
  %v2168 = vunpack.c.h.b16 %v2082
  %v2169 = vunpack.c.l.b16 %v2083
  %v2170 = vunpack.c.h.b16 %v2083
  %v2171 = vunpack.c.l.b16 %v2084
  %v2172 = vunpack.c.h.b16 %v2084
  %v2173 = vunpack.c.l.b16 %v2085
  %v2174 = vunpack.c.h.b16 %v2085
  %v2175 = vunpack.c.l.b16 %v2086
  %v2176 = vunpack.c.h.b16 %v2086
  %v2177 = vunpack.c.l.b16 %v2087
  %v2178 = vunpack.c.h.b16 %v2087
  %v2179 = vunpack.c.l.b16 %v2088
  %v2180 = vunpack.c.h.b16 %v2088
  %v2181 = vunpack.c.l.b16 %v2089
  %v2182 = vunpack.c.h.b16 %v2089
  %v2183 = vunpack.c.l.b16 %v2090
  %v2184 = vunpack.c.h.b16 %v2090
  %v2185 = vunpack.c.l.b16 %v2091
  %v2186 = vunpack.c.h.b16 %v2091
  %v2187 = vunpack.c.l.b16 %v2092
  %v2188 = vunpack.c.h.b16 %v2092
  %v2189 = vpack.c.b16 %v2129, %v2125
  %v2190 = vpack.c.b16 %v2130, %v2126
  %v2191 = vpack.c.b16 %v2131, %v2127
  %v2192 = vpack.c.b16 %v2132, %v2128
  %v2193 = vpack.c.b16 %v2137, %v2133
  %v2194 = vpack.c.b16 %v2138, %v2134
  %v2195 = vpack.c.b16 %v2139, %v2135
  %v2196 = vpack.c.b16 %v2140, %v2136
  %v2197 = vpack.c.b16 %v2145, %v2141
  %v2198 = vpack.c.b16 %v2146, %v2142
  %v2199 = vpack.c.b16 %v2147, %v2143
  %v2200 = vpack.c.b16 %v2148, %v2144
  %v2201 = vpack.c.b16 %v2153, %v2149
  %v2202 = vpack.c.b16 %v2154, %v2150
  %v2203 = vpack.c.b16 %v2155, %v2151
  %v2204 = vpack.c.b16 %v2156, %v2152
  %v2205 = vpack.c.b16 %v2161, %v2157
  %v2206 = vpack.c.b16 %v2162, %v2158
  %v2207 = vpack.c.b16 %v2163, %v2159
  %v2208 = vpack.c.b16 %v2164, %v2160
  %v2209 = vpack.c.b16 %v2169, %v2165
  %v2210 = vpack.c.b16 %v2170, %v2166
  %v2211 = vpack.c.b16 %v2171, %v2167
  %v2212 = vpack.c.b16 %v2172, %v2168
  %v2213 = vpack.c.b16 %v2177, %v2173
  %v2214 = vpack.c.b16 %v2178, %v2174
  %v2215 = vpack.c.b16 %v2179, %v2175
  %v2216 = vpack.c.b16 %v2180, %v2176
  %v2217 = vpack.c.b16 %v2185, %v2181
  %v2218 = vpack.c.b16 %v2186, %v2182
  %v2219 = vpack.c.b16 %v2187, %v2183
  %v2220 = vpack.c.b16 %v2188, %v2184
  %2253 = vmatprep.subr.bf16.mxu0 %v2190
  %2254 = vmatpush1.bf16.msra.mxu0 %v2189
  %2255 = vmatprep.subr.bf16.mxu0 %v2194
  %2256 = vmatpush1.bf16.msra.mxu0 %v2193
  %2257 = vmatprep.subr.bf16.mxu0 %v2198
  %2258 = vmatpush1.bf16.msra.mxu0 %v2197
  %2259 = vmatprep.subr.bf16.mxu0 %v2202
  %2260 = vmatpush1.bf16.msra.mxu0 %v2201
  %2261 = vmatprep.subr.bf16.mxu0 %v2206
  %2262 = vmatpush1.bf16.msra.mxu0 %v2205
  %2263 = vmatprep.subr.bf16.mxu0 %v2210
  %2264 = vmatpush1.bf16.msra.mxu0 %v2209
  %2265 = vmatprep.subr.bf16.mxu0 %v2214
  %2266 = vmatpush1.bf16.msra.mxu0 %v2213
  %2267 = vmatprep.subr.bf16.mxu0 %v2218
  %2268 = vmatpush1.bf16.msra.mxu0 %v2217
  %2269 = vmatprep.subr.bf16.mxu0 0
  %2270 = vmatpush1.bf16.msra.mxu0 0
  %2271 = vmatprep.subr.bf16.mxu0 0
  %2272 = vmatpush1.bf16.msra.mxu0 0
  %2273 = vmatprep.subr.bf16.mxu0 0
  %2274 = vmatpush1.bf16.msra.mxu0 0
  %2275 = vmatprep.subr.bf16.mxu0 0
  %2276 = vmatpush1.bf16.msra.mxu0 0
  %2277 = vmatprep.subr.bf16.mxu0 0
  %2278 = vmatpush1.bf16.msra.mxu0 0
  %2279 = vmatprep.subr.bf16.mxu0 0
  %2280 = vmatpush1.bf16.msra.mxu0 0
  %2281 = vmatprep.subr.bf16.mxu0 0
  %2282 = vmatpush1.bf16.msra.mxu0 0
  %2283 = vmatprep.subr.bf16.mxu0 0
  %2284 = vmatpush1.bf16.msra.mxu0 0
  %2285 = vmatprep.mubr.bf16.mxu0 0
  %2286 = vmatmul.mubr.bf16.gmra.mrb[0].mxu0 %v2060
  %v2287 = vpop.f32.mrb[0].mxu0
  %v2288 = vadd.f32 0.0, %v2287
  %v2289 = vpop.f32.mrb[0].mxu0
  %v2290 = vadd.f32 0.0, %v2289
  %v2291 = vpop.f32.mrb[0].mxu0
  %v2292 = vpop.f32.mrb[0].mxu0
  %2293 = vdwg.mxu0
  %2294 = vmatprep.subr.bf16.mxu0 %v2192
  %2295 = vmatpush1.bf16.msra.mxu0 %v2191
  %2296 = vmatprep.subr.bf16.mxu0 %v2196
  %2297 = vmatpush1.bf16.msra.mxu0 %v2195
  %2298 = vmatprep.subr.bf16.mxu0 %v2200
  %2299 = vmatpush1.bf16.msra.mxu0 %v2199
  %2300 = vmatprep.subr.bf16.mxu0 %v2204
  %2301 = vmatpush1.bf16.msra.mxu0 %v2203
  %2302 = vmatprep.subr.bf16.mxu0 %v2208
  %2303 = vmatpush1.bf16.msra.mxu0 %v2207
  %2304 = vmatprep.subr.bf16.mxu0 %v2212
  %2305 = vmatpush1.bf16.msra.mxu0 %v2211
  %2306 = vmatprep.subr.bf16.mxu0 %v2216
  %2307 = vmatpush1.bf16.msra.mxu0 %v2215
  %2308 = vmatprep.subr.bf16.mxu0 %v2220
  %2309 = vmatpush1.bf16.msra.mxu0 %v2219
  %2310 = vmatprep.subr.bf16.mxu0 0
  %2311 = vmatpush1.bf16.msra.mxu0 0
  %2312 = vmatprep.subr.bf16.mxu0 0
  %2313 = vmatpush1.bf16.msra.mxu0 0
  %2314 = vmatprep.subr.bf16.mxu0 0
  %2315 = vmatpush1.bf16.msra.mxu0 0
  %2316 = vmatprep.subr.bf16.mxu0 0
  %2317 = vmatpush1.bf16.msra.mxu0 0
  %2318 = vmatprep.subr.bf16.mxu0 0
  %2319 = vmatpush1.bf16.msra.mxu0 0
  %2320 = vmatprep.subr.bf16.mxu0 0
  %2321 = vmatpush1.bf16.msra.mxu0 0
  %2322 = vmatprep.subr.bf16.mxu0 0
  %2323 = vmatpush1.bf16.msra.mxu0 0
  %2324 = vmatprep.subr.bf16.mxu0 0
  %2325 = vmatpush1.bf16.msra.mxu0 0
  %2326 = vmatprep.mubr.bf16.mxu0 0
  %2327 = vmatmul.mubr.bf16.gmra.mrb[0].mxu0 %v2060
  %v2328 = vpop.f32.mrb[0].mxu0
  %v2329 = vadd.f32 0.0, %v2328
  %v2330 = vpop.f32.mrb[0].mxu0
  %v2331 = vadd.f32 0.0, %v2330
  %v2332 = vpop.f32.mrb[0].mxu0
  %v2333 = vpop.f32.mrb[0].mxu0
  %2334 = vdwg.mxu0
  %v2335 = vadd.f32 %v2055, %v2288
  %v2336 = vadd.f32 %v2056, %v2290
  %v2337 = vadd.f32 %v2057, %v2329
  %v2338 = vadd.f32 %v2058, %v2331
  %v2339 = vxor.u32 %v2335, 2147483648
  %v2340 = vxor.u32 %v2336, 2147483648
  %v2341 = vmul.f32 %v2339, 1.442695
  %v2342 = vpow.pop %v2341
  %v2343 = vmul.f32 %v2340, 1.442695
  %v2344 = vpow.pop %v2343
  %v2345 = vadd.f32 %v2342, 1.0
  %v2346 = vadd.f32 %v2344, 1.0
  %v2347 = vrcp.pop %v2345
  %v2348 = vmul.f32 1.0, %v2347
  %v2349 = vrcp.pop %v2346
  %v2350 = vmul.f32 1.0, %v2349
  %v2351 = vtanh.pop %v2337
  %v2352 = vxor.u32 %v2338, 2147483648
  %v2353 = vmul.f32 %v2352, 1.442695
  %v2354 = vpow.pop %v2353
  %v2355 = vadd.f32 %v2354, 1.0
  %v2356 = vrcp.pop %v2355
  %v2357 = vmul.f32 1.0, %v2356
  %v2358 = vld [vmem:[#allocation3] sm:$0xff]
  %v2359 = vmul.f32 %v2350, %v2358
  %v2360 = vmul.f32 %v2348, %v2351
  %v2361 = vadd.f32 %v2359, %v2360
  %v2362 = vtanh.pop %v2361
  %v2363 = vmul.f32 %v2357, %v2362
  %2364 = vst [vmem:[#allocation3] sm:$0xff] %v2361
  %2365 = vst [vmem:[#allocation2] sm:$0xff] %v2363
  %s2366 = scalar_lea.vmem [#allocation5], 40
  %2367 = vst [vmem:[%s2366] sm:$0xff] %v2363
  %s2368 = smul.u32 6, 4
  %s2369 = smul.addr %s2368, 8
  %s2370 = scalar_lea.vmem [#allocation6], %s2369
  %v2371 = vld [vmem:[%s2370] sm:$0xff]
  %v2372 = vld [vmem:[%s2370 + $0x8] sm:$0xff]
  %v2373 = vld [vmem:[%s2370 + $0x10] sm:$0xff]
  %v2374 = vld [vmem:[%s2370 + $0x18] sm:$0xff]
  %v2375 = vld [vmem:[#allocation2] sm:$0xff]
  %v2376 = vpack.c.bf16 %v2375, %v2375
  %v2377 = vld [vmem:[%s3] sm:$0xff]
  %v2378 = vld [vmem:[%s3 + $0x8] sm:$0xff]
  %v2379 = vld [vmem:[%s3 + $0x10] sm:$0xff]
  %v2380 = vld [vmem:[%s3 + $0x18] sm:$0xff]
  %v2381 = vld [vmem:[%s3 + $0x20] sm:$0xff]
  %v2382 = vld [vmem:[%s3 + $0x28] sm:$0xff]
  %v2383 = vld [vmem:[%s3 + $0x30] sm:$0xff]
  %v2384 = vld [vmem:[%s3 + $0x38] sm:$0xff]
  %v2385 = vld [vmem:[%s3 + $0x40] sm:$0xff]
  %v2386 = vld [vmem:[%s3 + $0x48] sm:$0xff]
  %v2387 = vld [vmem:[%s3 + $0x50] sm:$0xff]
  %v2388 = vld [vmem:[%s3 + $0x58] sm:$0xff]
  %v2389 = vld [vmem:[%s3 + $0x60] sm:$0xff]
  %v2390 = vld [vmem:[%s3 + $0x68] sm:$0xff]
  %v2391 = vld [vmem:[%s3 + $0x70] sm:$0xff]
  %v2392 = vld [vmem:[%s3 + $0x78] sm:$0xff]
  %v2393 = vld [vmem:[%s3 + $0x80] sm:$0xff]
  %v2394 = vld [vmem:[%s3 + $0x88] sm:$0xff]
  %v2395 = vld [vmem:[%s3 + $0x90] sm:$0xff]
  %v2396 = vld [vmem:[%s3 + $0x98] sm:$0xff]
  %v2397 = vld [vmem:[%s3 + $0xa0] sm:$0xff]
  %v2398 = vld [vmem:[%s3 + $0xa8] sm:$0xff]
  %v2399 = vld [vmem:[%s3 + $0xb0] sm:$0xff]
  %v2400 = vld [vmem:[%s3 + $0xb8] sm:$0xff]
  %v2401 = vld [vmem:[%s3 + $0xc0] sm:$0xff]
  %v2402 = vld [vmem:[%s3 + $0xc8] sm:$0xff]
  %v2403 = vld [vmem:[%s3 + $0xd0] sm:$0xff]
  %v2404 = vld [vmem:[%s3 + $0xd8] sm:$0xff]
  %v2405 = vld [vmem:[%s3 + $0xe0] sm:$0xff]
  %v2406 = vld [vmem:[%s3 + $0xe8] sm:$0xff]
  %v2407 = vld [vmem:[%s3 + $0xf0] sm:$0xff]
  %v2408 = vld [vmem:[%s3 + $0xf8] sm:$0xff]
  %v2441 = vunpack.c.l.b16 %v2377
  %v2442 = vunpack.c.h.b16 %v2377
  %v2443 = vunpack.c.l.b16 %v2378
  %v2444 = vunpack.c.h.b16 %v2378
  %v2445 = vunpack.c.l.b16 %v2379
  %v2446 = vunpack.c.h.b16 %v2379
  %v2447 = vunpack.c.l.b16 %v2380
  %v2448 = vunpack.c.h.b16 %v2380
  %v2449 = vunpack.c.l.b16 %v2381
  %v2450 = vunpack.c.h.b16 %v2381
  %v2451 = vunpack.c.l.b16 %v2382
  %v2452 = vunpack.c.h.b16 %v2382
  %v2453 = vunpack.c.l.b16 %v2383
  %v2454 = vunpack.c.h.b16 %v2383
  %v2455 = vunpack.c.l.b16 %v2384
  %v2456 = vunpack.c.h.b16 %v2384
  %v2457 = vunpack.c.l.b16 %v2385
  %v2458 = vunpack.c.h.b16 %v2385
  %v2459 = vunpack.c.l.b16 %v2386
  %v2460 = vunpack.c.h.b16 %v2386
  %v2461 = vunpack.c.l.b16 %v2387
  %v2462 = vunpack.c.h.b16 %v2387
  %v2463 = vunpack.c.l.b16 %v2388
  %v2464 = vunpack.c.h.b16 %v2388
  %v2465 = vunpack.c.l.b16 %v2389
  %v2466 = vunpack.c.h.b16 %v2389
  %v2467 = vunpack.c.l.b16 %v2390
  %v2468 = vunpack.c.h.b16 %v2390
  %v2469 = vunpack.c.l.b16 %v2391
  %v2470 = vunpack.c.h.b16 %v2391
  %v2471 = vunpack.c.l.b16 %v2392
  %v2472 = vunpack.c.h.b16 %v2392
  %v2473 = vunpack.c.l.b16 %v2393
  %v2474 = vunpack.c.h.b16 %v2393
  %v2475 = vunpack.c.l.b16 %v2394
  %v2476 = vunpack.c.h.b16 %v2394
  %v2477 = vunpack.c.l.b16 %v2395
  %v2478 = vunpack.c.h.b16 %v2395
  %v2479 = vunpack.c.l.b16 %v2396
  %v2480 = vunpack.c.h.b16 %v2396
  %v2481 = vunpack.c.l.b16 %v2397
  %v2482 = vunpack.c.h.b16 %v2397
  %v2483 = vunpack.c.l.b16 %v2398
  %v2484 = vunpack.c.h.b16 %v2398
  %v2485 = vunpack.c.l.b16 %v2399
  %v2486 = vunpack.c.h.b16 %v2399
  %v2487 = vunpack.c.l.b16 %v2400
  %v2488 = vunpack.c.h.b16 %v2400
  %v2489 = vunpack.c.l.b16 %v2401
  %v2490 = vunpack.c.h.b16 %v2401
  %v2491 = vunpack.c.l.b16 %v2402
  %v2492 = vunpack.c.h.b16 %v2402
  %v2493 = vunpack.c.l.b16 %v2403
  %v2494 = vunpack.c.h.b16 %v2403
  %v2495 = vunpack.c.l.b16 %v2404
  %v2496 = vunpack.c.h.b16 %v2404
  %v2497 = vunpack.c.l.b16 %v2405
  %v2498 = vunpack.c.h.b16 %v2405
  %v2499 = vunpack.c.l.b16 %v2406
  %v2500 = vunpack.c.h.b16 %v2406
  %v2501 = vunpack.c.l.b16 %v2407
  %v2502 = vunpack.c.h.b16 %v2407
  %v2503 = vunpack.c.l.b16 %v2408
  %v2504 = vunpack.c.h.b16 %v2408
  %v2505 = vpack.c.b16 %v2445, %v2441
  %v2506 = vpack.c.b16 %v2446, %v2442
  %v2507 = vpack.c.b16 %v2447, %v2443
  %v2508 = vpack.c.b16 %v2448, %v2444
  %v2509 = vpack.c.b16 %v2453, %v2449
  %v2510 = vpack.c.b16 %v2454, %v2450
  %v2511 = vpack.c.b16 %v2455, %v2451
  %v2512 = vpack.c.b16 %v2456, %v2452
  %v2513 = vpack.c.b16 %v2461, %v2457
  %v2514 = vpack.c.b16 %v2462, %v2458
  %v2515 = vpack.c.b16 %v2463, %v2459
  %v2516 = vpack.c.b16 %v2464, %v2460
  %v2517 = vpack.c.b16 %v2469, %v2465
  %v2518 = vpack.c.b16 %v2470, %v2466
  %v2519 = vpack.c.b16 %v2471, %v2467
  %v2520 = vpack.c.b16 %v2472, %v2468
  %v2521 = vpack.c.b16 %v2477, %v2473
  %v2522 = vpack.c.b16 %v2478, %v2474
  %v2523 = vpack.c.b16 %v2479, %v2475
  %v2524 = vpack.c.b16 %v2480, %v2476
  %v2525 = vpack.c.b16 %v2485, %v2481
  %v2526 = vpack.c.b16 %v2486, %v2482
  %v2527 = vpack.c.b16 %v2487, %v2483
  %v2528 = vpack.c.b16 %v2488, %v2484
  %v2529 = vpack.c.b16 %v2493, %v2489
  %v2530 = vpack.c.b16 %v2494, %v2490
  %v2531 = vpack.c.b16 %v2495, %v2491
  %v2532 = vpack.c.b16 %v2496, %v2492
  %v2533 = vpack.c.b16 %v2501, %v2497
  %v2534 = vpack.c.b16 %v2502, %v2498
  %v2535 = vpack.c.b16 %v2503, %v2499
  %v2536 = vpack.c.b16 %v2504, %v2500
  %2569 = vmatprep.subr.bf16.mxu0 %v2506
  %2570 = vmatpush1.bf16.msra.mxu0 %v2505
  %2571 = vmatprep.subr.bf16.mxu0 %v2510
  %2572 = vmatpush1.bf16.msra.mxu0 %v2509
  %2573 = vmatprep.subr.bf16.mxu0 %v2514
  %2574 = vmatpush1.bf16.msra.mxu0 %v2513
  %2575 = vmatprep.subr.bf16.mxu0 %v2518
  %2576 = vmatpush1.bf16.msra.mxu0 %v2517
  %2577 = vmatprep.subr.bf16.mxu0 %v2522
  %2578 = vmatpush1.bf16.msra.mxu0 %v2521
  %2579 = vmatprep.subr.bf16.mxu0 %v2526
  %2580 = vmatpush1.bf16.msra.mxu0 %v2525
  %2581 = vmatprep.subr.bf16.mxu0 %v2530
  %2582 = vmatpush1.bf16.msra.mxu0 %v2529
  %2583 = vmatprep.subr.bf16.mxu0 %v2534
  %2584 = vmatpush1.bf16.msra.mxu0 %v2533
  %2585 = vmatprep.subr.bf16.mxu0 0
  %2586 = vmatpush1.bf16.msra.mxu0 0
  %2587 = vmatprep.subr.bf16.mxu0 0
  %2588 = vmatpush1.bf16.msra.mxu0 0
  %2589 = vmatprep.subr.bf16.mxu0 0
  %2590 = vmatpush1.bf16.msra.mxu0 0
  %2591 = vmatprep.subr.bf16.mxu0 0
  %2592 = vmatpush1.bf16.msra.mxu0 0
  %2593 = vmatprep.subr.bf16.mxu0 0
  %2594 = vmatpush1.bf16.msra.mxu0 0
  %2595 = vmatprep.subr.bf16.mxu0 0
  %2596 = vmatpush1.bf16.msra.mxu0 0
  %2597 = vmatprep.subr.bf16.mxu0 0
  %2598 = vmatpush1.bf16.msra.mxu0 0
  %2599 = vmatprep.subr.bf16.mxu0 0
  %2600 = vmatpush1.bf16.msra.mxu0 0
  %2601 = vmatprep.mubr.bf16.mxu0 0
  %2602 = vmatmul.mubr.bf16.gmra.mrb[0].mxu0 %v2376
  %v2603 = vpop.f32.mrb[0].mxu0
  %v2604 = vadd.f32 0.0, %v2603
  %v2605 = vpop.f32.mrb[0].mxu0
  %v2606 = vadd.f32 0.0, %v2605
  %v2607 = vpop.f32.mrb[0].mxu0
  %v2608 = vpop.f32.mrb[0].mxu0
  %2609 = vdwg.mxu0
  %2610 = vmatprep.subr.bf16.mxu0 %v2508
  %2611 = vmatpush1.bf16.msra.mxu0 %v2507
  %2612 = vmatprep.subr.bf16.mxu0 %v2512
  %2613 = vmatpush1.bf16.msra.mxu0 %v2511
  %2614 = vmatprep.subr.bf16.mxu0 %v2516
  %2615 = vmatpush1.bf16.msra.mxu0 %v2515
  %2616 = vmatprep.subr.bf16.mxu0 %v2520
  %2617 = vmatpush1.bf16.msra.mxu0 %v2519
  %2618 = vmatprep.subr.bf16.mxu0 %v2524
  %2619 = vmatpush1.bf16.msra.mxu0 %v2523
  %2620 = vmatprep.subr.bf16.mxu0 %v2528
  %2621 = vmatpush1.bf16.msra.mxu0 %v2527
  %2622 = vmatprep.subr.bf16.mxu0 %v2532
  %2623 = vmatpush1.bf16.msra.mxu0 %v2531
  %2624 = vmatprep.subr.bf16.mxu0 %v2536
  %2625 = vmatpush1.bf16.msra.mxu0 %v2535
  %2626 = vmatprep.subr.bf16.mxu0 0
  %2627 = vmatpush1.bf16.msra.mxu0 0
  %2628 = vmatprep.subr.bf16.mxu0 0
  %2629 = vmatpush1.bf16.msra.mxu0 0
  %2630 = vmatprep.subr.bf16.mxu0 0
  %2631 = vmatpush1.bf16.msra.mxu0 0
  %2632 = vmatprep.subr.bf16.mxu0 0
  %2633 = vmatpush1.bf16.msra.mxu0 0
  %2634 = vmatprep.subr.bf16.mxu0 0
  %2635 = vmatpush1.bf16.msra.mxu0 0
  %2636 = vmatprep.subr.bf16.mxu0 0
  %2637 = vmatpush1.bf16.msra.mxu0 0
  %2638 = vmatprep.subr.bf16.mxu0 0
  %2639 = vmatpush1.bf16.msra.mxu0 0
  %2640 = vmatprep.subr.bf16.mxu0 0
  %2641 = vmatpush1.bf16.msra.mxu0 0
  %2642 = vmatprep.mubr.bf16.mxu0 0
  %2643 = vmatmul.mubr.bf16.gmra.mrb[0].mxu0 %v2376
  %v2644 = vpop.f32.mrb[0].mxu0
  %v2645 = vadd.f32 0.0, %v2644
  %v2646 = vpop.f32.mrb[0].mxu0
  %v2647 = vadd.f32 0.0, %v2646
  %v2648 = vpop.f32.mrb[0].mxu0
  %v2649 = vpop.f32.mrb[0].mxu0
  %2650 = vdwg.mxu0
  %v2651 = vadd.f32 %v2371, %v2604
  %v2652 = vadd.f32 %v2372, %v2606
  %v2653 = vadd.f32 %v2373, %v2645
  %v2654 = vadd.f32 %v2374, %v2647
  %v2655 = vxor.u32 %v2651, 2147483648
  %v2656 = vxor.u32 %v2652, 2147483648
  %v2657 = vmul.f32 %v2655, 1.442695
  %v2658 = vpow.pop %v2657
  %v2659 = vmul.f32 %v2656, 1.442695
  %v2660 = vpow.pop %v2659
  %v2661 = vadd.f32 %v2658, 1.0
  %v2662 = vadd.f32 %v2660, 1.0
  %v2663 = vrcp.pop %v2661
  %v2664 = vmul.f32 1.0, %v2663
  %v2665 = vrcp.pop %v2662
  %v2666 = vmul.f32 1.0, %v2665
  %v2667 = vtanh.pop %v2653
  %v2668 = vxor.u32 %v2654, 2147483648
  %v2669 = vmul.f32 %v2668, 1.442695
  %v2670 = vpow.pop %v2669
  %v2671 = vadd.f32 %v2670, 1.0
  %v2672 = vrcp.pop %v2671
  %v2673 = vmul.f32 1.0, %v2672
  %v2674 = vld [vmem:[#allocation3] sm:$0xff]
  %v2675 = vmul.f32 %v2666, %v2674
  %v2676 = vmul.f32 %v2664, %v2667
  %v2677 = vadd.f32 %v2675, %v2676
  %v2678 = vtanh.pop %v2677
  %v2679 = vmul.f32 %v2673, %v2678
  %2680 = vst [vmem:[#allocation3] sm:$0xff] %v2677
  %2681 = vst [vmem:[#allocation2] sm:$0xff] %v2679
  %s2682 = scalar_lea.vmem [#allocation5], 48
  %2683 = vst [vmem:[%s2682] sm:$0xff] %v2679
  %s2684 = smul.u32 7, 4
  %s2685 = smul.addr %s2684, 8
  %s2686 = scalar_lea.vmem [#allocation6], %s2685
  %v2687 = vld [vmem:[%s2686] sm:$0xff]
  %v2688 = vld [vmem:[%s2686 + $0x8] sm:$0xff]
  %v2689 = vld [vmem:[%s2686 + $0x10] sm:$0xff]
  %v2690 = vld [vmem:[%s2686 + $0x18] sm:$0xff]
  %v2691 = vld [vmem:[#allocation2] sm:$0xff]
  %v2692 = vpack.c.bf16 %v2691, %v2691
  %v2693 = vld [vmem:[%s3] sm:$0xff]
  %v2694 = vld [vmem:[%s3 + $0x8] sm:$0xff]
  %v2695 = vld [vmem:[%s3 + $0x10] sm:$0xff]
  %v2696 = vld [vmem:[%s3 + $0x18] sm:$0xff]
  %v2697 = vld [vmem:[%s3 + $0x20] sm:$0xff]
  %v2698 = vld [vmem:[%s3 + $0x28] sm:$0xff]
  %v2699 = vld [vmem:[%s3 + $0x30] sm:$0xff]
  %v2700 = vld [vmem:[%s3 + $0x38] sm:$0xff]
  %v2701 = vld [vmem:[%s3 + $0x40] sm:$0xff]
  %v2702 = vld [vmem:[%s3 + $0x48] sm:$0xff]
  %v2703 = vld [vmem:[%s3 + $0x50] sm:$0xff]
  %v2704 = vld [vmem:[%s3 + $0x58] sm:$0xff]
  %v2705 = vld [vmem:[%s3 + $0x60] sm:$0xff]
  %v2706 = vld [vmem:[%s3 + $0x68] sm:$0xff]
  %v2707 = vld [vmem:[%s3 + $0x70] sm:$0xff]
  %v2708 = vld [vmem:[%s3 + $0x78] sm:$0xff]
  %v2709 = vld [vmem:[%s3 + $0x80] sm:$0xff]
  %v2710 = vld [vmem:[%s3 + $0x88] sm:$0xff]
  %v2711 = vld [vmem:[%s3 + $0x90] sm:$0xff]
  %v2712 = vld [vmem:[%s3 + $0x98] sm:$0xff]
  %v2713 = vld [vmem:[%s3 + $0xa0] sm:$0xff]
  %v2714 = vld [vmem:[%s3 + $0xa8] sm:$0xff]
  %v2715 = vld [vmem:[%s3 + $0xb0] sm:$0xff]
  %v2716 = vld [vmem:[%s3 + $0xb8] sm:$0xff]
  %v2717 = vld [vmem:[%s3 + $0xc0] sm:$0xff]
  %v2718 = vld [vmem:[%s3 + $0xc8] sm:$0xff]
  %v2719 = vld [vmem:[%s3 + $0xd0] sm:$0xff]
  %v2720 = vld [vmem:[%s3 + $0xd8] sm:$0xff]
  %v2721 = vld [vmem:[%s3 + $0xe0] sm:$0xff]
  %v2722 = vld [vmem:[%s3 + $0xe8] sm:$0xff]
  %v2723 = vld [vmem:[%s3 + $0xf0] sm:$0xff]
  %v2724 = vld [vmem:[%s3 + $0xf8] sm:$0xff]
  %v2757 = vunpack.c.l.b16 %v2693
  %v2758 = vunpack.c.h.b16 %v2693
  %v2759 = vunpack.c.l.b16 %v2694
  %v2760 = vunpack.c.h.b16 %v2694
  %v2761 = vunpack.c.l.b16 %v2695
  %v2762 = vunpack.c.h.b16 %v2695
  %v2763 = vunpack.c.l.b16 %v2696
  %v2764 = vunpack.c.h.b16 %v2696
  %v2765 = vunpack.c.l.b16 %v2697
  %v2766 = vunpack.c.h.b16 %v2697
  %v2767 = vunpack.c.l.b16 %v2698
  %v2768 = vunpack.c.h.b16 %v2698
  %v2769 = vunpack.c.l.b16 %v2699
  %v2770 = vunpack.c.h.b16 %v2699
  %v2771 = vunpack.c.l.b16 %v2700
  %v2772 = vunpack.c.h.b16 %v2700
  %v2773 = vunpack.c.l.b16 %v2701
  %v2774 = vunpack.c.h.b16 %v2701
  %v2775 = vunpack.c.l.b16 %v2702
  %v2776 = vunpack.c.h.b16 %v2702
  %v2777 = vunpack.c.l.b16 %v2703
  %v2778 = vunpack.c.h.b16 %v2703
  %v2779 = vunpack.c.l.b16 %v2704
  %v2780 = vunpack.c.h.b16 %v2704
  %v2781 = vunpack.c.l.b16 %v2705
  %v2782 = vunpack.c.h.b16 %v2705
  %v2783 = vunpack.c.l.b16 %v2706
  %v2784 = vunpack.c.h.b16 %v2706
  %v2785 = vunpack.c.l.b16 %v2707
  %v2786 = vunpack.c.h.b16 %v2707
  %v2787 = vunpack.c.l.b16 %v2708
  %v2788 = vunpack.c.h.b16 %v2708
  %v2789 = vunpack.c.l.b16 %v2709
  %v2790 = vunpack.c.h.b16 %v2709
  %v2791 = vunpack.c.l.b16 %v2710
  %v2792 = vunpack.c.h.b16 %v2710
  %v2793 = vunpack.c.l.b16 %v2711
  %v2794 = vunpack.c.h.b16 %v2711
  %v2795 = vunpack.c.l.b16 %v2712
  %v2796 = vunpack.c.h.b16 %v2712
  %v2797 = vunpack.c.l.b16 %v2713
  %v2798 = vunpack.c.h.b16 %v2713
  %v2799 = vunpack.c.l.b16 %v2714
  %v2800 = vunpack.c.h.b16 %v2714
  %v2801 = vunpack.c.l.b16 %v2715
  %v2802 = vunpack.c.h.b16 %v2715
  %v2803 = vunpack.c.l.b16 %v2716
  %v2804 = vunpack.c.h.b16 %v2716
  %v2805 = vunpack.c.l.b16 %v2717
  %v2806 = vunpack.c.h.b16 %v2717
  %v2807 = vunpack.c.l.b16 %v2718
  %v2808 = vunpack.c.h.b16 %v2718
  %v2809 = vunpack.c.l.b16 %v2719
  %v2810 = vunpack.c.h.b16 %v2719
  %v2811 = vunpack.c.l.b16 %v2720
  %v2812 = vunpack.c.h.b16 %v2720
  %v2813 = vunpack.c.l.b16 %v2721
  %v2814 = vunpack.c.h.b16 %v2721
  %v2815 = vunpack.c.l.b16 %v2722
  %v2816 = vunpack.c.h.b16 %v2722
  %v2817 = vunpack.c.l.b16 %v2723
  %v2818 = vunpack.c.h.b16 %v2723
  %v2819 = vunpack.c.l.b16 %v2724
  %v2820 = vunpack.c.h.b16 %v2724
  %v2821 = vpack.c.b16 %v2761, %v2757
  %v2822 = vpack.c.b16 %v2762, %v2758
  %v2823 = vpack.c.b16 %v2763, %v2759
  %v2824 = vpack.c.b16 %v2764, %v2760
  %v2825 = vpack.c.b16 %v2769, %v2765
  %v2826 = vpack.c.b16 %v2770, %v2766
  %v2827 = vpack.c.b16 %v2771, %v2767
  %v2828 = vpack.c.b16 %v2772, %v2768
  %v2829 = vpack.c.b16 %v2777, %v2773
  %v2830 = vpack.c.b16 %v2778, %v2774
  %v2831 = vpack.c.b16 %v2779, %v2775
  %v2832 = vpack.c.b16 %v2780, %v2776
  %v2833 = vpack.c.b16 %v2785, %v2781
  %v2834 = vpack.c.b16 %v2786, %v2782
  %v2835 = vpack.c.b16 %v2787, %v2783
  %v2836 = vpack.c.b16 %v2788, %v2784
  %v2837 = vpack.c.b16 %v2793, %v2789
  %v2838 = vpack.c.b16 %v2794, %v2790
  %v2839 = vpack.c.b16 %v2795, %v2791
  %v2840 = vpack.c.b16 %v2796, %v2792
  %v2841 = vpack.c.b16 %v2801, %v2797
  %v2842 = vpack.c.b16 %v2802, %v2798
  %v2843 = vpack.c.b16 %v2803, %v2799
  %v2844 = vpack.c.b16 %v2804, %v2800
  %v2845 = vpack.c.b16 %v2809, %v2805
  %v2846 = vpack.c.b16 %v2810, %v2806
  %v2847 = vpack.c.b16 %v2811, %v2807
  %v2848 = vpack.c.b16 %v2812, %v2808
  %v2849 = vpack.c.b16 %v2817, %v2813
  %v2850 = vpack.c.b16 %v2818, %v2814
  %v2851 = vpack.c.b16 %v2819, %v2815
  %v2852 = vpack.c.b16 %v2820, %v2816
  %2885 = vmatprep.subr.bf16.mxu0 %v2822
  %2886 = vmatpush1.bf16.msra.mxu0 %v2821
  %2887 = vmatprep.subr.bf16.mxu0 %v2826
  %2888 = vmatpush1.bf16.msra.mxu0 %v2825
  %2889 = vmatprep.subr.bf16.mxu0 %v2830
  %2890 = vmatpush1.bf16.msra.mxu0 %v2829
  %2891 = vmatprep.subr.bf16.mxu0 %v2834
  %2892 = vmatpush1.bf16.msra.mxu0 %v2833
  %2893 = vmatprep.subr.bf16.mxu0 %v2838
  %2894 = vmatpush1.bf16.msra.mxu0 %v2837
  %2895 = vmatprep.subr.bf16.mxu0 %v2842
  %2896 = vmatpush1.bf16.msra.mxu0 %v2841
  %2897 = vmatprep.subr.bf16.mxu0 %v2846
  %2898 = vmatpush1.bf16.msra.mxu0 %v2845
  %2899 = vmatprep.subr.bf16.mxu0 %v2850
  %2900 = vmatpush1.bf16.msra.mxu0 %v2849
  %2901 = vmatprep.subr.bf16.mxu0 0
  %2902 = vmatpush1.bf16.msra.mxu0 0
  %2903 = vmatprep.subr.bf16.mxu0 0
  %2904 = vmatpush1.bf16.msra.mxu0 0
  %2905 = vmatprep.subr.bf16.mxu0 0
  %2906 = vmatpush1.bf16.msra.mxu0 0
  %2907 = vmatprep.subr.bf16.mxu0 0
  %2908 = vmatpush1.bf16.msra.mxu0 0
  %2909 = vmatprep.subr.bf16.mxu0 0
  %2910 = vmatpush1.bf16.msra.mxu0 0
  %2911 = vmatprep.subr.bf16.mxu0 0
  %2912 = vmatpush1.bf16.msra.mxu0 0
  %2913 = vmatprep.subr.bf16.mxu0 0
  %2914 = vmatpush1.bf16.msra.mxu0 0
  %2915 = vmatprep.subr.bf16.mxu0 0
  %2916 = vmatpush1.bf16.msra.mxu0 0
  %2917 = vmatprep.mubr.bf16.mxu0 0
  %2918 = vmatmul.mubr.bf16.gmra.mrb[0].mxu0 %v2692
  %v2919 = vpop.f32.mrb[0].mxu0
  %v2920 = vadd.f32 0.0, %v2919
  %v2921 = vpop.f32.mrb[0].mxu0
  %v2922 = vadd.f32 0.0, %v2921
  %v2923 = vpop.f32.mrb[0].mxu0
  %v2924 = vpop.f32.mrb[0].mxu0
  %2925 = vdwg.mxu0
  %2926 = vmatprep.subr.bf16.mxu0 %v2824
  %2927 = vmatpush1.bf16.msra.mxu0 %v2823
  %2928 = vmatprep.subr.bf16.mxu0 %v2828
  %2929 = vmatpush1.bf16.msra.mxu0 %v2827
  %2930 = vmatprep.subr.bf16.mxu0 %v2832
  %2931 = vmatpush1.bf16.msra.mxu0 %v2831
  %2932 = vmatprep.subr.bf16.mxu0 %v2836
  %2933 = vmatpush1.bf16.msra.mxu0 %v2835
  %2934 = vmatprep.subr.bf16.mxu0 %v2840
  %2935 = vmatpush1.bf16.msra.mxu0 %v2839
  %2936 = vmatprep.subr.bf16.mxu0 %v2844
  %2937 = vmatpush1.bf16.msra.mxu0 %v2843
  %2938 = vmatprep.subr.bf16.mxu0 %v2848
  %2939 = vmatpush1.bf16.msra.mxu0 %v2847
  %2940 = vmatprep.subr.bf16.mxu0 %v2852
  %2941 = vmatpush1.bf16.msra.mxu0 %v2851
  %2942 = vmatprep.subr.bf16.mxu0 0
  %2943 = vmatpush1.bf16.msra.mxu0 0
  %2944 = vmatprep.subr.bf16.mxu0 0
  %2945 = vmatpush1.bf16.msra.mxu0 0
  %2946 = vmatprep.subr.bf16.mxu0 0
  %2947 = vmatpush1.bf16.msra.mxu0 0
  %2948 = vmatprep.subr.bf16.mxu0 0
  %2949 = vmatpush1.bf16.msra.mxu0 0
  %2950 = vmatprep.subr.bf16.mxu0 0
  %2951 = vmatpush1.bf16.msra.mxu0 0
  %2952 = vmatprep.subr.bf16.mxu0 0
  %2953 = vmatpush1.bf16.msra.mxu0 0
  %2954 = vmatprep.subr.bf16.mxu0 0
  %2955 = vmatpush1.bf16.msra.mxu0 0
  %2956 = vmatprep.subr.bf16.mxu0 0
  %2957 = vmatpush1.bf16.msra.mxu0 0
  %2958 = vmatprep.mubr.bf16.mxu0 0
  %2959 = vmatmul.mubr.bf16.gmra.mrb[0].mxu0 %v2692
  %v2960 = vpop.f32.mrb[0].mxu0
  %v2961 = vadd.f32 0.0, %v2960
  %v2962 = vpop.f32.mrb[0].mxu0
  %v2963 = vadd.f32 0.0, %v2962
  %v2964 = vpop.f32.mrb[0].mxu0
  %v2965 = vpop.f32.mrb[0].mxu0
  %2966 = vdwg.mxu0
  %v2967 = vadd.f32 %v2687, %v2920
  %v2968 = vadd.f32 %v2688, %v2922
  %v2969 = vadd.f32 %v2689, %v2961
  %v2970 = vadd.f32 %v2690, %v2963
  %v2971 = vxor.u32 %v2967, 2147483648
  %v2972 = vxor.u32 %v2968, 2147483648
  %v2973 = vmul.f32 %v2971, 1.442695
  %v2974 = vpow.pop %v2973
  %v2975 = vmul.f32 %v2972, 1.442695
  %v2976 = vpow.pop %v2975
  %v2977 = vadd.f32 %v2974, 1.0
  %v2978 = vadd.f32 %v2976, 1.0
  %v2979 = vrcp.pop %v2977
  %v2980 = vmul.f32 1.0, %v2979
  %v2981 = vrcp.pop %v2978
  %v2982 = vmul.f32 1.0, %v2981
  %v2983 = vtanh.pop %v2969
  %v2984 = vxor.u32 %v2970, 2147483648
  %v2985 = vmul.f32 %v2984, 1.442695
  %v2986 = vpow.pop %v2985
  %v2987 = vadd.f32 %v2986, 1.0
  %v2988 = vrcp.pop %v2987
  %v2989 = vmul.f32 1.0, %v2988
  %v2990 = vld [vmem:[#allocation3] sm:$0xff]
  %v2991 = vmul.f32 %v2982, %v2990
  %v2992 = vmul.f32 %v2980, %v2983
  %v2993 = vadd.f32 %v2991, %v2992
  %v2994 = vtanh.pop %v2993
  %v2995 = vmul.f32 %v2989, %v2994
  %2996 = vst [vmem:[#allocation3] sm:$0xff] %v2993
  %2997 = vst [vmem:[#allocation2] sm:$0xff] %v2995
  %s2998 = scalar_lea.vmem [#allocation5], 56
  %2999 = vst [vmem:[%s2998] sm:$0xff] %v2995
  %v3000 = vld [vmem:[#allocation5] sm:$0xff]
  %v3001 = vld [vmem:[#allocation5 + $0x8] sm:$0xff]
  %v3002 = vld [vmem:[#allocation5 + $0x10] sm:$0xff]
  %v3003 = vld [vmem:[#allocation5 + $0x18] sm:$0xff]
  %v3004 = vld [vmem:[#allocation5 + $0x20] sm:$0xff]
  %v3005 = vld [vmem:[#allocation5 + $0x28] sm:$0xff]
  %v3006 = vld [vmem:[#allocation5 + $0x30] sm:$0xff]
  %v3007 = vld [vmem:[#allocation5 + $0x38] sm:$0xff]
  %v3008 = vpack.c.bf16 %v3001, %v3000
  %v3009 = vpack.c.bf16 %v3003, %v3002
  %v3010 = vpack.c.bf16 %v3005, %v3004
  %v3011 = vpack.c.bf16 %v3007, %v3006
  %v3012 = vld [vmem:[%s5] sm:$0xff]
  %v3013 = vld [vmem:[%s5 + $0x8] sm:$0xff]
  %v3014 = vld [vmem:[%s5 + $0x10] sm:$0xff]
  %v3015 = vld [vmem:[%s5 + $0x18] sm:$0xff]
  %v3016 = vld [vmem:[%s5 + $0x20] sm:$0xff]
  %v3017 = vld [vmem:[%s5 + $0x28] sm:$0xff]
  %v3018 = vld [vmem:[%s5 + $0x30] sm:$0xff]
  %v3019 = vld [vmem:[%s5 + $0x38] sm:$0xff]
  %v3020 = vld [vmem:[%s5 + $0x40] sm:$0xff]
  %v3021 = vld [vmem:[%s5 + $0x48] sm:$0xff]
  %v3022 = vld [vmem:[%s5 + $0x50] sm:$0xff]
  %v3023 = vld [vmem:[%s5 + $0x58] sm:$0xff]
  %v3024 = vld [vmem:[%s5 + $0x60] sm:$0xff]
  %v3025 = vld [vmem:[%s5 + $0x68] sm:$0xff]
  %v3026 = vld [vmem:[%s5 + $0x70] sm:$0xff]
  %v3027 = vld [vmem:[%s5 + $0x78] sm:$0xff]
  %v3028 = vld [vmem:[%s5 + $0x80] sm:$0xff]
  %v3029 = vld [vmem:[%s5 + $0x88] sm:$0xff]
  %v3030 = vld [vmem:[%s5 + $0x90] sm:$0xff]
  %v3031 = vld [vmem:[%s5 + $0x98] sm:$0xff]
  %v3032 = vld [vmem:[%s5 + $0xa0] sm:$0xff]
  %v3033 = vld [vmem:[%s5 + $0xa8] sm:$0xff]
  %v3034 = vld [vmem:[%s5 + $0xb0] sm:$0xff]
  %v3035 = vld [vmem:[%s5 + $0xb8] sm:$0xff]
  %v3036 = vld [vmem:[%s5 + $0xc0] sm:$0xff]
  %v3037 = vld [vmem:[%s5 + $0xc8] sm:$0xff]
  %v3038 = vld [vmem:[%s5 + $0xd0] sm:$0xff]
  %v3039 = vld [vmem:[%s5 + $0xd8] sm:$0xff]
  %v3040 = vld [vmem:[%s5 + $0xe0] sm:$0xff]
  %v3041 = vld [vmem:[%s5 + $0xe8] sm:$0xff]
  %v3042 = vld [vmem:[%s5 + $0xf0] sm:$0xff]
  %v3043 = vld [vmem:[%s5 + $0xf8] sm:$0xff]
  %v3044 = vld [vmem:[%s7] sm:$0xf]
  %v3046 = vlaneseq
  %v3047 = vshrl.u32 %v3046, 7
  %v3048 = vsub.s32 0, %v3047
  %v3049 = vrot.slane %v3044, %v3048
  %v3050 = vlaneseq
  %v3051 = vshrl.u32 %v3050, 7
  %v3052 = vsub.s32 1, %v3051
  %v3053 = vrot.slane %v3044, %v3052
  %v3054 = vlaneseq
  %v3055 = vshrl.u32 %v3054, 7
  %v3056 = vsub.s32 2, %v3055
  %v3057 = vrot.slane %v3044, %v3056
  %v3058 = vlaneseq
  %v3059 = vshrl.u32 %v3058, 7
  %v3060 = vsub.s32 3, %v3059
  %v3061 = vrot.slane %v3044, %v3060
  %v3098 = vunpack.c.l.b16 %v3012
  %v3099 = vunpack.c.h.b16 %v3012
  %v3100 = vunpack.c.l.b16 %v3013
  %v3101 = vunpack.c.h.b16 %v3013
  %v3102 = vunpack.c.l.b16 %v3014
  %v3103 = vunpack.c.h.b16 %v3014
  %v3104 = vunpack.c.l.b16 %v3015
  %v3105 = vunpack.c.h.b16 %v3015
  %v3106 = vunpack.c.l.b16 %v3016
  %v3107 = vunpack.c.h.b16 %v3016
  %v3108 = vunpack.c.l.b16 %v3017
  %v3109 = vunpack.c.h.b16 %v3017
  %v3110 = vunpack.c.l.b16 %v3018
  %v3111 = vunpack.c.h.b16 %v3018
  %v3112 = vunpack.c.l.b16 %v3019
  %v3113 = vunpack.c.h.b16 %v3019
  %v3114 = vunpack.c.l.b16 %v3020
  %v3115 = vunpack.c.h.b16 %v3020
  %v3116 = vunpack.c.l.b16 %v3021
  %v3117 = vunpack.c.h.b16 %v3021
  %v3118 = vunpack.c.l.b16 %v3022
  %v3119 = vunpack.c.h.b16 %v3022
  %v3120 = vunpack.c.l.b16 %v3023
  %v3121 = vunpack.c.h.b16 %v3023
  %v3122 = vunpack.c.l.b16 %v3024
  %v3123 = vunpack.c.h.b16 %v3024
  %v3124 = vunpack.c.l.b16 %v3025
  %v3125 = vunpack.c.h.b16 %v3025
  %v3126 = vunpack.c.l.b16 %v3026
  %v3127 = vunpack.c.h.b16 %v3026
  %v3128 = vunpack.c.l.b16 %v3027
  %v3129 = vunpack.c.h.b16 %v3027
  %v3130 = vunpack.c.l.b16 %v3028
  %v3131 = vunpack.c.h.b16 %v3028
  %v3132 = vunpack.c.l.b16 %v3029
  %v3133 = vunpack.c.h.b16 %v3029
  %v3134 = vunpack.c.l.b16 %v3030
  %v3135 = vunpack.c.h.b16 %v3030
  %v3136 = vunpack.c.l.b16 %v3031
  %v3137 = vunpack.c.h.b16 %v3031
  %v3138 = vunpack.c.l.b16 %v3032
  %v3139 = vunpack.c.h.b16 %v3032
  %v3140 = vunpack.c.l.b16 %v3033
  %v3141 = vunpack.c.h.b16 %v3033
  %v3142 = vunpack.c.l.b16 %v3034
  %v3143 = vunpack.c.h.b16 %v3034
  %v3144 = vunpack.c.l.b16 %v3035
  %v3145 = vunpack.c.h.b16 %v3035
  %v3146 = vunpack.c.l.b16 %v3036
  %v3147 = vunpack.c.h.b16 %v3036
  %v3148 = vunpack.c.l.b16 %v3037
  %v3149 = vunpack.c.h.b16 %v3037
  %v3150 = vunpack.c.l.b16 %v3038
  %v3151 = vunpack.c.h.b16 %v3038
  %v3152 = vunpack.c.l.b16 %v3039
  %v3153 = vunpack.c.h.b16 %v3039
  %v3154 = vunpack.c.l.b16 %v3040
  %v3155 = vunpack.c.h.b16 %v3040
  %v3156 = vunpack.c.l.b16 %v3041
  %v3157 = vunpack.c.h.b16 %v3041
  %v3158 = vunpack.c.l.b16 %v3042
  %v3159 = vunpack.c.h.b16 %v3042
  %v3160 = vunpack.c.l.b16 %v3043
  %v3161 = vunpack.c.h.b16 %v3043
  %v3162 = vpack.c.b16 %v3102, %v3098
  %v3163 = vpack.c.b16 %v3103, %v3099
  %v3164 = vpack.c.b16 %v3104, %v3100
  %v3165 = vpack.c.b16 %v3105, %v3101
  %v3166 = vpack.c.b16 %v3110, %v3106
  %v3167 = vpack.c.b16 %v3111, %v3107
  %v3168 = vpack.c.b16 %v3112, %v3108
  %v3169 = vpack.c.b16 %v3113, %v3109
  %v3170 = vpack.c.b16 %v3118, %v3114
  %v3171 = vpack.c.b16 %v3119, %v3115
  %v3172 = vpack.c.b16 %v3120, %v3116
  %v3173 = vpack.c.b16 %v3121, %v3117
  %v3174 = vpack.c.b16 %v3126, %v3122
  %v3175 = vpack.c.b16 %v3127, %v3123
  %v3176 = vpack.c.b16 %v3128, %v3124
  %v3177 = vpack.c.b16 %v3129, %v3125
  %v3178 = vpack.c.b16 %v3134, %v3130
  %v3179 = vpack.c.b16 %v3135, %v3131
  %v3180 = vpack.c.b16 %v3136, %v3132
  %v3181 = vpack.c.b16 %v3137, %v3133
  %v3182 = vpack.c.b16 %v3142, %v3138
  %v3183 = vpack.c.b16 %v3143, %v3139
  %v3184 = vpack.c.b16 %v3144, %v3140
  %v3185 = vpack.c.b16 %v3145, %v3141
  %v3186 = vpack.c.b16 %v3150, %v3146
  %v3187 = vpack.c.b16 %v3151, %v3147
  %v3188 = vpack.c.b16 %v3152, %v3148
  %v3189 = vpack.c.b16 %v3153, %v3149
  %v3190 = vpack.c.b16 %v3158, %v3154
  %v3191 = vpack.c.b16 %v3159, %v3155
  %v3192 = vpack.c.b16 %v3160, %v3156
  %v3193 = vpack.c.b16 %v3161, %v3157
  %3226 = vmatprep.subr.bf16.mxu0 %v3163
  %3227 = vmatpush1.bf16.msra.mxu0 %v3162
  %3228 = vmatprep.subr.bf16.mxu0 %v3167
  %3229 = vmatpush1.bf16.msra.mxu0 %v3166
  %3230 = vmatprep.subr.bf16.mxu0 %v3171
  %3231 = vmatpush1.bf16.msra.mxu0 %v3170
  %3232 = vmatprep.subr.bf16.mxu0 %v3175
  %3233 = vmatpush1.bf16.msra.mxu0 %v3174
  %3234 = vmatprep.subr.bf16.mxu0 %v3179
  %3235 = vmatpush1.bf16.msra.mxu0 %v3178
  %3236 = vmatprep.subr.bf16.mxu0 %v3183
  %3237 = vmatpush1.bf16.msra.mxu0 %v3182
  %3238 = vmatprep.subr.bf16.mxu0 %v3187
  %3239 = vmatpush1.bf16.msra.mxu0 %v3186
  %3240 = vmatprep.subr.bf16.mxu0 %v3191
  %3241 = vmatpush1.bf16.msra.mxu0 %v3190
  %3242 = vmatprep.subr.bf16.mxu0 0
  %3243 = vmatpush1.bf16.msra.mxu0 0
  %3244 = vmatprep.subr.bf16.mxu0 0
  %3245 = vmatpush1.bf16.msra.mxu0 0
  %3246 = vmatprep.subr.bf16.mxu0 0
  %3247 = vmatpush1.bf16.msra.mxu0 0
  %3248 = vmatprep.subr.bf16.mxu0 0
  %3249 = vmatpush1.bf16.msra.mxu0 0
  %3250 = vmatprep.subr.bf16.mxu0 0
  %3251 = vmatpush1.bf16.msra.mxu0 0
  %3252 = vmatprep.subr.bf16.mxu0 0
  %3253 = vmatpush1.bf16.msra.mxu0 0
  %3254 = vmatprep.subr.bf16.mxu0 0
  %3255 = vmatpush1.bf16.msra.mxu0 0
  %3256 = vmatprep.subr.bf16.mxu0 0
  %3257 = vmatpush1.bf16.msra.mxu0 0
  %3258 = vmatprep.mubr.bf16.mxu0 0
  %3259 = vmatmul.mubr.bf16.gmra.mrb[0].mxu0 %v3008
  %v3260 = vpop.f32.mrb[0].mxu0
  %v3261 = vadd.f32 %v3049, %v3260
  %v3262 = vpop.f32.mrb[0].mxu0
  %v3263 = vadd.f32 %v3053, %v3262
  %v3264 = vpop.f32.mrb[0].mxu0
  %v3265 = vadd.f32 %v3049, %v3264
  %v3266 = vpop.f32.mrb[0].mxu0
  %v3267 = vadd.f32 %v3053, %v3266
  %3268 = vmatprep.mubr.bf16.mxu0 0
  %3269 = vmatmul.mubr.bf16.gmra.mrb[0].mxu0 %v3009
  %v3270 = vpop.f32.mrb[0].mxu0
  %v3271 = vadd.f32 %v3049, %v3270
  %v3272 = vpop.f32.mrb[0].mxu0
  %v3273 = vadd.f32 %v3053, %v3272
  %v3274 = vpop.f32.mrb[0].mxu0
  %v3275 = vadd.f32 %v3049, %v3274
  %v3276 = vpop.f32.mrb[0].mxu0
  %v3277 = vadd.f32 %v3053, %v3276
  %3278 = vmatprep.mubr.bf16.mxu0 0
  %3279 = vmatmul.mubr.bf16.gmra.mrb[0].mxu0 %v3010
  %v3280 = vpop.f32.mrb[0].mxu0
  %v3281 = vadd.f32 %v3049, %v3280
  %v3282 = vpop.f32.mrb[0].mxu0
  %v3283 = vadd.f32 %v3053, %v3282
  %v3284 = vpop.f32.mrb[0].mxu0
  %v3285 = vadd.f32 %v3049, %v3284
  %v3286 = vpop.f32.mrb[0].mxu0
  %v3287 = vadd.f32 %v3053, %v3286
  %3288 = vmatprep.mubr.bf16.mxu0 0
  %3289 = vmatmul.mubr.bf16.gmra.mrb[0].mxu0 %v3011
  %v3290 = vpop.f32.mrb[0].mxu0
  %v3291 = vadd.f32 %v3049, %v3290
  %v3292 = vpop.f32.mrb[0].mxu0
  %v3293 = vadd.f32 %v3053, %v3292
  %v3294 = vpop.f32.mrb[0].mxu0
  %v3295 = vadd.f32 %v3049, %v3294
  %v3296 = vpop.f32.mrb[0].mxu0
  %v3297 = vadd.f32 %v3053, %v3296
  %3298 = vdwg.mxu0
  %3299 = vmatprep.subr.bf16.mxu0 %v3165
  %3300 = vmatpush1.bf16.msra.mxu0 %v3164
  %3301 = vmatprep.subr.bf16.mxu0 %v3169
  %3302 = vmatpush1.bf16.msra.mxu0 %v3168
  %3303 = vmatprep.subr.bf16.mxu0 %v3173
  %3304 = vmatpush1.bf16.msra.mxu0 %v3172
  %3305 = vmatprep.subr.bf16.mxu0 %v3177
  %3306 = vmatpush1.bf16.msra.mxu0 %v3176
  %3307 = vmatprep.subr.bf16.mxu0 %v3181
  %3308 = vmatpush1.bf16.msra.mxu0 %v3180
  %3309 = vmatprep.subr.bf16.mxu0 %v3185
  %3310 = vmatpush1.bf16.msra.mxu0 %v3184
  %3311 = vmatprep.subr.bf16.mxu0 %v3189
  %3312 = vmatpush1.bf16.msra.mxu0 %v3188
  %3313 = vmatprep.subr.bf16.mxu0 %v3193
  %3314 = vmatpush1.bf16.msra.mxu0 %v3192
  %3315 = vmatprep.subr.bf16.mxu0 0
  %3316 = vmatpush1.bf16.msra.mxu0 0
  %3317 = vmatprep.subr.bf16.mxu0 0
  %3318 = vmatpush1.bf16.msra.mxu0 0
  %3319 = vmatprep.subr.bf16.mxu0 0
  %3320 = vmatpush1.bf16.msra.mxu0 0
  %3321 = vmatprep.subr.bf16.mxu0 0
  %3322 = vmatpush1.bf16.msra.mxu0 0
  %3323 = vmatprep.subr.bf16.mxu0 0
  %3324 = vmatpush1.bf16.msra.mxu0 0
  %3325 = vmatprep.subr.bf16.mxu0 0
  %3326 = vmatpush1.bf16.msra.mxu0 0
  %3327 = vmatprep.subr.bf16.mxu0 0
  %3328 = vmatpush1.bf16.msra.mxu0 0
  %3329 = vmatprep.subr.bf16.mxu0 0
  %3330 = vmatpush1.bf16.msra.mxu0 0
  %3331 = vmatprep.mubr.bf16.mxu0 0
  %3332 = vmatmul.mubr.bf16.gmra.mrb[0].mxu0 %v3008
  %v3333 = vpop.f32.mrb[0].mxu0
  %v3334 = vadd.f32 %v3057, %v3333
  %v3335 = vpop.f32.mrb[0].mxu0
  %v3336 = vadd.f32 %v3061, %v3335
  %v3337 = vpop.f32.mrb[0].mxu0
  %v3338 = vadd.f32 %v3057, %v3337
  %v3339 = vpop.f32.mrb[0].mxu0
  %v3340 = vadd.f32 %v3061, %v3339
  %3341 = vmatprep.mubr.bf16.mxu0 0
  %3342 = vmatmul.mubr.bf16.gmra.mrb[0].mxu0 %v3009
  %v3343 = vpop.f32.mrb[0].mxu0
  %v3344 = vadd.f32 %v3057, %v3343
  %v3345 = vpop.f32.mrb[0].mxu0
  %v3346 = vadd.f32 %v3061, %v3345
  %v3347 = vpop.f32.mrb[0].mxu0
  %v3348 = vadd.f32 %v3057, %v3347
  %v3349 = vpop.f32.mrb[0].mxu0
  %v3350 = vadd.f32 %v3061, %v3349
  %3351 = vmatprep.mubr.bf16.mxu0 0
  %3352 = vmatmul.mubr.bf16.gmra.mrb[0].mxu0 %v3010
  %v3353 = vpop.f32.mrb[0].mxu0
  %v3354 = vadd.f32 %v3057, %v3353
  %v3355 = vpop.f32.mrb[0].mxu0
  %v3356 = vadd.f32 %v3061, %v3355
  %v3357 = vpop.f32.mrb[0].mxu0
  %v3358 = vadd.f32 %v3057, %v3357
  %v3359 = vpop.f32.mrb[0].mxu0
  %v3360 = vadd.f32 %v3061, %v3359
  %3361 = vmatprep.mubr.bf16.mxu0 0
  %3362 = vmatmul.mubr.bf16.gmra.mrb[0].mxu0 %v3011
  %v3363 = vpop.f32.mrb[0].mxu0
  %v3364 = vadd.f32 %v3057, %v3363
  %v3365 = vpop.f32.mrb[0].mxu0
  %v3366 = vadd.f32 %v3061, %v3365
  %v3367 = vpop.f32.mrb[0].mxu0
  %v3368 = vadd.f32 %v3057, %v3367
  %v3369 = vpop.f32.mrb[0].mxu0
  %v3370 = vadd.f32 %v3061, %v3369
  %3371 = vdwg.mxu0
  %3372 = vst [vmem:[#allocation6] sm:$0xff] %v3261
  %3373 = vst [vmem:[#allocation6 + $0x8] sm:$0xff] %v3263
  %3374 = vst [vmem:[#allocation6 + $0x10] sm:$0xff] %v3334
  %3375 = vst [vmem:[#allocation6 + $0x18] sm:$0xff] %v3336
  %3376 = vst [vmem:[#allocation6 + $0x20] sm:$0xff] %v3265
  %3377 = vst [vmem:[#allocation6 + $0x28] sm:$0xff] %v3267
  %3378 = vst [vmem:[#allocation6 + $0x30] sm:$0xff] %v3338
  %3379 = vst [vmem:[#allocation6 + $0x38] sm:$0xff] %v3340
  %3380 = vst [vmem:[#allocation6 + $0x40] sm:$0xff] %v3271
  %3381 = vst [vmem:[#allocation6 + $0x48] sm:$0xff] %v3273
  %3382 = vst [vmem:[#allocation6 + $0x50] sm:$0xff] %v3344
  %3383 = vst [vmem:[#allocation6 + $0x58] sm:$0xff] %v3346
  %3384 = vst [vmem:[#allocation6 + $0x60] sm:$0xff] %v3275
  %3385 = vst [vmem:[#allocation6 + $0x68] sm:$0xff] %v3277
  %3386 = vst [vmem:[#allocation6 + $0x70] sm:$0xff] %v3348
  %3387 = vst [vmem:[#allocation6 + $0x78] sm:$0xff] %v3350
  %3388 = vst [vmem:[#allocation6 + $0x80] sm:$0xff] %v3281
  %3389 = vst [vmem:[#allocation6 + $0x88] sm:$0xff] %v3283
  %3390 = vst [vmem:[#allocation6 + $0x90] sm:$0xff] %v3354
  %3391 = vst [vmem:[#allocation6 + $0x98] sm:$0xff] %v3356
  %3392 = vst [vmem:[#allocation6 + $0xa0] sm:$0xff] %v3285
  %3393 = vst [vmem:[#allocation6 + $0xa8] sm:$0xff] %v3287
  %3394 = vst [vmem:[#allocation6 + $0xb0] sm:$0xff] %v3358
  %3395 = vst [vmem:[#allocation6 + $0xb8] sm:$0xff] %v3360
  %3396 = vst [vmem:[#allocation6 + $0xc0] sm:$0xff] %v3291
  %3397 = vst [vmem:[#allocation6 + $0xc8] sm:$0xff] %v3293
  %3398 = vst [vmem:[#allocation6 + $0xd0] sm:$0xff] %v3364
  %3399 = vst [vmem:[#allocation6 + $0xd8] sm:$0xff] %v3366
  %3400 = vst [vmem:[#allocation6 + $0xe0] sm:$0xff] %v3295
  %3401 = vst [vmem:[#allocation6 + $0xe8] sm:$0xff] %v3297
  %3402 = vst [vmem:[#allocation6 + $0xf0] sm:$0xff] %v3368
  %3403 = vst [vmem:[#allocation6 + $0xf8] sm:$0xff] %v3370
  %3404 = vst [vmem:[#allocation2] sm:$0xff] 0.0
  %3405 = vst [vmem:[#allocation3] sm:$0xff] 0.0
  %v3406 = vld [vmem:[%s475] sm:$0xff]
  %v3407 = vld [vmem:[%s475 + $0x8] sm:$0xff]
  %v3408 = vld [vmem:[%s475 + $0x10] sm:$0xff]
  %v3409 = vld [vmem:[%s475 + $0x18] sm:$0xff]
  %v3410 = vld [vmem:[#allocation2] sm:$0xff]
  %v3411 = vpack.c.bf16 %v3410, %v3410
  %v3412 = vld [vmem:[%s6] sm:$0xff]
  %v3413 = vld [vmem:[%s6 + $0x8] sm:$0xff]
  %v3414 = vld [vmem:[%s6 + $0x10] sm:$0xff]
  %v3415 = vld [vmem:[%s6 + $0x18] sm:$0xff]
  %v3416 = vld [vmem:[%s6 + $0x20] sm:$0xff]
  %v3417 = vld [vmem:[%s6 + $0x28] sm:$0xff]
  %v3418 = vld [vmem:[%s6 + $0x30] sm:$0xff]
  %v3419 = vld [vmem:[%s6 + $0x38] sm:$0xff]
  %v3420 = vld [vmem:[%s6 + $0x40] sm:$0xff]
  %v3421 = vld [vmem:[%s6 + $0x48] sm:$0xff]
  %v3422 = vld [vmem:[%s6 + $0x50] sm:$0xff]
  %v3423 = vld [vmem:[%s6 + $0x58] sm:$0xff]
  %v3424 = vld [vmem:[%s6 + $0x60] sm:$0xff]
  %v3425 = vld [vmem:[%s6 + $0x68] sm:$0xff]
  %v3426 = vld [vmem:[%s6 + $0x70] sm:$0xff]
  %v3427 = vld [vmem:[%s6 + $0x78] sm:$0xff]
  %v3428 = vld [vmem:[%s6 + $0x80] sm:$0xff]
  %v3429 = vld [vmem:[%s6 + $0x88] sm:$0xff]
  %v3430 = vld [vmem:[%s6 + $0x90] sm:$0xff]
  %v3431 = vld [vmem:[%s6 + $0x98] sm:$0xff]
  %v3432 = vld [vmem:[%s6 + $0xa0] sm:$0xff]
  %v3433 = vld [vmem:[%s6 + $0xa8] sm:$0xff]
  %v3434 = vld [vmem:[%s6 + $0xb0] sm:$0xff]
  %v3435 = vld [vmem:[%s6 + $0xb8] sm:$0xff]
  %v3436 = vld [vmem:[%s6 + $0xc0] sm:$0xff]
  %v3437 = vld [vmem:[%s6 + $0xc8] sm:$0xff]
  %v3438 = vld [vmem:[%s6 + $0xd0] sm:$0xff]
  %v3439 = vld [vmem:[%s6 + $0xd8] sm:$0xff]
  %v3440 = vld [vmem:[%s6 + $0xe0] sm:$0xff]
  %v3441 = vld [vmem:[%s6 + $0xe8] sm:$0xff]
  %v3442 = vld [vmem:[%s6 + $0xf0] sm:$0xff]
  %v3443 = vld [vmem:[%s6 + $0xf8] sm:$0xff]
  %v3476 = vunpack.c.l.b16 %v3412
  %v3477 = vunpack.c.h.b16 %v3412
  %v3478 = vunpack.c.l.b16 %v3413
  %v3479 = vunpack.c.h.b16 %v3413
  %v3480 = vunpack.c.l.b16 %v3414
  %v3481 = vunpack.c.h.b16 %v3414
  %v3482 = vunpack.c.l.b16 %v3415
  %v3483 = vunpack.c.h.b16 %v3415
  %v3484 = vunpack.c.l.b16 %v3416
  %v3485 = vunpack.c.h.b16 %v3416
  %v3486 = vunpack.c.l.b16 %v3417
  %v3487 = vunpack.c.h.b16 %v3417
  %v3488 = vunpack.c.l.b16 %v3418
  %v3489 = vunpack.c.h.b16 %v3418
  %v3490 = vunpack.c.l.b16 %v3419
  %v3491 = vunpack.c.h.b16 %v3419
  %v3492 = vunpack.c.l.b16 %v3420
  %v3493 = vunpack.c.h.b16 %v3420
  %v3494 = vunpack.c.l.b16 %v3421
  %v3495 = vunpack.c.h.b16 %v3421
  %v3496 = vunpack.c.l.b16 %v3422
  %v3497 = vunpack.c.h.b16 %v3422
  %v3498 = vunpack.c.l.b16 %v3423
  %v3499 = vunpack.c.h.b16 %v3423
  %v3500 = vunpack.c.l.b16 %v3424
  %v3501 = vunpack.c.h.b16 %v3424
  %v3502 = vunpack.c.l.b16 %v3425
  %v3503 = vunpack.c.h.b16 %v3425
  %v3504 = vunpack.c.l.b16 %v3426
  %v3505 = vunpack.c.h.b16 %v3426
  %v3506 = vunpack.c.l.b16 %v3427
  %v3507 = vunpack.c.h.b16 %v3427
  %v3508 = vunpack.c.l.b16 %v3428
  %v3509 = vunpack.c.h.b16 %v3428
  %v3510 = vunpack.c.l.b16 %v3429
  %v3511 = vunpack.c.h.b16 %v3429
  %v3512 = vunpack.c.l.b16 %v3430
  %v3513 = vunpack.c.h.b16 %v3430
  %v3514 = vunpack.c.l.b16 %v3431
  %v3515 = vunpack.c.h.b16 %v3431
  %v3516 = vunpack.c.l.b16 %v3432
  %v3517 = vunpack.c.h.b16 %v3432
  %v3518 = vunpack.c.l.b16 %v3433
  %v3519 = vunpack.c.h.b16 %v3433
  %v3520 = vunpack.c.l.b16 %v3434
  %v3521 = vunpack.c.h.b16 %v3434
  %v3522 = vunpack.c.l.b16 %v3435
  %v3523 = vunpack.c.h.b16 %v3435
  %v3524 = vunpack.c.l.b16 %v3436
  %v3525 = vunpack.c.h.b16 %v3436
  %v3526 = vunpack.c.l.b16 %v3437
  %v3527 = vunpack.c.h.b16 %v3437
  %v3528 = vunpack.c.l.b16 %v3438
  %v3529 = vunpack.c.h.b16 %v3438
  %v3530 = vunpack.c.l.b16 %v3439
  %v3531 = vunpack.c.h.b16 %v3439
  %v3532 = vunpack.c.l.b16 %v3440
  %v3533 = vunpack.c.h.b16 %v3440
  %v3534 = vunpack.c.l.b16 %v3441
  %v3535 = vunpack.c.h.b16 %v3441
  %v3536 = vunpack.c.l.b16 %v3442
  %v3537 = vunpack.c.h.b16 %v3442
  %v3538 = vunpack.c.l.b16 %v3443
  %v3539 = vunpack.c.h.b16 %v3443
  %v3540 = vpack.c.b16 %v3480, %v3476
  %v3541 = vpack.c.b16 %v3481, %v3477
  %v3542 = vpack.c.b16 %v3482, %v3478
  %v3543 = vpack.c.b16 %v3483, %v3479
  %v3544 = vpack.c.b16 %v3488, %v3484
  %v3545 = vpack.c.b16 %v3489, %v3485
  %v3546 = vpack.c.b16 %v3490, %v3486
  %v3547 = vpack.c.b16 %v3491, %v3487
  %v3548 = vpack.c.b16 %v3496, %v3492
  %v3549 = vpack.c.b16 %v3497, %v3493
  %v3550 = vpack.c.b16 %v3498, %v3494
  %v3551 = vpack.c.b16 %v3499, %v3495
  %v3552 = vpack.c.b16 %v3504, %v3500
  %v3553 = vpack.c.b16 %v3505, %v3501
  %v3554 = vpack.c.b16 %v3506, %v3502
  %v3555 = vpack.c.b16 %v3507, %v3503
  %v3556 = vpack.c.b16 %v3512, %v3508
  %v3557 = vpack.c.b16 %v3513, %v3509
  %v3558 = vpack.c.b16 %v3514, %v3510
  %v3559 = vpack.c.b16 %v3515, %v3511
  %v3560 = vpack.c.b16 %v3520, %v3516
  %v3561 = vpack.c.b16 %v3521, %v3517
  %v3562 = vpack.c.b16 %v3522, %v3518
  %v3563 = vpack.c.b16 %v3523, %v3519
  %v3564 = vpack.c.b16 %v3528, %v3524
  %v3565 = vpack.c.b16 %v3529, %v3525
  %v3566 = vpack.c.b16 %v3530, %v3526
  %v3567 = vpack.c.b16 %v3531, %v3527
  %v3568 = vpack.c.b16 %v3536, %v3532
  %v3569 = vpack.c.b16 %v3537, %v3533
  %v3570 = vpack.c.b16 %v3538, %v3534
  %v3571 = vpack.c.b16 %v3539, %v3535
  %3604 = vmatprep.subr.bf16.mxu0 %v3541
  %3605 = vmatpush1.bf16.msra.mxu0 %v3540
  %3606 = vmatprep.subr.bf16.mxu0 %v3545
  %3607 = vmatpush1.bf16.msra.mxu0 %v3544
  %3608 = vmatprep.subr.bf16.mxu0 %v3549
  %3609 = vmatpush1.bf16.msra.mxu0 %v3548
  %3610 = vmatprep.subr.bf16.mxu0 %v3553
  %3611 = vmatpush1.bf16.msra.mxu0 %v3552
  %3612 = vmatprep.subr.bf16.mxu0 %v3557
  %3613 = vmatpush1.bf16.msra.mxu0 %v3556
  %3614 = vmatprep.subr.bf16.mxu0 %v3561
  %3615 = vmatpush1.bf16.msra.mxu0 %v3560
  %3616 = vmatprep.subr.bf16.mxu0 %v3565
  %3617 = vmatpush1.bf16.msra.mxu0 %v3564
  %3618 = vmatprep.subr.bf16.mxu0 %v3569
  %3619 = vmatpush1.bf16.msra.mxu0 %v3568
  %3620 = vmatprep.subr.bf16.mxu0 0
  %3621 = vmatpush1.bf16.msra.mxu0 0
  %3622 = vmatprep.subr.bf16.mxu0 0
  %3623 = vmatpush1.bf16.msra.mxu0 0
  %3624 = vmatprep.subr.bf16.mxu0 0
  %3625 = vmatpush1.bf16.msra.mxu0 0
  %3626 = vmatprep.subr.bf16.mxu0 0
  %3627 = vmatpush1.bf16.msra.mxu0 0
  %3628 = vmatprep.subr.bf16.mxu0 0
  %3629 = vmatpush1.bf16.msra.mxu0 0
  %3630 = vmatprep.subr.bf16.mxu0 0
  %3631 = vmatpush1.bf16.msra.mxu0 0
  %3632 = vmatprep.subr.bf16.mxu0 0
  %3633 = vmatpush1.bf16.msra.mxu0 0
  %3634 = vmatprep.subr.bf16.mxu0 0
  %3635 = vmatpush1.bf16.msra.mxu0 0
  %3636 = vmatprep.mubr.bf16.mxu0 0
  %3637 = vmatmul.mubr.bf16.gmra.mrb[0].mxu0 %v3411
  %v3638 = vpop.f32.mrb[0].mxu0
  %v3639 = vadd.f32 0.0, %v3638
  %v3640 = vpop.f32.mrb[0].mxu0
  %v3641 = vadd.f32 0.0, %v3640
  %v3642 = vpop.f32.mrb[0].mxu0
  %v3643 = vpop.f32.mrb[0].mxu0
  %3644 = vdwg.mxu0
  %3645 = vmatprep.subr.bf16.mxu0 %v3543
  %3646 = vmatpush1.bf16.msra.mxu0 %v3542
  %3647 = vmatprep.subr.bf16.mxu0 %v3547
  %3648 = vmatpush1.bf16.msra.mxu0 %v3546
  %3649 = vmatprep.subr.bf16.mxu0 %v3551
  %3650 = vmatpush1.bf16.msra.mxu0 %v3550
  %3651 = vmatprep.subr.bf16.mxu0 %v3555
  %3652 = vmatpush1.bf16.msra.mxu0 %v3554
  %3653 = vmatprep.subr.bf16.mxu0 %v3559
  %3654 = vmatpush1.bf16.msra.mxu0 %v3558
  %3655 = vmatprep.subr.bf16.mxu0 %v3563
  %3656 = vmatpush1.bf16.msra.mxu0 %v3562
  %3657 = vmatprep.subr.bf16.mxu0 %v3567
  %3658 = vmatpush1.bf16.msra.mxu0 %v3566
  %3659 = vmatprep.subr.bf16.mxu0 %v3571
  %3660 = vmatpush1.bf16.msra.mxu0 %v3570
  %3661 = vmatprep.subr.bf16.mxu0 0
  %3662 = vmatpush1.bf16.msra.mxu0 0
  %3663 = vmatprep.subr.bf16.mxu0 0
  %3664 = vmatpush1.bf16.msra.mxu0 0
  %3665 = vmatprep.subr.bf16.mxu0 0
  %3666 = vmatpush1.bf16.msra.mxu0 0
  %3667 = vmatprep.subr.bf16.mxu0 0
  %3668 = vmatpush1.bf16.msra.mxu0 0
  %3669 = vmatprep.subr.bf16.mxu0 0
  %3670 = vmatpush1.bf16.msra.mxu0 0
  %3671 = vmatprep.subr.bf16.mxu0 0
  %3672 = vmatpush1.bf16.msra.mxu0 0
  %3673 = vmatprep.subr.bf16.mxu0 0
  %3674 = vmatpush1.bf16.msra.mxu0 0
  %3675 = vmatprep.subr.bf16.mxu0 0
  %3676 = vmatpush1.bf16.msra.mxu0 0
  %3677 = vmatprep.mubr.bf16.mxu0 0
  %3678 = vmatmul.mubr.bf16.gmra.mrb[0].mxu0 %v3411
  %v3679 = vpop.f32.mrb[0].mxu0
  %v3680 = vadd.f32 0.0, %v3679
  %v3681 = vpop.f32.mrb[0].mxu0
  %v3682 = vadd.f32 0.0, %v3681
  %v3683 = vpop.f32.mrb[0].mxu0
  %v3684 = vpop.f32.mrb[0].mxu0
  %3685 = vdwg.mxu0
  %v3686 = vadd.f32 %v3406, %v3639
  %v3687 = vadd.f32 %v3407, %v3641
  %v3688 = vadd.f32 %v3408, %v3680
  %v3689 = vadd.f32 %v3409, %v3682
  %v3690 = vxor.u32 %v3686, 2147483648
  %v3691 = vxor.u32 %v3687, 2147483648
  %v3692 = vmul.f32 %v3690, 1.442695
  %v3693 = vpow.pop %v3692
  %v3694 = vmul.f32 %v3691, 1.442695
  %v3695 = vpow.pop %v3694
  %v3696 = vadd.f32 %v3693, 1.0
  %v3697 = vadd.f32 %v3695, 1.0
  %v3698 = vrcp.pop %v3696
  %v3699 = vmul.f32 1.0, %v3698
  %v3700 = vrcp.pop %v3697
  %v3701 = vmul.f32 1.0, %v3700
  %v3702 = vtanh.pop %v3688
  %v3703 = vxor.u32 %v3689, 2147483648
  %v3704 = vmul.f32 %v3703, 1.442695
  %v3705 = vpow.pop %v3704
  %v3706 = vadd.f32 %v3705, 1.0
  %v3707 = vrcp.pop %v3706
  %v3708 = vmul.f32 1.0, %v3707
  %v3709 = vld [vmem:[#allocation3] sm:$0xff]
  %v3710 = vmul.f32 %v3701, %v3709
  %v3711 = vmul.f32 %v3699, %v3702
  %v3712 = vadd.f32 %v3710, %v3711
  %v3713 = vtanh.pop %v3712
  %v3714 = vmul.f32 %v3708, %v3713
  %3715 = vst [vmem:[#allocation3] sm:$0xff] %v3712
  %3716 = vst [vmem:[#allocation2] sm:$0xff] %v3714
  %3717 = vst [vmem:[#allocation5] sm:$0xff] %v3714
  %v3718 = vld [vmem:[%s790] sm:$0xff]
  %v3719 = vld [vmem:[%s790 + $0x8] sm:$0xff]
  %v3720 = vld [vmem:[%s790 + $0x10] sm:$0xff]
  %v3721 = vld [vmem:[%s790 + $0x18] sm:$0xff]
  %v3722 = vld [vmem:[#allocation2] sm:$0xff]
  %v3723 = vpack.c.bf16 %v3722, %v3722
  %v3724 = vld [vmem:[%s6] sm:$0xff]
  %v3725 = vld [vmem:[%s6 + $0x8] sm:$0xff]
  %v3726 = vld [vmem:[%s6 + $0x10] sm:$0xff]
  %v3727 = vld [vmem:[%s6 + $0x18] sm:$0xff]
  %v3728 = vld [vmem:[%s6 + $0x20] sm:$0xff]
  %v3729 = vld [vmem:[%s6 + $0x28] sm:$0xff]
  %v3730 = vld [vmem:[%s6 + $0x30] sm:$0xff]
  %v3731 = vld [vmem:[%s6 + $0x38] sm:$0xff]
  %v3732 = vld [vmem:[%s6 + $0x40] sm:$0xff]
  %v3733 = vld [vmem:[%s6 + $0x48] sm:$0xff]
  %v3734 = vld [vmem:[%s6 + $0x50] sm:$0xff]
  %v3735 = vld [vmem:[%s6 + $0x58] sm:$0xff]
  %v3736 = vld [vmem:[%s6 + $0x60] sm:$0xff]
  %v3737 = vld [vmem:[%s6 + $0x68] sm:$0xff]
  %v3738 = vld [vmem:[%s6 + $0x70] sm:$0xff]
  %v3739 = vld [vmem:[%s6 + $0x78] sm:$0xff]
  %v3740 = vld [vmem:[%s6 + $0x80] sm:$0xff]
  %v3741 = vld [vmem:[%s6 + $0x88] sm:$0xff]
  %v3742 = vld [vmem:[%s6 + $0x90] sm:$0xff]
  %v3743 = vld [vmem:[%s6 + $0x98] sm:$0xff]
  %v3744 = vld [vmem:[%s6 + $0xa0] sm:$0xff]
  %v3745 = vld [vmem:[%s6 + $0xa8] sm:$0xff]
  %v3746 = vld [vmem:[%s6 + $0xb0] sm:$0xff]
  %v3747 = vld [vmem:[%s6 + $0xb8] sm:$0xff]
  %v3748 = vld [vmem:[%s6 + $0xc0] sm:$0xff]
  %v3749 = vld [vmem:[%s6 + $0xc8] sm:$0xff]
  %v3750 = vld [vmem:[%s6 + $0xd0] sm:$0xff]
  %v3751 = vld [vmem:[%s6 + $0xd8] sm:$0xff]
  %v3752 = vld [vmem:[%s6 + $0xe0] sm:$0xff]
  %v3753 = vld [vmem:[%s6 + $0xe8] sm:$0xff]
  %v3754 = vld [vmem:[%s6 + $0xf0] sm:$0xff]
  %v3755 = vld [vmem:[%s6 + $0xf8] sm:$0xff]
  %v3788 = vunpack.c.l.b16 %v3724
  %v3789 = vunpack.c.h.b16 %v3724
  %v3790 = vunpack.c.l.b16 %v3725
  %v3791 = vunpack.c.h.b16 %v3725
  %v3792 = vunpack.c.l.b16 %v3726
  %v3793 = vunpack.c.h.b16 %v3726
  %v3794 = vunpack.c.l.b16 %v3727
  %v3795 = vunpack.c.h.b16 %v3727
  %v3796 = vunpack.c.l.b16 %v3728
  %v3797 = vunpack.c.h.b16 %v3728
  %v3798 = vunpack.c.l.b16 %v3729
  %v3799 = vunpack.c.h.b16 %v3729
  %v3800 = vunpack.c.l.b16 %v3730
  %v3801 = vunpack.c.h.b16 %v3730
  %v3802 = vunpack.c.l.b16 %v3731
  %v3803 = vunpack.c.h.b16 %v3731
  %v3804 = vunpack.c.l.b16 %v3732
  %v3805 = vunpack.c.h.b16 %v3732
  %v3806 = vunpack.c.l.b16 %v3733
  %v3807 = vunpack.c.h.b16 %v3733
  %v3808 = vunpack.c.l.b16 %v3734
  %v3809 = vunpack.c.h.b16 %v3734
  %v3810 = vunpack.c.l.b16 %v3735
  %v3811 = vunpack.c.h.b16 %v3735
  %v3812 = vunpack.c.l.b16 %v3736
  %v3813 = vunpack.c.h.b16 %v3736
  %v3814 = vunpack.c.l.b16 %v3737
  %v3815 = vunpack.c.h.b16 %v3737
  %v3816 = vunpack.c.l.b16 %v3738
  %v3817 = vunpack.c.h.b16 %v3738
  %v3818 = vunpack.c.l.b16 %v3739
  %v3819 = vunpack.c.h.b16 %v3739
  %v3820 = vunpack.c.l.b16 %v3740
  %v3821 = vunpack.c.h.b16 %v3740
  %v3822 = vunpack.c.l.b16 %v3741
  %v3823 = vunpack.c.h.b16 %v3741
  %v3824 = vunpack.c.l.b16 %v3742
  %v3825 = vunpack.c.h.b16 %v3742
  %v3826 = vunpack.c.l.b16 %v3743
  %v3827 = vunpack.c.h.b16 %v3743
  %v3828 = vunpack.c.l.b16 %v3744
  %v3829 = vunpack.c.h.b16 %v3744
  %v3830 = vunpack.c.l.b16 %v3745
  %v3831 = vunpack.c.h.b16 %v3745
  %v3832 = vunpack.c.l.b16 %v3746
  %v3833 = vunpack.c.h.b16 %v3746
  %v3834 = vunpack.c.l.b16 %v3747
  %v3835 = vunpack.c.h.b16 %v3747
  %v3836 = vunpack.c.l.b16 %v3748
  %v3837 = vunpack.c.h.b16 %v3748
  %v3838 = vunpack.c.l.b16 %v3749
  %v3839 = vunpack.c.h.b16 %v3749
  %v3840 = vunpack.c.l.b16 %v3750
  %v3841 = vunpack.c.h.b16 %v3750
  %v3842 = vunpack.c.l.b16 %v3751
  %v3843 = vunpack.c.h.b16 %v3751
  %v3844 = vunpack.c.l.b16 %v3752
  %v3845 = vunpack.c.h.b16 %v3752
  %v3846 = vunpack.c.l.b16 %v3753
  %v3847 = vunpack.c.h.b16 %v3753
  %v3848 = vunpack.c.l.b16 %v3754
  %v3849 = vunpack.c.h.b16 %v3754
  %v3850 = vunpack.c.l.b16 %v3755
  %v3851 = vunpack.c.h.b16 %v3755
  %v3852 = vpack.c.b16 %v3792, %v3788
  %v3853 = vpack.c.b16 %v3793, %v3789
  %v3854 = vpack.c.b16 %v3794, %v3790
  %v3855 = vpack.c.b16 %v3795, %v3791
  %v3856 = vpack.c.b16 %v3800, %v3796
  %v3857 = vpack.c.b16 %v3801, %v3797
  %v3858 = vpack.c.b16 %v3802, %v3798
  %v3859 = vpack.c.b16 %v3803, %v3799
  %v3860 = vpack.c.b16 %v3808, %v3804
  %v3861 = vpack.c.b16 %v3809, %v3805
  %v3862 = vpack.c.b16 %v3810, %v3806
  %v3863 = vpack.c.b16 %v3811, %v3807
  %v3864 = vpack.c.b16 %v3816, %v3812
  %v3865 = vpack.c.b16 %v3817, %v3813
  %v3866 = vpack.c.b16 %v3818, %v3814
  %v3867 = vpack.c.b16 %v3819, %v3815
  %v3868 = vpack.c.b16 %v3824, %v3820
  %v3869 = vpack.c.b16 %v3825, %v3821
  %v3870 = vpack.c.b16 %v3826, %v3822
  %v3871 = vpack.c.b16 %v3827, %v3823
  %v3872 = vpack.c.b16 %v3832, %v3828
  %v3873 = vpack.c.b16 %v3833, %v3829
  %v3874 = vpack.c.b16 %v3834, %v3830
  %v3875 = vpack.c.b16 %v3835, %v3831
  %v3876 = vpack.c.b16 %v3840, %v3836
  %v3877 = vpack.c.b16 %v3841, %v3837
  %v3878 = vpack.c.b16 %v3842, %v3838
  %v3879 = vpack.c.b16 %v3843, %v3839
  %v3880 = vpack.c.b16 %v3848, %v3844
  %v3881 = vpack.c.b16 %v3849, %v3845
  %v3882 = vpack.c.b16 %v3850, %v3846
  %v3883 = vpack.c.b16 %v3851, %v3847
  %3916 = vmatprep.subr.bf16.mxu0 %v3853
  %3917 = vmatpush1.bf16.msra.mxu0 %v3852
  %3918 = vmatprep.subr.bf16.mxu0 %v3857
  %3919 = vmatpush1.bf16.msra.mxu0 %v3856
  %3920 = vmatprep.subr.bf16.mxu0 %v3861
  %3921 = vmatpush1.bf16.msra.mxu0 %v3860
  %3922 = vmatprep.subr.bf16.mxu0 %v3865
  %3923 = vmatpush1.bf16.msra.mxu0 %v3864
  %3924 = vmatprep.subr.bf16.mxu0 %v3869
  %3925 = vmatpush1.bf16.msra.mxu0 %v3868
  %3926 = vmatprep.subr.bf16.mxu0 %v3873
  %3927 = vmatpush1.bf16.msra.mxu0 %v3872
  %3928 = vmatprep.subr.bf16.mxu0 %v3877
  %3929 = vmatpush1.bf16.msra.mxu0 %v3876
  %3930 = vmatprep.subr.bf16.mxu0 %v3881
  %3931 = vmatpush1.bf16.msra.mxu0 %v3880
  %3932 = vmatprep.subr.bf16.mxu0 0
  %3933 = vmatpush1.bf16.msra.mxu0 0
  %3934 = vmatprep.subr.bf16.mxu0 0
  %3935 = vmatpush1.bf16.msra.mxu0 0
  %3936 = vmatprep.subr.bf16.mxu0 0
  %3937 = vmatpush1.bf16.msra.mxu0 0
  %3938 = vmatprep.subr.bf16.mxu0 0
  %3939 = vmatpush1.bf16.msra.mxu0 0
  %3940 = vmatprep.subr.bf16.mxu0 0
  %3941 = vmatpush1.bf16.msra.mxu0 0
  %3942 = vmatprep.subr.bf16.mxu0 0
  %3943 = vmatpush1.bf16.msra.mxu0 0
  %3944 = vmatprep.subr.bf16.mxu0 0
  %3945 = vmatpush1.bf16.msra.mxu0 0
  %3946 = vmatprep.subr.bf16.mxu0 0
  %3947 = vmatpush1.bf16.msra.mxu0 0
  %3948 = vmatprep.mubr.bf16.mxu0 0
  %3949 = vmatmul.mubr.bf16.gmra.mrb[0].mxu0 %v3723
  %v3950 = vpop.f32.mrb[0].mxu0
  %v3951 = vadd.f32 0.0, %v3950
  %v3952 = vpop.f32.mrb[0].mxu0
  %v3953 = vadd.f32 0.0, %v3952
  %v3954 = vpop.f32.mrb[0].mxu0
  %v3955 = vpop.f32.mrb[0].mxu0
  %3956 = vdwg.mxu0
  %3957 = vmatprep.subr.bf16.mxu0 %v3855
  %3958 = vmatpush1.bf16.msra.mxu0 %v3854
  %3959 = vmatprep.subr.bf16.mxu0 %v3859
  %3960 = vmatpush1.bf16.msra.mxu0 %v3858
  %3961 = vmatprep.subr.bf16.mxu0 %v3863
  %3962 = vmatpush1.bf16.msra.mxu0 %v3862
  %3963 = vmatprep.subr.bf16.mxu0 %v3867
  %3964 = vmatpush1.bf16.msra.mxu0 %v3866
  %3965 = vmatprep.subr.bf16.mxu0 %v3871
  %3966 = vmatpush1.bf16.msra.mxu0 %v3870
  %3967 = vmatprep.subr.bf16.mxu0 %v3875
  %3968 = vmatpush1.bf16.msra.mxu0 %v3874
  %3969 = vmatprep.subr.bf16.mxu0 %v3879
  %3970 = vmatpush1.bf16.msra.mxu0 %v3878
  %3971 = vmatprep.subr.bf16.mxu0 %v3883
  %3972 = vmatpush1.bf16.msra.mxu0 %v3882
  %3973 = vmatprep.subr.bf16.mxu0 0
  %3974 = vmatpush1.bf16.msra.mxu0 0
  %3975 = vmatprep.subr.bf16.mxu0 0
  %3976 = vmatpush1.bf16.msra.mxu0 0
  %3977 = vmatprep.subr.bf16.mxu0 0
  %3978 = vmatpush1.bf16.msra.mxu0 0
  %3979 = vmatprep.subr.bf16.mxu0 0
  %3980 = vmatpush1.bf16.msra.mxu0 0
  %3981 = vmatprep.subr.bf16.mxu0 0
  %3982 = vmatpush1.bf16.msra.mxu0 0
  %3983 = vmatprep.subr.bf16.mxu0 0
  %3984 = vmatpush1.bf16.msra.mxu0 0
  %3985 = vmatprep.subr.bf16.mxu0 0
  %3986 = vmatpush1.bf16.msra.mxu0 0
  %3987 = vmatprep.subr.bf16.mxu0 0
  %3988 = vmatpush1.bf16.msra.mxu0 0
  %3989 = vmatprep.mubr.bf16.mxu0 0
  %3990 = vmatmul.mubr.bf16.gmra.mrb[0].mxu0 %v3723
  %v3991 = vpop.f32.mrb[0].mxu0
  %v3992 = vadd.f32 0.0, %v3991
  %v3993 = vpop.f32.mrb[0].mxu0
  %v3994 = vadd.f32 0.0, %v3993
  %v3995 = vpop.f32.mrb[0].mxu0
  %v3996 = vpop.f32.mrb[0].mxu0
  %3997 = vdwg.mxu0
  %v3998 = vadd.f32 %v3718, %v3951
  %v3999 = vadd.f32 %v3719, %v3953
  %v4000 = vadd.f32 %v3720, %v3992
  %v4001 = vadd.f32 %v3721, %v3994
  %v4002 = vxor.u32 %v3998, 2147483648
  %v4003 = vxor.u32 %v3999, 2147483648
  %v4004 = vmul.f32 %v4002, 1.442695
  %v4005 = vpow.pop %v4004
  %v4006 = vmul.f32 %v4003, 1.442695
  %v4007 = vpow.pop %v4006
  %v4008 = vadd.f32 %v4005, 1.0
  %v4009 = vadd.f32 %v4007, 1.0
  %v4010 = vrcp.pop %v4008
  %v4011 = vmul.f32 1.0, %v4010
  %v4012 = vrcp.pop %v4009
  %v4013 = vmul.f32 1.0, %v4012
  %v4014 = vtanh.pop %v4000
  %v4015 = vxor.u32 %v4001, 2147483648
  %v4016 = vmul.f32 %v4015, 1.442695
  %v4017 = vpow.pop %v4016
  %v4018 = vadd.f32 %v4017, 1.0
  %v4019 = vrcp.pop %v4018
  %v4020 = vmul.f32 1.0, %v4019
  %v4021 = vld [vmem:[#allocation3] sm:$0xff]
  %v4022 = vmul.f32 %v4013, %v4021
  %v4023 = vmul.f32 %v4011, %v4014
  %v4024 = vadd.f32 %v4022, %v4023
  %v4025 = vtanh.pop %v4024
  %v4026 = vmul.f32 %v4020, %v4025
  %4027 = vst [vmem:[#allocation3] sm:$0xff] %v4024
  %4028 = vst [vmem:[#allocation2] sm:$0xff] %v4026
  %4029 = vst [vmem:[%s1102] sm:$0xff] %v4026
  %v4030 = vld [vmem:[%s1106] sm:$0xff]
  %v4031 = vld [vmem:[%s1106 + $0x8] sm:$0xff]
  %v4032 = vld [vmem:[%s1106 + $0x10] sm:$0xff]
  %v4033 = vld [vmem:[%s1106 + $0x18] sm:$0xff]
  %v4034 = vld [vmem:[#allocation2] sm:$0xff]
  %v4035 = vpack.c.bf16 %v4034, %v4034
  %v4036 = vld [vmem:[%s6] sm:$0xff]
  %v4037 = vld [vmem:[%s6 + $0x8] sm:$0xff]
  %v4038 = vld [vmem:[%s6 + $0x10] sm:$0xff]
  %v4039 = vld [vmem:[%s6 + $0x18] sm:$0xff]
  %v4040 = vld [vmem:[%s6 + $0x20] sm:$0xff]
  %v4041 = vld [vmem:[%s6 + $0x28] sm:$0xff]
  %v4042 = vld [vmem:[%s6 + $0x30] sm:$0xff]
  %v4043 = vld [vmem:[%s6 + $0x38] sm:$0xff]
  %v4044 = vld [vmem:[%s6 + $0x40] sm:$0xff]
  %v4045 = vld [vmem:[%s6 + $0x48] sm:$0xff]
  %v4046 = vld [vmem:[%s6 + $0x50] sm:$0xff]
  %v4047 = vld [vmem:[%s6 + $0x58] sm:$0xff]
  %v4048 = vld [vmem:[%s6 + $0x60] sm:$0xff]
  %v4049 = vld [vmem:[%s6 + $0x68] sm:$0xff]
  %v4050 = vld [vmem:[%s6 + $0x70] sm:$0xff]
  %v4051 = vld [vmem:[%s6 + $0x78] sm:$0xff]
  %v4052 = vld [vmem:[%s6 + $0x80] sm:$0xff]
  %v4053 = vld [vmem:[%s6 + $0x88] sm:$0xff]
  %v4054 = vld [vmem:[%s6 + $0x90] sm:$0xff]
  %v4055 = vld [vmem:[%s6 + $0x98] sm:$0xff]
  %v4056 = vld [vmem:[%s6 + $0xa0] sm:$0xff]
  %v4057 = vld [vmem:[%s6 + $0xa8] sm:$0xff]
  %v4058 = vld [vmem:[%s6 + $0xb0] sm:$0xff]
  %v4059 = vld [vmem:[%s6 + $0xb8] sm:$0xff]
  %v4060 = vld [vmem:[%s6 + $0xc0] sm:$0xff]
  %v4061 = vld [vmem:[%s6 + $0xc8] sm:$0xff]
  %v4062 = vld [vmem:[%s6 + $0xd0] sm:$0xff]
  %v4063 = vld [vmem:[%s6 + $0xd8] sm:$0xff]
  %v4064 = vld [vmem:[%s6 + $0xe0] sm:$0xff]
  %v4065 = vld [vmem:[%s6 + $0xe8] sm:$0xff]
  %v4066 = vld [vmem:[%s6 + $0xf0] sm:$0xff]
  %v4067 = vld [vmem:[%s6 + $0xf8] sm:$0xff]
  %v4100 = vunpack.c.l.b16 %v4036
  %v4101 = vunpack.c.h.b16 %v4036
  %v4102 = vunpack.c.l.b16 %v4037
  %v4103 = vunpack.c.h.b16 %v4037
  %v4104 = vunpack.c.l.b16 %v4038
  %v4105 = vunpack.c.h.b16 %v4038
  %v4106 = vunpack.c.l.b16 %v4039
  %v4107 = vunpack.c.h.b16 %v4039
  %v4108 = vunpack.c.l.b16 %v4040
  %v4109 = vunpack.c.h.b16 %v4040
  %v4110 = vunpack.c.l.b16 %v4041
  %v4111 = vunpack.c.h.b16 %v4041
  %v4112 = vunpack.c.l.b16 %v4042
  %v4113 = vunpack.c.h.b16 %v4042
  %v4114 = vunpack.c.l.b16 %v4043
  %v4115 = vunpack.c.h.b16 %v4043
  %v4116 = vunpack.c.l.b16 %v4044
  %v4117 = vunpack.c.h.b16 %v4044
  %v4118 = vunpack.c.l.b16 %v4045
  %v4119 = vunpack.c.h.b16 %v4045
  %v4120 = vunpack.c.l.b16 %v4046
  %v4121 = vunpack.c.h.b16 %v4046
  %v4122 = vunpack.c.l.b16 %v4047
  %v4123 = vunpack.c.h.b16 %v4047
  %v4124 = vunpack.c.l.b16 %v4048
  %v4125 = vunpack.c.h.b16 %v4048
  %v4126 = vunpack.c.l.b16 %v4049
  %v4127 = vunpack.c.h.b16 %v4049
  %v4128 = vunpack.c.l.b16 %v4050
  %v4129 = vunpack.c.h.b16 %v4050
  %v4130 = vunpack.c.l.b16 %v4051
  %v4131 = vunpack.c.h.b16 %v4051
  %v4132 = vunpack.c.l.b16 %v4052
  %v4133 = vunpack.c.h.b16 %v4052
  %v4134 = vunpack.c.l.b16 %v4053
  %v4135 = vunpack.c.h.b16 %v4053
  %v4136 = vunpack.c.l.b16 %v4054
  %v4137 = vunpack.c.h.b16 %v4054
  %v4138 = vunpack.c.l.b16 %v4055
  %v4139 = vunpack.c.h.b16 %v4055
  %v4140 = vunpack.c.l.b16 %v4056
  %v4141 = vunpack.c.h.b16 %v4056
  %v4142 = vunpack.c.l.b16 %v4057
  %v4143 = vunpack.c.h.b16 %v4057
  %v4144 = vunpack.c.l.b16 %v4058
  %v4145 = vunpack.c.h.b16 %v4058
  %v4146 = vunpack.c.l.b16 %v4059
  %v4147 = vunpack.c.h.b16 %v4059
  %v4148 = vunpack.c.l.b16 %v4060
  %v4149 = vunpack.c.h.b16 %v4060
  %v4150 = vunpack.c.l.b16 %v4061
  %v4151 = vunpack.c.h.b16 %v4061
  %v4152 = vunpack.c.l.b16 %v4062
  %v4153 = vunpack.c.h.b16 %v4062
  %v4154 = vunpack.c.l.b16 %v4063
  %v4155 = vunpack.c.h.b16 %v4063
  %v4156 = vunpack.c.l.b16 %v4064
  %v4157 = vunpack.c.h.b16 %v4064
  %v4158 = vunpack.c.l.b16 %v4065
  %v4159 = vunpack.c.h.b16 %v4065
  %v4160 = vunpack.c.l.b16 %v4066
  %v4161 = vunpack.c.h.b16 %v4066
  %v4162 = vunpack.c.l.b16 %v4067
  %v4163 = vunpack.c.h.b16 %v4067
  %v4164 = vpack.c.b16 %v4104, %v4100
  %v4165 = vpack.c.b16 %v4105, %v4101
  %v4166 = vpack.c.b16 %v4106, %v4102
  %v4167 = vpack.c.b16 %v4107, %v4103
  %v4168 = vpack.c.b16 %v4112, %v4108
  %v4169 = vpack.c.b16 %v4113, %v4109
  %v4170 = vpack.c.b16 %v4114, %v4110
  %v4171 = vpack.c.b16 %v4115, %v4111
  %v4172 = vpack.c.b16 %v4120, %v4116
  %v4173 = vpack.c.b16 %v4121, %v4117
  %v4174 = vpack.c.b16 %v4122, %v4118
  %v4175 = vpack.c.b16 %v4123, %v4119
  %v4176 = vpack.c.b16 %v4128, %v4124
  %v4177 = vpack.c.b16 %v4129, %v4125
  %v4178 = vpack.c.b16 %v4130, %v4126
  %v4179 = vpack.c.b16 %v4131, %v4127
  %v4180 = vpack.c.b16 %v4136, %v4132
  %v4181 = vpack.c.b16 %v4137, %v4133
  %v4182 = vpack.c.b16 %v4138, %v4134
  %v4183 = vpack.c.b16 %v4139, %v4135
  %v4184 = vpack.c.b16 %v4144, %v4140
  %v4185 = vpack.c.b16 %v4145, %v4141
  %v4186 = vpack.c.b16 %v4146, %v4142
  %v4187 = vpack.c.b16 %v4147, %v4143
  %v4188 = vpack.c.b16 %v4152, %v4148
  %v4189 = vpack.c.b16 %v4153, %v4149
  %v4190 = vpack.c.b16 %v4154, %v4150
  %v4191 = vpack.c.b16 %v4155, %v4151
  %v4192 = vpack.c.b16 %v4160, %v4156
  %v4193 = vpack.c.b16 %v4161, %v4157
  %v4194 = vpack.c.b16 %v4162, %v4158
  %v4195 = vpack.c.b16 %v4163, %v4159
  %4228 = vmatprep.subr.bf16.mxu0 %v4165
  %4229 = vmatpush1.bf16.msra.mxu0 %v4164
  %4230 = vmatprep.subr.bf16.mxu0 %v4169
  %4231 = vmatpush1.bf16.msra.mxu0 %v4168
  %4232 = vmatprep.subr.bf16.mxu0 %v4173
  %4233 = vmatpush1.bf16.msra.mxu0 %v4172
  %4234 = vmatprep.subr.bf16.mxu0 %v4177
  %4235 = vmatpush1.bf16.msra.mxu0 %v4176
  %4236 = vmatprep.subr.bf16.mxu0 %v4181
  %4237 = vmatpush1.bf16.msra.mxu0 %v4180
  %4238 = vmatprep.subr.bf16.mxu0 %v4185
  %4239 = vmatpush1.bf16.msra.mxu0 %v4184
  %4240 = vmatprep.subr.bf16.mxu0 %v4189
  %4241 = vmatpush1.bf16.msra.mxu0 %v4188
  %4242 = vmatprep.subr.bf16.mxu0 %v4193
  %4243 = vmatpush1.bf16.msra.mxu0 %v4192
  %4244 = vmatprep.subr.bf16.mxu0 0
  %4245 = vmatpush1.bf16.msra.mxu0 0
  %4246 = vmatprep.subr.bf16.mxu0 0
  %4247 = vmatpush1.bf16.msra.mxu0 0
  %4248 = vmatprep.subr.bf16.mxu0 0
  %4249 = vmatpush1.bf16.msra.mxu0 0
  %4250 = vmatprep.subr.bf16.mxu0 0
  %4251 = vmatpush1.bf16.msra.mxu0 0
  %4252 = vmatprep.subr.bf16.mxu0 0
  %4253 = vmatpush1.bf16.msra.mxu0 0
  %4254 = vmatprep.subr.bf16.mxu0 0
  %4255 = vmatpush1.bf16.msra.mxu0 0
  %4256 = vmatprep.subr.bf16.mxu0 0
  %4257 = vmatpush1.bf16.msra.mxu0 0
  %4258 = vmatprep.subr.bf16.mxu0 0
  %4259 = vmatpush1.bf16.msra.mxu0 0
  %4260 = vmatprep.mubr.bf16.mxu0 0
  %4261 = vmatmul.mubr.bf16.gmra.mrb[0].mxu0 %v4035
  %v4262 = vpop.f32.mrb[0].mxu0
  %v4263 = vadd.f32 0.0, %v4262
  %v4264 = vpop.f32.mrb[0].mxu0
  %v4265 = vadd.f32 0.0, %v4264
  %v4266 = vpop.f32.mrb[0].mxu0
  %v4267 = vpop.f32.mrb[0].mxu0
  %4268 = vdwg.mxu0
  %4269 = vmatprep.subr.bf16.mxu0 %v4167
  %4270 = vmatpush1.bf16.msra.mxu0 %v4166
  %4271 = vmatprep.subr.bf16.mxu0 %v4171
  %4272 = vmatpush1.bf16.msra.mxu0 %v4170
  %4273 = vmatprep.subr.bf16.mxu0 %v4175
  %4274 = vmatpush1.bf16.msra.mxu0 %v4174
  %4275 = vmatprep.subr.bf16.mxu0 %v4179
  %4276 = vmatpush1.bf16.msra.mxu0 %v4178
  %4277 = vmatprep.subr.bf16.mxu0 %v4183
  %4278 = vmatpush1.bf16.msra.mxu0 %v4182
  %4279 = vmatprep.subr.bf16.mxu0 %v4187
  %4280 = vmatpush1.bf16.msra.mxu0 %v4186
  %4281 = vmatprep.subr.bf16.mxu0 %v4191
  %4282 = vmatpush1.bf16.msra.mxu0 %v4190
  %4283 = vmatprep.subr.bf16.mxu0 %v4195
  %4284 = vmatpush1.bf16.msra.mxu0 %v4194
  %4285 = vmatprep.subr.bf16.mxu0 0
  %4286 = vmatpush1.bf16.msra.mxu0 0
  %4287 = vmatprep.subr.bf16.mxu0 0
  %4288 = vmatpush1.bf16.msra.mxu0 0
  %4289 = vmatprep.subr.bf16.mxu0 0
  %4290 = vmatpush1.bf16.msra.mxu0 0
  %4291 = vmatprep.subr.bf16.mxu0 0
  %4292 = vmatpush1.bf16.msra.mxu0 0
  %4293 = vmatprep.subr.bf16.mxu0 0
  %4294 = vmatpush1.bf16.msra.mxu0 0
  %4295 = vmatprep.subr.bf16.mxu0 0
  %4296 = vmatpush1.bf16.msra.mxu0 0
  %4297 = vmatprep.subr.bf16.mxu0 0
  %4298 = vmatpush1.bf16.msra.mxu0 0
  %4299 = vmatprep.subr.bf16.mxu0 0
  %4300 = vmatpush1.bf16.msra.mxu0 0
  %4301 = vmatprep.mubr.bf16.mxu0 0
  %4302 = vmatmul.mubr.bf16.gmra.mrb[0].mxu0 %v4035
  %v4303 = vpop.f32.mrb[0].mxu0
  %v4304 = vadd.f32 0.0, %v4303
  %v4305 = vpop.f32.mrb[0].mxu0
  %v4306 = vadd.f32 0.0, %v4305
  %v4307 = vpop.f32.mrb[0].mxu0
  %v4308 = vpop.f32.mrb[0].mxu0
  %4309 = vdwg.mxu0
  %v4310 = vadd.f32 %v4030, %v4263
  %v4311 = vadd.f32 %v4031, %v4265
  %v4312 = vadd.f32 %v4032, %v4304
  %v4313 = vadd.f32 %v4033, %v4306
  %v4314 = vxor.u32 %v4310, 2147483648
  %v4315 = vxor.u32 %v4311, 2147483648
  %v4316 = vmul.f32 %v4314, 1.442695
  %v4317 = vpow.pop %v4316
  %v4318 = vmul.f32 %v4315, 1.442695
  %v4319 = vpow.pop %v4318
  %v4320 = vadd.f32 %v4317, 1.0
  %v4321 = vadd.f32 %v4319, 1.0
  %v4322 = vrcp.pop %v4320
  %v4323 = vmul.f32 1.0, %v4322
  %v4324 = vrcp.pop %v4321
  %v4325 = vmul.f32 1.0, %v4324
  %v4326 = vtanh.pop %v4312
  %v4327 = vxor.u32 %v4313, 2147483648
  %v4328 = vmul.f32 %v4327, 1.442695
  %v4329 = vpow.pop %v4328
  %v4330 = vadd.f32 %v4329, 1.0
  %v4331 = vrcp.pop %v4330
  %v4332 = vmul.f32 1.0, %v4331
  %v4333 = vld [vmem:[#allocation3] sm:$0xff]
  %v4334 = vmul.f32 %v4325, %v4333
  %v4335 = vmul.f32 %v4323, %v4326
  %v4336 = vadd.f32 %v4334, %v4335
  %v4337 = vtanh.pop %v4336
  %v4338 = vmul.f32 %v4332, %v4337
  %4339 = vst [vmem:[#allocation3] sm:$0xff] %v4336
  %4340 = vst [vmem:[#allocation2] sm:$0xff] %v4338
  %4341 = vst [vmem:[%s1418] sm:$0xff] %v4338
  %v4342 = vld [vmem:[%s1422] sm:$0xff]
  %v4343 = vld [vmem:[%s1422 + $0x8] sm:$0xff]
  %v4344 = vld [vmem:[%s1422 + $0x10] sm:$0xff]
  %v4345 = vld [vmem:[%s1422 + $0x18] sm:$0xff]
  %v4346 = vld [vmem:[#allocation2] sm:$0xff]
  %v4347 = vpack.c.bf16 %v4346, %v4346
  %v4348 = vld [vmem:[%s6] sm:$0xff]
  %v4349 = vld [vmem:[%s6 + $0x8] sm:$0xff]
  %v4350 = vld [vmem:[%s6 + $0x10] sm:$0xff]
  %v4351 = vld [vmem:[%s6 + $0x18] sm:$0xff]
  %v4352 = vld [vmem:[%s6 + $0x20] sm:$0xff]
  %v4353 = vld [vmem:[%s6 + $0x28] sm:$0xff]
  %v4354 = vld [vmem:[%s6 + $0x30] sm:$0xff]
  %v4355 = vld [vmem:[%s6 + $0x38] sm:$0xff]
  %v4356 = vld [vmem:[%s6 + $0x40] sm:$0xff]
  %v4357 = vld [vmem:[%s6 + $0x48] sm:$0xff]
  %v4358 = vld [vmem:[%s6 + $0x50] sm:$0xff]
  %v4359 = vld [vmem:[%s6 + $0x58] sm:$0xff]
  %v4360 = vld [vmem:[%s6 + $0x60] sm:$0xff]
  %v4361 = vld [vmem:[%s6 + $0x68] sm:$0xff]
  %v4362 = vld [vmem:[%s6 + $0x70] sm:$0xff]
  %v4363 = vld [vmem:[%s6 + $0x78] sm:$0xff]
  %v4364 = vld [vmem:[%s6 + $0x80] sm:$0xff]
  %v4365 = vld [vmem:[%s6 + $0x88] sm:$0xff]
  %v4366 = vld [vmem:[%s6 + $0x90] sm:$0xff]
  %v4367 = vld [vmem:[%s6 + $0x98] sm:$0xff]
  %v4368 = vld [vmem:[%s6 + $0xa0] sm:$0xff]
  %v4369 = vld [vmem:[%s6 + $0xa8] sm:$0xff]
  %v4370 = vld [vmem:[%s6 + $0xb0] sm:$0xff]
  %v4371 = vld [vmem:[%s6 + $0xb8] sm:$0xff]
  %v4372 = vld [vmem:[%s6 + $0xc0] sm:$0xff]
  %v4373 = vld [vmem:[%s6 + $0xc8] sm:$0xff]
  %v4374 = vld [vmem:[%s6 + $0xd0] sm:$0xff]
  %v4375 = vld [vmem:[%s6 + $0xd8] sm:$0xff]
  %v4376 = vld [vmem:[%s6 + $0xe0] sm:$0xff]
  %v4377 = vld [vmem:[%s6 + $0xe8] sm:$0xff]
  %v4378 = vld [vmem:[%s6 + $0xf0] sm:$0xff]
  %v4379 = vld [vmem:[%s6 + $0xf8] sm:$0xff]
  %v4412 = vunpack.c.l.b16 %v4348
  %v4413 = vunpack.c.h.b16 %v4348
  %v4414 = vunpack.c.l.b16 %v4349
  %v4415 = vunpack.c.h.b16 %v4349
  %v4416 = vunpack.c.l.b16 %v4350
  %v4417 = vunpack.c.h.b16 %v4350
  %v4418 = vunpack.c.l.b16 %v4351
  %v4419 = vunpack.c.h.b16 %v4351
  %v4420 = vunpack.c.l.b16 %v4352
  %v4421 = vunpack.c.h.b16 %v4352
  %v4422 = vunpack.c.l.b16 %v4353
  %v4423 = vunpack.c.h.b16 %v4353
  %v4424 = vunpack.c.l.b16 %v4354
  %v4425 = vunpack.c.h.b16 %v4354
  %v4426 = vunpack.c.l.b16 %v4355
  %v4427 = vunpack.c.h.b16 %v4355
  %v4428 = vunpack.c.l.b16 %v4356
  %v4429 = vunpack.c.h.b16 %v4356
  %v4430 = vunpack.c.l.b16 %v4357
  %v4431 = vunpack.c.h.b16 %v4357
  %v4432 = vunpack.c.l.b16 %v4358
  %v4433 = vunpack.c.h.b16 %v4358
  %v4434 = vunpack.c.l.b16 %v4359
  %v4435 = vunpack.c.h.b16 %v4359
  %v4436 = vunpack.c.l.b16 %v4360
  %v4437 = vunpack.c.h.b16 %v4360
  %v4438 = vunpack.c.l.b16 %v4361
  %v4439 = vunpack.c.h.b16 %v4361
  %v4440 = vunpack.c.l.b16 %v4362
  %v4441 = vunpack.c.h.b16 %v4362
  %v4442 = vunpack.c.l.b16 %v4363
  %v4443 = vunpack.c.h.b16 %v4363
  %v4444 = vunpack.c.l.b16 %v4364
  %v4445 = vunpack.c.h.b16 %v4364
  %v4446 = vunpack.c.l.b16 %v4365
  %v4447 = vunpack.c.h.b16 %v4365
  %v4448 = vunpack.c.l.b16 %v4366
  %v4449 = vunpack.c.h.b16 %v4366
  %v4450 = vunpack.c.l.b16 %v4367
  %v4451 = vunpack.c.h.b16 %v4367
  %v4452 = vunpack.c.l.b16 %v4368
  %v4453 = vunpack.c.h.b16 %v4368
  %v4454 = vunpack.c.l.b16 %v4369
  %v4455 = vunpack.c.h.b16 %v4369
  %v4456 = vunpack.c.l.b16 %v4370
  %v4457 = vunpack.c.h.b16 %v4370
  %v4458 = vunpack.c.l.b16 %v4371
  %v4459 = vunpack.c.h.b16 %v4371
  %v4460 = vunpack.c.l.b16 %v4372
  %v4461 = vunpack.c.h.b16 %v4372
  %v4462 = vunpack.c.l.b16 %v4373
  %v4463 = vunpack.c.h.b16 %v4373
  %v4464 = vunpack.c.l.b16 %v4374
  %v4465 = vunpack.c.h.b16 %v4374
  %v4466 = vunpack.c.l.b16 %v4375
  %v4467 = vunpack.c.h.b16 %v4375
  %v4468 = vunpack.c.l.b16 %v4376
  %v4469 = vunpack.c.h.b16 %v4376
  %v4470 = vunpack.c.l.b16 %v4377
  %v4471 = vunpack.c.h.b16 %v4377
  %v4472 = vunpack.c.l.b16 %v4378
  %v4473 = vunpack.c.h.b16 %v4378
  %v4474 = vunpack.c.l.b16 %v4379
  %v4475 = vunpack.c.h.b16 %v4379
  %v4476 = vpack.c.b16 %v4416, %v4412
  %v4477 = vpack.c.b16 %v4417, %v4413
  %v4478 = vpack.c.b16 %v4418, %v4414
  %v4479 = vpack.c.b16 %v4419, %v4415
  %v4480 = vpack.c.b16 %v4424, %v4420
  %v4481 = vpack.c.b16 %v4425, %v4421
  %v4482 = vpack.c.b16 %v4426, %v4422
  %v4483 = vpack.c.b16 %v4427, %v4423
  %v4484 = vpack.c.b16 %v4432, %v4428
  %v4485 = vpack.c.b16 %v4433, %v4429
  %v4486 = vpack.c.b16 %v4434, %v4430
  %v4487 = vpack.c.b16 %v4435, %v4431
  %v4488 = vpack.c.b16 %v4440, %v4436
  %v4489 = vpack.c.b16 %v4441, %v4437
  %v4490 = vpack.c.b16 %v4442, %v4438
  %v4491 = vpack.c.b16 %v4443, %v4439
  %v4492 = vpack.c.b16 %v4448, %v4444
  %v4493 = vpack.c.b16 %v4449, %v4445
  %v4494 = vpack.c.b16 %v4450, %v4446
  %v4495 = vpack.c.b16 %v4451, %v4447
  %v4496 = vpack.c.b16 %v4456, %v4452
  %v4497 = vpack.c.b16 %v4457, %v4453
  %v4498 = vpack.c.b16 %v4458, %v4454
  %v4499 = vpack.c.b16 %v4459, %v4455
  %v4500 = vpack.c.b16 %v4464, %v4460
  %v4501 = vpack.c.b16 %v4465, %v4461
  %v4502 = vpack.c.b16 %v4466, %v4462
  %v4503 = vpack.c.b16 %v4467, %v4463
  %v4504 = vpack.c.b16 %v4472, %v4468
  %v4505 = vpack.c.b16 %v4473, %v4469
  %v4506 = vpack.c.b16 %v4474, %v4470
  %v4507 = vpack.c.b16 %v4475, %v4471
  %4540 = vmatprep.subr.bf16.mxu0 %v4477
  %4541 = vmatpush1.bf16.msra.mxu0 %v4476
  %4542 = vmatprep.subr.bf16.mxu0 %v4481
  %4543 = vmatpush1.bf16.msra.mxu0 %v4480
  %4544 = vmatprep.subr.bf16.mxu0 %v4485
  %4545 = vmatpush1.bf16.msra.mxu0 %v4484
  %4546 = vmatprep.subr.bf16.mxu0 %v4489
  %4547 = vmatpush1.bf16.msra.mxu0 %v4488
  %4548 = vmatprep.subr.bf16.mxu0 %v4493
  %4549 = vmatpush1.bf16.msra.mxu0 %v4492
  %4550 = vmatprep.subr.bf16.mxu0 %v4497
  %4551 = vmatpush1.bf16.msra.mxu0 %v4496
  %4552 = vmatprep.subr.bf16.mxu0 %v4501
  %4553 = vmatpush1.bf16.msra.mxu0 %v4500
  %4554 = vmatprep.subr.bf16.mxu0 %v4505
  %4555 = vmatpush1.bf16.msra.mxu0 %v4504
  %4556 = vmatprep.subr.bf16.mxu0 0
  %4557 = vmatpush1.bf16.msra.mxu0 0
  %4558 = vmatprep.subr.bf16.mxu0 0
  %4559 = vmatpush1.bf16.msra.mxu0 0
  %4560 = vmatprep.subr.bf16.mxu0 0
  %4561 = vmatpush1.bf16.msra.mxu0 0
  %4562 = vmatprep.subr.bf16.mxu0 0
  %4563 = vmatpush1.bf16.msra.mxu0 0
  %4564 = vmatprep.subr.bf16.mxu0 0
  %4565 = vmatpush1.bf16.msra.mxu0 0
  %4566 = vmatprep.subr.bf16.mxu0 0
  %4567 = vmatpush1.bf16.msra.mxu0 0
  %4568 = vmatprep.subr.bf16.mxu0 0
  %4569 = vmatpush1.bf16.msra.mxu0 0
  %4570 = vmatprep.subr.bf16.mxu0 0
  %4571 = vmatpush1.bf16.msra.mxu0 0
  %4572 = vmatprep.mubr.bf16.mxu0 0
  %4573 = vmatmul.mubr.bf16.gmra.mrb[0].mxu0 %v4347
  %v4574 = vpop.f32.mrb[0].mxu0
  %v4575 = vadd.f32 0.0, %v4574
  %v4576 = vpop.f32.mrb[0].mxu0
  %v4577 = vadd.f32 0.0, %v4576
  %v4578 = vpop.f32.mrb[0].mxu0
  %v4579 = vpop.f32.mrb[0].mxu0
  %4580 = vdwg.mxu0
  %4581 = vmatprep.subr.bf16.mxu0 %v4479
  %4582 = vmatpush1.bf16.msra.mxu0 %v4478
  %4583 = vmatprep.subr.bf16.mxu0 %v4483
  %4584 = vmatpush1.bf16.msra.mxu0 %v4482
  %4585 = vmatprep.subr.bf16.mxu0 %v4487
  %4586 = vmatpush1.bf16.msra.mxu0 %v4486
  %4587 = vmatprep.subr.bf16.mxu0 %v4491
  %4588 = vmatpush1.bf16.msra.mxu0 %v4490
  %4589 = vmatprep.subr.bf16.mxu0 %v4495
  %4590 = vmatpush1.bf16.msra.mxu0 %v4494
  %4591 = vmatprep.subr.bf16.mxu0 %v4499
  %4592 = vmatpush1.bf16.msra.mxu0 %v4498
  %4593 = vmatprep.subr.bf16.mxu0 %v4503
  %4594 = vmatpush1.bf16.msra.mxu0 %v4502
  %4595 = vmatprep.subr.bf16.mxu0 %v4507
  %4596 = vmatpush1.bf16.msra.mxu0 %v4506
  %4597 = vmatprep.subr.bf16.mxu0 0
  %4598 = vmatpush1.bf16.msra.mxu0 0
  %4599 = vmatprep.subr.bf16.mxu0 0
  %4600 = vmatpush1.bf16.msra.mxu0 0
  %4601 = vmatprep.subr.bf16.mxu0 0
  %4602 = vmatpush1.bf16.msra.mxu0 0
  %4603 = vmatprep.subr.bf16.mxu0 0
  %4604 = vmatpush1.bf16.msra.mxu0 0
  %4605 = vmatprep.subr.bf16.mxu0 0
  %4606 = vmatpush1.bf16.msra.mxu0 0
  %4607 = vmatprep.subr.bf16.mxu0 0
  %4608 = vmatpush1.bf16.msra.mxu0 0
  %4609 = vmatprep.subr.bf16.mxu0 0
  %4610 = vmatpush1.bf16.msra.mxu0 0
  %4611 = vmatprep.subr.bf16.mxu0 0
  %4612 = vmatpush1.bf16.msra.mxu0 0
  %4613 = vmatprep.mubr.bf16.mxu0 0
  %4614 = vmatmul.mubr.bf16.gmra.mrb[0].mxu0 %v4347
  %v4615 = vpop.f32.mrb[0].mxu0
  %v4616 = vadd.f32 0.0, %v4615
  %v4617 = vpop.f32.mrb[0].mxu0
  %v4618 = vadd.f32 0.0, %v4617
  %v4619 = vpop.f32.mrb[0].mxu0
  %v4620 = vpop.f32.mrb[0].mxu0
  %4621 = vdwg.mxu0
  %v4622 = vadd.f32 %v4342, %v4575
  %v4623 = vadd.f32 %v4343, %v4577
  %v4624 = vadd.f32 %v4344, %v4616
  %v4625 = vadd.f32 %v4345, %v4618
  %v4626 = vxor.u32 %v4622, 2147483648
  %v4627 = vxor.u32 %v4623, 2147483648
  %v4628 = vmul.f32 %v4626, 1.442695
  %v4629 = vpow.pop %v4628
  %v4630 = vmul.f32 %v4627, 1.442695
  %v4631 = vpow.pop %v4630
  %v4632 = vadd.f32 %v4629, 1.0
  %v4633 = vadd.f32 %v4631, 1.0
  %v4634 = vrcp.pop %v4632
  %v4635 = vmul.f32 1.0, %v4634
  %v4636 = vrcp.pop %v4633
  %v4637 = vmul.f32 1.0, %v4636
  %v4638 = vtanh.pop %v4624
  %v4639 = vxor.u32 %v4625, 2147483648
  %v4640 = vmul.f32 %v4639, 1.442695
  %v4641 = vpow.pop %v4640
  %v4642 = vadd.f32 %v4641, 1.0
  %v4643 = vrcp.pop %v4642
  %v4644 = vmul.f32 1.0, %v4643
  %v4645 = vld [vmem:[#allocation3] sm:$0xff]
  %v4646 = vmul.f32 %v4637, %v4645
  %v4647 = vmul.f32 %v4635, %v4638
  %v4648 = vadd.f32 %v4646, %v4647
  %v4649 = vtanh.pop %v4648
  %v4650 = vmul.f32 %v4644, %v4649
  %4651 = vst [vmem:[#allocation3] sm:$0xff] %v4648
  %4652 = vst [vmem:[#allocation2] sm:$0xff] %v4650
  %4653 = vst [vmem:[%s1734] sm:$0xff] %v4650
  %v4654 = vld [vmem:[%s1738] sm:$0xff]
  %v4655 = vld [vmem:[%s1738 + $0x8] sm:$0xff]
  %v4656 = vld [vmem:[%s1738 + $0x10] sm:$0xff]
  %v4657 = vld [vmem:[%s1738 + $0x18] sm:$0xff]
  %v4658 = vld [vmem:[#allocation2] sm:$0xff]
  %v4659 = vpack.c.bf16 %v4658, %v4658
  %v4660 = vld [vmem:[%s6] sm:$0xff]
  %v4661 = vld [vmem:[%s6 + $0x8] sm:$0xff]
  %v4662 = vld [vmem:[%s6 + $0x10] sm:$0xff]
  %v4663 = vld [vmem:[%s6 + $0x18] sm:$0xff]
  %v4664 = vld [vmem:[%s6 + $0x20] sm:$0xff]
  %v4665 = vld [vmem:[%s6 + $0x28] sm:$0xff]
  %v4666 = vld [vmem:[%s6 + $0x30] sm:$0xff]
  %v4667 = vld [vmem:[%s6 + $0x38] sm:$0xff]
  %v4668 = vld [vmem:[%s6 + $0x40] sm:$0xff]
  %v4669 = vld [vmem:[%s6 + $0x48] sm:$0xff]
  %v4670 = vld [vmem:[%s6 + $0x50] sm:$0xff]
  %v4671 = vld [vmem:[%s6 + $0x58] sm:$0xff]
  %v4672 = vld [vmem:[%s6 + $0x60] sm:$0xff]
  %v4673 = vld [vmem:[%s6 + $0x68] sm:$0xff]
  %v4674 = vld [vmem:[%s6 + $0x70] sm:$0xff]
  %v4675 = vld [vmem:[%s6 + $0x78] sm:$0xff]
  %v4676 = vld [vmem:[%s6 + $0x80] sm:$0xff]
  %v4677 = vld [vmem:[%s6 + $0x88] sm:$0xff]
  %v4678 = vld [vmem:[%s6 + $0x90] sm:$0xff]
  %v4679 = vld [vmem:[%s6 + $0x98] sm:$0xff]
  %v4680 = vld [vmem:[%s6 + $0xa0] sm:$0xff]
  %v4681 = vld [vmem:[%s6 + $0xa8] sm:$0xff]
  %v4682 = vld [vmem:[%s6 + $0xb0] sm:$0xff]
  %v4683 = vld [vmem:[%s6 + $0xb8] sm:$0xff]
  %v4684 = vld [vmem:[%s6 + $0xc0] sm:$0xff]
  %v4685 = vld [vmem:[%s6 + $0xc8] sm:$0xff]
  %v4686 = vld [vmem:[%s6 + $0xd0] sm:$0xff]
  %v4687 = vld [vmem:[%s6 + $0xd8] sm:$0xff]
  %v4688 = vld [vmem:[%s6 + $0xe0] sm:$0xff]
  %v4689 = vld [vmem:[%s6 + $0xe8] sm:$0xff]
  %v4690 = vld [vmem:[%s6 + $0xf0] sm:$0xff]
  %v4691 = vld [vmem:[%s6 + $0xf8] sm:$0xff]
  %v4724 = vunpack.c.l.b16 %v4660
  %v4725 = vunpack.c.h.b16 %v4660
  %v4726 = vunpack.c.l.b16 %v4661
  %v4727 = vunpack.c.h.b16 %v4661
  %v4728 = vunpack.c.l.b16 %v4662
  %v4729 = vunpack.c.h.b16 %v4662
  %v4730 = vunpack.c.l.b16 %v4663
  %v4731 = vunpack.c.h.b16 %v4663
  %v4732 = vunpack.c.l.b16 %v4664
  %v4733 = vunpack.c.h.b16 %v4664
  %v4734 = vunpack.c.l.b16 %v4665
  %v4735 = vunpack.c.h.b16 %v4665
  %v4736 = vunpack.c.l.b16 %v4666
  %v4737 = vunpack.c.h.b16 %v4666
  %v4738 = vunpack.c.l.b16 %v4667
  %v4739 = vunpack.c.h.b16 %v4667
  %v4740 = vunpack.c.l.b16 %v4668
  %v4741 = vunpack.c.h.b16 %v4668
  %v4742 = vunpack.c.l.b16 %v4669
  %v4743 = vunpack.c.h.b16 %v4669
  %v4744 = vunpack.c.l.b16 %v4670
  %v4745 = vunpack.c.h.b16 %v4670
  %v4746 = vunpack.c.l.b16 %v4671
  %v4747 = vunpack.c.h.b16 %v4671
  %v4748 = vunpack.c.l.b16 %v4672
  %v4749 = vunpack.c.h.b16 %v4672
  %v4750 = vunpack.c.l.b16 %v4673
  %v4751 = vunpack.c.h.b16 %v4673
  %v4752 = vunpack.c.l.b16 %v4674
  %v4753 = vunpack.c.h.b16 %v4674
  %v4754 = vunpack.c.l.b16 %v4675
  %v4755 = vunpack.c.h.b16 %v4675
  %v4756 = vunpack.c.l.b16 %v4676
  %v4757 = vunpack.c.h.b16 %v4676
  %v4758 = vunpack.c.l.b16 %v4677
  %v4759 = vunpack.c.h.b16 %v4677
  %v4760 = vunpack.c.l.b16 %v4678
  %v4761 = vunpack.c.h.b16 %v4678
  %v4762 = vunpack.c.l.b16 %v4679
  %v4763 = vunpack.c.h.b16 %v4679
  %v4764 = vunpack.c.l.b16 %v4680
  %v4765 = vunpack.c.h.b16 %v4680
  %v4766 = vunpack.c.l.b16 %v4681
  %v4767 = vunpack.c.h.b16 %v4681
  %v4768 = vunpack.c.l.b16 %v4682
  %v4769 = vunpack.c.h.b16 %v4682
  %v4770 = vunpack.c.l.b16 %v4683
  %v4771 = vunpack.c.h.b16 %v4683
  %v4772 = vunpack.c.l.b16 %v4684
  %v4773 = vunpack.c.h.b16 %v4684
  %v4774 = vunpack.c.l.b16 %v4685
  %v4775 = vunpack.c.h.b16 %v4685
  %v4776 = vunpack.c.l.b16 %v4686
  %v4777 = vunpack.c.h.b16 %v4686
  %v4778 = vunpack.c.l.b16 %v4687
  %v4779 = vunpack.c.h.b16 %v4687
  %v4780 = vunpack.c.l.b16 %v4688
  %v4781 = vunpack.c.h.b16 %v4688
  %v4782 = vunpack.c.l.b16 %v4689
  %v4783 = vunpack.c.h.b16 %v4689
  %v4784 = vunpack.c.l.b16 %v4690
  %v4785 = vunpack.c.h.b16 %v4690
  %v4786 = vunpack.c.l.b16 %v4691
  %v4787 = vunpack.c.h.b16 %v4691
  %v4788 = vpack.c.b16 %v4728, %v4724
  %v4789 = vpack.c.b16 %v4729, %v4725
  %v4790 = vpack.c.b16 %v4730, %v4726
  %v4791 = vpack.c.b16 %v4731, %v4727
  %v4792 = vpack.c.b16 %v4736, %v4732
  %v4793 = vpack.c.b16 %v4737, %v4733
  %v4794 = vpack.c.b16 %v4738, %v4734
  %v4795 = vpack.c.b16 %v4739, %v4735
  %v4796 = vpack.c.b16 %v4744, %v4740
  %v4797 = vpack.c.b16 %v4745, %v4741
  %v4798 = vpack.c.b16 %v4746, %v4742
  %v4799 = vpack.c.b16 %v4747, %v4743
  %v4800 = vpack.c.b16 %v4752, %v4748
  %v4801 = vpack.c.b16 %v4753, %v4749
  %v4802 = vpack.c.b16 %v4754, %v4750
  %v4803 = vpack.c.b16 %v4755, %v4751
  %v4804 = vpack.c.b16 %v4760, %v4756
  %v4805 = vpack.c.b16 %v4761, %v4757
  %v4806 = vpack.c.b16 %v4762, %v4758
  %v4807 = vpack.c.b16 %v4763, %v4759
  %v4808 = vpack.c.b16 %v4768, %v4764
  %v4809 = vpack.c.b16 %v4769, %v4765
  %v4810 = vpack.c.b16 %v4770, %v4766
  %v4811 = vpack.c.b16 %v4771, %v4767
  %v4812 = vpack.c.b16 %v4776, %v4772
  %v4813 = vpack.c.b16 %v4777, %v4773
  %v4814 = vpack.c.b16 %v4778, %v4774
  %v4815 = vpack.c.b16 %v4779, %v4775
  %v4816 = vpack.c.b16 %v4784, %v4780
  %v4817 = vpack.c.b16 %v4785, %v4781
  %v4818 = vpack.c.b16 %v4786, %v4782
  %v4819 = vpack.c.b16 %v4787, %v4783
  %4852 = vmatprep.subr.bf16.mxu0 %v4789
  %4853 = vmatpush1.bf16.msra.mxu0 %v4788
  %4854 = vmatprep.subr.bf16.mxu0 %v4793
  %4855 = vmatpush1.bf16.msra.mxu0 %v4792
  %4856 = vmatprep.subr.bf16.mxu0 %v4797
  %4857 = vmatpush1.bf16.msra.mxu0 %v4796
  %4858 = vmatprep.subr.bf16.mxu0 %v4801
  %4859 = vmatpush1.bf16.msra.mxu0 %v4800
  %4860 = vmatprep.subr.bf16.mxu0 %v4805
  %4861 = vmatpush1.bf16.msra.mxu0 %v4804
  %4862 = vmatprep.subr.bf16.mxu0 %v4809
  %4863 = vmatpush1.bf16.msra.mxu0 %v4808
  %4864 = vmatprep.subr.bf16.mxu0 %v4813
  %4865 = vmatpush1.bf16.msra.mxu0 %v4812
  %4866 = vmatprep.subr.bf16.mxu0 %v4817
  %4867 = vmatpush1.bf16.msra.mxu0 %v4816
  %4868 = vmatprep.subr.bf16.mxu0 0
  %4869 = vmatpush1.bf16.msra.mxu0 0
  %4870 = vmatprep.subr.bf16.mxu0 0
  %4871 = vmatpush1.bf16.msra.mxu0 0
  %4872 = vmatprep.subr.bf16.mxu0 0
  %4873 = vmatpush1.bf16.msra.mxu0 0
  %4874 = vmatprep.subr.bf16.mxu0 0
  %4875 = vmatpush1.bf16.msra.mxu0 0
  %4876 = vmatprep.subr.bf16.mxu0 0
  %4877 = vmatpush1.bf16.msra.mxu0 0
  %4878 = vmatprep.subr.bf16.mxu0 0
  %4879 = vmatpush1.bf16.msra.mxu0 0
  %4880 = vmatprep.subr.bf16.mxu0 0
  %4881 = vmatpush1.bf16.msra.mxu0 0
  %4882 = vmatprep.subr.bf16.mxu0 0
  %4883 = vmatpush1.bf16.msra.mxu0 0
  %4884 = vmatprep.mubr.bf16.mxu0 0
  %4885 = vmatmul.mubr.bf16.gmra.mrb[0].mxu0 %v4659
  %v4886 = vpop.f32.mrb[0].mxu0
  %v4887 = vadd.f32 0.0, %v4886
  %v4888 = vpop.f32.mrb[0].mxu0
  %v4889 = vadd.f32 0.0, %v4888
  %v4890 = vpop.f32.mrb[0].mxu0
  %v4891 = vpop.f32.mrb[0].mxu0
  %4892 = vdwg.mxu0
  %4893 = vmatprep.subr.bf16.mxu0 %v4791
  %4894 = vmatpush1.bf16.msra.mxu0 %v4790
  %4895 = vmatprep.subr.bf16.mxu0 %v4795
  %4896 = vmatpush1.bf16.msra.mxu0 %v4794
  %4897 = vmatprep.subr.bf16.mxu0 %v4799
  %4898 = vmatpush1.bf16.msra.mxu0 %v4798
  %4899 = vmatprep.subr.bf16.mxu0 %v4803
  %4900 = vmatpush1.bf16.msra.mxu0 %v4802
  %4901 = vmatprep.subr.bf16.mxu0 %v4807
  %4902 = vmatpush1.bf16.msra.mxu0 %v4806
  %4903 = vmatprep.subr.bf16.mxu0 %v4811
  %4904 = vmatpush1.bf16.msra.mxu0 %v4810
  %4905 = vmatprep.subr.bf16.mxu0 %v4815
  %4906 = vmatpush1.bf16.msra.mxu0 %v4814
  %4907 = vmatprep.subr.bf16.mxu0 %v4819
  %4908 = vmatpush1.bf16.msra.mxu0 %v4818
  %4909 = vmatprep.subr.bf16.mxu0 0
  %4910 = vmatpush1.bf16.msra.mxu0 0
  %4911 = vmatprep.subr.bf16.mxu0 0
  %4912 = vmatpush1.bf16.msra.mxu0 0
  %4913 = vmatprep.subr.bf16.mxu0 0
  %4914 = vmatpush1.bf16.msra.mxu0 0
  %4915 = vmatprep.subr.bf16.mxu0 0
  %4916 = vmatpush1.bf16.msra.mxu0 0
  %4917 = vmatprep.subr.bf16.mxu0 0
  %4918 = vmatpush1.bf16.msra.mxu0 0
  %4919 = vmatprep.subr.bf16.mxu0 0
  %4920 = vmatpush1.bf16.msra.mxu0 0
  %4921 = vmatprep.subr.bf16.mxu0 0
  %4922 = vmatpush1.bf16.msra.mxu0 0
  %4923 = vmatprep.subr.bf16.mxu0 0
  %4924 = vmatpush1.bf16.msra.mxu0 0
  %4925 = vmatprep.mubr.bf16.mxu0 0
  %4926 = vmatmul.mubr.bf16.gmra.mrb[0].mxu0 %v4659
  %v4927 = vpop.f32.mrb[0].mxu0
  %v4928 = vadd.f32 0.0, %v4927
  %v4929 = vpop.f32.mrb[0].mxu0
  %v4930 = vadd.f32 0.0, %v4929
  %v4931 = vpop.f32.mrb[0].mxu0
  %v4932 = vpop.f32.mrb[0].mxu0
  %4933 = vdwg.mxu0
  %v4934 = vadd.f32 %v4654, %v4887
  %v4935 = vadd.f32 %v4655, %v4889
  %v4936 = vadd.f32 %v4656, %v4928
  %v4937 = vadd.f32 %v4657, %v4930
  %v4938 = vxor.u32 %v4934, 2147483648
  %v4939 = vxor.u32 %v4935, 2147483648
  %v4940 = vmul.f32 %v4938, 1.442695
  %v4941 = vpow.pop %v4940
  %v4942 = vmul.f32 %v4939, 1.442695
  %v4943 = vpow.pop %v4942
  %v4944 = vadd.f32 %v4941, 1.0
  %v4945 = vadd.f32 %v4943, 1.0
  %v4946 = vrcp.pop %v4944
  %v4947 = vmul.f32 1.0, %v4946
  %v4948 = vrcp.pop %v4945
  %v4949 = vmul.f32 1.0, %v4948
  %v4950 = vtanh.pop %v4936
  %v4951 = vxor.u32 %v4937, 2147483648
  %v4952 = vmul.f32 %v4951, 1.442695
  %v4953 = vpow.pop %v4952
  %v4954 = vadd.f32 %v4953, 1.0
  %v4955 = vrcp.pop %v4954
  %v4956 = vmul.f32 1.0, %v4955
  %v4957 = vld [vmem:[#allocation3] sm:$0xff]
  %v4958 = vmul.f32 %v4949, %v4957
  %v4959 = vmul.f32 %v4947, %v4950
  %v4960 = vadd.f32 %v4958, %v4959
  %v4961 = vtanh.pop %v4960
  %v4962 = vmul.f32 %v4956, %v4961
  %4963 = vst [vmem:[#allocation3] sm:$0xff] %v4960
  %4964 = vst [vmem:[#allocation2] sm:$0xff] %v4962
  %4965 = vst [vmem:[%s2050] sm:$0xff] %v4962
  %v4966 = vld [vmem:[%s2054] sm:$0xff]
  %v4967 = vld [vmem:[%s2054 + $0x8] sm:$0xff]
  %v4968 = vld [vmem:[%s2054 + $0x10] sm:$0xff]
  %v4969 = vld [vmem:[%s2054 + $0x18] sm:$0xff]
  %v4970 = vld [vmem:[#allocation2] sm:$0xff]
  %v4971 = vpack.c.bf16 %v4970, %v4970
  %v4972 = vld [vmem:[%s6] sm:$0xff]
  %v4973 = vld [vmem:[%s6 + $0x8] sm:$0xff]
  %v4974 = vld [vmem:[%s6 + $0x10] sm:$0xff]
  %v4975 = vld [vmem:[%s6 + $0x18] sm:$0xff]
  %v4976 = vld [vmem:[%s6 + $0x20] sm:$0xff]
  %v4977 = vld [vmem:[%s6 + $0x28] sm:$0xff]
  %v4978 = vld [vmem:[%s6 + $0x30] sm:$0xff]
  %v4979 = vld [vmem:[%s6 + $0x38] sm:$0xff]
  %v4980 = vld [vmem:[%s6 + $0x40] sm:$0xff]
  %v4981 = vld [vmem:[%s6 + $0x48] sm:$0xff]
  %v4982 = vld [vmem:[%s6 + $0x50] sm:$0xff]
  %v4983 = vld [vmem:[%s6 + $0x58] sm:$0xff]
  %v4984 = vld [vmem:[%s6 + $0x60] sm:$0xff]
  %v4985 = vld [vmem:[%s6 + $0x68] sm:$0xff]
  %v4986 = vld [vmem:[%s6 + $0x70] sm:$0xff]
  %v4987 = vld [vmem:[%s6 + $0x78] sm:$0xff]
  %v4988 = vld [vmem:[%s6 + $0x80] sm:$0xff]
  %v4989 = vld [vmem:[%s6 + $0x88] sm:$0xff]
  %v4990 = vld [vmem:[%s6 + $0x90] sm:$0xff]
  %v4991 = vld [vmem:[%s6 + $0x98] sm:$0xff]
  %v4992 = vld [vmem:[%s6 + $0xa0] sm:$0xff]
  %v4993 = vld [vmem:[%s6 + $0xa8] sm:$0xff]
  %v4994 = vld [vmem:[%s6 + $0xb0] sm:$0xff]
  %v4995 = vld [vmem:[%s6 + $0xb8] sm:$0xff]
  %v4996 = vld [vmem:[%s6 + $0xc0] sm:$0xff]
  %v4997 = vld [vmem:[%s6 + $0xc8] sm:$0xff]
  %v4998 = vld [vmem:[%s6 + $0xd0] sm:$0xff]
  %v4999 = vld [vmem:[%s6 + $0xd8] sm:$0xff]
  %v5000 = vld [vmem:[%s6 + $0xe0] sm:$0xff]
  %v5001 = vld [vmem:[%s6 + $0xe8] sm:$0xff]
  %v5002 = vld [vmem:[%s6 + $0xf0] sm:$0xff]
  %v5003 = vld [vmem:[%s6 + $0xf8] sm:$0xff]
  %v5036 = vunpack.c.l.b16 %v4972
  %v5037 = vunpack.c.h.b16 %v4972
  %v5038 = vunpack.c.l.b16 %v4973
  %v5039 = vunpack.c.h.b16 %v4973
  %v5040 = vunpack.c.l.b16 %v4974
  %v5041 = vunpack.c.h.b16 %v4974
  %v5042 = vunpack.c.l.b16 %v4975
  %v5043 = vunpack.c.h.b16 %v4975
  %v5044 = vunpack.c.l.b16 %v4976
  %v5045 = vunpack.c.h.b16 %v4976
  %v5046 = vunpack.c.l.b16 %v4977
  %v5047 = vunpack.c.h.b16 %v4977
  %v5048 = vunpack.c.l.b16 %v4978
  %v5049 = vunpack.c.h.b16 %v4978
  %v5050 = vunpack.c.l.b16 %v4979
  %v5051 = vunpack.c.h.b16 %v4979
  %v5052 = vunpack.c.l.b16 %v4980
  %v5053 = vunpack.c.h.b16 %v4980
  %v5054 = vunpack.c.l.b16 %v4981
  %v5055 = vunpack.c.h.b16 %v4981
  %v5056 = vunpack.c.l.b16 %v4982
  %v5057 = vunpack.c.h.b16 %v4982
  %v5058 = vunpack.c.l.b16 %v4983
  %v5059 = vunpack.c.h.b16 %v4983
  %v5060 = vunpack.c.l.b16 %v4984
  %v5061 = vunpack.c.h.b16 %v4984
  %v5062 = vunpack.c.l.b16 %v4985
  %v5063 = vunpack.c.h.b16 %v4985
  %v5064 = vunpack.c.l.b16 %v4986
  %v5065 = vunpack.c.h.b16 %v4986
  %v5066 = vunpack.c.l.b16 %v4987
  %v5067 = vunpack.c.h.b16 %v4987
  %v5068 = vunpack.c.l.b16 %v4988
  %v5069 = vunpack.c.h.b16 %v4988
  %v5070 = vunpack.c.l.b16 %v4989
  %v5071 = vunpack.c.h.b16 %v4989
  %v5072 = vunpack.c.l.b16 %v4990
  %v5073 = vunpack.c.h.b16 %v4990
  %v5074 = vunpack.c.l.b16 %v4991
  %v5075 = vunpack.c.h.b16 %v4991
  %v5076 = vunpack.c.l.b16 %v4992
  %v5077 = vunpack.c.h.b16 %v4992
  %v5078 = vunpack.c.l.b16 %v4993
  %v5079 = vunpack.c.h.b16 %v4993
  %v5080 = vunpack.c.l.b16 %v4994
  %v5081 = vunpack.c.h.b16 %v4994
  %v5082 = vunpack.c.l.b16 %v4995
  %v5083 = vunpack.c.h.b16 %v4995
  %v5084 = vunpack.c.l.b16 %v4996
  %v5085 = vunpack.c.h.b16 %v4996
  %v5086 = vunpack.c.l.b16 %v4997
  %v5087 = vunpack.c.h.b16 %v4997
  %v5088 = vunpack.c.l.b16 %v4998
  %v5089 = vunpack.c.h.b16 %v4998
  %v5090 = vunpack.c.l.b16 %v4999
  %v5091 = vunpack.c.h.b16 %v4999
  %v5092 = vunpack.c.l.b16 %v5000
  %v5093 = vunpack.c.h.b16 %v5000
  %v5094 = vunpack.c.l.b16 %v5001
  %v5095 = vunpack.c.h.b16 %v5001
  %v5096 = vunpack.c.l.b16 %v5002
  %v5097 = vunpack.c.h.b16 %v5002
  %v5098 = vunpack.c.l.b16 %v5003
  %v5099 = vunpack.c.h.b16 %v5003
  %v5100 = vpack.c.b16 %v5040, %v5036
  %v5101 = vpack.c.b16 %v5041, %v5037
  %v5102 = vpack.c.b16 %v5042, %v5038
  %v5103 = vpack.c.b16 %v5043, %v5039
  %v5104 = vpack.c.b16 %v5048, %v5044
  %v5105 = vpack.c.b16 %v5049, %v5045
  %v5106 = vpack.c.b16 %v5050, %v5046
  %v5107 = vpack.c.b16 %v5051, %v5047
  %v5108 = vpack.c.b16 %v5056, %v5052
  %v5109 = vpack.c.b16 %v5057, %v5053
  %v5110 = vpack.c.b16 %v5058, %v5054
  %v5111 = vpack.c.b16 %v5059, %v5055
  %v5112 = vpack.c.b16 %v5064, %v5060
  %v5113 = vpack.c.b16 %v5065, %v5061
  %v5114 = vpack.c.b16 %v5066, %v5062
  %v5115 = vpack.c.b16 %v5067, %v5063
  %v5116 = vpack.c.b16 %v5072, %v5068
  %v5117 = vpack.c.b16 %v5073, %v5069
  %v5118 = vpack.c.b16 %v5074, %v5070
  %v5119 = vpack.c.b16 %v5075, %v5071
  %v5120 = vpack.c.b16 %v5080, %v5076
  %v5121 = vpack.c.b16 %v5081, %v5077
  %v5122 = vpack.c.b16 %v5082, %v5078
  %v5123 = vpack.c.b16 %v5083, %v5079
  %v5124 = vpack.c.b16 %v5088, %v5084
  %v5125 = vpack.c.b16 %v5089, %v5085
  %v5126 = vpack.c.b16 %v5090, %v5086
  %v5127 = vpack.c.b16 %v5091, %v5087
  %v5128 = vpack.c.b16 %v5096, %v5092
  %v5129 = vpack.c.b16 %v5097, %v5093
  %v5130 = vpack.c.b16 %v5098, %v5094
  %v5131 = vpack.c.b16 %v5099, %v5095
  %5164 = vmatprep.subr.bf16.mxu0 %v5101
  %5165 = vmatpush1.bf16.msra.mxu0 %v5100
  %5166 = vmatprep.subr.bf16.mxu0 %v5105
  %5167 = vmatpush1.bf16.msra.mxu0 %v5104
  %5168 = vmatprep.subr.bf16.mxu0 %v5109
  %5169 = vmatpush1.bf16.msra.mxu0 %v5108
  %5170 = vmatprep.subr.bf16.mxu0 %v5113
  %5171 = vmatpush1.bf16.msra.mxu0 %v5112
  %5172 = vmatprep.subr.bf16.mxu0 %v5117
  %5173 = vmatpush1.bf16.msra.mxu0 %v5116
  %5174 = vmatprep.subr.bf16.mxu0 %v5121
  %5175 = vmatpush1.bf16.msra.mxu0 %v5120
  %5176 = vmatprep.subr.bf16.mxu0 %v5125
  %5177 = vmatpush1.bf16.msra.mxu0 %v5124
  %5178 = vmatprep.subr.bf16.mxu0 %v5129
  %5179 = vmatpush1.bf16.msra.mxu0 %v5128
  %5180 = vmatprep.subr.bf16.mxu0 0
  %5181 = vmatpush1.bf16.msra.mxu0 0
  %5182 = vmatprep.subr.bf16.mxu0 0
  %5183 = vmatpush1.bf16.msra.mxu0 0
  %5184 = vmatprep.subr.bf16.mxu0 0
  %5185 = vmatpush1.bf16.msra.mxu0 0
  %5186 = vmatprep.subr.bf16.mxu0 0
  %5187 = vmatpush1.bf16.msra.mxu0 0
  %5188 = vmatprep.subr.bf16.mxu0 0
  %5189 = vmatpush1.bf16.msra.mxu0 0
  %5190 = vmatprep.subr.bf16.mxu0 0
  %5191 = vmatpush1.bf16.msra.mxu0 0
  %5192 = vmatprep.subr.bf16.mxu0 0
  %5193 = vmatpush1.bf16.msra.mxu0 0
  %5194 = vmatprep.subr.bf16.mxu0 0
  %5195 = vmatpush1.bf16.msra.mxu0 0
  %5196 = vmatprep.mubr.bf16.mxu0 0
  %5197 = vmatmul.mubr.bf16.gmra.mrb[0].mxu0 %v4971
  %v5198 = vpop.f32.mrb[0].mxu0
  %v5199 = vadd.f32 0.0, %v5198
  %v5200 = vpop.f32.mrb[0].mxu0
  %v5201 = vadd.f32 0.0, %v5200
  %v5202 = vpop.f32.mrb[0].mxu0
  %v5203 = vpop.f32.mrb[0].mxu0
  %5204 = vdwg.mxu0
  %5205 = vmatprep.subr.bf16.mxu0 %v5103
  %5206 = vmatpush1.bf16.msra.mxu0 %v5102
  %5207 = vmatprep.subr.bf16.mxu0 %v5107
  %5208 = vmatpush1.bf16.msra.mxu0 %v5106
  %5209 = vmatprep.subr.bf16.mxu0 %v5111
  %5210 = vmatpush1.bf16.msra.mxu0 %v5110
  %5211 = vmatprep.subr.bf16.mxu0 %v5115
  %5212 = vmatpush1.bf16.msra.mxu0 %v5114
  %5213 = vmatprep.subr.bf16.mxu0 %v5119
  %5214 = vmatpush1.bf16.msra.mxu0 %v5118
  %5215 = vmatprep.subr.bf16.mxu0 %v5123
  %5216 = vmatpush1.bf16.msra.mxu0 %v5122
  %5217 = vmatprep.subr.bf16.mxu0 %v5127
  %5218 = vmatpush1.bf16.msra.mxu0 %v5126
  %5219 = vmatprep.subr.bf16.mxu0 %v5131
  %5220 = vmatpush1.bf16.msra.mxu0 %v5130
  %5221 = vmatprep.subr.bf16.mxu0 0
  %5222 = vmatpush1.bf16.msra.mxu0 0
  %5223 = vmatprep.subr.bf16.mxu0 0
  %5224 = vmatpush1.bf16.msra.mxu0 0
  %5225 = vmatprep.subr.bf16.mxu0 0
  %5226 = vmatpush1.bf16.msra.mxu0 0
  %5227 = vmatprep.subr.bf16.mxu0 0
  %5228 = vmatpush1.bf16.msra.mxu0 0
  %5229 = vmatprep.subr.bf16.mxu0 0
  %5230 = vmatpush1.bf16.msra.mxu0 0
  %5231 = vmatprep.subr.bf16.mxu0 0
  %5232 = vmatpush1.bf16.msra.mxu0 0
  %5233 = vmatprep.subr.bf16.mxu0 0
  %5234 = vmatpush1.bf16.msra.mxu0 0
  %5235 = vmatprep.subr.bf16.mxu0 0
  %5236 = vmatpush1.bf16.msra.mxu0 0
  %5237 = vmatprep.mubr.bf16.mxu0 0
  %5238 = vmatmul.mubr.bf16.gmra.mrb[0].mxu0 %v4971
  %v5239 = vpop.f32.mrb[0].mxu0
  %v5240 = vadd.f32 0.0, %v5239
  %v5241 = vpop.f32.mrb[0].mxu0
  %v5242 = vadd.f32 0.0, %v5241
  %v5243 = vpop.f32.mrb[0].mxu0
  %v5244 = vpop.f32.mrb[0].mxu0
  %5245 = vdwg.mxu0
  %v5246 = vadd.f32 %v4966, %v5199
  %v5247 = vadd.f32 %v4967, %v5201
  %v5248 = vadd.f32 %v4968, %v5240
  %v5249 = vadd.f32 %v4969, %v5242
  %v5250 = vxor.u32 %v5246, 2147483648
  %v5251 = vxor.u32 %v5247, 2147483648
  %v5252 = vmul.f32 %v5250, 1.442695
  %v5253 = vpow.pop %v5252
  %v5254 = vmul.f32 %v5251, 1.442695
  %v5255 = vpow.pop %v5254
  %v5256 = vadd.f32 %v5253, 1.0
  %v5257 = vadd.f32 %v5255, 1.0
  %v5258 = vrcp.pop %v5256
  %v5259 = vmul.f32 1.0, %v5258
  %v5260 = vrcp.pop %v5257
  %v5261 = vmul.f32 1.0, %v5260
  %v5262 = vtanh.pop %v5248
  %v5263 = vxor.u32 %v5249, 2147483648
  %v5264 = vmul.f32 %v5263, 1.442695
  %v5265 = vpow.pop %v5264
  %v5266 = vadd.f32 %v5265, 1.0
  %v5267 = vrcp.pop %v5266
  %v5268 = vmul.f32 1.0, %v5267
  %v5269 = vld [vmem:[#allocation3] sm:$0xff]
  %v5270 = vmul.f32 %v5261, %v5269
  %v5271 = vmul.f32 %v5259, %v5262
  %v5272 = vadd.f32 %v5270, %v5271
  %v5273 = vtanh.pop %v5272
  %v5274 = vmul.f32 %v5268, %v5273
  %5275 = vst [vmem:[#allocation3] sm:$0xff] %v5272
  %5276 = vst [vmem:[#allocation2] sm:$0xff] %v5274
  %5277 = vst [vmem:[%s2366] sm:$0xff] %v5274
  %v5278 = vld [vmem:[%s2370] sm:$0xff]
  %v5279 = vld [vmem:[%s2370 + $0x8] sm:$0xff]
  %v5280 = vld [vmem:[%s2370 + $0x10] sm:$0xff]
  %v5281 = vld [vmem:[%s2370 + $0x18] sm:$0xff]
  %v5282 = vld [vmem:[#allocation2] sm:$0xff]
  %v5283 = vpack.c.bf16 %v5282, %v5282
  %v5284 = vld [vmem:[%s6] sm:$0xff]
  %v5285 = vld [vmem:[%s6 + $0x8] sm:$0xff]
  %v5286 = vld [vmem:[%s6 + $0x10] sm:$0xff]
  %v5287 = vld [vmem:[%s6 + $0x18] sm:$0xff]
  %v5288 = vld [vmem:[%s6 + $0x20] sm:$0xff]
  %v5289 = vld [vmem:[%s6 + $0x28] sm:$0xff]
  %v5290 = vld [vmem:[%s6 + $0x30] sm:$0xff]
  %v5291 = vld [vmem:[%s6 + $0x38] sm:$0xff]
  %v5292 = vld [vmem:[%s6 + $0x40] sm:$0xff]
  %v5293 = vld [vmem:[%s6 + $0x48] sm:$0xff]
  %v5294 = vld [vmem:[%s6 + $0x50] sm:$0xff]
  %v5295 = vld [vmem:[%s6 + $0x58] sm:$0xff]
  %v5296 = vld [vmem:[%s6 + $0x60] sm:$0xff]
  %v5297 = vld [vmem:[%s6 + $0x68] sm:$0xff]
  %v5298 = vld [vmem:[%s6 + $0x70] sm:$0xff]
  %v5299 = vld [vmem:[%s6 + $0x78] sm:$0xff]
  %v5300 = vld [vmem:[%s6 + $0x80] sm:$0xff]
  %v5301 = vld [vmem:[%s6 + $0x88] sm:$0xff]
  %v5302 = vld [vmem:[%s6 + $0x90] sm:$0xff]
  %v5303 = vld [vmem:[%s6 + $0x98] sm:$0xff]
  %v5304 = vld [vmem:[%s6 + $0xa0] sm:$0xff]
  %v5305 = vld [vmem:[%s6 + $0xa8] sm:$0xff]
  %v5306 = vld [vmem:[%s6 + $0xb0] sm:$0xff]
  %v5307 = vld [vmem:[%s6 + $0xb8] sm:$0xff]
  %v5308 = vld [vmem:[%s6 + $0xc0] sm:$0xff]
  %v5309 = vld [vmem:[%s6 + $0xc8] sm:$0xff]
  %v5310 = vld [vmem:[%s6 + $0xd0] sm:$0xff]
  %v5311 = vld [vmem:[%s6 + $0xd8] sm:$0xff]
  %v5312 = vld [vmem:[%s6 + $0xe0] sm:$0xff]
  %v5313 = vld [vmem:[%s6 + $0xe8] sm:$0xff]
  %v5314 = vld [vmem:[%s6 + $0xf0] sm:$0xff]
  %v5315 = vld [vmem:[%s6 + $0xf8] sm:$0xff]
  %v5348 = vunpack.c.l.b16 %v5284
  %v5349 = vunpack.c.h.b16 %v5284
  %v5350 = vunpack.c.l.b16 %v5285
  %v5351 = vunpack.c.h.b16 %v5285
  %v5352 = vunpack.c.l.b16 %v5286
  %v5353 = vunpack.c.h.b16 %v5286
  %v5354 = vunpack.c.l.b16 %v5287
  %v5355 = vunpack.c.h.b16 %v5287
  %v5356 = vunpack.c.l.b16 %v5288
  %v5357 = vunpack.c.h.b16 %v5288
  %v5358 = vunpack.c.l.b16 %v5289
  %v5359 = vunpack.c.h.b16 %v5289
  %v5360 = vunpack.c.l.b16 %v5290
  %v5361 = vunpack.c.h.b16 %v5290
  %v5362 = vunpack.c.l.b16 %v5291
  %v5363 = vunpack.c.h.b16 %v5291
  %v5364 = vunpack.c.l.b16 %v5292
  %v5365 = vunpack.c.h.b16 %v5292
  %v5366 = vunpack.c.l.b16 %v5293
  %v5367 = vunpack.c.h.b16 %v5293
  %v5368 = vunpack.c.l.b16 %v5294
  %v5369 = vunpack.c.h.b16 %v5294
  %v5370 = vunpack.c.l.b16 %v5295
  %v5371 = vunpack.c.h.b16 %v5295
  %v5372 = vunpack.c.l.b16 %v5296
  %v5373 = vunpack.c.h.b16 %v5296
  %v5374 = vunpack.c.l.b16 %v5297
  %v5375 = vunpack.c.h.b16 %v5297
  %v5376 = vunpack.c.l.b16 %v5298
  %v5377 = vunpack.c.h.b16 %v5298
  %v5378 = vunpack.c.l.b16 %v5299
  %v5379 = vunpack.c.h.b16 %v5299
  %v5380 = vunpack.c.l.b16 %v5300
  %v5381 = vunpack.c.h.b16 %v5300
  %v5382 = vunpack.c.l.b16 %v5301
  %v5383 = vunpack.c.h.b16 %v5301
  %v5384 = vunpack.c.l.b16 %v5302
  %v5385 = vunpack.c.h.b16 %v5302
  %v5386 = vunpack.c.l.b16 %v5303
  %v5387 = vunpack.c.h.b16 %v5303
  %v5388 = vunpack.c.l.b16 %v5304
  %v5389 = vunpack.c.h.b16 %v5304
  %v5390 = vunpack.c.l.b16 %v5305
  %v5391 = vunpack.c.h.b16 %v5305
  %v5392 = vunpack.c.l.b16 %v5306
  %v5393 = vunpack.c.h.b16 %v5306
  %v5394 = vunpack.c.l.b16 %v5307
  %v5395 = vunpack.c.h.b16 %v5307
  %v5396 = vunpack.c.l.b16 %v5308
  %v5397 = vunpack.c.h.b16 %v5308
  %v5398 = vunpack.c.l.b16 %v5309
  %v5399 = vunpack.c.h.b16 %v5309
  %v5400 = vunpack.c.l.b16 %v5310
  %v5401 = vunpack.c.h.b16 %v5310
  %v5402 = vunpack.c.l.b16 %v5311
  %v5403 = vunpack.c.h.b16 %v5311
  %v5404 = vunpack.c.l.b16 %v5312
  %v5405 = vunpack.c.h.b16 %v5312
  %v5406 = vunpack.c.l.b16 %v5313
  %v5407 = vunpack.c.h.b16 %v5313
  %v5408 = vunpack.c.l.b16 %v5314
  %v5409 = vunpack.c.h.b16 %v5314
  %v5410 = vunpack.c.l.b16 %v5315
  %v5411 = vunpack.c.h.b16 %v5315
  %v5412 = vpack.c.b16 %v5352, %v5348
  %v5413 = vpack.c.b16 %v5353, %v5349
  %v5414 = vpack.c.b16 %v5354, %v5350
  %v5415 = vpack.c.b16 %v5355, %v5351
  %v5416 = vpack.c.b16 %v5360, %v5356
  %v5417 = vpack.c.b16 %v5361, %v5357
  %v5418 = vpack.c.b16 %v5362, %v5358
  %v5419 = vpack.c.b16 %v5363, %v5359
  %v5420 = vpack.c.b16 %v5368, %v5364
  %v5421 = vpack.c.b16 %v5369, %v5365
  %v5422 = vpack.c.b16 %v5370, %v5366
  %v5423 = vpack.c.b16 %v5371, %v5367
  %v5424 = vpack.c.b16 %v5376, %v5372
  %v5425 = vpack.c.b16 %v5377, %v5373
  %v5426 = vpack.c.b16 %v5378, %v5374
  %v5427 = vpack.c.b16 %v5379, %v5375
  %v5428 = vpack.c.b16 %v5384, %v5380
  %v5429 = vpack.c.b16 %v5385, %v5381
  %v5430 = vpack.c.b16 %v5386, %v5382
  %v5431 = vpack.c.b16 %v5387, %v5383
  %v5432 = vpack.c.b16 %v5392, %v5388
  %v5433 = vpack.c.b16 %v5393, %v5389
  %v5434 = vpack.c.b16 %v5394, %v5390
  %v5435 = vpack.c.b16 %v5395, %v5391
  %v5436 = vpack.c.b16 %v5400, %v5396
  %v5437 = vpack.c.b16 %v5401, %v5397
  %v5438 = vpack.c.b16 %v5402, %v5398
  %v5439 = vpack.c.b16 %v5403, %v5399
  %v5440 = vpack.c.b16 %v5408, %v5404
  %v5441 = vpack.c.b16 %v5409, %v5405
  %v5442 = vpack.c.b16 %v5410, %v5406
  %v5443 = vpack.c.b16 %v5411, %v5407
  %5476 = vmatprep.subr.bf16.mxu0 %v5413
  %5477 = vmatpush1.bf16.msra.mxu0 %v5412
  %5478 = vmatprep.subr.bf16.mxu0 %v5417
  %5479 = vmatpush1.bf16.msra.mxu0 %v5416
  %5480 = vmatprep.subr.bf16.mxu0 %v5421
  %5481 = vmatpush1.bf16.msra.mxu0 %v5420
  %5482 = vmatprep.subr.bf16.mxu0 %v5425
  %5483 = vmatpush1.bf16.msra.mxu0 %v5424
  %5484 = vmatprep.subr.bf16.mxu0 %v5429
  %5485 = vmatpush1.bf16.msra.mxu0 %v5428
  %5486 = vmatprep.subr.bf16.mxu0 %v5433
  %5487 = vmatpush1.bf16.msra.mxu0 %v5432
  %5488 = vmatprep.subr.bf16.mxu0 %v5437
  %5489 = vmatpush1.bf16.msra.mxu0 %v5436
  %5490 = vmatprep.subr.bf16.mxu0 %v5441
  %5491 = vmatpush1.bf16.msra.mxu0 %v5440
  %5492 = vmatprep.subr.bf16.mxu0 0
  %5493 = vmatpush1.bf16.msra.mxu0 0
  %5494 = vmatprep.subr.bf16.mxu0 0
  %5495 = vmatpush1.bf16.msra.mxu0 0
  %5496 = vmatprep.subr.bf16.mxu0 0
  %5497 = vmatpush1.bf16.msra.mxu0 0
  %5498 = vmatprep.subr.bf16.mxu0 0
  %5499 = vmatpush1.bf16.msra.mxu0 0
  %5500 = vmatprep.subr.bf16.mxu0 0
  %5501 = vmatpush1.bf16.msra.mxu0 0
  %5502 = vmatprep.subr.bf16.mxu0 0
  %5503 = vmatpush1.bf16.msra.mxu0 0
  %5504 = vmatprep.subr.bf16.mxu0 0
  %5505 = vmatpush1.bf16.msra.mxu0 0
  %5506 = vmatprep.subr.bf16.mxu0 0
  %5507 = vmatpush1.bf16.msra.mxu0 0
  %5508 = vmatprep.mubr.bf16.mxu0 0
  %5509 = vmatmul.mubr.bf16.gmra.mrb[0].mxu0 %v5283
  %v5510 = vpop.f32.mrb[0].mxu0
  %v5511 = vadd.f32 0.0, %v5510
  %v5512 = vpop.f32.mrb[0].mxu0
  %v5513 = vadd.f32 0.0, %v5512
  %v5514 = vpop.f32.mrb[0].mxu0
  %v5515 = vpop.f32.mrb[0].mxu0
  %5516 = vdwg.mxu0
  %5517 = vmatprep.subr.bf16.mxu0 %v5415
  %5518 = vmatpush1.bf16.msra.mxu0 %v5414
  %5519 = vmatprep.subr.bf16.mxu0 %v5419
  %5520 = vmatpush1.bf16.msra.mxu0 %v5418
  %5521 = vmatprep.subr.bf16.mxu0 %v5423
  %5522 = vmatpush1.bf16.msra.mxu0 %v5422
  %5523 = vmatprep.subr.bf16.mxu0 %v5427
  %5524 = vmatpush1.bf16.msra.mxu0 %v5426
  %5525 = vmatprep.subr.bf16.mxu0 %v5431
  %5526 = vmatpush1.bf16.msra.mxu0 %v5430
  %5527 = vmatprep.subr.bf16.mxu0 %v5435
  %5528 = vmatpush1.bf16.msra.mxu0 %v5434
  %5529 = vmatprep.subr.bf16.mxu0 %v5439
  %5530 = vmatpush1.bf16.msra.mxu0 %v5438
  %5531 = vmatprep.subr.bf16.mxu0 %v5443
  %5532 = vmatpush1.bf16.msra.mxu0 %v5442
  %5533 = vmatprep.subr.bf16.mxu0 0
  %5534 = vmatpush1.bf16.msra.mxu0 0
  %5535 = vmatprep.subr.bf16.mxu0 0
  %5536 = vmatpush1.bf16.msra.mxu0 0
  %5537 = vmatprep.subr.bf16.mxu0 0
  %5538 = vmatpush1.bf16.msra.mxu0 0
  %5539 = vmatprep.subr.bf16.mxu0 0
  %5540 = vmatpush1.bf16.msra.mxu0 0
  %5541 = vmatprep.subr.bf16.mxu0 0
  %5542 = vmatpush1.bf16.msra.mxu0 0
  %5543 = vmatprep.subr.bf16.mxu0 0
  %5544 = vmatpush1.bf16.msra.mxu0 0
  %5545 = vmatprep.subr.bf16.mxu0 0
  %5546 = vmatpush1.bf16.msra.mxu0 0
  %5547 = vmatprep.subr.bf16.mxu0 0
  %5548 = vmatpush1.bf16.msra.mxu0 0
  %5549 = vmatprep.mubr.bf16.mxu0 0
  %5550 = vmatmul.mubr.bf16.gmra.mrb[0].mxu0 %v5283
  %v5551 = vpop.f32.mrb[0].mxu0
  %v5552 = vadd.f32 0.0, %v5551
  %v5553 = vpop.f32.mrb[0].mxu0
  %v5554 = vadd.f32 0.0, %v5553
  %v5555 = vpop.f32.mrb[0].mxu0
  %v5556 = vpop.f32.mrb[0].mxu0
  %5557 = vdwg.mxu0
  %v5558 = vadd.f32 %v5278, %v5511
  %v5559 = vadd.f32 %v5279, %v5513
  %v5560 = vadd.f32 %v5280, %v5552
  %v5561 = vadd.f32 %v5281, %v5554
  %v5562 = vxor.u32 %v5558, 2147483648
  %v5563 = vxor.u32 %v5559, 2147483648
  %v5564 = vmul.f32 %v5562, 1.442695
  %v5565 = vpow.pop %v5564
  %v5566 = vmul.f32 %v5563, 1.442695
  %v5567 = vpow.pop %v5566
  %v5568 = vadd.f32 %v5565, 1.0
  %v5569 = vadd.f32 %v5567, 1.0
  %v5570 = vrcp.pop %v5568
  %v5571 = vmul.f32 1.0, %v5570
  %v5572 = vrcp.pop %v5569
  %v5573 = vmul.f32 1.0, %v5572
  %v5574 = vtanh.pop %v5560
  %v5575 = vxor.u32 %v5561, 2147483648
  %v5576 = vmul.f32 %v5575, 1.442695
  %v5577 = vpow.pop %v5576
  %v5578 = vadd.f32 %v5577, 1.0
  %v5579 = vrcp.pop %v5578
  %v5580 = vmul.f32 1.0, %v5579
  %v5581 = vld [vmem:[#allocation3] sm:$0xff]
  %v5582 = vmul.f32 %v5573, %v5581
  %v5583 = vmul.f32 %v5571, %v5574
  %v5584 = vadd.f32 %v5582, %v5583
  %v5585 = vtanh.pop %v5584
  %v5586 = vmul.f32 %v5580, %v5585
  %5587 = vst [vmem:[#allocation3] sm:$0xff] %v5584
  %5588 = vst [vmem:[#allocation2] sm:$0xff] %v5586
  %5589 = vst [vmem:[%s2682] sm:$0xff] %v5586
  %v5590 = vld [vmem:[%s2686] sm:$0xff]
  %v5591 = vld [vmem:[%s2686 + $0x8] sm:$0xff]
  %v5592 = vld [vmem:[%s2686 + $0x10] sm:$0xff]
  %v5593 = vld [vmem:[%s2686 + $0x18] sm:$0xff]
  %v5594 = vld [vmem:[#allocation2] sm:$0xff]
  %v5595 = vpack.c.bf16 %v5594, %v5594
  %v5596 = vld [vmem:[%s6] sm:$0xff]
  %v5597 = vld [vmem:[%s6 + $0x8] sm:$0xff]
  %v5598 = vld [vmem:[%s6 + $0x10] sm:$0xff]
  %v5599 = vld [vmem:[%s6 + $0x18] sm:$0xff]
  %v5600 = vld [vmem:[%s6 + $0x20] sm:$0xff]
  %v5601 = vld [vmem:[%s6 + $0x28] sm:$0xff]
  %v5602 = vld [vmem:[%s6 + $0x30] sm:$0xff]
  %v5603 = vld [vmem:[%s6 + $0x38] sm:$0xff]
  %v5604 = vld [vmem:[%s6 + $0x40] sm:$0xff]
  %v5605 = vld [vmem:[%s6 + $0x48] sm:$0xff]
  %v5606 = vld [vmem:[%s6 + $0x50] sm:$0xff]
  %v5607 = vld [vmem:[%s6 + $0x58] sm:$0xff]
  %v5608 = vld [vmem:[%s6 + $0x60] sm:$0xff]
  %v5609 = vld [vmem:[%s6 + $0x68] sm:$0xff]
  %v5610 = vld [vmem:[%s6 + $0x70] sm:$0xff]
  %v5611 = vld [vmem:[%s6 + $0x78] sm:$0xff]
  %v5612 = vld [vmem:[%s6 + $0x80] sm:$0xff]
  %v5613 = vld [vmem:[%s6 + $0x88] sm:$0xff]
  %v5614 = vld [vmem:[%s6 + $0x90] sm:$0xff]
  %v5615 = vld [vmem:[%s6 + $0x98] sm:$0xff]
  %v5616 = vld [vmem:[%s6 + $0xa0] sm:$0xff]
  %v5617 = vld [vmem:[%s6 + $0xa8] sm:$0xff]
  %v5618 = vld [vmem:[%s6 + $0xb0] sm:$0xff]
  %v5619 = vld [vmem:[%s6 + $0xb8] sm:$0xff]
  %v5620 = vld [vmem:[%s6 + $0xc0] sm:$0xff]
  %v5621 = vld [vmem:[%s6 + $0xc8] sm:$0xff]
  %v5622 = vld [vmem:[%s6 + $0xd0] sm:$0xff]
  %v5623 = vld [vmem:[%s6 + $0xd8] sm:$0xff]
  %v5624 = vld [vmem:[%s6 + $0xe0] sm:$0xff]
  %v5625 = vld [vmem:[%s6 + $0xe8] sm:$0xff]
  %v5626 = vld [vmem:[%s6 + $0xf0] sm:$0xff]
  %v5627 = vld [vmem:[%s6 + $0xf8] sm:$0xff]
  %v5660 = vunpack.c.l.b16 %v5596
  %v5661 = vunpack.c.h.b16 %v5596
  %v5662 = vunpack.c.l.b16 %v5597
  %v5663 = vunpack.c.h.b16 %v5597
  %v5664 = vunpack.c.l.b16 %v5598
  %v5665 = vunpack.c.h.b16 %v5598
  %v5666 = vunpack.c.l.b16 %v5599
  %v5667 = vunpack.c.h.b16 %v5599
  %v5668 = vunpack.c.l.b16 %v5600
  %v5669 = vunpack.c.h.b16 %v5600
  %v5670 = vunpack.c.l.b16 %v5601
  %v5671 = vunpack.c.h.b16 %v5601
  %v5672 = vunpack.c.l.b16 %v5602
  %v5673 = vunpack.c.h.b16 %v5602
  %v5674 = vunpack.c.l.b16 %v5603
  %v5675 = vunpack.c.h.b16 %v5603
  %v5676 = vunpack.c.l.b16 %v5604
  %v5677 = vunpack.c.h.b16 %v5604
  %v5678 = vunpack.c.l.b16 %v5605
  %v5679 = vunpack.c.h.b16 %v5605
  %v5680 = vunpack.c.l.b16 %v5606
  %v5681 = vunpack.c.h.b16 %v5606
  %v5682 = vunpack.c.l.b16 %v5607
  %v5683 = vunpack.c.h.b16 %v5607
  %v5684 = vunpack.c.l.b16 %v5608
  %v5685 = vunpack.c.h.b16 %v5608
  %v5686 = vunpack.c.l.b16 %v5609
  %v5687 = vunpack.c.h.b16 %v5609
  %v5688 = vunpack.c.l.b16 %v5610
  %v5689 = vunpack.c.h.b16 %v5610
  %v5690 = vunpack.c.l.b16 %v5611
  %v5691 = vunpack.c.h.b16 %v5611
  %v5692 = vunpack.c.l.b16 %v5612
  %v5693 = vunpack.c.h.b16 %v5612
  %v5694 = vunpack.c.l.b16 %v5613
  %v5695 = vunpack.c.h.b16 %v5613
  %v5696 = vunpack.c.l.b16 %v5614
  %v5697 = vunpack.c.h.b16 %v5614
  %v5698 = vunpack.c.l.b16 %v5615
  %v5699 = vunpack.c.h.b16 %v5615
  %v5700 = vunpack.c.l.b16 %v5616
  %v5701 = vunpack.c.h.b16 %v5616
  %v5702 = vunpack.c.l.b16 %v5617
  %v5703 = vunpack.c.h.b16 %v5617
  %v5704 = vunpack.c.l.b16 %v5618
  %v5705 = vunpack.c.h.b16 %v5618
  %v5706 = vunpack.c.l.b16 %v5619
  %v5707 = vunpack.c.h.b16 %v5619
  %v5708 = vunpack.c.l.b16 %v5620
  %v5709 = vunpack.c.h.b16 %v5620
  %v5710 = vunpack.c.l.b16 %v5621
  %v5711 = vunpack.c.h.b16 %v5621
  %v5712 = vunpack.c.l.b16 %v5622
  %v5713 = vunpack.c.h.b16 %v5622
  %v5714 = vunpack.c.l.b16 %v5623
  %v5715 = vunpack.c.h.b16 %v5623
  %v5716 = vunpack.c.l.b16 %v5624
  %v5717 = vunpack.c.h.b16 %v5624
  %v5718 = vunpack.c.l.b16 %v5625
  %v5719 = vunpack.c.h.b16 %v5625
  %v5720 = vunpack.c.l.b16 %v5626
  %v5721 = vunpack.c.h.b16 %v5626
  %v5722 = vunpack.c.l.b16 %v5627
  %v5723 = vunpack.c.h.b16 %v5627
  %v5724 = vpack.c.b16 %v5664, %v5660
  %v5725 = vpack.c.b16 %v5665, %v5661
  %v5726 = vpack.c.b16 %v5666, %v5662
  %v5727 = vpack.c.b16 %v5667, %v5663
  %v5728 = vpack.c.b16 %v5672, %v5668
  %v5729 = vpack.c.b16 %v5673, %v5669
  %v5730 = vpack.c.b16 %v5674, %v5670
  %v5731 = vpack.c.b16 %v5675, %v5671
  %v5732 = vpack.c.b16 %v5680, %v5676
  %v5733 = vpack.c.b16 %v5681, %v5677
  %v5734 = vpack.c.b16 %v5682, %v5678
  %v5735 = vpack.c.b16 %v5683, %v5679
  %v5736 = vpack.c.b16 %v5688, %v5684
  %v5737 = vpack.c.b16 %v5689, %v5685
  %v5738 = vpack.c.b16 %v5690, %v5686
  %v5739 = vpack.c.b16 %v5691, %v5687
  %v5740 = vpack.c.b16 %v5696, %v5692
  %v5741 = vpack.c.b16 %v5697, %v5693
  %v5742 = vpack.c.b16 %v5698, %v5694
  %v5743 = vpack.c.b16 %v5699, %v5695
  %v5744 = vpack.c.b16 %v5704, %v5700
  %v5745 = vpack.c.b16 %v5705, %v5701
  %v5746 = vpack.c.b16 %v5706, %v5702
  %v5747 = vpack.c.b16 %v5707, %v5703
  %v5748 = vpack.c.b16 %v5712, %v5708
  %v5749 = vpack.c.b16 %v5713, %v5709
  %v5750 = vpack.c.b16 %v5714, %v5710
  %v5751 = vpack.c.b16 %v5715, %v5711
  %v5752 = vpack.c.b16 %v5720, %v5716
  %v5753 = vpack.c.b16 %v5721, %v5717
  %v5754 = vpack.c.b16 %v5722, %v5718
  %v5755 = vpack.c.b16 %v5723, %v5719
  %5788 = vmatprep.subr.bf16.mxu0 %v5725
  %5789 = vmatpush1.bf16.msra.mxu0 %v5724
  %5790 = vmatprep.subr.bf16.mxu0 %v5729
  %5791 = vmatpush1.bf16.msra.mxu0 %v5728
  %5792 = vmatprep.subr.bf16.mxu0 %v5733
  %5793 = vmatpush1.bf16.msra.mxu0 %v5732
  %5794 = vmatprep.subr.bf16.mxu0 %v5737
  %5795 = vmatpush1.bf16.msra.mxu0 %v5736
  %5796 = vmatprep.subr.bf16.mxu0 %v5741
  %5797 = vmatpush1.bf16.msra.mxu0 %v5740
  %5798 = vmatprep.subr.bf16.mxu0 %v5745
  %5799 = vmatpush1.bf16.msra.mxu0 %v5744
  %5800 = vmatprep.subr.bf16.mxu0 %v5749
  %5801 = vmatpush1.bf16.msra.mxu0 %v5748
  %5802 = vmatprep.subr.bf16.mxu0 %v5753
  %5803 = vmatpush1.bf16.msra.mxu0 %v5752
  %5804 = vmatprep.subr.bf16.mxu0 0
  %5805 = vmatpush1.bf16.msra.mxu0 0
  %5806 = vmatprep.subr.bf16.mxu0 0
  %5807 = vmatpush1.bf16.msra.mxu0 0
  %5808 = vmatprep.subr.bf16.mxu0 0
  %5809 = vmatpush1.bf16.msra.mxu0 0
  %5810 = vmatprep.subr.bf16.mxu0 0
  %5811 = vmatpush1.bf16.msra.mxu0 0
  %5812 = vmatprep.subr.bf16.mxu0 0
  %5813 = vmatpush1.bf16.msra.mxu0 0
  %5814 = vmatprep.subr.bf16.mxu0 0
  %5815 = vmatpush1.bf16.msra.mxu0 0
  %5816 = vmatprep.subr.bf16.mxu0 0
  %5817 = vmatpush1.bf16.msra.mxu0 0
  %5818 = vmatprep.subr.bf16.mxu0 0
  %5819 = vmatpush1.bf16.msra.mxu0 0
  %5820 = vmatprep.mubr.bf16.mxu0 0
  %5821 = vmatmul.mubr.bf16.gmra.mrb[0].mxu0 %v5595
  %v5822 = vpop.f32.mrb[0].mxu0
  %v5823 = vadd.f32 0.0, %v5822
  %v5824 = vpop.f32.mrb[0].mxu0
  %v5825 = vadd.f32 0.0, %v5824
  %v5826 = vpop.f32.mrb[0].mxu0
  %v5827 = vpop.f32.mrb[0].mxu0
  %5828 = vdwg.mxu0
  %5829 = vmatprep.subr.bf16.mxu0 %v5727
  %5830 = vmatpush1.bf16.msra.mxu0 %v5726
  %5831 = vmatprep.subr.bf16.mxu0 %v5731
  %5832 = vmatpush1.bf16.msra.mxu0 %v5730
  %5833 = vmatprep.subr.bf16.mxu0 %v5735
  %5834 = vmatpush1.bf16.msra.mxu0 %v5734
  %5835 = vmatprep.subr.bf16.mxu0 %v5739
  %5836 = vmatpush1.bf16.msra.mxu0 %v5738
  %5837 = vmatprep.subr.bf16.mxu0 %v5743
  %5838 = vmatpush1.bf16.msra.mxu0 %v5742
  %5839 = vmatprep.subr.bf16.mxu0 %v5747
  %5840 = vmatpush1.bf16.msra.mxu0 %v5746
  %5841 = vmatprep.subr.bf16.mxu0 %v5751
  %5842 = vmatpush1.bf16.msra.mxu0 %v5750
  %5843 = vmatprep.subr.bf16.mxu0 %v5755
  %5844 = vmatpush1.bf16.msra.mxu0 %v5754
  %5845 = vmatprep.subr.bf16.mxu0 0
  %5846 = vmatpush1.bf16.msra.mxu0 0
  %5847 = vmatprep.subr.bf16.mxu0 0
  %5848 = vmatpush1.bf16.msra.mxu0 0
  %5849 = vmatprep.subr.bf16.mxu0 0
  %5850 = vmatpush1.bf16.msra.mxu0 0
  %5851 = vmatprep.subr.bf16.mxu0 0
  %5852 = vmatpush1.bf16.msra.mxu0 0
  %5853 = vmatprep.subr.bf16.mxu0 0
  %5854 = vmatpush1.bf16.msra.mxu0 0
  %5855 = vmatprep.subr.bf16.mxu0 0
  %5856 = vmatpush1.bf16.msra.mxu0 0
  %5857 = vmatprep.subr.bf16.mxu0 0
  %5858 = vmatpush1.bf16.msra.mxu0 0
  %5859 = vmatprep.subr.bf16.mxu0 0
  %5860 = vmatpush1.bf16.msra.mxu0 0
  %5861 = vmatprep.mubr.bf16.mxu0 0
  %5862 = vmatmul.mubr.bf16.gmra.mrb[0].mxu0 %v5595
  %v5863 = vpop.f32.mrb[0].mxu0
  %v5864 = vadd.f32 0.0, %v5863
  %v5865 = vpop.f32.mrb[0].mxu0
  %v5866 = vadd.f32 0.0, %v5865
  %v5867 = vpop.f32.mrb[0].mxu0
  %v5868 = vpop.f32.mrb[0].mxu0
  %5869 = vdwg.mxu0
  %v5870 = vadd.f32 %v5590, %v5823
  %v5871 = vadd.f32 %v5591, %v5825
  %v5872 = vadd.f32 %v5592, %v5864
  %v5873 = vadd.f32 %v5593, %v5866
  %v5874 = vxor.u32 %v5870, 2147483648
  %v5875 = vxor.u32 %v5871, 2147483648
  %v5876 = vmul.f32 %v5874, 1.442695
  %v5877 = vpow.pop %v5876
  %v5878 = vmul.f32 %v5875, 1.442695
  %v5879 = vpow.pop %v5878
  %v5880 = vadd.f32 %v5877, 1.0
  %v5881 = vadd.f32 %v5879, 1.0
  %v5882 = vrcp.pop %v5880
  %v5883 = vmul.f32 1.0, %v5882
  %v5884 = vrcp.pop %v5881
  %v5885 = vmul.f32 1.0, %v5884
  %v5886 = vtanh.pop %v5872
  %v5887 = vxor.u32 %v5873, 2147483648
  %v5888 = vmul.f32 %v5887, 1.442695
  %v5889 = vpow.pop %v5888
  %v5890 = vadd.f32 %v5889, 1.0
  %v5891 = vrcp.pop %v5890
  %v5892 = vmul.f32 1.0, %v5891
  %v5893 = vld [vmem:[#allocation3] sm:$0xff]
  %v5894 = vmul.f32 %v5885, %v5893
  %v5895 = vmul.f32 %v5883, %v5886
  %v5896 = vadd.f32 %v5894, %v5895
  %v5897 = vtanh.pop %v5896
  %v5898 = vmul.f32 %v5892, %v5897
  %5899 = vst [vmem:[#allocation3] sm:$0xff] %v5896
  %5900 = vst [vmem:[#allocation2] sm:$0xff] %v5898
  %5901 = vst [vmem:[%s2998] sm:$0xff] %v5898
  %v5902 = vld [vmem:[#allocation5] sm:$0xff]
  %v5903 = vld [vmem:[#allocation5 + $0x8] sm:$0xff]
  %v5904 = vld [vmem:[#allocation5 + $0x10] sm:$0xff]
  %v5905 = vld [vmem:[#allocation5 + $0x18] sm:$0xff]
  %v5906 = vld [vmem:[#allocation5 + $0x20] sm:$0xff]
  %v5907 = vld [vmem:[#allocation5 + $0x28] sm:$0xff]
  %v5908 = vld [vmem:[#allocation5 + $0x30] sm:$0xff]
  %v5909 = vld [vmem:[#allocation5 + $0x38] sm:$0xff]
  %v5910 = vpack.c.bf16 %v5903, %v5902
  %v5911 = vpack.c.bf16 %v5905, %v5904
  %v5912 = vpack.c.bf16 %v5907, %v5906
  %v5913 = vpack.c.bf16 %v5909, %v5908
  %v5914 = vld [vmem:[%s8] sm:$0xff]
  %v5915 = vld [vmem:[%s8 + $0x8] sm:$0xff]
  %v5916 = vld [vmem:[%s8 + $0x10] sm:$0xff]
  %v5917 = vld [vmem:[%s8 + $0x18] sm:$0xff]
  %v5918 = vld [vmem:[%s8 + $0x20] sm:$0xff]
  %v5919 = vld [vmem:[%s8 + $0x28] sm:$0xff]
  %v5920 = vld [vmem:[%s8 + $0x30] sm:$0xff]
  %v5921 = vld [vmem:[%s8 + $0x38] sm:$0xff]
  %v5922 = vld [vmem:[%s8 + $0x40] sm:$0xff]
  %v5923 = vld [vmem:[%s8 + $0x48] sm:$0xff]
  %v5924 = vld [vmem:[%s8 + $0x50] sm:$0xff]
  %v5925 = vld [vmem:[%s8 + $0x58] sm:$0xff]
  %v5926 = vld [vmem:[%s8 + $0x60] sm:$0xff]
  %v5927 = vld [vmem:[%s8 + $0x68] sm:$0xff]
  %v5928 = vld [vmem:[%s8 + $0x70] sm:$0xff]
  %v5929 = vld [vmem:[%s8 + $0x78] sm:$0xff]
  %v5930 = vld [vmem:[%s8 + $0x80] sm:$0xff]
  %v5931 = vld [vmem:[%s8 + $0x88] sm:$0xff]
  %v5932 = vld [vmem:[%s8 + $0x90] sm:$0xff]
  %v5933 = vld [vmem:[%s8 + $0x98] sm:$0xff]
  %v5934 = vld [vmem:[%s8 + $0xa0] sm:$0xff]
  %v5935 = vld [vmem:[%s8 + $0xa8] sm:$0xff]
  %v5936 = vld [vmem:[%s8 + $0xb0] sm:$0xff]
  %v5937 = vld [vmem:[%s8 + $0xb8] sm:$0xff]
  %v5938 = vld [vmem:[%s8 + $0xc0] sm:$0xff]
  %v5939 = vld [vmem:[%s8 + $0xc8] sm:$0xff]
  %v5940 = vld [vmem:[%s8 + $0xd0] sm:$0xff]
  %v5941 = vld [vmem:[%s8 + $0xd8] sm:$0xff]
  %v5942 = vld [vmem:[%s8 + $0xe0] sm:$0xff]
  %v5943 = vld [vmem:[%s8 + $0xe8] sm:$0xff]
  %v5944 = vld [vmem:[%s8 + $0xf0] sm:$0xff]
  %v5945 = vld [vmem:[%s8 + $0xf8] sm:$0xff]
  %v5946 = vld [vmem:[%s10] sm:$0xf]
  %v5948 = vlaneseq
  %v5949 = vshrl.u32 %v5948, 7
  %v5950 = vsub.s32 0, %v5949
  %v5951 = vrot.slane %v5946, %v5950
  %v5952 = vlaneseq
  %v5953 = vshrl.u32 %v5952, 7
  %v5954 = vsub.s32 1, %v5953
  %v5955 = vrot.slane %v5946, %v5954
  %v5956 = vlaneseq
  %v5957 = vshrl.u32 %v5956, 7
  %v5958 = vsub.s32 2, %v5957
  %v5959 = vrot.slane %v5946, %v5958
  %v5960 = vlaneseq
  %v5961 = vshrl.u32 %v5960, 7
  %v5962 = vsub.s32 3, %v5961
  %v5963 = vrot.slane %v5946, %v5962
  %v6000 = vunpack.c.l.b16 %v5914
  %v6001 = vunpack.c.h.b16 %v5914
  %v6002 = vunpack.c.l.b16 %v5915
  %v6003 = vunpack.c.h.b16 %v5915
  %v6004 = vunpack.c.l.b16 %v5916
  %v6005 = vunpack.c.h.b16 %v5916
  %v6006 = vunpack.c.l.b16 %v5917
  %v6007 = vunpack.c.h.b16 %v5917
  %v6008 = vunpack.c.l.b16 %v5918
  %v6009 = vunpack.c.h.b16 %v5918
  %v6010 = vunpack.c.l.b16 %v5919
  %v6011 = vunpack.c.h.b16 %v5919
  %v6012 = vunpack.c.l.b16 %v5920
  %v6013 = vunpack.c.h.b16 %v5920
  %v6014 = vunpack.c.l.b16 %v5921
  %v6015 = vunpack.c.h.b16 %v5921
  %v6016 = vunpack.c.l.b16 %v5922
  %v6017 = vunpack.c.h.b16 %v5922
  %v6018 = vunpack.c.l.b16 %v5923
  %v6019 = vunpack.c.h.b16 %v5923
  %v6020 = vunpack.c.l.b16 %v5924
  %v6021 = vunpack.c.h.b16 %v5924
  %v6022 = vunpack.c.l.b16 %v5925
  %v6023 = vunpack.c.h.b16 %v5925
  %v6024 = vunpack.c.l.b16 %v5926
  %v6025 = vunpack.c.h.b16 %v5926
  %v6026 = vunpack.c.l.b16 %v5927
  %v6027 = vunpack.c.h.b16 %v5927
  %v6028 = vunpack.c.l.b16 %v5928
  %v6029 = vunpack.c.h.b16 %v5928
  %v6030 = vunpack.c.l.b16 %v5929
  %v6031 = vunpack.c.h.b16 %v5929
  %v6032 = vunpack.c.l.b16 %v5930
  %v6033 = vunpack.c.h.b16 %v5930
  %v6034 = vunpack.c.l.b16 %v5931
  %v6035 = vunpack.c.h.b16 %v5931
  %v6036 = vunpack.c.l.b16 %v5932
  %v6037 = vunpack.c.h.b16 %v5932
  %v6038 = vunpack.c.l.b16 %v5933
  %v6039 = vunpack.c.h.b16 %v5933
  %v6040 = vunpack.c.l.b16 %v5934
  %v6041 = vunpack.c.h.b16 %v5934
  %v6042 = vunpack.c.l.b16 %v5935
  %v6043 = vunpack.c.h.b16 %v5935
  %v6044 = vunpack.c.l.b16 %v5936
  %v6045 = vunpack.c.h.b16 %v5936
  %v6046 = vunpack.c.l.b16 %v5937
  %v6047 = vunpack.c.h.b16 %v5937
  %v6048 = vunpack.c.l.b16 %v5938
  %v6049 = vunpack.c.h.b16 %v5938
  %v6050 = vunpack.c.l.b16 %v5939
  %v6051 = vunpack.c.h.b16 %v5939
  %v6052 = vunpack.c.l.b16 %v5940
  %v6053 = vunpack.c.h.b16 %v5940
  %v6054 = vunpack.c.l.b16 %v5941
  %v6055 = vunpack.c.h.b16 %v5941
  %v6056 = vunpack.c.l.b16 %v5942
  %v6057 = vunpack.c.h.b16 %v5942
  %v6058 = vunpack.c.l.b16 %v5943
  %v6059 = vunpack.c.h.b16 %v5943
  %v6060 = vunpack.c.l.b16 %v5944
  %v6061 = vunpack.c.h.b16 %v5944
  %v6062 = vunpack.c.l.b16 %v5945
  %v6063 = vunpack.c.h.b16 %v5945
  %v6064 = vpack.c.b16 %v6004, %v6000
  %v6065 = vpack.c.b16 %v6005, %v6001
  %v6066 = vpack.c.b16 %v6006, %v6002
  %v6067 = vpack.c.b16 %v6007, %v6003
  %v6068 = vpack.c.b16 %v6012, %v6008
  %v6069 = vpack.c.b16 %v6013, %v6009
  %v6070 = vpack.c.b16 %v6014, %v6010
  %v6071 = vpack.c.b16 %v6015, %v6011
  %v6072 = vpack.c.b16 %v6020, %v6016
  %v6073 = vpack.c.b16 %v6021, %v6017
  %v6074 = vpack.c.b16 %v6022, %v6018
  %v6075 = vpack.c.b16 %v6023, %v6019
  %v6076 = vpack.c.b16 %v6028, %v6024
  %v6077 = vpack.c.b16 %v6029, %v6025
  %v6078 = vpack.c.b16 %v6030, %v6026
  %v6079 = vpack.c.b16 %v6031, %v6027
  %v6080 = vpack.c.b16 %v6036, %v6032
  %v6081 = vpack.c.b16 %v6037, %v6033
  %v6082 = vpack.c.b16 %v6038, %v6034
  %v6083 = vpack.c.b16 %v6039, %v6035
  %v6084 = vpack.c.b16 %v6044, %v6040
  %v6085 = vpack.c.b16 %v6045, %v6041
  %v6086 = vpack.c.b16 %v6046, %v6042
  %v6087 = vpack.c.b16 %v6047, %v6043
  %v6088 = vpack.c.b16 %v6052, %v6048
  %v6089 = vpack.c.b16 %v6053, %v6049
  %v6090 = vpack.c.b16 %v6054, %v6050
  %v6091 = vpack.c.b16 %v6055, %v6051
  %v6092 = vpack.c.b16 %v6060, %v6056
  %v6093 = vpack.c.b16 %v6061, %v6057
  %v6094 = vpack.c.b16 %v6062, %v6058
  %v6095 = vpack.c.b16 %v6063, %v6059
  %6128 = vmatprep.subr.bf16.mxu0 %v6065
  %6129 = vmatpush1.bf16.msra.mxu0 %v6064
  %6130 = vmatprep.subr.bf16.mxu0 %v6069
  %6131 = vmatpush1.bf16.msra.mxu0 %v6068
  %6132 = vmatprep.subr.bf16.mxu0 %v6073
  %6133 = vmatpush1.bf16.msra.mxu0 %v6072
  %6134 = vmatprep.subr.bf16.mxu0 %v6077
  %6135 = vmatpush1.bf16.msra.mxu0 %v6076
  %6136 = vmatprep.subr.bf16.mxu0 %v6081
  %6137 = vmatpush1.bf16.msra.mxu0 %v6080
  %6138 = vmatprep.subr.bf16.mxu0 %v6085
  %6139 = vmatpush1.bf16.msra.mxu0 %v6084
  %6140 = vmatprep.subr.bf16.mxu0 %v6089
  %6141 = vmatpush1.bf16.msra.mxu0 %v6088
  %6142 = vmatprep.subr.bf16.mxu0 %v6093
  %6143 = vmatpush1.bf16.msra.mxu0 %v6092
  %6144 = vmatprep.subr.bf16.mxu0 0
  %6145 = vmatpush1.bf16.msra.mxu0 0
  %6146 = vmatprep.subr.bf16.mxu0 0
  %6147 = vmatpush1.bf16.msra.mxu0 0
  %6148 = vmatprep.subr.bf16.mxu0 0
  %6149 = vmatpush1.bf16.msra.mxu0 0
  %6150 = vmatprep.subr.bf16.mxu0 0
  %6151 = vmatpush1.bf16.msra.mxu0 0
  %6152 = vmatprep.subr.bf16.mxu0 0
  %6153 = vmatpush1.bf16.msra.mxu0 0
  %6154 = vmatprep.subr.bf16.mxu0 0
  %6155 = vmatpush1.bf16.msra.mxu0 0
  %6156 = vmatprep.subr.bf16.mxu0 0
  %6157 = vmatpush1.bf16.msra.mxu0 0
  %6158 = vmatprep.subr.bf16.mxu0 0
  %6159 = vmatpush1.bf16.msra.mxu0 0
  %6160 = vmatprep.mubr.bf16.mxu0 0
  %6161 = vmatmul.mubr.bf16.gmra.mrb[0].mxu0 %v5910
  %v6162 = vpop.f32.mrb[0].mxu0
  %v6163 = vadd.f32 %v5951, %v6162
  %v6164 = vpop.f32.mrb[0].mxu0
  %v6165 = vadd.f32 %v5955, %v6164
  %v6166 = vpop.f32.mrb[0].mxu0
  %v6167 = vadd.f32 %v5951, %v6166
  %v6168 = vpop.f32.mrb[0].mxu0
  %v6169 = vadd.f32 %v5955, %v6168
  %6170 = vmatprep.mubr.bf16.mxu0 0
  %6171 = vmatmul.mubr.bf16.gmra.mrb[0].mxu0 %v5911
  %v6172 = vpop.f32.mrb[0].mxu0
  %v6173 = vadd.f32 %v5951, %v6172
  %v6174 = vpop.f32.mrb[0].mxu0
  %v6175 = vadd.f32 %v5955, %v6174
  %v6176 = vpop.f32.mrb[0].mxu0
  %v6177 = vadd.f32 %v5951, %v6176
  %v6178 = vpop.f32.mrb[0].mxu0
  %v6179 = vadd.f32 %v5955, %v6178
  %6180 = vmatprep.mubr.bf16.mxu0 0
  %6181 = vmatmul.mubr.bf16.gmra.mrb[0].mxu0 %v5912
  %v6182 = vpop.f32.mrb[0].mxu0
  %v6183 = vadd.f32 %v5951, %v6182
  %v6184 = vpop.f32.mrb[0].mxu0
  %v6185 = vadd.f32 %v5955, %v6184
  %v6186 = vpop.f32.mrb[0].mxu0
  %v6187 = vadd.f32 %v5951, %v6186
  %v6188 = vpop.f32.mrb[0].mxu0
  %v6189 = vadd.f32 %v5955, %v6188
  %6190 = vmatprep.mubr.bf16.mxu0 0
  %6191 = vmatmul.mubr.bf16.gmra.mrb[0].mxu0 %v5913
  %v6192 = vpop.f32.mrb[0].mxu0
  %v6193 = vadd.f32 %v5951, %v6192
  %v6194 = vpop.f32.mrb[0].mxu0
  %v6195 = vadd.f32 %v5955, %v6194
  %v6196 = vpop.f32.mrb[0].mxu0
  %v6197 = vadd.f32 %v5951, %v6196
  %v6198 = vpop.f32.mrb[0].mxu0
  %v6199 = vadd.f32 %v5955, %v6198
  %6200 = vdwg.mxu0
  %6201 = vmatprep.subr.bf16.mxu0 %v6067
  %6202 = vmatpush1.bf16.msra.mxu0 %v6066
  %6203 = vmatprep.subr.bf16.mxu0 %v6071
  %6204 = vmatpush1.bf16.msra.mxu0 %v6070
  %6205 = vmatprep.subr.bf16.mxu0 %v6075
  %6206 = vmatpush1.bf16.msra.mxu0 %v6074
  %6207 = vmatprep.subr.bf16.mxu0 %v6079
  %6208 = vmatpush1.bf16.msra.mxu0 %v6078
  %6209 = vmatprep.subr.bf16.mxu0 %v6083
  %6210 = vmatpush1.bf16.msra.mxu0 %v6082
  %6211 = vmatprep.subr.bf16.mxu0 %v6087
  %6212 = vmatpush1.bf16.msra.mxu0 %v6086
  %6213 = vmatprep.subr.bf16.mxu0 %v6091
  %6214 = vmatpush1.bf16.msra.mxu0 %v6090
  %6215 = vmatprep.subr.bf16.mxu0 %v6095
  %6216 = vmatpush1.bf16.msra.mxu0 %v6094
  %6217 = vmatprep.subr.bf16.mxu0 0
  %6218 = vmatpush1.bf16.msra.mxu0 0
  %6219 = vmatprep.subr.bf16.mxu0 0
  %6220 = vmatpush1.bf16.msra.mxu0 0
  %6221 = vmatprep.subr.bf16.mxu0 0
  %6222 = vmatpush1.bf16.msra.mxu0 0
  %6223 = vmatprep.subr.bf16.mxu0 0
  %6224 = vmatpush1.bf16.msra.mxu0 0
  %6225 = vmatprep.subr.bf16.mxu0 0
  %6226 = vmatpush1.bf16.msra.mxu0 0
  %6227 = vmatprep.subr.bf16.mxu0 0
  %6228 = vmatpush1.bf16.msra.mxu0 0
  %6229 = vmatprep.subr.bf16.mxu0 0
  %6230 = vmatpush1.bf16.msra.mxu0 0
  %6231 = vmatprep.subr.bf16.mxu0 0
  %6232 = vmatpush1.bf16.msra.mxu0 0
  %6233 = vmatprep.mubr.bf16.mxu0 0
  %6234 = vmatmul.mubr.bf16.gmra.mrb[0].mxu0 %v5910
  %v6235 = vpop.f32.mrb[0].mxu0
  %v6236 = vadd.f32 %v5959, %v6235
  %v6237 = vpop.f32.mrb[0].mxu0
  %v6238 = vadd.f32 %v5963, %v6237
  %v6239 = vpop.f32.mrb[0].mxu0
  %v6240 = vadd.f32 %v5959, %v6239
  %v6241 = vpop.f32.mrb[0].mxu0
  %v6242 = vadd.f32 %v5963, %v6241
  %6243 = vmatprep.mubr.bf16.mxu0 0
  %6244 = vmatmul.mubr.bf16.gmra.mrb[0].mxu0 %v5911
  %v6245 = vpop.f32.mrb[0].mxu0
  %v6246 = vadd.f32 %v5959, %v6245
  %v6247 = vpop.f32.mrb[0].mxu0
  %v6248 = vadd.f32 %v5963, %v6247
  %v6249 = vpop.f32.mrb[0].mxu0
  %v6250 = vadd.f32 %v5959, %v6249
  %v6251 = vpop.f32.mrb[0].mxu0
  %v6252 = vadd.f32 %v5963, %v6251
  %6253 = vmatprep.mubr.bf16.mxu0 0
  %6254 = vmatmul.mubr.bf16.gmra.mrb[0].mxu0 %v5912
  %v6255 = vpop.f32.mrb[0].mxu0
  %v6256 = vadd.f32 %v5959, %v6255
  %v6257 = vpop.f32.mrb[0].mxu0
  %v6258 = vadd.f32 %v5963, %v6257
  %v6259 = vpop.f32.mrb[0].mxu0
  %v6260 = vadd.f32 %v5959, %v6259
  %v6261 = vpop.f32.mrb[0].mxu0
  %v6262 = vadd.f32 %v5963, %v6261
  %6263 = vmatprep.mubr.bf16.mxu0 0
  %6264 = vmatmul.mubr.bf16.gmra.mrb[0].mxu0 %v5913
  %v6265 = vpop.f32.mrb[0].mxu0
  %v6266 = vadd.f32 %v5959, %v6265
  %v6267 = vpop.f32.mrb[0].mxu0
  %v6268 = vadd.f32 %v5963, %v6267
  %v6269 = vpop.f32.mrb[0].mxu0
  %v6270 = vadd.f32 %v5959, %v6269
  %v6271 = vpop.f32.mrb[0].mxu0
  %v6272 = vadd.f32 %v5963, %v6271
  %6273 = vdwg.mxu0
  %6274 = vst [vmem:[#allocation6] sm:$0xff] %v6163
  %6275 = vst [vmem:[#allocation6 + $0x8] sm:$0xff] %v6165
  %6276 = vst [vmem:[#allocation6 + $0x10] sm:$0xff] %v6236
  %6277 = vst [vmem:[#allocation6 + $0x18] sm:$0xff] %v6238
  %6278 = vst [vmem:[#allocation6 + $0x20] sm:$0xff] %v6167
  %6279 = vst [vmem:[#allocation6 + $0x28] sm:$0xff] %v6169
  %6280 = vst [vmem:[#allocation6 + $0x30] sm:$0xff] %v6240
  %6281 = vst [vmem:[#allocation6 + $0x38] sm:$0xff] %v6242
  %6282 = vst [vmem:[#allocation6 + $0x40] sm:$0xff] %v6173
  %6283 = vst [vmem:[#allocation6 + $0x48] sm:$0xff] %v6175
  %6284 = vst [vmem:[#allocation6 + $0x50] sm:$0xff] %v6246
  %6285 = vst [vmem:[#allocation6 + $0x58] sm:$0xff] %v6248
  %6286 = vst [vmem:[#allocation6 + $0x60] sm:$0xff] %v6177
  %6287 = vst [vmem:[#allocation6 + $0x68] sm:$0xff] %v6179
  %6288 = vst [vmem:[#allocation6 + $0x70] sm:$0xff] %v6250
  %6289 = vst [vmem:[#allocation6 + $0x78] sm:$0xff] %v6252
  %6290 = vst [vmem:[#allocation6 + $0x80] sm:$0xff] %v6183
  %6291 = vst [vmem:[#allocation6 + $0x88] sm:$0xff] %v6185
  %6292 = vst [vmem:[#allocation6 + $0x90] sm:$0xff] %v6256
  %6293 = vst [vmem:[#allocation6 + $0x98] sm:$0xff] %v6258
  %6294 = vst [vmem:[#allocation6 + $0xa0] sm:$0xff] %v6187
  %6295 = vst [vmem:[#allocation6 + $0xa8] sm:$0xff] %v6189
  %6296 = vst [vmem:[#allocation6 + $0xb0] sm:$0xff] %v6260
  %6297 = vst [vmem:[#allocation6 + $0xb8] sm:$0xff] %v6262
  %6298 = vst [vmem:[#allocation6 + $0xc0] sm:$0xff] %v6193
  %6299 = vst [vmem:[#allocation6 + $0xc8] sm:$0xff] %v6195
  %6300 = vst [vmem:[#allocation6 + $0xd0] sm:$0xff] %v6266
  %6301 = vst [vmem:[#allocation6 + $0xd8] sm:$0xff] %v6268
  %6302 = vst [vmem:[#allocation6 + $0xe0] sm:$0xff] %v6197
  %6303 = vst [vmem:[#allocation6 + $0xe8] sm:$0xff] %v6199
  %6304 = vst [vmem:[#allocation6 + $0xf0] sm:$0xff] %v6270
  %6305 = vst [vmem:[#allocation6 + $0xf8] sm:$0xff] %v6272
  %6306 = vst [vmem:[#allocation2] sm:$0xff] 0.0
  %6307 = vst [vmem:[#allocation3] sm:$0xff] 0.0
  %v6308 = vld [vmem:[%s475] sm:$0xff]
  %v6309 = vld [vmem:[%s475 + $0x8] sm:$0xff]
  %v6310 = vld [vmem:[%s475 + $0x10] sm:$0xff]
  %v6311 = vld [vmem:[%s475 + $0x18] sm:$0xff]
  %v6312 = vld [vmem:[#allocation2] sm:$0xff]
  %v6313 = vpack.c.bf16 %v6312, %v6312
  %v6314 = vld [vmem:[%s9] sm:$0xff]
  %v6315 = vld [vmem:[%s9 + $0x8] sm:$0xff]
  %v6316 = vld [vmem:[%s9 + $0x10] sm:$0xff]
  %v6317 = vld [vmem:[%s9 + $0x18] sm:$0xff]
  %v6318 = vld [vmem:[%s9 + $0x20] sm:$0xff]
  %v6319 = vld [vmem:[%s9 + $0x28] sm:$0xff]
  %v6320 = vld [vmem:[%s9 + $0x30] sm:$0xff]
  %v6321 = vld [vmem:[%s9 + $0x38] sm:$0xff]
  %v6322 = vld [vmem:[%s9 + $0x40] sm:$0xff]
  %v6323 = vld [vmem:[%s9 + $0x48] sm:$0xff]
  %v6324 = vld [vmem:[%s9 + $0x50] sm:$0xff]
  %v6325 = vld [vmem:[%s9 + $0x58] sm:$0xff]
  %v6326 = vld [vmem:[%s9 + $0x60] sm:$0xff]
  %v6327 = vld [vmem:[%s9 + $0x68] sm:$0xff]
  %v6328 = vld [vmem:[%s9 + $0x70] sm:$0xff]
  %v6329 = vld [vmem:[%s9 + $0x78] sm:$0xff]
  %v6330 = vld [vmem:[%s9 + $0x80] sm:$0xff]
  %v6331 = vld [vmem:[%s9 + $0x88] sm:$0xff]
  %v6332 = vld [vmem:[%s9 + $0x90] sm:$0xff]
  %v6333 = vld [vmem:[%s9 + $0x98] sm:$0xff]
  %v6334 = vld [vmem:[%s9 + $0xa0] sm:$0xff]
  %v6335 = vld [vmem:[%s9 + $0xa8] sm:$0xff]
  %v6336 = vld [vmem:[%s9 + $0xb0] sm:$0xff]
  %v6337 = vld [vmem:[%s9 + $0xb8] sm:$0xff]
  %v6338 = vld [vmem:[%s9 + $0xc0] sm:$0xff]
  %v6339 = vld [vmem:[%s9 + $0xc8] sm:$0xff]
  %v6340 = vld [vmem:[%s9 + $0xd0] sm:$0xff]
  %v6341 = vld [vmem:[%s9 + $0xd8] sm:$0xff]
  %v6342 = vld [vmem:[%s9 + $0xe0] sm:$0xff]
  %v6343 = vld [vmem:[%s9 + $0xe8] sm:$0xff]
  %v6344 = vld [vmem:[%s9 + $0xf0] sm:$0xff]
  %v6345 = vld [vmem:[%s9 + $0xf8] sm:$0xff]
  %v6378 = vunpack.c.l.b16 %v6314
  %v6379 = vunpack.c.h.b16 %v6314
  %v6380 = vunpack.c.l.b16 %v6315
  %v6381 = vunpack.c.h.b16 %v6315
  %v6382 = vunpack.c.l.b16 %v6316
  %v6383 = vunpack.c.h.b16 %v6316
  %v6384 = vunpack.c.l.b16 %v6317
  %v6385 = vunpack.c.h.b16 %v6317
  %v6386 = vunpack.c.l.b16 %v6318
  %v6387 = vunpack.c.h.b16 %v6318
  %v6388 = vunpack.c.l.b16 %v6319
  %v6389 = vunpack.c.h.b16 %v6319
  %v6390 = vunpack.c.l.b16 %v6320
  %v6391 = vunpack.c.h.b16 %v6320
  %v6392 = vunpack.c.l.b16 %v6321
  %v6393 = vunpack.c.h.b16 %v6321
  %v6394 = vunpack.c.l.b16 %v6322
  %v6395 = vunpack.c.h.b16 %v6322
  %v6396 = vunpack.c.l.b16 %v6323
  %v6397 = vunpack.c.h.b16 %v6323
  %v6398 = vunpack.c.l.b16 %v6324
  %v6399 = vunpack.c.h.b16 %v6324
  %v6400 = vunpack.c.l.b16 %v6325
  %v6401 = vunpack.c.h.b16 %v6325
  %v6402 = vunpack.c.l.b16 %v6326
  %v6403 = vunpack.c.h.b16 %v6326
  %v6404 = vunpack.c.l.b16 %v6327
  %v6405 = vunpack.c.h.b16 %v6327
  %v6406 = vunpack.c.l.b16 %v6328
  %v6407 = vunpack.c.h.b16 %v6328
  %v6408 = vunpack.c.l.b16 %v6329
  %v6409 = vunpack.c.h.b16 %v6329
  %v6410 = vunpack.c.l.b16 %v6330
  %v6411 = vunpack.c.h.b16 %v6330
  %v6412 = vunpack.c.l.b16 %v6331
  %v6413 = vunpack.c.h.b16 %v6331
  %v6414 = vunpack.c.l.b16 %v6332
  %v6415 = vunpack.c.h.b16 %v6332
  %v6416 = vunpack.c.l.b16 %v6333
  %v6417 = vunpack.c.h.b16 %v6333
  %v6418 = vunpack.c.l.b16 %v6334
  %v6419 = vunpack.c.h.b16 %v6334
  %v6420 = vunpack.c.l.b16 %v6335
  %v6421 = vunpack.c.h.b16 %v6335
  %v6422 = vunpack.c.l.b16 %v6336
  %v6423 = vunpack.c.h.b16 %v6336
  %v6424 = vunpack.c.l.b16 %v6337
  %v6425 = vunpack.c.h.b16 %v6337
  %v6426 = vunpack.c.l.b16 %v6338
  %v6427 = vunpack.c.h.b16 %v6338
  %v6428 = vunpack.c.l.b16 %v6339
  %v6429 = vunpack.c.h.b16 %v6339
  %v6430 = vunpack.c.l.b16 %v6340
  %v6431 = vunpack.c.h.b16 %v6340
  %v6432 = vunpack.c.l.b16 %v6341
  %v6433 = vunpack.c.h.b16 %v6341
  %v6434 = vunpack.c.l.b16 %v6342
  %v6435 = vunpack.c.h.b16 %v6342
  %v6436 = vunpack.c.l.b16 %v6343
  %v6437 = vunpack.c.h.b16 %v6343
  %v6438 = vunpack.c.l.b16 %v6344
  %v6439 = vunpack.c.h.b16 %v6344
  %v6440 = vunpack.c.l.b16 %v6345
  %v6441 = vunpack.c.h.b16 %v6345
  %v6442 = vpack.c.b16 %v6382, %v6378
  %v6443 = vpack.c.b16 %v6383, %v6379
  %v6444 = vpack.c.b16 %v6384, %v6380
  %v6445 = vpack.c.b16 %v6385, %v6381
  %v6446 = vpack.c.b16 %v6390, %v6386
  %v6447 = vpack.c.b16 %v6391, %v6387
  %v6448 = vpack.c.b16 %v6392, %v6388
  %v6449 = vpack.c.b16 %v6393, %v6389
  %v6450 = vpack.c.b16 %v6398, %v6394
  %v6451 = vpack.c.b16 %v6399, %v6395
  %v6452 = vpack.c.b16 %v6400, %v6396
  %v6453 = vpack.c.b16 %v6401, %v6397
  %v6454 = vpack.c.b16 %v6406, %v6402
  %v6455 = vpack.c.b16 %v6407, %v6403
  %v6456 = vpack.c.b16 %v6408, %v6404
  %v6457 = vpack.c.b16 %v6409, %v6405
  %v6458 = vpack.c.b16 %v6414, %v6410
  %v6459 = vpack.c.b16 %v6415, %v6411
  %v6460 = vpack.c.b16 %v6416, %v6412
  %v6461 = vpack.c.b16 %v6417, %v6413
  %v6462 = vpack.c.b16 %v6422, %v6418
  %v6463 = vpack.c.b16 %v6423, %v6419
  %v6464 = vpack.c.b16 %v6424, %v6420
  %v6465 = vpack.c.b16 %v6425, %v6421
  %v6466 = vpack.c.b16 %v6430, %v6426
  %v6467 = vpack.c.b16 %v6431, %v6427
  %v6468 = vpack.c.b16 %v6432, %v6428
  %v6469 = vpack.c.b16 %v6433, %v6429
  %v6470 = vpack.c.b16 %v6438, %v6434
  %v6471 = vpack.c.b16 %v6439, %v6435
  %v6472 = vpack.c.b16 %v6440, %v6436
  %v6473 = vpack.c.b16 %v6441, %v6437
  %6506 = vmatprep.subr.bf16.mxu0 %v6443
  %6507 = vmatpush1.bf16.msra.mxu0 %v6442
  %6508 = vmatprep.subr.bf16.mxu0 %v6447
  %6509 = vmatpush1.bf16.msra.mxu0 %v6446
  %6510 = vmatprep.subr.bf16.mxu0 %v6451
  %6511 = vmatpush1.bf16.msra.mxu0 %v6450
  %6512 = vmatprep.subr.bf16.mxu0 %v6455
  %6513 = vmatpush1.bf16.msra.mxu0 %v6454
  %6514 = vmatprep.subr.bf16.mxu0 %v6459
  %6515 = vmatpush1.bf16.msra.mxu0 %v6458
  %6516 = vmatprep.subr.bf16.mxu0 %v6463
  %6517 = vmatpush1.bf16.msra.mxu0 %v6462
  %6518 = vmatprep.subr.bf16.mxu0 %v6467
  %6519 = vmatpush1.bf16.msra.mxu0 %v6466
  %6520 = vmatprep.subr.bf16.mxu0 %v6471
  %6521 = vmatpush1.bf16.msra.mxu0 %v6470
  %6522 = vmatprep.subr.bf16.mxu0 0
  %6523 = vmatpush1.bf16.msra.mxu0 0
  %6524 = vmatprep.subr.bf16.mxu0 0
  %6525 = vmatpush1.bf16.msra.mxu0 0
  %6526 = vmatprep.subr.bf16.mxu0 0
  %6527 = vmatpush1.bf16.msra.mxu0 0
  %6528 = vmatprep.subr.bf16.mxu0 0
  %6529 = vmatpush1.bf16.msra.mxu0 0
  %6530 = vmatprep.subr.bf16.mxu0 0
  %6531 = vmatpush1.bf16.msra.mxu0 0
  %6532 = vmatprep.subr.bf16.mxu0 0
  %6533 = vmatpush1.bf16.msra.mxu0 0
  %6534 = vmatprep.subr.bf16.mxu0 0
  %6535 = vmatpush1.bf16.msra.mxu0 0
  %6536 = vmatprep.subr.bf16.mxu0 0
  %6537 = vmatpush1.bf16.msra.mxu0 0
  %6538 = vmatprep.mubr.bf16.mxu0 0
  %6539 = vmatmul.mubr.bf16.gmra.mrb[0].mxu0 %v6313
  %v6540 = vpop.f32.mrb[0].mxu0
  %v6541 = vadd.f32 0.0, %v6540
  %v6542 = vpop.f32.mrb[0].mxu0
  %v6543 = vadd.f32 0.0, %v6542
  %v6544 = vpop.f32.mrb[0].mxu0
  %v6545 = vpop.f32.mrb[0].mxu0
  %6546 = vdwg.mxu0
  %6547 = vmatprep.subr.bf16.mxu0 %v6445
  %6548 = vmatpush1.bf16.msra.mxu0 %v6444
  %6549 = vmatprep.subr.bf16.mxu0 %v6449
  %6550 = vmatpush1.bf16.msra.mxu0 %v6448
  %6551 = vmatprep.subr.bf16.mxu0 %v6453
  %6552 = vmatpush1.bf16.msra.mxu0 %v6452
  %6553 = vmatprep.subr.bf16.mxu0 %v6457
  %6554 = vmatpush1.bf16.msra.mxu0 %v6456
  %6555 = vmatprep.subr.bf16.mxu0 %v6461
  %6556 = vmatpush1.bf16.msra.mxu0 %v6460
  %6557 = vmatprep.subr.bf16.mxu0 %v6465
  %6558 = vmatpush1.bf16.msra.mxu0 %v6464
  %6559 = vmatprep.subr.bf16.mxu0 %v6469
  %6560 = vmatpush1.bf16.msra.mxu0 %v6468
  %6561 = vmatprep.subr.bf16.mxu0 %v6473
  %6562 = vmatpush1.bf16.msra.mxu0 %v6472
  %6563 = vmatprep.subr.bf16.mxu0 0
  %6564 = vmatpush1.bf16.msra.mxu0 0
  %6565 = vmatprep.subr.bf16.mxu0 0
  %6566 = vmatpush1.bf16.msra.mxu0 0
  %6567 = vmatprep.subr.bf16.mxu0 0
  %6568 = vmatpush1.bf16.msra.mxu0 0
  %6569 = vmatprep.subr.bf16.mxu0 0
  %6570 = vmatpush1.bf16.msra.mxu0 0
  %6571 = vmatprep.subr.bf16.mxu0 0
  %6572 = vmatpush1.bf16.msra.mxu0 0
  %6573 = vmatprep.subr.bf16.mxu0 0
  %6574 = vmatpush1.bf16.msra.mxu0 0
  %6575 = vmatprep.subr.bf16.mxu0 0
  %6576 = vmatpush1.bf16.msra.mxu0 0
  %6577 = vmatprep.subr.bf16.mxu0 0
  %6578 = vmatpush1.bf16.msra.mxu0 0
  %6579 = vmatprep.mubr.bf16.mxu0 0
  %6580 = vmatmul.mubr.bf16.gmra.mrb[0].mxu0 %v6313
  %v6581 = vpop.f32.mrb[0].mxu0
  %v6582 = vadd.f32 0.0, %v6581
  %v6583 = vpop.f32.mrb[0].mxu0
  %v6584 = vadd.f32 0.0, %v6583
  %v6585 = vpop.f32.mrb[0].mxu0
  %v6586 = vpop.f32.mrb[0].mxu0
  %6587 = vdwg.mxu0
  %v6588 = vadd.f32 %v6308, %v6541
  %v6589 = vadd.f32 %v6309, %v6543
  %v6590 = vadd.f32 %v6310, %v6582
  %v6591 = vadd.f32 %v6311, %v6584
  %v6592 = vxor.u32 %v6588, 2147483648
  %v6593 = vxor.u32 %v6589, 2147483648
  %v6594 = vmul.f32 %v6592, 1.442695
  %v6595 = vpow.pop %v6594
  %v6596 = vmul.f32 %v6593, 1.442695
  %v6597 = vpow.pop %v6596
  %v6598 = vadd.f32 %v6595, 1.0
  %v6599 = vadd.f32 %v6597, 1.0
  %v6600 = vrcp.pop %v6598
  %v6601 = vmul.f32 1.0, %v6600
  %v6602 = vrcp.pop %v6599
  %v6603 = vmul.f32 1.0, %v6602
  %v6604 = vtanh.pop %v6590
  %v6605 = vxor.u32 %v6591, 2147483648
  %v6606 = vmul.f32 %v6605, 1.442695
  %v6607 = vpow.pop %v6606
  %v6608 = vadd.f32 %v6607, 1.0
  %v6609 = vrcp.pop %v6608
  %v6610 = vmul.f32 1.0, %v6609
  %v6611 = vld [vmem:[#allocation3] sm:$0xff]
  %v6612 = vmul.f32 %v6603, %v6611
  %v6613 = vmul.f32 %v6601, %v6604
  %v6614 = vadd.f32 %v6612, %v6613
  %v6615 = vtanh.pop %v6614
  %v6616 = vmul.f32 %v6610, %v6615
  %6617 = vst [vmem:[#allocation3] sm:$0xff] %v6614
  %6618 = vst [vmem:[#allocation2] sm:$0xff] %v6616
  %v6619 = vsub.s32 %v45, 1
  %vm6620 = vcmp.eq.s32.totalorder %v6619, 0
  %v6621 = vld [vmem:[#allocation4] sm:$0xff]
  %v6622 = vsel %vm6620, 1, 0
  %6623 = vset.pattern.permute.xlu0 0
  %6624 = vperm.xlu0 %6623, %v6622
  %v6625 = vpop.permute.xlu0 %6624
  %vm6626 = vcmp.eq.s32.totalorder %v6625, 1
  %v6627 = vsel %vm6626, %v6616, %v6621
  %6628 = vst [vmem:[#allocation4] sm:$0xff] %v6627
  %v6629 = vld [vmem:[%s790] sm:$0xff]
  %v6630 = vld [vmem:[%s790 + $0x8] sm:$0xff]
  %v6631 = vld [vmem:[%s790 + $0x10] sm:$0xff]
  %v6632 = vld [vmem:[%s790 + $0x18] sm:$0xff]
  %v6633 = vld [vmem:[#allocation2] sm:$0xff]
  %v6634 = vpack.c.bf16 %v6633, %v6633
  %v6635 = vld [vmem:[%s9] sm:$0xff]
  %v6636 = vld [vmem:[%s9 + $0x8] sm:$0xff]
  %v6637 = vld [vmem:[%s9 + $0x10] sm:$0xff]
  %v6638 = vld [vmem:[%s9 + $0x18] sm:$0xff]
  %v6639 = vld [vmem:[%s9 + $0x20] sm:$0xff]
  %v6640 = vld [vmem:[%s9 + $0x28] sm:$0xff]
  %v6641 = vld [vmem:[%s9 + $0x30] sm:$0xff]
  %v6642 = vld [vmem:[%s9 + $0x38] sm:$0xff]
  %v6643 = vld [vmem:[%s9 + $0x40] sm:$0xff]
  %v6644 = vld [vmem:[%s9 + $0x48] sm:$0xff]
  %v6645 = vld [vmem:[%s9 + $0x50] sm:$0xff]
  %v6646 = vld [vmem:[%s9 + $0x58] sm:$0xff]
  %v6647 = vld [vmem:[%s9 + $0x60] sm:$0xff]
  %v6648 = vld [vmem:[%s9 + $0x68] sm:$0xff]
  %v6649 = vld [vmem:[%s9 + $0x70] sm:$0xff]
  %v6650 = vld [vmem:[%s9 + $0x78] sm:$0xff]
  %v6651 = vld [vmem:[%s9 + $0x80] sm:$0xff]
  %v6652 = vld [vmem:[%s9 + $0x88] sm:$0xff]
  %v6653 = vld [vmem:[%s9 + $0x90] sm:$0xff]
  %v6654 = vld [vmem:[%s9 + $0x98] sm:$0xff]
  %v6655 = vld [vmem:[%s9 + $0xa0] sm:$0xff]
  %v6656 = vld [vmem:[%s9 + $0xa8] sm:$0xff]
  %v6657 = vld [vmem:[%s9 + $0xb0] sm:$0xff]
  %v6658 = vld [vmem:[%s9 + $0xb8] sm:$0xff]
  %v6659 = vld [vmem:[%s9 + $0xc0] sm:$0xff]
  %v6660 = vld [vmem:[%s9 + $0xc8] sm:$0xff]
  %v6661 = vld [vmem:[%s9 + $0xd0] sm:$0xff]
  %v6662 = vld [vmem:[%s9 + $0xd8] sm:$0xff]
  %v6663 = vld [vmem:[%s9 + $0xe0] sm:$0xff]
  %v6664 = vld [vmem:[%s9 + $0xe8] sm:$0xff]
  %v6665 = vld [vmem:[%s9 + $0xf0] sm:$0xff]
  %v6666 = vld [vmem:[%s9 + $0xf8] sm:$0xff]
  %v6699 = vunpack.c.l.b16 %v6635
  %v6700 = vunpack.c.h.b16 %v6635
  %v6701 = vunpack.c.l.b16 %v6636
  %v6702 = vunpack.c.h.b16 %v6636
  %v6703 = vunpack.c.l.b16 %v6637
  %v6704 = vunpack.c.h.b16 %v6637
  %v6705 = vunpack.c.l.b16 %v6638
  %v6706 = vunpack.c.h.b16 %v6638
  %v6707 = vunpack.c.l.b16 %v6639
  %v6708 = vunpack.c.h.b16 %v6639
  %v6709 = vunpack.c.l.b16 %v6640
  %v6710 = vunpack.c.h.b16 %v6640
  %v6711 = vunpack.c.l.b16 %v6641
  %v6712 = vunpack.c.h.b16 %v6641
  %v6713 = vunpack.c.l.b16 %v6642
  %v6714 = vunpack.c.h.b16 %v6642
  %v6715 = vunpack.c.l.b16 %v6643
  %v6716 = vunpack.c.h.b16 %v6643
  %v6717 = vunpack.c.l.b16 %v6644
  %v6718 = vunpack.c.h.b16 %v6644
  %v6719 = vunpack.c.l.b16 %v6645
  %v6720 = vunpack.c.h.b16 %v6645
  %v6721 = vunpack.c.l.b16 %v6646
  %v6722 = vunpack.c.h.b16 %v6646
  %v6723 = vunpack.c.l.b16 %v6647
  %v6724 = vunpack.c.h.b16 %v6647
  %v6725 = vunpack.c.l.b16 %v6648
  %v6726 = vunpack.c.h.b16 %v6648
  %v6727 = vunpack.c.l.b16 %v6649
  %v6728 = vunpack.c.h.b16 %v6649
  %v6729 = vunpack.c.l.b16 %v6650
  %v6730 = vunpack.c.h.b16 %v6650
  %v6731 = vunpack.c.l.b16 %v6651
  %v6732 = vunpack.c.h.b16 %v6651
  %v6733 = vunpack.c.l.b16 %v6652
  %v6734 = vunpack.c.h.b16 %v6652
  %v6735 = vunpack.c.l.b16 %v6653
  %v6736 = vunpack.c.h.b16 %v6653
  %v6737 = vunpack.c.l.b16 %v6654
  %v6738 = vunpack.c.h.b16 %v6654
  %v6739 = vunpack.c.l.b16 %v6655
  %v6740 = vunpack.c.h.b16 %v6655
  %v6741 = vunpack.c.l.b16 %v6656
  %v6742 = vunpack.c.h.b16 %v6656
  %v6743 = vunpack.c.l.b16 %v6657
  %v6744 = vunpack.c.h.b16 %v6657
  %v6745 = vunpack.c.l.b16 %v6658
  %v6746 = vunpack.c.h.b16 %v6658
  %v6747 = vunpack.c.l.b16 %v6659
  %v6748 = vunpack.c.h.b16 %v6659
  %v6749 = vunpack.c.l.b16 %v6660
  %v6750 = vunpack.c.h.b16 %v6660
  %v6751 = vunpack.c.l.b16 %v6661
  %v6752 = vunpack.c.h.b16 %v6661
  %v6753 = vunpack.c.l.b16 %v6662
  %v6754 = vunpack.c.h.b16 %v6662
  %v6755 = vunpack.c.l.b16 %v6663
  %v6756 = vunpack.c.h.b16 %v6663
  %v6757 = vunpack.c.l.b16 %v6664
  %v6758 = vunpack.c.h.b16 %v6664
  %v6759 = vunpack.c.l.b16 %v6665
  %v6760 = vunpack.c.h.b16 %v6665
  %v6761 = vunpack.c.l.b16 %v6666
  %v6762 = vunpack.c.h.b16 %v6666
  %v6763 = vpack.c.b16 %v6703, %v6699
  %v6764 = vpack.c.b16 %v6704, %v6700
  %v6765 = vpack.c.b16 %v6705, %v6701
  %v6766 = vpack.c.b16 %v6706, %v6702
  %v6767 = vpack.c.b16 %v6711, %v6707
  %v6768 = vpack.c.b16 %v6712, %v6708
  %v6769 = vpack.c.b16 %v6713, %v6709
  %v6770 = vpack.c.b16 %v6714, %v6710
  %v6771 = vpack.c.b16 %v6719, %v6715
  %v6772 = vpack.c.b16 %v6720, %v6716
  %v6773 = vpack.c.b16 %v6721, %v6717
  %v6774 = vpack.c.b16 %v6722, %v6718
  %v6775 = vpack.c.b16 %v6727, %v6723
  %v6776 = vpack.c.b16 %v6728, %v6724
  %v6777 = vpack.c.b16 %v6729, %v6725
  %v6778 = vpack.c.b16 %v6730, %v6726
  %v6779 = vpack.c.b16 %v6735, %v6731
  %v6780 = vpack.c.b16 %v6736, %v6732
  %v6781 = vpack.c.b16 %v6737, %v6733
  %v6782 = vpack.c.b16 %v6738, %v6734
  %v6783 = vpack.c.b16 %v6743, %v6739
  %v6784 = vpack.c.b16 %v6744, %v6740
  %v6785 = vpack.c.b16 %v6745, %v6741
  %v6786 = vpack.c.b16 %v6746, %v6742
  %v6787 = vpack.c.b16 %v6751, %v6747
  %v6788 = vpack.c.b16 %v6752, %v6748
  %v6789 = vpack.c.b16 %v6753, %v6749
  %v6790 = vpack.c.b16 %v6754, %v6750
  %v6791 = vpack.c.b16 %v6759, %v6755
  %v6792 = vpack.c.b16 %v6760, %v6756
  %v6793 = vpack.c.b16 %v6761, %v6757
  %v6794 = vpack.c.b16 %v6762, %v6758
  %6827 = vmatprep.subr.bf16.mxu0 %v6764
  %6828 = vmatpush1.bf16.msra.mxu0 %v6763
  %6829 = vmatprep.subr.bf16.mxu0 %v6768
  %6830 = vmatpush1.bf16.msra.mxu0 %v6767
  %6831 = vmatprep.subr.bf16.mxu0 %v6772
  %6832 = vmatpush1.bf16.msra.mxu0 %v6771
  %6833 = vmatprep.subr.bf16.mxu0 %v6776
  %6834 = vmatpush1.bf16.msra.mxu0 %v6775
  %6835 = vmatprep.subr.bf16.mxu0 %v6780
  %6836 = vmatpush1.bf16.msra.mxu0 %v6779
  %6837 = vmatprep.subr.bf16.mxu0 %v6784
  %6838 = vmatpush1.bf16.msra.mxu0 %v6783
  %6839 = vmatprep.subr.bf16.mxu0 %v6788
  %6840 = vmatpush1.bf16.msra.mxu0 %v6787
  %6841 = vmatprep.subr.bf16.mxu0 %v6792
  %6842 = vmatpush1.bf16.msra.mxu0 %v6791
  %6843 = vmatprep.subr.bf16.mxu0 0
  %6844 = vmatpush1.bf16.msra.mxu0 0
  %6845 = vmatprep.subr.bf16.mxu0 0
  %6846 = vmatpush1.bf16.msra.mxu0 0
  %6847 = vmatprep.subr.bf16.mxu0 0
  %6848 = vmatpush1.bf16.msra.mxu0 0
  %6849 = vmatprep.subr.bf16.mxu0 0
  %6850 = vmatpush1.bf16.msra.mxu0 0
  %6851 = vmatprep.subr.bf16.mxu0 0
  %6852 = vmatpush1.bf16.msra.mxu0 0
  %6853 = vmatprep.subr.bf16.mxu0 0
  %6854 = vmatpush1.bf16.msra.mxu0 0
  %6855 = vmatprep.subr.bf16.mxu0 0
  %6856 = vmatpush1.bf16.msra.mxu0 0
  %6857 = vmatprep.subr.bf16.mxu0 0
  %6858 = vmatpush1.bf16.msra.mxu0 0
  %6859 = vmatprep.mubr.bf16.mxu0 0
  %6860 = vmatmul.mubr.bf16.gmra.mrb[0].mxu0 %v6634
  %v6861 = vpop.f32.mrb[0].mxu0
  %v6862 = vadd.f32 0.0, %v6861
  %v6863 = vpop.f32.mrb[0].mxu0
  %v6864 = vadd.f32 0.0, %v6863
  %v6865 = vpop.f32.mrb[0].mxu0
  %v6866 = vpop.f32.mrb[0].mxu0
  %6867 = vdwg.mxu0
  %6868 = vmatprep.subr.bf16.mxu0 %v6766
  %6869 = vmatpush1.bf16.msra.mxu0 %v6765
  %6870 = vmatprep.subr.bf16.mxu0 %v6770
  %6871 = vmatpush1.bf16.msra.mxu0 %v6769
  %6872 = vmatprep.subr.bf16.mxu0 %v6774
  %6873 = vmatpush1.bf16.msra.mxu0 %v6773
  %6874 = vmatprep.subr.bf16.mxu0 %v6778
  %6875 = vmatpush1.bf16.msra.mxu0 %v6777
  %6876 = vmatprep.subr.bf16.mxu0 %v6782
  %6877 = vmatpush1.bf16.msra.mxu0 %v6781
  %6878 = vmatprep.subr.bf16.mxu0 %v6786
  %6879 = vmatpush1.bf16.msra.mxu0 %v6785
  %6880 = vmatprep.subr.bf16.mxu0 %v6790
  %6881 = vmatpush1.bf16.msra.mxu0 %v6789
  %6882 = vmatprep.subr.bf16.mxu0 %v6794
  %6883 = vmatpush1.bf16.msra.mxu0 %v6793
  %6884 = vmatprep.subr.bf16.mxu0 0
  %6885 = vmatpush1.bf16.msra.mxu0 0
  %6886 = vmatprep.subr.bf16.mxu0 0
  %6887 = vmatpush1.bf16.msra.mxu0 0
  %6888 = vmatprep.subr.bf16.mxu0 0
  %6889 = vmatpush1.bf16.msra.mxu0 0
  %6890 = vmatprep.subr.bf16.mxu0 0
  %6891 = vmatpush1.bf16.msra.mxu0 0
  %6892 = vmatprep.subr.bf16.mxu0 0
  %6893 = vmatpush1.bf16.msra.mxu0 0
  %6894 = vmatprep.subr.bf16.mxu0 0
  %6895 = vmatpush1.bf16.msra.mxu0 0
  %6896 = vmatprep.subr.bf16.mxu0 0
  %6897 = vmatpush1.bf16.msra.mxu0 0
  %6898 = vmatprep.subr.bf16.mxu0 0
  %6899 = vmatpush1.bf16.msra.mxu0 0
  %6900 = vmatprep.mubr.bf16.mxu0 0
  %6901 = vmatmul.mubr.bf16.gmra.mrb[0].mxu0 %v6634
  %v6902 = vpop.f32.mrb[0].mxu0
  %v6903 = vadd.f32 0.0, %v6902
  %v6904 = vpop.f32.mrb[0].mxu0
  %v6905 = vadd.f32 0.0, %v6904
  %v6906 = vpop.f32.mrb[0].mxu0
  %v6907 = vpop.f32.mrb[0].mxu0
  %6908 = vdwg.mxu0
  %v6909 = vadd.f32 %v6629, %v6862
  %v6910 = vadd.f32 %v6630, %v6864
  %v6911 = vadd.f32 %v6631, %v6903
  %v6912 = vadd.f32 %v6632, %v6905
  %v6913 = vxor.u32 %v6909, 2147483648
  %v6914 = vxor.u32 %v6910, 2147483648
  %v6915 = vmul.f32 %v6913, 1.442695
  %v6916 = vpow.pop %v6915
  %v6917 = vmul.f32 %v6914, 1.442695
  %v6918 = vpow.pop %v6917
  %v6919 = vadd.f32 %v6916, 1.0
  %v6920 = vadd.f32 %v6918, 1.0
  %v6921 = vrcp.pop %v6919
  %v6922 = vmul.f32 1.0, %v6921
  %v6923 = vrcp.pop %v6920
  %v6924 = vmul.f32 1.0, %v6923
  %v6925 = vtanh.pop %v6911
  %v6926 = vxor.u32 %v6912, 2147483648
  %v6927 = vmul.f32 %v6926, 1.442695
  %v6928 = vpow.pop %v6927
  %v6929 = vadd.f32 %v6928, 1.0
  %v6930 = vrcp.pop %v6929
  %v6931 = vmul.f32 1.0, %v6930
  %v6932 = vld [vmem:[#allocation3] sm:$0xff]
  %v6933 = vmul.f32 %v6924, %v6932
  %v6934 = vmul.f32 %v6922, %v6925
  %v6935 = vadd.f32 %v6933, %v6934
  %v6936 = vtanh.pop %v6935
  %v6937 = vmul.f32 %v6931, %v6936
  %6938 = vst [vmem:[#allocation3] sm:$0xff] %v6935
  %6939 = vst [vmem:[#allocation2] sm:$0xff] %v6937
  %vm6940 = vcmp.eq.s32.totalorder %v6619, 1
  %v6941 = vld [vmem:[#allocation4] sm:$0xff]
  %v6942 = vsel %vm6940, 1, 0
  %6943 = vset.pattern.permute.xlu0 0
  %6944 = vperm.xlu0 %6943, %v6942
  %v6945 = vpop.permute.xlu0 %6944
  %vm6946 = vcmp.eq.s32.totalorder %v6945, 1
  %v6947 = vsel %vm6946, %v6937, %v6941
  %6948 = vst [vmem:[#allocation4] sm:$0xff] %v6947
  %v6949 = vld [vmem:[%s1106] sm:$0xff]
  %v6950 = vld [vmem:[%s1106 + $0x8] sm:$0xff]
  %v6951 = vld [vmem:[%s1106 + $0x10] sm:$0xff]
  %v6952 = vld [vmem:[%s1106 + $0x18] sm:$0xff]
  %v6953 = vld [vmem:[#allocation2] sm:$0xff]
  %v6954 = vpack.c.bf16 %v6953, %v6953
  %v6955 = vld [vmem:[%s9] sm:$0xff]
  %v6956 = vld [vmem:[%s9 + $0x8] sm:$0xff]
  %v6957 = vld [vmem:[%s9 + $0x10] sm:$0xff]
  %v6958 = vld [vmem:[%s9 + $0x18] sm:$0xff]
  %v6959 = vld [vmem:[%s9 + $0x20] sm:$0xff]
  %v6960 = vld [vmem:[%s9 + $0x28] sm:$0xff]
  %v6961 = vld [vmem:[%s9 + $0x30] sm:$0xff]
  %v6962 = vld [vmem:[%s9 + $0x38] sm:$0xff]
  %v6963 = vld [vmem:[%s9 + $0x40] sm:$0xff]
  %v6964 = vld [vmem:[%s9 + $0x48] sm:$0xff]
  %v6965 = vld [vmem:[%s9 + $0x50] sm:$0xff]
  %v6966 = vld [vmem:[%s9 + $0x58] sm:$0xff]
  %v6967 = vld [vmem:[%s9 + $0x60] sm:$0xff]
  %v6968 = vld [vmem:[%s9 + $0x68] sm:$0xff]
  %v6969 = vld [vmem:[%s9 + $0x70] sm:$0xff]
  %v6970 = vld [vmem:[%s9 + $0x78] sm:$0xff]
  %v6971 = vld [vmem:[%s9 + $0x80] sm:$0xff]
  %v6972 = vld [vmem:[%s9 + $0x88] sm:$0xff]
  %v6973 = vld [vmem:[%s9 + $0x90] sm:$0xff]
  %v6974 = vld [vmem:[%s9 + $0x98] sm:$0xff]
  %v6975 = vld [vmem:[%s9 + $0xa0] sm:$0xff]
  %v6976 = vld [vmem:[%s9 + $0xa8] sm:$0xff]
  %v6977 = vld [vmem:[%s9 + $0xb0] sm:$0xff]
  %v6978 = vld [vmem:[%s9 + $0xb8] sm:$0xff]
  %v6979 = vld [vmem:[%s9 + $0xc0] sm:$0xff]
  %v6980 = vld [vmem:[%s9 + $0xc8] sm:$0xff]
  %v6981 = vld [vmem:[%s9 + $0xd0] sm:$0xff]
  %v6982 = vld [vmem:[%s9 + $0xd8] sm:$0xff]
  %v6983 = vld [vmem:[%s9 + $0xe0] sm:$0xff]
  %v6984 = vld [vmem:[%s9 + $0xe8] sm:$0xff]
  %v6985 = vld [vmem:[%s9 + $0xf0] sm:$0xff]
  %v6986 = vld [vmem:[%s9 + $0xf8] sm:$0xff]
  %v7019 = vunpack.c.l.b16 %v6955
  %v7020 = vunpack.c.h.b16 %v6955
  %v7021 = vunpack.c.l.b16 %v6956
  %v7022 = vunpack.c.h.b16 %v6956
  %v7023 = vunpack.c.l.b16 %v6957
  %v7024 = vunpack.c.h.b16 %v6957
  %v7025 = vunpack.c.l.b16 %v6958
  %v7026 = vunpack.c.h.b16 %v6958
  %v7027 = vunpack.c.l.b16 %v6959
  %v7028 = vunpack.c.h.b16 %v6959
  %v7029 = vunpack.c.l.b16 %v6960
  %v7030 = vunpack.c.h.b16 %v6960
  %v7031 = vunpack.c.l.b16 %v6961
  %v7032 = vunpack.c.h.b16 %v6961
  %v7033 = vunpack.c.l.b16 %v6962
  %v7034 = vunpack.c.h.b16 %v6962
  %v7035 = vunpack.c.l.b16 %v6963
  %v7036 = vunpack.c.h.b16 %v6963
  %v7037 = vunpack.c.l.b16 %v6964
  %v7038 = vunpack.c.h.b16 %v6964
  %v7039 = vunpack.c.l.b16 %v6965
  %v7040 = vunpack.c.h.b16 %v6965
  %v7041 = vunpack.c.l.b16 %v6966
  %v7042 = vunpack.c.h.b16 %v6966
  %v7043 = vunpack.c.l.b16 %v6967
  %v7044 = vunpack.c.h.b16 %v6967
  %v7045 = vunpack.c.l.b16 %v6968
  %v7046 = vunpack.c.h.b16 %v6968
  %v7047 = vunpack.c.l.b16 %v6969
  %v7048 = vunpack.c.h.b16 %v6969
  %v7049 = vunpack.c.l.b16 %v6970
  %v7050 = vunpack.c.h.b16 %v6970
  %v7051 = vunpack.c.l.b16 %v6971
  %v7052 = vunpack.c.h.b16 %v6971
  %v7053 = vunpack.c.l.b16 %v6972
  %v7054 = vunpack.c.h.b16 %v6972
  %v7055 = vunpack.c.l.b16 %v6973
  %v7056 = vunpack.c.h.b16 %v6973
  %v7057 = vunpack.c.l.b16 %v6974
  %v7058 = vunpack.c.h.b16 %v6974
  %v7059 = vunpack.c.l.b16 %v6975
  %v7060 = vunpack.c.h.b16 %v6975
  %v7061 = vunpack.c.l.b16 %v6976
  %v7062 = vunpack.c.h.b16 %v6976
  %v7063 = vunpack.c.l.b16 %v6977
  %v7064 = vunpack.c.h.b16 %v6977
  %v7065 = vunpack.c.l.b16 %v6978
  %v7066 = vunpack.c.h.b16 %v6978
  %v7067 = vunpack.c.l.b16 %v6979
  %v7068 = vunpack.c.h.b16 %v6979
  %v7069 = vunpack.c.l.b16 %v6980
  %v7070 = vunpack.c.h.b16 %v6980
  %v7071 = vunpack.c.l.b16 %v6981
  %v7072 = vunpack.c.h.b16 %v6981
  %v7073 = vunpack.c.l.b16 %v6982
  %v7074 = vunpack.c.h.b16 %v6982
  %v7075 = vunpack.c.l.b16 %v6983
  %v7076 = vunpack.c.h.b16 %v6983
  %v7077 = vunpack.c.l.b16 %v6984
  %v7078 = vunpack.c.h.b16 %v6984
  %v7079 = vunpack.c.l.b16 %v6985
  %v7080 = vunpack.c.h.b16 %v6985
  %v7081 = vunpack.c.l.b16 %v6986
  %v7082 = vunpack.c.h.b16 %v6986
  %v7083 = vpack.c.b16 %v7023, %v7019
  %v7084 = vpack.c.b16 %v7024, %v7020
  %v7085 = vpack.c.b16 %v7025, %v7021
  %v7086 = vpack.c.b16 %v7026, %v7022
  %v7087 = vpack.c.b16 %v7031, %v7027
  %v7088 = vpack.c.b16 %v7032, %v7028
  %v7089 = vpack.c.b16 %v7033, %v7029
  %v7090 = vpack.c.b16 %v7034, %v7030
  %v7091 = vpack.c.b16 %v7039, %v7035
  %v7092 = vpack.c.b16 %v7040, %v7036
  %v7093 = vpack.c.b16 %v7041, %v7037
  %v7094 = vpack.c.b16 %v7042, %v7038
  %v7095 = vpack.c.b16 %v7047, %v7043
  %v7096 = vpack.c.b16 %v7048, %v7044
  %v7097 = vpack.c.b16 %v7049, %v7045
  %v7098 = vpack.c.b16 %v7050, %v7046
  %v7099 = vpack.c.b16 %v7055, %v7051
  %v7100 = vpack.c.b16 %v7056, %v7052
  %v7101 = vpack.c.b16 %v7057, %v7053
  %v7102 = vpack.c.b16 %v7058, %v7054
  %v7103 = vpack.c.b16 %v7063, %v7059
  %v7104 = vpack.c.b16 %v7064, %v7060
  %v7105 = vpack.c.b16 %v7065, %v7061
  %v7106 = vpack.c.b16 %v7066, %v7062
  %v7107 = vpack.c.b16 %v7071, %v7067
  %v7108 = vpack.c.b16 %v7072, %v7068
  %v7109 = vpack.c.b16 %v7073, %v7069
  %v7110 = vpack.c.b16 %v7074, %v7070
  %v7111 = vpack.c.b16 %v7079, %v7075
  %v7112 = vpack.c.b16 %v7080, %v7076
  %v7113 = vpack.c.b16 %v7081, %v7077
  %v7114 = vpack.c.b16 %v7082, %v7078
  %7147 = vmatprep.subr.bf16.mxu0 %v7084
  %7148 = vmatpush1.bf16.msra.mxu0 %v7083
  %7149 = vmatprep.subr.bf16.mxu0 %v7088
  %7150 = vmatpush1.bf16.msra.mxu0 %v7087
  %7151 = vmatprep.subr.bf16.mxu0 %v7092
  %7152 = vmatpush1.bf16.msra.mxu0 %v7091
  %7153 = vmatprep.subr.bf16.mxu0 %v7096
  %7154 = vmatpush1.bf16.msra.mxu0 %v7095
  %7155 = vmatprep.subr.bf16.mxu0 %v7100
  %7156 = vmatpush1.bf16.msra.mxu0 %v7099
  %7157 = vmatprep.subr.bf16.mxu0 %v7104
  %7158 = vmatpush1.bf16.msra.mxu0 %v7103
  %7159 = vmatprep.subr.bf16.mxu0 %v7108
  %7160 = vmatpush1.bf16.msra.mxu0 %v7107
  %7161 = vmatprep.subr.bf16.mxu0 %v7112
  %7162 = vmatpush1.bf16.msra.mxu0 %v7111
  %7163 = vmatprep.subr.bf16.mxu0 0
  %7164 = vmatpush1.bf16.msra.mxu0 0
  %7165 = vmatprep.subr.bf16.mxu0 0
  %7166 = vmatpush1.bf16.msra.mxu0 0
  %7167 = vmatprep.subr.bf16.mxu0 0
  %7168 = vmatpush1.bf16.msra.mxu0 0
  %7169 = vmatprep.subr.bf16.mxu0 0
  %7170 = vmatpush1.bf16.msra.mxu0 0
  %7171 = vmatprep.subr.bf16.mxu0 0
  %7172 = vmatpush1.bf16.msra.mxu0 0
  %7173 = vmatprep.subr.bf16.mxu0 0
  %7174 = vmatpush1.bf16.msra.mxu0 0
  %7175 = vmatprep.subr.bf16.mxu0 0
  %7176 = vmatpush1.bf16.msra.mxu0 0
  %7177 = vmatprep.subr.bf16.mxu0 0
  %7178 = vmatpush1.bf16.msra.mxu0 0
  %7179 = vmatprep.mubr.bf16.mxu0 0
  %7180 = vmatmul.mubr.bf16.gmra.mrb[0].mxu0 %v6954
  %v7181 = vpop.f32.mrb[0].mxu0
  %v7182 = vadd.f32 0.0, %v7181
  %v7183 = vpop.f32.mrb[0].mxu0
  %v7184 = vadd.f32 0.0, %v7183
  %v7185 = vpop.f32.mrb[0].mxu0
  %v7186 = vpop.f32.mrb[0].mxu0
  %7187 = vdwg.mxu0
  %7188 = vmatprep.subr.bf16.mxu0 %v7086
  %7189 = vmatpush1.bf16.msra.mxu0 %v7085
  %7190 = vmatprep.subr.bf16.mxu0 %v7090
  %7191 = vmatpush1.bf16.msra.mxu0 %v7089
  %7192 = vmatprep.subr.bf16.mxu0 %v7094
  %7193 = vmatpush1.bf16.msra.mxu0 %v7093
  %7194 = vmatprep.subr.bf16.mxu0 %v7098
  %7195 = vmatpush1.bf16.msra.mxu0 %v7097
  %7196 = vmatprep.subr.bf16.mxu0 %v7102
  %7197 = vmatpush1.bf16.msra.mxu0 %v7101
  %7198 = vmatprep.subr.bf16.mxu0 %v7106
  %7199 = vmatpush1.bf16.msra.mxu0 %v7105
  %7200 = vmatprep.subr.bf16.mxu0 %v7110
  %7201 = vmatpush1.bf16.msra.mxu0 %v7109
  %7202 = vmatprep.subr.bf16.mxu0 %v7114
  %7203 = vmatpush1.bf16.msra.mxu0 %v7113
  %7204 = vmatprep.subr.bf16.mxu0 0
  %7205 = vmatpush1.bf16.msra.mxu0 0
  %7206 = vmatprep.subr.bf16.mxu0 0
  %7207 = vmatpush1.bf16.msra.mxu0 0
  %7208 = vmatprep.subr.bf16.mxu0 0
  %7209 = vmatpush1.bf16.msra.mxu0 0
  %7210 = vmatprep.subr.bf16.mxu0 0
  %7211 = vmatpush1.bf16.msra.mxu0 0
  %7212 = vmatprep.subr.bf16.mxu0 0
  %7213 = vmatpush1.bf16.msra.mxu0 0
  %7214 = vmatprep.subr.bf16.mxu0 0
  %7215 = vmatpush1.bf16.msra.mxu0 0
  %7216 = vmatprep.subr.bf16.mxu0 0
  %7217 = vmatpush1.bf16.msra.mxu0 0
  %7218 = vmatprep.subr.bf16.mxu0 0
  %7219 = vmatpush1.bf16.msra.mxu0 0
  %7220 = vmatprep.mubr.bf16.mxu0 0
  %7221 = vmatmul.mubr.bf16.gmra.mrb[0].mxu0 %v6954
  %v7222 = vpop.f32.mrb[0].mxu0
  %v7223 = vadd.f32 0.0, %v7222
  %v7224 = vpop.f32.mrb[0].mxu0
  %v7225 = vadd.f32 0.0, %v7224
  %v7226 = vpop.f32.mrb[0].mxu0
  %v7227 = vpop.f32.mrb[0].mxu0
  %7228 = vdwg.mxu0
  %v7229 = vadd.f32 %v6949, %v7182
  %v7230 = vadd.f32 %v6950, %v7184
  %v7231 = vadd.f32 %v6951, %v7223
  %v7232 = vadd.f32 %v6952, %v7225
  %v7233 = vxor.u32 %v7229, 2147483648
  %v7234 = vxor.u32 %v7230, 2147483648
  %v7235 = vmul.f32 %v7233, 1.442695
  %v7236 = vpow.pop %v7235
  %v7237 = vmul.f32 %v7234, 1.442695
  %v7238 = vpow.pop %v7237
  %v7239 = vadd.f32 %v7236, 1.0
  %v7240 = vadd.f32 %v7238, 1.0
  %v7241 = vrcp.pop %v7239
  %v7242 = vmul.f32 1.0, %v7241
  %v7243 = vrcp.pop %v7240
  %v7244 = vmul.f32 1.0, %v7243
  %v7245 = vtanh.pop %v7231
  %v7246 = vxor.u32 %v7232, 2147483648
  %v7247 = vmul.f32 %v7246, 1.442695
  %v7248 = vpow.pop %v7247
  %v7249 = vadd.f32 %v7248, 1.0
  %v7250 = vrcp.pop %v7249
  %v7251 = vmul.f32 1.0, %v7250
  %v7252 = vld [vmem:[#allocation3] sm:$0xff]
  %v7253 = vmul.f32 %v7244, %v7252
  %v7254 = vmul.f32 %v7242, %v7245
  %v7255 = vadd.f32 %v7253, %v7254
  %v7256 = vtanh.pop %v7255
  %v7257 = vmul.f32 %v7251, %v7256
  %7258 = vst [vmem:[#allocation3] sm:$0xff] %v7255
  %7259 = vst [vmem:[#allocation2] sm:$0xff] %v7257
  %vm7260 = vcmp.eq.s32.totalorder %v6619, 2
  %v7261 = vld [vmem:[#allocation4] sm:$0xff]
  %v7262 = vsel %vm7260, 1, 0
  %7263 = vset.pattern.permute.xlu0 0
  %7264 = vperm.xlu0 %7263, %v7262
  %v7265 = vpop.permute.xlu0 %7264
  %vm7266 = vcmp.eq.s32.totalorder %v7265, 1
  %v7267 = vsel %vm7266, %v7257, %v7261
  %7268 = vst [vmem:[#allocation4] sm:$0xff] %v7267
  %v7269 = vld [vmem:[%s1422] sm:$0xff]
  %v7270 = vld [vmem:[%s1422 + $0x8] sm:$0xff]
  %v7271 = vld [vmem:[%s1422 + $0x10] sm:$0xff]
  %v7272 = vld [vmem:[%s1422 + $0x18] sm:$0xff]
  %v7273 = vld [vmem:[#allocation2] sm:$0xff]
  %v7274 = vpack.c.bf16 %v7273, %v7273
  %v7275 = vld [vmem:[%s9] sm:$0xff]
  %v7276 = vld [vmem:[%s9 + $0x8] sm:$0xff]
  %v7277 = vld [vmem:[%s9 + $0x10] sm:$0xff]
  %v7278 = vld [vmem:[%s9 + $0x18] sm:$0xff]
  %v7279 = vld [vmem:[%s9 + $0x20] sm:$0xff]
  %v7280 = vld [vmem:[%s9 + $0x28] sm:$0xff]
  %v7281 = vld [vmem:[%s9 + $0x30] sm:$0xff]
  %v7282 = vld [vmem:[%s9 + $0x38] sm:$0xff]
  %v7283 = vld [vmem:[%s9 + $0x40] sm:$0xff]
  %v7284 = vld [vmem:[%s9 + $0x48] sm:$0xff]
  %v7285 = vld [vmem:[%s9 + $0x50] sm:$0xff]
  %v7286 = vld [vmem:[%s9 + $0x58] sm:$0xff]
  %v7287 = vld [vmem:[%s9 + $0x60] sm:$0xff]
  %v7288 = vld [vmem:[%s9 + $0x68] sm:$0xff]
  %v7289 = vld [vmem:[%s9 + $0x70] sm:$0xff]
  %v7290 = vld [vmem:[%s9 + $0x78] sm:$0xff]
  %v7291 = vld [vmem:[%s9 + $0x80] sm:$0xff]
  %v7292 = vld [vmem:[%s9 + $0x88] sm:$0xff]
  %v7293 = vld [vmem:[%s9 + $0x90] sm:$0xff]
  %v7294 = vld [vmem:[%s9 + $0x98] sm:$0xff]
  %v7295 = vld [vmem:[%s9 + $0xa0] sm:$0xff]
  %v7296 = vld [vmem:[%s9 + $0xa8] sm:$0xff]
  %v7297 = vld [vmem:[%s9 + $0xb0] sm:$0xff]
  %v7298 = vld [vmem:[%s9 + $0xb8] sm:$0xff]
  %v7299 = vld [vmem:[%s9 + $0xc0] sm:$0xff]
  %v7300 = vld [vmem:[%s9 + $0xc8] sm:$0xff]
  %v7301 = vld [vmem:[%s9 + $0xd0] sm:$0xff]
  %v7302 = vld [vmem:[%s9 + $0xd8] sm:$0xff]
  %v7303 = vld [vmem:[%s9 + $0xe0] sm:$0xff]
  %v7304 = vld [vmem:[%s9 + $0xe8] sm:$0xff]
  %v7305 = vld [vmem:[%s9 + $0xf0] sm:$0xff]
  %v7306 = vld [vmem:[%s9 + $0xf8] sm:$0xff]
  %v7339 = vunpack.c.l.b16 %v7275
  %v7340 = vunpack.c.h.b16 %v7275
  %v7341 = vunpack.c.l.b16 %v7276
  %v7342 = vunpack.c.h.b16 %v7276
  %v7343 = vunpack.c.l.b16 %v7277
  %v7344 = vunpack.c.h.b16 %v7277
  %v7345 = vunpack.c.l.b16 %v7278
  %v7346 = vunpack.c.h.b16 %v7278
  %v7347 = vunpack.c.l.b16 %v7279
  %v7348 = vunpack.c.h.b16 %v7279
  %v7349 = vunpack.c.l.b16 %v7280
  %v7350 = vunpack.c.h.b16 %v7280
  %v7351 = vunpack.c.l.b16 %v7281
  %v7352 = vunpack.c.h.b16 %v7281
  %v7353 = vunpack.c.l.b16 %v7282
  %v7354 = vunpack.c.h.b16 %v7282
  %v7355 = vunpack.c.l.b16 %v7283
  %v7356 = vunpack.c.h.b16 %v7283
  %v7357 = vunpack.c.l.b16 %v7284
  %v7358 = vunpack.c.h.b16 %v7284
  %v7359 = vunpack.c.l.b16 %v7285
  %v7360 = vunpack.c.h.b16 %v7285
  %v7361 = vunpack.c.l.b16 %v7286
  %v7362 = vunpack.c.h.b16 %v7286
  %v7363 = vunpack.c.l.b16 %v7287
  %v7364 = vunpack.c.h.b16 %v7287
  %v7365 = vunpack.c.l.b16 %v7288
  %v7366 = vunpack.c.h.b16 %v7288
  %v7367 = vunpack.c.l.b16 %v7289
  %v7368 = vunpack.c.h.b16 %v7289
  %v7369 = vunpack.c.l.b16 %v7290
  %v7370 = vunpack.c.h.b16 %v7290
  %v7371 = vunpack.c.l.b16 %v7291
  %v7372 = vunpack.c.h.b16 %v7291
  %v7373 = vunpack.c.l.b16 %v7292
  %v7374 = vunpack.c.h.b16 %v7292
  %v7375 = vunpack.c.l.b16 %v7293
  %v7376 = vunpack.c.h.b16 %v7293
  %v7377 = vunpack.c.l.b16 %v7294
  %v7378 = vunpack.c.h.b16 %v7294
  %v7379 = vunpack.c.l.b16 %v7295
  %v7380 = vunpack.c.h.b16 %v7295
  %v7381 = vunpack.c.l.b16 %v7296
  %v7382 = vunpack.c.h.b16 %v7296
  %v7383 = vunpack.c.l.b16 %v7297
  %v7384 = vunpack.c.h.b16 %v7297
  %v7385 = vunpack.c.l.b16 %v7298
  %v7386 = vunpack.c.h.b16 %v7298
  %v7387 = vunpack.c.l.b16 %v7299
  %v7388 = vunpack.c.h.b16 %v7299
  %v7389 = vunpack.c.l.b16 %v7300
  %v7390 = vunpack.c.h.b16 %v7300
  %v7391 = vunpack.c.l.b16 %v7301
  %v7392 = vunpack.c.h.b16 %v7301
  %v7393 = vunpack.c.l.b16 %v7302
  %v7394 = vunpack.c.h.b16 %v7302
  %v7395 = vunpack.c.l.b16 %v7303
  %v7396 = vunpack.c.h.b16 %v7303
  %v7397 = vunpack.c.l.b16 %v7304
  %v7398 = vunpack.c.h.b16 %v7304
  %v7399 = vunpack.c.l.b16 %v7305
  %v7400 = vunpack.c.h.b16 %v7305
  %v7401 = vunpack.c.l.b16 %v7306
  %v7402 = vunpack.c.h.b16 %v7306
  %v7403 = vpack.c.b16 %v7343, %v7339
  %v7404 = vpack.c.b16 %v7344, %v7340
  %v7405 = vpack.c.b16 %v7345, %v7341
  %v7406 = vpack.c.b16 %v7346, %v7342
  %v7407 = vpack.c.b16 %v7351, %v7347
  %v7408 = vpack.c.b16 %v7352, %v7348
  %v7409 = vpack.c.b16 %v7353, %v7349
  %v7410 = vpack.c.b16 %v7354, %v7350
  %v7411 = vpack.c.b16 %v7359, %v7355
  %v7412 = vpack.c.b16 %v7360, %v7356
  %v7413 = vpack.c.b16 %v7361, %v7357
  %v7414 = vpack.c.b16 %v7362, %v7358
  %v7415 = vpack.c.b16 %v7367, %v7363
  %v7416 = vpack.c.b16 %v7368, %v7364
  %v7417 = vpack.c.b16 %v7369, %v7365
  %v7418 = vpack.c.b16 %v7370, %v7366
  %v7419 = vpack.c.b16 %v7375, %v7371
  %v7420 = vpack.c.b16 %v7376, %v7372
  %v7421 = vpack.c.b16 %v7377, %v7373
  %v7422 = vpack.c.b16 %v7378, %v7374
  %v7423 = vpack.c.b16 %v7383, %v7379
  %v7424 = vpack.c.b16 %v7384, %v7380
  %v7425 = vpack.c.b16 %v7385, %v7381
  %v7426 = vpack.c.b16 %v7386, %v7382
  %v7427 = vpack.c.b16 %v7391, %v7387
  %v7428 = vpack.c.b16 %v7392, %v7388
  %v7429 = vpack.c.b16 %v7393, %v7389
  %v7430 = vpack.c.b16 %v7394, %v7390
  %v7431 = vpack.c.b16 %v7399, %v7395
  %v7432 = vpack.c.b16 %v7400, %v7396
  %v7433 = vpack.c.b16 %v7401, %v7397
  %v7434 = vpack.c.b16 %v7402, %v7398
  %7467 = vmatprep.subr.bf16.mxu0 %v7404
  %7468 = vmatpush1.bf16.msra.mxu0 %v7403
  %7469 = vmatprep.subr.bf16.mxu0 %v7408
  %7470 = vmatpush1.bf16.msra.mxu0 %v7407
  %7471 = vmatprep.subr.bf16.mxu0 %v7412
  %7472 = vmatpush1.bf16.msra.mxu0 %v7411
  %7473 = vmatprep.subr.bf16.mxu0 %v7416
  %7474 = vmatpush1.bf16.msra.mxu0 %v7415
  %7475 = vmatprep.subr.bf16.mxu0 %v7420
  %7476 = vmatpush1.bf16.msra.mxu0 %v7419
  %7477 = vmatprep.subr.bf16.mxu0 %v7424
  %7478 = vmatpush1.bf16.msra.mxu0 %v7423
  %7479 = vmatprep.subr.bf16.mxu0 %v7428
  %7480 = vmatpush1.bf16.msra.mxu0 %v7427
  %7481 = vmatprep.subr.bf16.mxu0 %v7432
  %7482 = vmatpush1.bf16.msra.mxu0 %v7431
  %7483 = vmatprep.subr.bf16.mxu0 0
  %7484 = vmatpush1.bf16.msra.mxu0 0
  %7485 = vmatprep.subr.bf16.mxu0 0
  %7486 = vmatpush1.bf16.msra.mxu0 0
  %7487 = vmatprep.subr.bf16.mxu0 0
  %7488 = vmatpush1.bf16.msra.mxu0 0
  %7489 = vmatprep.subr.bf16.mxu0 0
  %7490 = vmatpush1.bf16.msra.mxu0 0
  %7491 = vmatprep.subr.bf16.mxu0 0
  %7492 = vmatpush1.bf16.msra.mxu0 0
  %7493 = vmatprep.subr.bf16.mxu0 0
  %7494 = vmatpush1.bf16.msra.mxu0 0
  %7495 = vmatprep.subr.bf16.mxu0 0
  %7496 = vmatpush1.bf16.msra.mxu0 0
  %7497 = vmatprep.subr.bf16.mxu0 0
  %7498 = vmatpush1.bf16.msra.mxu0 0
  %7499 = vmatprep.mubr.bf16.mxu0 0
  %7500 = vmatmul.mubr.bf16.gmra.mrb[0].mxu0 %v7274
  %v7501 = vpop.f32.mrb[0].mxu0
  %v7502 = vadd.f32 0.0, %v7501
  %v7503 = vpop.f32.mrb[0].mxu0
  %v7504 = vadd.f32 0.0, %v7503
  %v7505 = vpop.f32.mrb[0].mxu0
  %v7506 = vpop.f32.mrb[0].mxu0
  %7507 = vdwg.mxu0
  %7508 = vmatprep.subr.bf16.mxu0 %v7406
  %7509 = vmatpush1.bf16.msra.mxu0 %v7405
  %7510 = vmatprep.subr.bf16.mxu0 %v7410
  %7511 = vmatpush1.bf16.msra.mxu0 %v7409
  %7512 = vmatprep.subr.bf16.mxu0 %v7414
  %7513 = vmatpush1.bf16.msra.mxu0 %v7413
  %7514 = vmatprep.subr.bf16.mxu0 %v7418
  %7515 = vmatpush1.bf16.msra.mxu0 %v7417
  %7516 = vmatprep.subr.bf16.mxu0 %v7422
  %7517 = vmatpush1.bf16.msra.mxu0 %v7421
  %7518 = vmatprep.subr.bf16.mxu0 %v7426
  %7519 = vmatpush1.bf16.msra.mxu0 %v7425
  %7520 = vmatprep.subr.bf16.mxu0 %v7430
  %7521 = vmatpush1.bf16.msra.mxu0 %v7429
  %7522 = vmatprep.subr.bf16.mxu0 %v7434
  %7523 = vmatpush1.bf16.msra.mxu0 %v7433
  %7524 = vmatprep.subr.bf16.mxu0 0
  %7525 = vmatpush1.bf16.msra.mxu0 0
  %7526 = vmatprep.subr.bf16.mxu0 0
  %7527 = vmatpush1.bf16.msra.mxu0 0
  %7528 = vmatprep.subr.bf16.mxu0 0
  %7529 = vmatpush1.bf16.msra.mxu0 0
  %7530 = vmatprep.subr.bf16.mxu0 0
  %7531 = vmatpush1.bf16.msra.mxu0 0
  %7532 = vmatprep.subr.bf16.mxu0 0
  %7533 = vmatpush1.bf16.msra.mxu0 0
  %7534 = vmatprep.subr.bf16.mxu0 0
  %7535 = vmatpush1.bf16.msra.mxu0 0
  %7536 = vmatprep.subr.bf16.mxu0 0
  %7537 = vmatpush1.bf16.msra.mxu0 0
  %7538 = vmatprep.subr.bf16.mxu0 0
  %7539 = vmatpush1.bf16.msra.mxu0 0
  %7540 = vmatprep.mubr.bf16.mxu0 0
  %7541 = vmatmul.mubr.bf16.gmra.mrb[0].mxu0 %v7274
  %v7542 = vpop.f32.mrb[0].mxu0
  %v7543 = vadd.f32 0.0, %v7542
  %v7544 = vpop.f32.mrb[0].mxu0
  %v7545 = vadd.f32 0.0, %v7544
  %v7546 = vpop.f32.mrb[0].mxu0
  %v7547 = vpop.f32.mrb[0].mxu0
  %7548 = vdwg.mxu0
  %v7549 = vadd.f32 %v7269, %v7502
  %v7550 = vadd.f32 %v7270, %v7504
  %v7551 = vadd.f32 %v7271, %v7543
  %v7552 = vadd.f32 %v7272, %v7545
  %v7553 = vxor.u32 %v7549, 2147483648
  %v7554 = vxor.u32 %v7550, 2147483648
  %v7555 = vmul.f32 %v7553, 1.442695
  %v7556 = vpow.pop %v7555
  %v7557 = vmul.f32 %v7554, 1.442695
  %v7558 = vpow.pop %v7557
  %v7559 = vadd.f32 %v7556, 1.0
  %v7560 = vadd.f32 %v7558, 1.0
  %v7561 = vrcp.pop %v7559
  %v7562 = vmul.f32 1.0, %v7561
  %v7563 = vrcp.pop %v7560
  %v7564 = vmul.f32 1.0, %v7563
  %v7565 = vtanh.pop %v7551
  %v7566 = vxor.u32 %v7552, 2147483648
  %v7567 = vmul.f32 %v7566, 1.442695
  %v7568 = vpow.pop %v7567
  %v7569 = vadd.f32 %v7568, 1.0
  %v7570 = vrcp.pop %v7569
  %v7571 = vmul.f32 1.0, %v7570
  %v7572 = vld [vmem:[#allocation3] sm:$0xff]
  %v7573 = vmul.f32 %v7564, %v7572
  %v7574 = vmul.f32 %v7562, %v7565
  %v7575 = vadd.f32 %v7573, %v7574
  %v7576 = vtanh.pop %v7575
  %v7577 = vmul.f32 %v7571, %v7576
  %7578 = vst [vmem:[#allocation3] sm:$0xff] %v7575
  %7579 = vst [vmem:[#allocation2] sm:$0xff] %v7577
  %vm7580 = vcmp.eq.s32.totalorder %v6619, 3
  %v7581 = vld [vmem:[#allocation4] sm:$0xff]
  %v7582 = vsel %vm7580, 1, 0
  %7583 = vset.pattern.permute.xlu0 0
  %7584 = vperm.xlu0 %7583, %v7582
  %v7585 = vpop.permute.xlu0 %7584
  %vm7586 = vcmp.eq.s32.totalorder %v7585, 1
  %v7587 = vsel %vm7586, %v7577, %v7581
  %7588 = vst [vmem:[#allocation4] sm:$0xff] %v7587
  %v7589 = vld [vmem:[%s1738] sm:$0xff]
  %v7590 = vld [vmem:[%s1738 + $0x8] sm:$0xff]
  %v7591 = vld [vmem:[%s1738 + $0x10] sm:$0xff]
  %v7592 = vld [vmem:[%s1738 + $0x18] sm:$0xff]
  %v7593 = vld [vmem:[#allocation2] sm:$0xff]
  %v7594 = vpack.c.bf16 %v7593, %v7593
  %v7595 = vld [vmem:[%s9] sm:$0xff]
  %v7596 = vld [vmem:[%s9 + $0x8] sm:$0xff]
  %v7597 = vld [vmem:[%s9 + $0x10] sm:$0xff]
  %v7598 = vld [vmem:[%s9 + $0x18] sm:$0xff]
  %v7599 = vld [vmem:[%s9 + $0x20] sm:$0xff]
  %v7600 = vld [vmem:[%s9 + $0x28] sm:$0xff]
  %v7601 = vld [vmem:[%s9 + $0x30] sm:$0xff]
  %v7602 = vld [vmem:[%s9 + $0x38] sm:$0xff]
  %v7603 = vld [vmem:[%s9 + $0x40] sm:$0xff]
  %v7604 = vld [vmem:[%s9 + $0x48] sm:$0xff]
  %v7605 = vld [vmem:[%s9 + $0x50] sm:$0xff]
  %v7606 = vld [vmem:[%s9 + $0x58] sm:$0xff]
  %v7607 = vld [vmem:[%s9 + $0x60] sm:$0xff]
  %v7608 = vld [vmem:[%s9 + $0x68] sm:$0xff]
  %v7609 = vld [vmem:[%s9 + $0x70] sm:$0xff]
  %v7610 = vld [vmem:[%s9 + $0x78] sm:$0xff]
  %v7611 = vld [vmem:[%s9 + $0x80] sm:$0xff]
  %v7612 = vld [vmem:[%s9 + $0x88] sm:$0xff]
  %v7613 = vld [vmem:[%s9 + $0x90] sm:$0xff]
  %v7614 = vld [vmem:[%s9 + $0x98] sm:$0xff]
  %v7615 = vld [vmem:[%s9 + $0xa0] sm:$0xff]
  %v7616 = vld [vmem:[%s9 + $0xa8] sm:$0xff]
  %v7617 = vld [vmem:[%s9 + $0xb0] sm:$0xff]
  %v7618 = vld [vmem:[%s9 + $0xb8] sm:$0xff]
  %v7619 = vld [vmem:[%s9 + $0xc0] sm:$0xff]
  %v7620 = vld [vmem:[%s9 + $0xc8] sm:$0xff]
  %v7621 = vld [vmem:[%s9 + $0xd0] sm:$0xff]
  %v7622 = vld [vmem:[%s9 + $0xd8] sm:$0xff]
  %v7623 = vld [vmem:[%s9 + $0xe0] sm:$0xff]
  %v7624 = vld [vmem:[%s9 + $0xe8] sm:$0xff]
  %v7625 = vld [vmem:[%s9 + $0xf0] sm:$0xff]
  %v7626 = vld [vmem:[%s9 + $0xf8] sm:$0xff]
  %v7659 = vunpack.c.l.b16 %v7595
  %v7660 = vunpack.c.h.b16 %v7595
  %v7661 = vunpack.c.l.b16 %v7596
  %v7662 = vunpack.c.h.b16 %v7596
  %v7663 = vunpack.c.l.b16 %v7597
  %v7664 = vunpack.c.h.b16 %v7597
  %v7665 = vunpack.c.l.b16 %v7598
  %v7666 = vunpack.c.h.b16 %v7598
  %v7667 = vunpack.c.l.b16 %v7599
  %v7668 = vunpack.c.h.b16 %v7599
  %v7669 = vunpack.c.l.b16 %v7600
  %v7670 = vunpack.c.h.b16 %v7600
  %v7671 = vunpack.c.l.b16 %v7601
  %v7672 = vunpack.c.h.b16 %v7601
  %v7673 = vunpack.c.l.b16 %v7602
  %v7674 = vunpack.c.h.b16 %v7602
  %v7675 = vunpack.c.l.b16 %v7603
  %v7676 = vunpack.c.h.b16 %v7603
  %v7677 = vunpack.c.l.b16 %v7604
  %v7678 = vunpack.c.h.b16 %v7604
  %v7679 = vunpack.c.l.b16 %v7605
  %v7680 = vunpack.c.h.b16 %v7605
  %v7681 = vunpack.c.l.b16 %v7606
  %v7682 = vunpack.c.h.b16 %v7606
  %v7683 = vunpack.c.l.b16 %v7607
  %v7684 = vunpack.c.h.b16 %v7607
  %v7685 = vunpack.c.l.b16 %v7608
  %v7686 = vunpack.c.h.b16 %v7608
  %v7687 = vunpack.c.l.b16 %v7609
  %v7688 = vunpack.c.h.b16 %v7609
  %v7689 = vunpack.c.l.b16 %v7610
  %v7690 = vunpack.c.h.b16 %v7610
  %v7691 = vunpack.c.l.b16 %v7611
  %v7692 = vunpack.c.h.b16 %v7611
  %v7693 = vunpack.c.l.b16 %v7612
  %v7694 = vunpack.c.h.b16 %v7612
  %v7695 = vunpack.c.l.b16 %v7613
  %v7696 = vunpack.c.h.b16 %v7613
  %v7697 = vunpack.c.l.b16 %v7614
  %v7698 = vunpack.c.h.b16 %v7614
  %v7699 = vunpack.c.l.b16 %v7615
  %v7700 = vunpack.c.h.b16 %v7615
  %v7701 = vunpack.c.l.b16 %v7616
  %v7702 = vunpack.c.h.b16 %v7616
  %v7703 = vunpack.c.l.b16 %v7617
  %v7704 = vunpack.c.h.b16 %v7617
  %v7705 = vunpack.c.l.b16 %v7618
  %v7706 = vunpack.c.h.b16 %v7618
  %v7707 = vunpack.c.l.b16 %v7619
  %v7708 = vunpack.c.h.b16 %v7619
  %v7709 = vunpack.c.l.b16 %v7620
  %v7710 = vunpack.c.h.b16 %v7620
  %v7711 = vunpack.c.l.b16 %v7621
  %v7712 = vunpack.c.h.b16 %v7621
  %v7713 = vunpack.c.l.b16 %v7622
  %v7714 = vunpack.c.h.b16 %v7622
  %v7715 = vunpack.c.l.b16 %v7623
  %v7716 = vunpack.c.h.b16 %v7623
  %v7717 = vunpack.c.l.b16 %v7624
  %v7718 = vunpack.c.h.b16 %v7624
  %v7719 = vunpack.c.l.b16 %v7625
  %v7720 = vunpack.c.h.b16 %v7625
  %v7721 = vunpack.c.l.b16 %v7626
  %v7722 = vunpack.c.h.b16 %v7626
  %v7723 = vpack.c.b16 %v7663, %v7659
  %v7724 = vpack.c.b16 %v7664, %v7660
  %v7725 = vpack.c.b16 %v7665, %v7661
  %v7726 = vpack.c.b16 %v7666, %v7662
  %v7727 = vpack.c.b16 %v7671, %v7667
  %v7728 = vpack.c.b16 %v7672, %v7668
  %v7729 = vpack.c.b16 %v7673, %v7669
  %v7730 = vpack.c.b16 %v7674, %v7670
  %v7731 = vpack.c.b16 %v7679, %v7675
  %v7732 = vpack.c.b16 %v7680, %v7676
  %v7733 = vpack.c.b16 %v7681, %v7677
  %v7734 = vpack.c.b16 %v7682, %v7678
  %v7735 = vpack.c.b16 %v7687, %v7683
  %v7736 = vpack.c.b16 %v7688, %v7684
  %v7737 = vpack.c.b16 %v7689, %v7685
  %v7738 = vpack.c.b16 %v7690, %v7686
  %v7739 = vpack.c.b16 %v7695, %v7691
  %v7740 = vpack.c.b16 %v7696, %v7692
  %v7741 = vpack.c.b16 %v7697, %v7693
  %v7742 = vpack.c.b16 %v7698, %v7694
  %v7743 = vpack.c.b16 %v7703, %v7699
  %v7744 = vpack.c.b16 %v7704, %v7700
  %v7745 = vpack.c.b16 %v7705, %v7701
  %v7746 = vpack.c.b16 %v7706, %v7702
  %v7747 = vpack.c.b16 %v7711, %v7707
  %v7748 = vpack.c.b16 %v7712, %v7708
  %v7749 = vpack.c.b16 %v7713, %v7709
  %v7750 = vpack.c.b16 %v7714, %v7710
  %v7751 = vpack.c.b16 %v7719, %v7715
  %v7752 = vpack.c.b16 %v7720, %v7716
  %v7753 = vpack.c.b16 %v7721, %v7717
  %v7754 = vpack.c.b16 %v7722, %v7718
  %7787 = vmatprep.subr.bf16.mxu0 %v7724
  %7788 = vmatpush1.bf16.msra.mxu0 %v7723
  %7789 = vmatprep.subr.bf16.mxu0 %v7728
  %7790 = vmatpush1.bf16.msra.mxu0 %v7727
  %7791 = vmatprep.subr.bf16.mxu0 %v7732
  %7792 = vmatpush1.bf16.msra.mxu0 %v7731
  %7793 = vmatprep.subr.bf16.mxu0 %v7736
  %7794 = vmatpush1.bf16.msra.mxu0 %v7735
  %7795 = vmatprep.subr.bf16.mxu0 %v7740
  %7796 = vmatpush1.bf16.msra.mxu0 %v7739
  %7797 = vmatprep.subr.bf16.mxu0 %v7744
  %7798 = vmatpush1.bf16.msra.mxu0 %v7743
  %7799 = vmatprep.subr.bf16.mxu0 %v7748
  %7800 = vmatpush1.bf16.msra.mxu0 %v7747
  %7801 = vmatprep.subr.bf16.mxu0 %v7752
  %7802 = vmatpush1.bf16.msra.mxu0 %v7751
  %7803 = vmatprep.subr.bf16.mxu0 0
  %7804 = vmatpush1.bf16.msra.mxu0 0
  %7805 = vmatprep.subr.bf16.mxu0 0
  %7806 = vmatpush1.bf16.msra.mxu0 0
  %7807 = vmatprep.subr.bf16.mxu0 0
  %7808 = vmatpush1.bf16.msra.mxu0 0
  %7809 = vmatprep.subr.bf16.mxu0 0
  %7810 = vmatpush1.bf16.msra.mxu0 0
  %7811 = vmatprep.subr.bf16.mxu0 0
  %7812 = vmatpush1.bf16.msra.mxu0 0
  %7813 = vmatprep.subr.bf16.mxu0 0
  %7814 = vmatpush1.bf16.msra.mxu0 0
  %7815 = vmatprep.subr.bf16.mxu0 0
  %7816 = vmatpush1.bf16.msra.mxu0 0
  %7817 = vmatprep.subr.bf16.mxu0 0
  %7818 = vmatpush1.bf16.msra.mxu0 0
  %7819 = vmatprep.mubr.bf16.mxu0 0
  %7820 = vmatmul.mubr.bf16.gmra.mrb[0].mxu0 %v7594
  %v7821 = vpop.f32.mrb[0].mxu0
  %v7822 = vadd.f32 0.0, %v7821
  %v7823 = vpop.f32.mrb[0].mxu0
  %v7824 = vadd.f32 0.0, %v7823
  %v7825 = vpop.f32.mrb[0].mxu0
  %v7826 = vpop.f32.mrb[0].mxu0
  %7827 = vdwg.mxu0
  %7828 = vmatprep.subr.bf16.mxu0 %v7726
  %7829 = vmatpush1.bf16.msra.mxu0 %v7725
  %7830 = vmatprep.subr.bf16.mxu0 %v7730
  %7831 = vmatpush1.bf16.msra.mxu0 %v7729
  %7832 = vmatprep.subr.bf16.mxu0 %v7734
  %7833 = vmatpush1.bf16.msra.mxu0 %v7733
  %7834 = vmatprep.subr.bf16.mxu0 %v7738
  %7835 = vmatpush1.bf16.msra.mxu0 %v7737
  %7836 = vmatprep.subr.bf16.mxu0 %v7742
  %7837 = vmatpush1.bf16.msra.mxu0 %v7741
  %7838 = vmatprep.subr.bf16.mxu0 %v7746
  %7839 = vmatpush1.bf16.msra.mxu0 %v7745
  %7840 = vmatprep.subr.bf16.mxu0 %v7750
  %7841 = vmatpush1.bf16.msra.mxu0 %v7749
  %7842 = vmatprep.subr.bf16.mxu0 %v7754
  %7843 = vmatpush1.bf16.msra.mxu0 %v7753
  %7844 = vmatprep.subr.bf16.mxu0 0
  %7845 = vmatpush1.bf16.msra.mxu0 0
  %7846 = vmatprep.subr.bf16.mxu0 0
  %7847 = vmatpush1.bf16.msra.mxu0 0
  %7848 = vmatprep.subr.bf16.mxu0 0
  %7849 = vmatpush1.bf16.msra.mxu0 0
  %7850 = vmatprep.subr.bf16.mxu0 0
  %7851 = vmatpush1.bf16.msra.mxu0 0
  %7852 = vmatprep.subr.bf16.mxu0 0
  %7853 = vmatpush1.bf16.msra.mxu0 0
  %7854 = vmatprep.subr.bf16.mxu0 0
  %7855 = vmatpush1.bf16.msra.mxu0 0
  %7856 = vmatprep.subr.bf16.mxu0 0
  %7857 = vmatpush1.bf16.msra.mxu0 0
  %7858 = vmatprep.subr.bf16.mxu0 0
  %7859 = vmatpush1.bf16.msra.mxu0 0
  %7860 = vmatprep.mubr.bf16.mxu0 0
  %7861 = vmatmul.mubr.bf16.gmra.mrb[0].mxu0 %v7594
  %v7862 = vpop.f32.mrb[0].mxu0
  %v7863 = vadd.f32 0.0, %v7862
  %v7864 = vpop.f32.mrb[0].mxu0
  %v7865 = vadd.f32 0.0, %v7864
  %v7866 = vpop.f32.mrb[0].mxu0
  %v7867 = vpop.f32.mrb[0].mxu0
  %7868 = vdwg.mxu0
  %v7869 = vadd.f32 %v7589, %v7822
  %v7870 = vadd.f32 %v7590, %v7824
  %v7871 = vadd.f32 %v7591, %v7863
  %v7872 = vadd.f32 %v7592, %v7865
  %v7873 = vxor.u32 %v7869, 2147483648
  %v7874 = vxor.u32 %v7870, 2147483648
  %v7875 = vmul.f32 %v7873, 1.442695
  %v7876 = vpow.pop %v7875
  %v7877 = vmul.f32 %v7874, 1.442695
  %v7878 = vpow.pop %v7877
  %v7879 = vadd.f32 %v7876, 1.0
  %v7880 = vadd.f32 %v7878, 1.0
  %v7881 = vrcp.pop %v7879
  %v7882 = vmul.f32 1.0, %v7881
  %v7883 = vrcp.pop %v7880
  %v7884 = vmul.f32 1.0, %v7883
  %v7885 = vtanh.pop %v7871
  %v7886 = vxor.u32 %v7872, 2147483648
  %v7887 = vmul.f32 %v7886, 1.442695
  %v7888 = vpow.pop %v7887
  %v7889 = vadd.f32 %v7888, 1.0
  %v7890 = vrcp.pop %v7889
  %v7891 = vmul.f32 1.0, %v7890
  %v7892 = vld [vmem:[#allocation3] sm:$0xff]
  %v7893 = vmul.f32 %v7884, %v7892
  %v7894 = vmul.f32 %v7882, %v7885
  %v7895 = vadd.f32 %v7893, %v7894
  %v7896 = vtanh.pop %v7895
  %v7897 = vmul.f32 %v7891, %v7896
  %7898 = vst [vmem:[#allocation3] sm:$0xff] %v7895
  %7899 = vst [vmem:[#allocation2] sm:$0xff] %v7897
  %vm7900 = vcmp.eq.s32.totalorder %v6619, 4
  %v7901 = vld [vmem:[#allocation4] sm:$0xff]
  %v7902 = vsel %vm7900, 1, 0
  %7903 = vset.pattern.permute.xlu0 0
  %7904 = vperm.xlu0 %7903, %v7902
  %v7905 = vpop.permute.xlu0 %7904
  %vm7906 = vcmp.eq.s32.totalorder %v7905, 1
  %v7907 = vsel %vm7906, %v7897, %v7901
  %7908 = vst [vmem:[#allocation4] sm:$0xff] %v7907
  %v7909 = vld [vmem:[%s2054] sm:$0xff]
  %v7910 = vld [vmem:[%s2054 + $0x8] sm:$0xff]
  %v7911 = vld [vmem:[%s2054 + $0x10] sm:$0xff]
  %v7912 = vld [vmem:[%s2054 + $0x18] sm:$0xff]
  %v7913 = vld [vmem:[#allocation2] sm:$0xff]
  %v7914 = vpack.c.bf16 %v7913, %v7913
  %v7915 = vld [vmem:[%s9] sm:$0xff]
  %v7916 = vld [vmem:[%s9 + $0x8] sm:$0xff]
  %v7917 = vld [vmem:[%s9 + $0x10] sm:$0xff]
  %v7918 = vld [vmem:[%s9 + $0x18] sm:$0xff]
  %v7919 = vld [vmem:[%s9 + $0x20] sm:$0xff]
  %v7920 = vld [vmem:[%s9 + $0x28] sm:$0xff]
  %v7921 = vld [vmem:[%s9 + $0x30] sm:$0xff]
  %v7922 = vld [vmem:[%s9 + $0x38] sm:$0xff]
  %v7923 = vld [vmem:[%s9 + $0x40] sm:$0xff]
  %v7924 = vld [vmem:[%s9 + $0x48] sm:$0xff]
  %v7925 = vld [vmem:[%s9 + $0x50] sm:$0xff]
  %v7926 = vld [vmem:[%s9 + $0x58] sm:$0xff]
  %v7927 = vld [vmem:[%s9 + $0x60] sm:$0xff]
  %v7928 = vld [vmem:[%s9 + $0x68] sm:$0xff]
  %v7929 = vld [vmem:[%s9 + $0x70] sm:$0xff]
  %v7930 = vld [vmem:[%s9 + $0x78] sm:$0xff]
  %v7931 = vld [vmem:[%s9 + $0x80] sm:$0xff]
  %v7932 = vld [vmem:[%s9 + $0x88] sm:$0xff]
  %v7933 = vld [vmem:[%s9 + $0x90] sm:$0xff]
  %v7934 = vld [vmem:[%s9 + $0x98] sm:$0xff]
  %v7935 = vld [vmem:[%s9 + $0xa0] sm:$0xff]
  %v7936 = vld [vmem:[%s9 + $0xa8] sm:$0xff]
  %v7937 = vld [vmem:[%s9 + $0xb0] sm:$0xff]
  %v7938 = vld [vmem:[%s9 + $0xb8] sm:$0xff]
  %v7939 = vld [vmem:[%s9 + $0xc0] sm:$0xff]
  %v7940 = vld [vmem:[%s9 + $0xc8] sm:$0xff]
  %v7941 = vld [vmem:[%s9 + $0xd0] sm:$0xff]
  %v7942 = vld [vmem:[%s9 + $0xd8] sm:$0xff]
  %v7943 = vld [vmem:[%s9 + $0xe0] sm:$0xff]
  %v7944 = vld [vmem:[%s9 + $0xe8] sm:$0xff]
  %v7945 = vld [vmem:[%s9 + $0xf0] sm:$0xff]
  %v7946 = vld [vmem:[%s9 + $0xf8] sm:$0xff]
  %v7979 = vunpack.c.l.b16 %v7915
  %v7980 = vunpack.c.h.b16 %v7915
  %v7981 = vunpack.c.l.b16 %v7916
  %v7982 = vunpack.c.h.b16 %v7916
  %v7983 = vunpack.c.l.b16 %v7917
  %v7984 = vunpack.c.h.b16 %v7917
  %v7985 = vunpack.c.l.b16 %v7918
  %v7986 = vunpack.c.h.b16 %v7918
  %v7987 = vunpack.c.l.b16 %v7919
  %v7988 = vunpack.c.h.b16 %v7919
  %v7989 = vunpack.c.l.b16 %v7920
  %v7990 = vunpack.c.h.b16 %v7920
  %v7991 = vunpack.c.l.b16 %v7921
  %v7992 = vunpack.c.h.b16 %v7921
  %v7993 = vunpack.c.l.b16 %v7922
  %v7994 = vunpack.c.h.b16 %v7922
  %v7995 = vunpack.c.l.b16 %v7923
  %v7996 = vunpack.c.h.b16 %v7923
  %v7997 = vunpack.c.l.b16 %v7924
  %v7998 = vunpack.c.h.b16 %v7924
  %v7999 = vunpack.c.l.b16 %v7925
  %v8000 = vunpack.c.h.b16 %v7925
  %v8001 = vunpack.c.l.b16 %v7926
  %v8002 = vunpack.c.h.b16 %v7926
  %v8003 = vunpack.c.l.b16 %v7927
  %v8004 = vunpack.c.h.b16 %v7927
  %v8005 = vunpack.c.l.b16 %v7928
  %v8006 = vunpack.c.h.b16 %v7928
  %v8007 = vunpack.c.l.b16 %v7929
  %v8008 = vunpack.c.h.b16 %v7929
  %v8009 = vunpack.c.l.b16 %v7930
  %v8010 = vunpack.c.h.b16 %v7930
  %v8011 = vunpack.c.l.b16 %v7931
  %v8012 = vunpack.c.h.b16 %v7931
  %v8013 = vunpack.c.l.b16 %v7932
  %v8014 = vunpack.c.h.b16 %v7932
  %v8015 = vunpack.c.l.b16 %v7933
  %v8016 = vunpack.c.h.b16 %v7933
  %v8017 = vunpack.c.l.b16 %v7934
  %v8018 = vunpack.c.h.b16 %v7934
  %v8019 = vunpack.c.l.b16 %v7935
  %v8020 = vunpack.c.h.b16 %v7935
  %v8021 = vunpack.c.l.b16 %v7936
  %v8022 = vunpack.c.h.b16 %v7936
  %v8023 = vunpack.c.l.b16 %v7937
  %v8024 = vunpack.c.h.b16 %v7937
  %v8025 = vunpack.c.l.b16 %v7938
  %v8026 = vunpack.c.h.b16 %v7938
  %v8027 = vunpack.c.l.b16 %v7939
  %v8028 = vunpack.c.h.b16 %v7939
  %v8029 = vunpack.c.l.b16 %v7940
  %v8030 = vunpack.c.h.b16 %v7940
  %v8031 = vunpack.c.l.b16 %v7941
  %v8032 = vunpack.c.h.b16 %v7941
  %v8033 = vunpack.c.l.b16 %v7942
  %v8034 = vunpack.c.h.b16 %v7942
  %v8035 = vunpack.c.l.b16 %v7943
  %v8036 = vunpack.c.h.b16 %v7943
  %v8037 = vunpack.c.l.b16 %v7944
  %v8038 = vunpack.c.h.b16 %v7944
  %v8039 = vunpack.c.l.b16 %v7945
  %v8040 = vunpack.c.h.b16 %v7945
  %v8041 = vunpack.c.l.b16 %v7946
  %v8042 = vunpack.c.h.b16 %v7946
  %v8043 = vpack.c.b16 %v7983, %v7979
  %v8044 = vpack.c.b16 %v7984, %v7980
  %v8045 = vpack.c.b16 %v7985, %v7981
  %v8046 = vpack.c.b16 %v7986, %v7982
  %v8047 = vpack.c.b16 %v7991, %v7987
  %v8048 = vpack.c.b16 %v7992, %v7988
  %v8049 = vpack.c.b16 %v7993, %v7989
  %v8050 = vpack.c.b16 %v7994, %v7990
  %v8051 = vpack.c.b16 %v7999, %v7995
  %v8052 = vpack.c.b16 %v8000, %v7996
  %v8053 = vpack.c.b16 %v8001, %v7997
  %v8054 = vpack.c.b16 %v8002, %v7998
  %v8055 = vpack.c.b16 %v8007, %v8003
  %v8056 = vpack.c.b16 %v8008, %v8004
  %v8057 = vpack.c.b16 %v8009, %v8005
  %v8058 = vpack.c.b16 %v8010, %v8006
  %v8059 = vpack.c.b16 %v8015, %v8011
  %v8060 = vpack.c.b16 %v8016, %v8012
  %v8061 = vpack.c.b16 %v8017, %v8013
  %v8062 = vpack.c.b16 %v8018, %v8014
  %v8063 = vpack.c.b16 %v8023, %v8019
  %v8064 = vpack.c.b16 %v8024, %v8020
  %v8065 = vpack.c.b16 %v8025, %v8021
  %v8066 = vpack.c.b16 %v8026, %v8022
  %v8067 = vpack.c.b16 %v8031, %v8027
  %v8068 = vpack.c.b16 %v8032, %v8028
  %v8069 = vpack.c.b16 %v8033, %v8029
  %v8070 = vpack.c.b16 %v8034, %v8030
  %v8071 = vpack.c.b16 %v8039, %v8035
  %v8072 = vpack.c.b16 %v8040, %v8036
  %v8073 = vpack.c.b16 %v8041, %v8037
  %v8074 = vpack.c.b16 %v8042, %v8038
  %8107 = vmatprep.subr.bf16.mxu0 %v8044
  %8108 = vmatpush1.bf16.msra.mxu0 %v8043
  %8109 = vmatprep.subr.bf16.mxu0 %v8048
  %8110 = vmatpush1.bf16.msra.mxu0 %v8047
  %8111 = vmatprep.subr.bf16.mxu0 %v8052
  %8112 = vmatpush1.bf16.msra.mxu0 %v8051
  %8113 = vmatprep.subr.bf16.mxu0 %v8056
  %8114 = vmatpush1.bf16.msra.mxu0 %v8055
  %8115 = vmatprep.subr.bf16.mxu0 %v8060
  %8116 = vmatpush1.bf16.msra.mxu0 %v8059
  %8117 = vmatprep.subr.bf16.mxu0 %v8064
  %8118 = vmatpush1.bf16.msra.mxu0 %v8063
  %8119 = vmatprep.subr.bf16.mxu0 %v8068
  %8120 = vmatpush1.bf16.msra.mxu0 %v8067
  %8121 = vmatprep.subr.bf16.mxu0 %v8072
  %8122 = vmatpush1.bf16.msra.mxu0 %v8071
  %8123 = vmatprep.subr.bf16.mxu0 0
  %8124 = vmatpush1.bf16.msra.mxu0 0
  %8125 = vmatprep.subr.bf16.mxu0 0
  %8126 = vmatpush1.bf16.msra.mxu0 0
  %8127 = vmatprep.subr.bf16.mxu0 0
  %8128 = vmatpush1.bf16.msra.mxu0 0
  %8129 = vmatprep.subr.bf16.mxu0 0
  %8130 = vmatpush1.bf16.msra.mxu0 0
  %8131 = vmatprep.subr.bf16.mxu0 0
  %8132 = vmatpush1.bf16.msra.mxu0 0
  %8133 = vmatprep.subr.bf16.mxu0 0
  %8134 = vmatpush1.bf16.msra.mxu0 0
  %8135 = vmatprep.subr.bf16.mxu0 0
  %8136 = vmatpush1.bf16.msra.mxu0 0
  %8137 = vmatprep.subr.bf16.mxu0 0
  %8138 = vmatpush1.bf16.msra.mxu0 0
  %8139 = vmatprep.mubr.bf16.mxu0 0
  %8140 = vmatmul.mubr.bf16.gmra.mrb[0].mxu0 %v7914
  %v8141 = vpop.f32.mrb[0].mxu0
  %v8142 = vadd.f32 0.0, %v8141
  %v8143 = vpop.f32.mrb[0].mxu0
  %v8144 = vadd.f32 0.0, %v8143
  %v8145 = vpop.f32.mrb[0].mxu0
  %v8146 = vpop.f32.mrb[0].mxu0
  %8147 = vdwg.mxu0
  %8148 = vmatprep.subr.bf16.mxu0 %v8046
  %8149 = vmatpush1.bf16.msra.mxu0 %v8045
  %8150 = vmatprep.subr.bf16.mxu0 %v8050
  %8151 = vmatpush1.bf16.msra.mxu0 %v8049
  %8152 = vmatprep.subr.bf16.mxu0 %v8054
  %8153 = vmatpush1.bf16.msra.mxu0 %v8053
  %8154 = vmatprep.subr.bf16.mxu0 %v8058
  %8155 = vmatpush1.bf16.msra.mxu0 %v8057
  %8156 = vmatprep.subr.bf16.mxu0 %v8062
  %8157 = vmatpush1.bf16.msra.mxu0 %v8061
  %8158 = vmatprep.subr.bf16.mxu0 %v8066
  %8159 = vmatpush1.bf16.msra.mxu0 %v8065
  %8160 = vmatprep.subr.bf16.mxu0 %v8070
  %8161 = vmatpush1.bf16.msra.mxu0 %v8069
  %8162 = vmatprep.subr.bf16.mxu0 %v8074
  %8163 = vmatpush1.bf16.msra.mxu0 %v8073
  %8164 = vmatprep.subr.bf16.mxu0 0
  %8165 = vmatpush1.bf16.msra.mxu0 0
  %8166 = vmatprep.subr.bf16.mxu0 0
  %8167 = vmatpush1.bf16.msra.mxu0 0
  %8168 = vmatprep.subr.bf16.mxu0 0
  %8169 = vmatpush1.bf16.msra.mxu0 0
  %8170 = vmatprep.subr.bf16.mxu0 0
  %8171 = vmatpush1.bf16.msra.mxu0 0
  %8172 = vmatprep.subr.bf16.mxu0 0
  %8173 = vmatpush1.bf16.msra.mxu0 0
  %8174 = vmatprep.subr.bf16.mxu0 0
  %8175 = vmatpush1.bf16.msra.mxu0 0
  %8176 = vmatprep.subr.bf16.mxu0 0
  %8177 = vmatpush1.bf16.msra.mxu0 0
  %8178 = vmatprep.subr.bf16.mxu0 0
  %8179 = vmatpush1.bf16.msra.mxu0 0
  %8180 = vmatprep.mubr.bf16.mxu0 0
  %8181 = vmatmul.mubr.bf16.gmra.mrb[0].mxu0 %v7914
  %v8182 = vpop.f32.mrb[0].mxu0
  %v8183 = vadd.f32 0.0, %v8182
  %v8184 = vpop.f32.mrb[0].mxu0
  %v8185 = vadd.f32 0.0, %v8184
  %v8186 = vpop.f32.mrb[0].mxu0
  %v8187 = vpop.f32.mrb[0].mxu0
  %8188 = vdwg.mxu0
  %v8189 = vadd.f32 %v7909, %v8142
  %v8190 = vadd.f32 %v7910, %v8144
  %v8191 = vadd.f32 %v7911, %v8183
  %v8192 = vadd.f32 %v7912, %v8185
  %v8193 = vxor.u32 %v8189, 2147483648
  %v8194 = vxor.u32 %v8190, 2147483648
  %v8195 = vmul.f32 %v8193, 1.442695
  %v8196 = vpow.pop %v8195
  %v8197 = vmul.f32 %v8194, 1.442695
  %v8198 = vpow.pop %v8197
  %v8199 = vadd.f32 %v8196, 1.0
  %v8200 = vadd.f32 %v8198, 1.0
  %v8201 = vrcp.pop %v8199
  %v8202 = vmul.f32 1.0, %v8201
  %v8203 = vrcp.pop %v8200
  %v8204 = vmul.f32 1.0, %v8203
  %v8205 = vtanh.pop %v8191
  %v8206 = vxor.u32 %v8192, 2147483648
  %v8207 = vmul.f32 %v8206, 1.442695
  %v8208 = vpow.pop %v8207
  %v8209 = vadd.f32 %v8208, 1.0
  %v8210 = vrcp.pop %v8209
  %v8211 = vmul.f32 1.0, %v8210
  %v8212 = vld [vmem:[#allocation3] sm:$0xff]
  %v8213 = vmul.f32 %v8204, %v8212
  %v8214 = vmul.f32 %v8202, %v8205
  %v8215 = vadd.f32 %v8213, %v8214
  %v8216 = vtanh.pop %v8215
  %v8217 = vmul.f32 %v8211, %v8216
  %8218 = vst [vmem:[#allocation3] sm:$0xff] %v8215
  %8219 = vst [vmem:[#allocation2] sm:$0xff] %v8217
  %vm8220 = vcmp.eq.s32.totalorder %v6619, 5
  %v8221 = vld [vmem:[#allocation4] sm:$0xff]
  %v8222 = vsel %vm8220, 1, 0
  %8223 = vset.pattern.permute.xlu0 0
  %8224 = vperm.xlu0 %8223, %v8222
  %v8225 = vpop.permute.xlu0 %8224
  %vm8226 = vcmp.eq.s32.totalorder %v8225, 1
  %v8227 = vsel %vm8226, %v8217, %v8221
  %8228 = vst [vmem:[#allocation4] sm:$0xff] %v8227
  %v8229 = vld [vmem:[%s2370] sm:$0xff]
  %v8230 = vld [vmem:[%s2370 + $0x8] sm:$0xff]
  %v8231 = vld [vmem:[%s2370 + $0x10] sm:$0xff]
  %v8232 = vld [vmem:[%s2370 + $0x18] sm:$0xff]
  %v8233 = vld [vmem:[#allocation2] sm:$0xff]
  %v8234 = vpack.c.bf16 %v8233, %v8233
  %v8235 = vld [vmem:[%s9] sm:$0xff]
  %v8236 = vld [vmem:[%s9 + $0x8] sm:$0xff]
  %v8237 = vld [vmem:[%s9 + $0x10] sm:$0xff]
  %v8238 = vld [vmem:[%s9 + $0x18] sm:$0xff]
  %v8239 = vld [vmem:[%s9 + $0x20] sm:$0xff]
  %v8240 = vld [vmem:[%s9 + $0x28] sm:$0xff]
  %v8241 = vld [vmem:[%s9 + $0x30] sm:$0xff]
  %v8242 = vld [vmem:[%s9 + $0x38] sm:$0xff]
  %v8243 = vld [vmem:[%s9 + $0x40] sm:$0xff]
  %v8244 = vld [vmem:[%s9 + $0x48] sm:$0xff]
  %v8245 = vld [vmem:[%s9 + $0x50] sm:$0xff]
  %v8246 = vld [vmem:[%s9 + $0x58] sm:$0xff]
  %v8247 = vld [vmem:[%s9 + $0x60] sm:$0xff]
  %v8248 = vld [vmem:[%s9 + $0x68] sm:$0xff]
  %v8249 = vld [vmem:[%s9 + $0x70] sm:$0xff]
  %v8250 = vld [vmem:[%s9 + $0x78] sm:$0xff]
  %v8251 = vld [vmem:[%s9 + $0x80] sm:$0xff]
  %v8252 = vld [vmem:[%s9 + $0x88] sm:$0xff]
  %v8253 = vld [vmem:[%s9 + $0x90] sm:$0xff]
  %v8254 = vld [vmem:[%s9 + $0x98] sm:$0xff]
  %v8255 = vld [vmem:[%s9 + $0xa0] sm:$0xff]
  %v8256 = vld [vmem:[%s9 + $0xa8] sm:$0xff]
  %v8257 = vld [vmem:[%s9 + $0xb0] sm:$0xff]
  %v8258 = vld [vmem:[%s9 + $0xb8] sm:$0xff]
  %v8259 = vld [vmem:[%s9 + $0xc0] sm:$0xff]
  %v8260 = vld [vmem:[%s9 + $0xc8] sm:$0xff]
  %v8261 = vld [vmem:[%s9 + $0xd0] sm:$0xff]
  %v8262 = vld [vmem:[%s9 + $0xd8] sm:$0xff]
  %v8263 = vld [vmem:[%s9 + $0xe0] sm:$0xff]
  %v8264 = vld [vmem:[%s9 + $0xe8] sm:$0xff]
  %v8265 = vld [vmem:[%s9 + $0xf0] sm:$0xff]
  %v8266 = vld [vmem:[%s9 + $0xf8] sm:$0xff]
  %v8299 = vunpack.c.l.b16 %v8235
  %v8300 = vunpack.c.h.b16 %v8235
  %v8301 = vunpack.c.l.b16 %v8236
  %v8302 = vunpack.c.h.b16 %v8236
  %v8303 = vunpack.c.l.b16 %v8237
  %v8304 = vunpack.c.h.b16 %v8237
  %v8305 = vunpack.c.l.b16 %v8238
  %v8306 = vunpack.c.h.b16 %v8238
  %v8307 = vunpack.c.l.b16 %v8239
  %v8308 = vunpack.c.h.b16 %v8239
  %v8309 = vunpack.c.l.b16 %v8240
  %v8310 = vunpack.c.h.b16 %v8240
  %v8311 = vunpack.c.l.b16 %v8241
  %v8312 = vunpack.c.h.b16 %v8241
  %v8313 = vunpack.c.l.b16 %v8242
  %v8314 = vunpack.c.h.b16 %v8242
  %v8315 = vunpack.c.l.b16 %v8243
  %v8316 = vunpack.c.h.b16 %v8243
  %v8317 = vunpack.c.l.b16 %v8244
  %v8318 = vunpack.c.h.b16 %v8244
  %v8319 = vunpack.c.l.b16 %v8245
  %v8320 = vunpack.c.h.b16 %v8245
  %v8321 = vunpack.c.l.b16 %v8246
  %v8322 = vunpack.c.h.b16 %v8246
  %v8323 = vunpack.c.l.b16 %v8247
  %v8324 = vunpack.c.h.b16 %v8247
  %v8325 = vunpack.c.l.b16 %v8248
  %v8326 = vunpack.c.h.b16 %v8248
  %v8327 = vunpack.c.l.b16 %v8249
  %v8328 = vunpack.c.h.b16 %v8249
  %v8329 = vunpack.c.l.b16 %v8250
  %v8330 = vunpack.c.h.b16 %v8250
  %v8331 = vunpack.c.l.b16 %v8251
  %v8332 = vunpack.c.h.b16 %v8251
  %v8333 = vunpack.c.l.b16 %v8252
  %v8334 = vunpack.c.h.b16 %v8252
  %v8335 = vunpack.c.l.b16 %v8253
  %v8336 = vunpack.c.h.b16 %v8253
  %v8337 = vunpack.c.l.b16 %v8254
  %v8338 = vunpack.c.h.b16 %v8254
  %v8339 = vunpack.c.l.b16 %v8255
  %v8340 = vunpack.c.h.b16 %v8255
  %v8341 = vunpack.c.l.b16 %v8256
  %v8342 = vunpack.c.h.b16 %v8256
  %v8343 = vunpack.c.l.b16 %v8257
  %v8344 = vunpack.c.h.b16 %v8257
  %v8345 = vunpack.c.l.b16 %v8258
  %v8346 = vunpack.c.h.b16 %v8258
  %v8347 = vunpack.c.l.b16 %v8259
  %v8348 = vunpack.c.h.b16 %v8259
  %v8349 = vunpack.c.l.b16 %v8260
  %v8350 = vunpack.c.h.b16 %v8260
  %v8351 = vunpack.c.l.b16 %v8261
  %v8352 = vunpack.c.h.b16 %v8261
  %v8353 = vunpack.c.l.b16 %v8262
  %v8354 = vunpack.c.h.b16 %v8262
  %v8355 = vunpack.c.l.b16 %v8263
  %v8356 = vunpack.c.h.b16 %v8263
  %v8357 = vunpack.c.l.b16 %v8264
  %v8358 = vunpack.c.h.b16 %v8264
  %v8359 = vunpack.c.l.b16 %v8265
  %v8360 = vunpack.c.h.b16 %v8265
  %v8361 = vunpack.c.l.b16 %v8266
  %v8362 = vunpack.c.h.b16 %v8266
  %v8363 = vpack.c.b16 %v8303, %v8299
  %v8364 = vpack.c.b16 %v8304, %v8300
  %v8365 = vpack.c.b16 %v8305, %v8301
  %v8366 = vpack.c.b16 %v8306, %v8302
  %v8367 = vpack.c.b16 %v8311, %v8307
  %v8368 = vpack.c.b16 %v8312, %v8308
  %v8369 = vpack.c.b16 %v8313, %v8309
  %v8370 = vpack.c.b16 %v8314, %v8310
  %v8371 = vpack.c.b16 %v8319, %v8315
  %v8372 = vpack.c.b16 %v8320, %v8316
  %v8373 = vpack.c.b16 %v8321, %v8317
  %v8374 = vpack.c.b16 %v8322, %v8318
  %v8375 = vpack.c.b16 %v8327, %v8323
  %v8376 = vpack.c.b16 %v8328, %v8324
  %v8377 = vpack.c.b16 %v8329, %v8325
  %v8378 = vpack.c.b16 %v8330, %v8326
  %v8379 = vpack.c.b16 %v8335, %v8331
  %v8380 = vpack.c.b16 %v8336, %v8332
  %v8381 = vpack.c.b16 %v8337, %v8333
  %v8382 = vpack.c.b16 %v8338, %v8334
  %v8383 = vpack.c.b16 %v8343, %v8339
  %v8384 = vpack.c.b16 %v8344, %v8340
  %v8385 = vpack.c.b16 %v8345, %v8341
  %v8386 = vpack.c.b16 %v8346, %v8342
  %v8387 = vpack.c.b16 %v8351, %v8347
  %v8388 = vpack.c.b16 %v8352, %v8348
  %v8389 = vpack.c.b16 %v8353, %v8349
  %v8390 = vpack.c.b16 %v8354, %v8350
  %v8391 = vpack.c.b16 %v8359, %v8355
  %v8392 = vpack.c.b16 %v8360, %v8356
  %v8393 = vpack.c.b16 %v8361, %v8357
  %v8394 = vpack.c.b16 %v8362, %v8358
  %8427 = vmatprep.subr.bf16.mxu0 %v8364
  %8428 = vmatpush1.bf16.msra.mxu0 %v8363
  %8429 = vmatprep.subr.bf16.mxu0 %v8368
  %8430 = vmatpush1.bf16.msra.mxu0 %v8367
  %8431 = vmatprep.subr.bf16.mxu0 %v8372
  %8432 = vmatpush1.bf16.msra.mxu0 %v8371
  %8433 = vmatprep.subr.bf16.mxu0 %v8376
  %8434 = vmatpush1.bf16.msra.mxu0 %v8375
  %8435 = vmatprep.subr.bf16.mxu0 %v8380
  %8436 = vmatpush1.bf16.msra.mxu0 %v8379
  %8437 = vmatprep.subr.bf16.mxu0 %v8384
  %8438 = vmatpush1.bf16.msra.mxu0 %v8383
  %8439 = vmatprep.subr.bf16.mxu0 %v8388
  %8440 = vmatpush1.bf16.msra.mxu0 %v8387
  %8441 = vmatprep.subr.bf16.mxu0 %v8392
  %8442 = vmatpush1.bf16.msra.mxu0 %v8391
  %8443 = vmatprep.subr.bf16.mxu0 0
  %8444 = vmatpush1.bf16.msra.mxu0 0
  %8445 = vmatprep.subr.bf16.mxu0 0
  %8446 = vmatpush1.bf16.msra.mxu0 0
  %8447 = vmatprep.subr.bf16.mxu0 0
  %8448 = vmatpush1.bf16.msra.mxu0 0
  %8449 = vmatprep.subr.bf16.mxu0 0
  %8450 = vmatpush1.bf16.msra.mxu0 0
  %8451 = vmatprep.subr.bf16.mxu0 0
  %8452 = vmatpush1.bf16.msra.mxu0 0
  %8453 = vmatprep.subr.bf16.mxu0 0
  %8454 = vmatpush1.bf16.msra.mxu0 0
  %8455 = vmatprep.subr.bf16.mxu0 0
  %8456 = vmatpush1.bf16.msra.mxu0 0
  %8457 = vmatprep.subr.bf16.mxu0 0
  %8458 = vmatpush1.bf16.msra.mxu0 0
  %8459 = vmatprep.mubr.bf16.mxu0 0
  %8460 = vmatmul.mubr.bf16.gmra.mrb[0].mxu0 %v8234
  %v8461 = vpop.f32.mrb[0].mxu0
  %v8462 = vadd.f32 0.0, %v8461
  %v8463 = vpop.f32.mrb[0].mxu0
  %v8464 = vadd.f32 0.0, %v8463
  %v8465 = vpop.f32.mrb[0].mxu0
  %v8466 = vpop.f32.mrb[0].mxu0
  %8467 = vdwg.mxu0
  %8468 = vmatprep.subr.bf16.mxu0 %v8366
  %8469 = vmatpush1.bf16.msra.mxu0 %v8365
  %8470 = vmatprep.subr.bf16.mxu0 %v8370
  %8471 = vmatpush1.bf16.msra.mxu0 %v8369
  %8472 = vmatprep.subr.bf16.mxu0 %v8374
  %8473 = vmatpush1.bf16.msra.mxu0 %v8373
  %8474 = vmatprep.subr.bf16.mxu0 %v8378
  %8475 = vmatpush1.bf16.msra.mxu0 %v8377
  %8476 = vmatprep.subr.bf16.mxu0 %v8382
  %8477 = vmatpush1.bf16.msra.mxu0 %v8381
  %8478 = vmatprep.subr.bf16.mxu0 %v8386
  %8479 = vmatpush1.bf16.msra.mxu0 %v8385
  %8480 = vmatprep.subr.bf16.mxu0 %v8390
  %8481 = vmatpush1.bf16.msra.mxu0 %v8389
  %8482 = vmatprep.subr.bf16.mxu0 %v8394
  %8483 = vmatpush1.bf16.msra.mxu0 %v8393
  %8484 = vmatprep.subr.bf16.mxu0 0
  %8485 = vmatpush1.bf16.msra.mxu0 0
  %8486 = vmatprep.subr.bf16.mxu0 0
  %8487 = vmatpush1.bf16.msra.mxu0 0
  %8488 = vmatprep.subr.bf16.mxu0 0
  %8489 = vmatpush1.bf16.msra.mxu0 0
  %8490 = vmatprep.subr.bf16.mxu0 0
  %8491 = vmatpush1.bf16.msra.mxu0 0
  %8492 = vmatprep.subr.bf16.mxu0 0
  %8493 = vmatpush1.bf16.msra.mxu0 0
  %8494 = vmatprep.subr.bf16.mxu0 0
  %8495 = vmatpush1.bf16.msra.mxu0 0
  %8496 = vmatprep.subr.bf16.mxu0 0
  %8497 = vmatpush1.bf16.msra.mxu0 0
  %8498 = vmatprep.subr.bf16.mxu0 0
  %8499 = vmatpush1.bf16.msra.mxu0 0
  %8500 = vmatprep.mubr.bf16.mxu0 0
  %8501 = vmatmul.mubr.bf16.gmra.mrb[0].mxu0 %v8234
  %v8502 = vpop.f32.mrb[0].mxu0
  %v8503 = vadd.f32 0.0, %v8502
  %v8504 = vpop.f32.mrb[0].mxu0
  %v8505 = vadd.f32 0.0, %v8504
  %v8506 = vpop.f32.mrb[0].mxu0
  %v8507 = vpop.f32.mrb[0].mxu0
  %8508 = vdwg.mxu0
  %v8509 = vadd.f32 %v8229, %v8462
  %v8510 = vadd.f32 %v8230, %v8464
  %v8511 = vadd.f32 %v8231, %v8503
  %v8512 = vadd.f32 %v8232, %v8505
  %v8513 = vxor.u32 %v8509, 2147483648
  %v8514 = vxor.u32 %v8510, 2147483648
  %v8515 = vmul.f32 %v8513, 1.442695
  %v8516 = vpow.pop %v8515
  %v8517 = vmul.f32 %v8514, 1.442695
  %v8518 = vpow.pop %v8517
  %v8519 = vadd.f32 %v8516, 1.0
  %v8520 = vadd.f32 %v8518, 1.0
  %v8521 = vrcp.pop %v8519
  %v8522 = vmul.f32 1.0, %v8521
  %v8523 = vrcp.pop %v8520
  %v8524 = vmul.f32 1.0, %v8523
  %v8525 = vtanh.pop %v8511
  %v8526 = vxor.u32 %v8512, 2147483648
  %v8527 = vmul.f32 %v8526, 1.442695
  %v8528 = vpow.pop %v8527
  %v8529 = vadd.f32 %v8528, 1.0
  %v8530 = vrcp.pop %v8529
  %v8531 = vmul.f32 1.0, %v8530
  %v8532 = vld [vmem:[#allocation3] sm:$0xff]
  %v8533 = vmul.f32 %v8524, %v8532
  %v8534 = vmul.f32 %v8522, %v8525
  %v8535 = vadd.f32 %v8533, %v8534
  %v8536 = vtanh.pop %v8535
  %v8537 = vmul.f32 %v8531, %v8536
  %8538 = vst [vmem:[#allocation3] sm:$0xff] %v8535
  %8539 = vst [vmem:[#allocation2] sm:$0xff] %v8537
  %vm8540 = vcmp.eq.s32.totalorder %v6619, 6
  %v8541 = vld [vmem:[#allocation4] sm:$0xff]
  %v8542 = vsel %vm8540, 1, 0
  %8543 = vset.pattern.permute.xlu0 0
  %8544 = vperm.xlu0 %8543, %v8542
  %v8545 = vpop.permute.xlu0 %8544
  %vm8546 = vcmp.eq.s32.totalorder %v8545, 1
  %v8547 = vsel %vm8546, %v8537, %v8541
  %8548 = vst [vmem:[#allocation4] sm:$0xff] %v8547
  %v8549 = vld [vmem:[%s2686] sm:$0xff]
  %v8550 = vld [vmem:[%s2686 + $0x8] sm:$0xff]
  %v8551 = vld [vmem:[%s2686 + $0x10] sm:$0xff]
  %v8552 = vld [vmem:[%s2686 + $0x18] sm:$0xff]
  %v8553 = vld [vmem:[#allocation2] sm:$0xff]
  %v8554 = vpack.c.bf16 %v8553, %v8553
  %v8555 = vld [vmem:[%s9] sm:$0xff]
  %v8556 = vld [vmem:[%s9 + $0x8] sm:$0xff]
  %v8557 = vld [vmem:[%s9 + $0x10] sm:$0xff]
  %v8558 = vld [vmem:[%s9 + $0x18] sm:$0xff]
  %v8559 = vld [vmem:[%s9 + $0x20] sm:$0xff]
  %v8560 = vld [vmem:[%s9 + $0x28] sm:$0xff]
  %v8561 = vld [vmem:[%s9 + $0x30] sm:$0xff]
  %v8562 = vld [vmem:[%s9 + $0x38] sm:$0xff]
  %v8563 = vld [vmem:[%s9 + $0x40] sm:$0xff]
  %v8564 = vld [vmem:[%s9 + $0x48] sm:$0xff]
  %v8565 = vld [vmem:[%s9 + $0x50] sm:$0xff]
  %v8566 = vld [vmem:[%s9 + $0x58] sm:$0xff]
  %v8567 = vld [vmem:[%s9 + $0x60] sm:$0xff]
  %v8568 = vld [vmem:[%s9 + $0x68] sm:$0xff]
  %v8569 = vld [vmem:[%s9 + $0x70] sm:$0xff]
  %v8570 = vld [vmem:[%s9 + $0x78] sm:$0xff]
  %v8571 = vld [vmem:[%s9 + $0x80] sm:$0xff]
  %v8572 = vld [vmem:[%s9 + $0x88] sm:$0xff]
  %v8573 = vld [vmem:[%s9 + $0x90] sm:$0xff]
  %v8574 = vld [vmem:[%s9 + $0x98] sm:$0xff]
  %v8575 = vld [vmem:[%s9 + $0xa0] sm:$0xff]
  %v8576 = vld [vmem:[%s9 + $0xa8] sm:$0xff]
  %v8577 = vld [vmem:[%s9 + $0xb0] sm:$0xff]
  %v8578 = vld [vmem:[%s9 + $0xb8] sm:$0xff]
  %v8579 = vld [vmem:[%s9 + $0xc0] sm:$0xff]
  %v8580 = vld [vmem:[%s9 + $0xc8] sm:$0xff]
  %v8581 = vld [vmem:[%s9 + $0xd0] sm:$0xff]
  %v8582 = vld [vmem:[%s9 + $0xd8] sm:$0xff]
  %v8583 = vld [vmem:[%s9 + $0xe0] sm:$0xff]
  %v8584 = vld [vmem:[%s9 + $0xe8] sm:$0xff]
  %v8585 = vld [vmem:[%s9 + $0xf0] sm:$0xff]
  %v8586 = vld [vmem:[%s9 + $0xf8] sm:$0xff]
  %v8619 = vunpack.c.l.b16 %v8555
  %v8620 = vunpack.c.h.b16 %v8555
  %v8621 = vunpack.c.l.b16 %v8556
  %v8622 = vunpack.c.h.b16 %v8556
  %v8623 = vunpack.c.l.b16 %v8557
  %v8624 = vunpack.c.h.b16 %v8557
  %v8625 = vunpack.c.l.b16 %v8558
  %v8626 = vunpack.c.h.b16 %v8558
  %v8627 = vunpack.c.l.b16 %v8559
  %v8628 = vunpack.c.h.b16 %v8559
  %v8629 = vunpack.c.l.b16 %v8560
  %v8630 = vunpack.c.h.b16 %v8560
  %v8631 = vunpack.c.l.b16 %v8561
  %v8632 = vunpack.c.h.b16 %v8561
  %v8633 = vunpack.c.l.b16 %v8562
  %v8634 = vunpack.c.h.b16 %v8562
  %v8635 = vunpack.c.l.b16 %v8563
  %v8636 = vunpack.c.h.b16 %v8563
  %v8637 = vunpack.c.l.b16 %v8564
  %v8638 = vunpack.c.h.b16 %v8564
  %v8639 = vunpack.c.l.b16 %v8565
  %v8640 = vunpack.c.h.b16 %v8565
  %v8641 = vunpack.c.l.b16 %v8566
  %v8642 = vunpack.c.h.b16 %v8566
  %v8643 = vunpack.c.l.b16 %v8567
  %v8644 = vunpack.c.h.b16 %v8567
  %v8645 = vunpack.c.l.b16 %v8568
  %v8646 = vunpack.c.h.b16 %v8568
  %v8647 = vunpack.c.l.b16 %v8569
  %v8648 = vunpack.c.h.b16 %v8569
  %v8649 = vunpack.c.l.b16 %v8570
  %v8650 = vunpack.c.h.b16 %v8570
  %v8651 = vunpack.c.l.b16 %v8571
  %v8652 = vunpack.c.h.b16 %v8571
  %v8653 = vunpack.c.l.b16 %v8572
  %v8654 = vunpack.c.h.b16 %v8572
  %v8655 = vunpack.c.l.b16 %v8573
  %v8656 = vunpack.c.h.b16 %v8573
  %v8657 = vunpack.c.l.b16 %v8574
  %v8658 = vunpack.c.h.b16 %v8574
  %v8659 = vunpack.c.l.b16 %v8575
  %v8660 = vunpack.c.h.b16 %v8575
  %v8661 = vunpack.c.l.b16 %v8576
  %v8662 = vunpack.c.h.b16 %v8576
  %v8663 = vunpack.c.l.b16 %v8577
  %v8664 = vunpack.c.h.b16 %v8577
  %v8665 = vunpack.c.l.b16 %v8578
  %v8666 = vunpack.c.h.b16 %v8578
  %v8667 = vunpack.c.l.b16 %v8579
  %v8668 = vunpack.c.h.b16 %v8579
  %v8669 = vunpack.c.l.b16 %v8580
  %v8670 = vunpack.c.h.b16 %v8580
  %v8671 = vunpack.c.l.b16 %v8581
  %v8672 = vunpack.c.h.b16 %v8581
  %v8673 = vunpack.c.l.b16 %v8582
  %v8674 = vunpack.c.h.b16 %v8582
  %v8675 = vunpack.c.l.b16 %v8583
  %v8676 = vunpack.c.h.b16 %v8583
  %v8677 = vunpack.c.l.b16 %v8584
  %v8678 = vunpack.c.h.b16 %v8584
  %v8679 = vunpack.c.l.b16 %v8585
  %v8680 = vunpack.c.h.b16 %v8585
  %v8681 = vunpack.c.l.b16 %v8586
  %v8682 = vunpack.c.h.b16 %v8586
  %v8683 = vpack.c.b16 %v8623, %v8619
  %v8684 = vpack.c.b16 %v8624, %v8620
  %v8685 = vpack.c.b16 %v8625, %v8621
  %v8686 = vpack.c.b16 %v8626, %v8622
  %v8687 = vpack.c.b16 %v8631, %v8627
  %v8688 = vpack.c.b16 %v8632, %v8628
  %v8689 = vpack.c.b16 %v8633, %v8629
  %v8690 = vpack.c.b16 %v8634, %v8630
  %v8691 = vpack.c.b16 %v8639, %v8635
  %v8692 = vpack.c.b16 %v8640, %v8636
  %v8693 = vpack.c.b16 %v8641, %v8637
  %v8694 = vpack.c.b16 %v8642, %v8638
  %v8695 = vpack.c.b16 %v8647, %v8643
  %v8696 = vpack.c.b16 %v8648, %v8644
  %v8697 = vpack.c.b16 %v8649, %v8645
  %v8698 = vpack.c.b16 %v8650, %v8646
  %v8699 = vpack.c.b16 %v8655, %v8651
  %v8700 = vpack.c.b16 %v8656, %v8652
  %v8701 = vpack.c.b16 %v8657, %v8653
  %v8702 = vpack.c.b16 %v8658, %v8654
  %v8703 = vpack.c.b16 %v8663, %v8659
  %v8704 = vpack.c.b16 %v8664, %v8660
  %v8705 = vpack.c.b16 %v8665, %v8661
  %v8706 = vpack.c.b16 %v8666, %v8662
  %v8707 = vpack.c.b16 %v8671, %v8667
  %v8708 = vpack.c.b16 %v8672, %v8668
  %v8709 = vpack.c.b16 %v8673, %v8669
  %v8710 = vpack.c.b16 %v8674, %v8670
  %v8711 = vpack.c.b16 %v8679, %v8675
  %v8712 = vpack.c.b16 %v8680, %v8676
  %v8713 = vpack.c.b16 %v8681, %v8677
  %v8714 = vpack.c.b16 %v8682, %v8678
  %8747 = vmatprep.subr.bf16.mxu0 %v8684
  %8748 = vmatpush1.bf16.msra.mxu0 %v8683
  %8749 = vmatprep.subr.bf16.mxu0 %v8688
  %8750 = vmatpush1.bf16.msra.mxu0 %v8687
  %8751 = vmatprep.subr.bf16.mxu0 %v8692
  %8752 = vmatpush1.bf16.msra.mxu0 %v8691
  %8753 = vmatprep.subr.bf16.mxu0 %v8696
  %8754 = vmatpush1.bf16.msra.mxu0 %v8695
  %8755 = vmatprep.subr.bf16.mxu0 %v8700
  %8756 = vmatpush1.bf16.msra.mxu0 %v8699
  %8757 = vmatprep.subr.bf16.mxu0 %v8704
  %8758 = vmatpush1.bf16.msra.mxu0 %v8703
  %8759 = vmatprep.subr.bf16.mxu0 %v8708
  %8760 = vmatpush1.bf16.msra.mxu0 %v8707
  %8761 = vmatprep.subr.bf16.mxu0 %v8712
  %8762 = vmatpush1.bf16.msra.mxu0 %v8711
  %8763 = vmatprep.subr.bf16.mxu0 0
  %8764 = vmatpush1.bf16.msra.mxu0 0
  %8765 = vmatprep.subr.bf16.mxu0 0
  %8766 = vmatpush1.bf16.msra.mxu0 0
  %8767 = vmatprep.subr.bf16.mxu0 0
  %8768 = vmatpush1.bf16.msra.mxu0 0
  %8769 = vmatprep.subr.bf16.mxu0 0
  %8770 = vmatpush1.bf16.msra.mxu0 0
  %8771 = vmatprep.subr.bf16.mxu0 0
  %8772 = vmatpush1.bf16.msra.mxu0 0
  %8773 = vmatprep.subr.bf16.mxu0 0
  %8774 = vmatpush1.bf16.msra.mxu0 0
  %8775 = vmatprep.subr.bf16.mxu0 0
  %8776 = vmatpush1.bf16.msra.mxu0 0
  %8777 = vmatprep.subr.bf16.mxu0 0
  %8778 = vmatpush1.bf16.msra.mxu0 0
  %8779 = vmatprep.mubr.bf16.mxu0 0
  %8780 = vmatmul.mubr.bf16.gmra.mrb[0].mxu0 %v8554
  %v8781 = vpop.f32.mrb[0].mxu0
  %v8782 = vadd.f32 0.0, %v8781
  %v8783 = vpop.f32.mrb[0].mxu0
  %v8784 = vadd.f32 0.0, %v8783
  %v8785 = vpop.f32.mrb[0].mxu0
  %v8786 = vpop.f32.mrb[0].mxu0
  %8787 = vdwg.mxu0
  %8788 = vmatprep.subr.bf16.mxu0 %v8686
  %8789 = vmatpush1.bf16.msra.mxu0 %v8685
  %8790 = vmatprep.subr.bf16.mxu0 %v8690
  %8791 = vmatpush1.bf16.msra.mxu0 %v8689
  %8792 = vmatprep.subr.bf16.mxu0 %v8694
  %8793 = vmatpush1.bf16.msra.mxu0 %v8693
  %8794 = vmatprep.subr.bf16.mxu0 %v8698
  %8795 = vmatpush1.bf16.msra.mxu0 %v8697
  %8796 = vmatprep.subr.bf16.mxu0 %v8702
  %8797 = vmatpush1.bf16.msra.mxu0 %v8701
  %8798 = vmatprep.subr.bf16.mxu0 %v8706
  %8799 = vmatpush1.bf16.msra.mxu0 %v8705
  %8800 = vmatprep.subr.bf16.mxu0 %v8710
  %8801 = vmatpush1.bf16.msra.mxu0 %v8709
  %8802 = vmatprep.subr.bf16.mxu0 %v8714
  %8803 = vmatpush1.bf16.msra.mxu0 %v8713
  %8804 = vmatprep.subr.bf16.mxu0 0
  %8805 = vmatpush1.bf16.msra.mxu0 0
  %8806 = vmatprep.subr.bf16.mxu0 0
  %8807 = vmatpush1.bf16.msra.mxu0 0
  %8808 = vmatprep.subr.bf16.mxu0 0
  %8809 = vmatpush1.bf16.msra.mxu0 0
  %8810 = vmatprep.subr.bf16.mxu0 0
  %8811 = vmatpush1.bf16.msra.mxu0 0
  %8812 = vmatprep.subr.bf16.mxu0 0
  %8813 = vmatpush1.bf16.msra.mxu0 0
  %8814 = vmatprep.subr.bf16.mxu0 0
  %8815 = vmatpush1.bf16.msra.mxu0 0
  %8816 = vmatprep.subr.bf16.mxu0 0
  %8817 = vmatpush1.bf16.msra.mxu0 0
  %8818 = vmatprep.subr.bf16.mxu0 0
  %8819 = vmatpush1.bf16.msra.mxu0 0
  %8820 = vmatprep.mubr.bf16.mxu0 0
  %8821 = vmatmul.mubr.bf16.gmra.mrb[0].mxu0 %v8554
  %v8822 = vpop.f32.mrb[0].mxu0
  %v8823 = vadd.f32 0.0, %v8822
  %v8824 = vpop.f32.mrb[0].mxu0
  %v8825 = vadd.f32 0.0, %v8824
  %v8826 = vpop.f32.mrb[0].mxu0
  %v8827 = vpop.f32.mrb[0].mxu0
  %8828 = vdwg.mxu0
  %v8829 = vadd.f32 %v8549, %v8782
  %v8830 = vadd.f32 %v8550, %v8784
  %v8831 = vadd.f32 %v8551, %v8823
  %v8832 = vadd.f32 %v8552, %v8825
  %v8833 = vxor.u32 %v8829, 2147483648
  %v8834 = vxor.u32 %v8830, 2147483648
  %v8835 = vmul.f32 %v8833, 1.442695
  %v8836 = vpow.pop %v8835
  %v8837 = vmul.f32 %v8834, 1.442695
  %v8838 = vpow.pop %v8837
  %v8839 = vadd.f32 %v8836, 1.0
  %v8840 = vadd.f32 %v8838, 1.0
  %v8841 = vrcp.pop %v8839
  %v8842 = vmul.f32 1.0, %v8841
  %v8843 = vrcp.pop %v8840
  %v8844 = vmul.f32 1.0, %v8843
  %v8845 = vtanh.pop %v8831
  %v8846 = vxor.u32 %v8832, 2147483648
  %v8847 = vmul.f32 %v8846, 1.442695
  %v8848 = vpow.pop %v8847
  %v8849 = vadd.f32 %v8848, 1.0
  %v8850 = vrcp.pop %v8849
  %v8851 = vmul.f32 1.0, %v8850
  %v8852 = vld [vmem:[#allocation3] sm:$0xff]
  %v8853 = vmul.f32 %v8844, %v8852
  %v8854 = vmul.f32 %v8842, %v8845
  %v8855 = vadd.f32 %v8853, %v8854
  %v8856 = vtanh.pop %v8855
  %v8857 = vmul.f32 %v8851, %v8856
  %8858 = vst [vmem:[#allocation3] sm:$0xff] %v8855
  %8859 = vst [vmem:[#allocation2] sm:$0xff] %v8857
  %vm8860 = vcmp.eq.s32.totalorder %v6619, 7
  %v8861 = vld [vmem:[#allocation4] sm:$0xff]
  %v8862 = vsel %vm8860, 1, 0
  %8863 = vset.pattern.permute.xlu0 0
  %8864 = vperm.xlu0 %8863, %v8862
  %v8865 = vpop.permute.xlu0 %8864
  %vm8866 = vcmp.eq.s32.totalorder %v8865, 1
  %v8867 = vsel %vm8866, %v8857, %v8861
  %8868 = vst [vmem:[#allocation4] sm:$0xff] %v8867
  %v8869 = vld [vmem:[#allocation4] sm:$0xff]
  %v8870 = vld [vmem:[%s11] sm:$0xff]
  %v8871 = vld [vmem:[%s11 + $0x8] sm:$0xff]
  %v8872 = vld [vmem:[%s11 + $0x10] sm:$0xff]
  %v8873 = vld [vmem:[%s11 + $0x18] sm:$0xff]
  %v8874 = vld [vmem:[%s11 + $0x20] sm:$0xff]
  %v8875 = vld [vmem:[%s11 + $0x28] sm:$0xff]
  %v8876 = vld [vmem:[%s11 + $0x30] sm:$0xff]
  %v8877 = vld [vmem:[%s11 + $0x38] sm:$0xff]
  %v8878 = vld [vmem:[%s11 + $0x40] sm:$0xff]
  %v8879 = vld [vmem:[%s11 + $0x48] sm:$0xff]
  %v8880 = vld [vmem:[%s11 + $0x50] sm:$0xff]
  %v8881 = vld [vmem:[%s11 + $0x58] sm:$0xff]
  %v8882 = vld [vmem:[%s11 + $0x60] sm:$0xff]
  %v8883 = vld [vmem:[%s11 + $0x68] sm:$0xff]
  %v8884 = vld [vmem:[%s11 + $0x70] sm:$0xff]
  %v8885 = vld [vmem:[%s11 + $0x78] sm:$0xff]
  %v8886 = vld [vmem:[%s12] sm:$0x1]
  %v8888 = vlaneseq
  %v8889 = vshrl.u32 %v8888, 7
  %v8890 = vsub.s32 0, %v8889
  %v8891 = vrot.slane %v8886, %v8890
  %8893 = vmatprep.subr.mxu0 0.0
  %8894 = vmatpush1.msra.mxu0 %v8870
  %8895 = vmatprep.subr.mxu0 0.0
  %8896 = vmatpush1.msra.mxu0 %v8871
  %8897 = vmatprep.subr.mxu0 0.0
  %8898 = vmatpush1.msra.mxu0 %v8872
  %8899 = vmatprep.subr.mxu0 0.0
  %8900 = vmatpush1.msra.mxu0 %v8873
  %8901 = vmatprep.subr.mxu0 0.0
  %8902 = vmatpush1.msra.mxu0 %v8874
  %8903 = vmatprep.subr.mxu0 0.0
  %8904 = vmatpush1.msra.mxu0 %v8875
  %8905 = vmatprep.subr.mxu0 0.0
  %8906 = vmatpush1.msra.mxu0 %v8876
  %8907 = vmatprep.subr.mxu0 0.0
  %8908 = vmatpush1.msra.mxu0 %v8877
  %8909 = vmatprep.subr.mxu0 0.0
  %8910 = vmatpush1.msra.mxu0 %v8878
  %8911 = vmatprep.subr.mxu0 0.0
  %8912 = vmatpush1.msra.mxu0 %v8879
  %8913 = vmatprep.subr.mxu0 0.0
  %8914 = vmatpush1.msra.mxu0 %v8880
  %8915 = vmatprep.subr.mxu0 0.0
  %8916 = vmatpush1.msra.mxu0 %v8881
  %8917 = vmatprep.subr.mxu0 0.0
  %8918 = vmatpush1.msra.mxu0 %v8882
  %8919 = vmatprep.subr.mxu0 0.0
  %8920 = vmatpush1.msra.mxu0 %v8883
  %8921 = vmatprep.subr.mxu0 0.0
  %8922 = vmatpush1.msra.mxu0 %v8884
  %8923 = vmatprep.subr.mxu0 0.0
  %8924 = vmatpush1.msra.mxu0 %v8885
  %8925 = vmatprep.subr.mxu0 0.0
  %8926 = vmatpush1.msra.mxu0 0.0
  %8927 = vmatprep.subr.mxu0 0.0
  %8928 = vmatpush1.msra.mxu0 0.0
  %8929 = vmatprep.subr.mxu0 0.0
  %8930 = vmatpush1.msra.mxu0 0.0
  %8931 = vmatprep.subr.mxu0 0.0
  %8932 = vmatpush1.msra.mxu0 0.0
  %8933 = vmatprep.subr.mxu0 0.0
  %8934 = vmatpush1.msra.mxu0 0.0
  %8935 = vmatprep.subr.mxu0 0.0
  %8936 = vmatpush1.msra.mxu0 0.0
  %8937 = vmatprep.subr.mxu0 0.0
  %8938 = vmatpush1.msra.mxu0 0.0
  %8939 = vmatprep.subr.mxu0 0.0
  %8940 = vmatpush1.msra.mxu0 0.0
  %8941 = vmatprep.subr.mxu0 0.0
  %8942 = vmatpush1.msra.mxu0 0.0
  %8943 = vmatprep.subr.mxu0 0.0
  %8944 = vmatpush1.msra.mxu0 0.0
  %8945 = vmatprep.subr.mxu0 0.0
  %8946 = vmatpush1.msra.mxu0 0.0
  %8947 = vmatprep.subr.mxu0 0.0
  %8948 = vmatpush1.msra.mxu0 0.0
  %8949 = vmatprep.subr.mxu0 0.0
  %8950 = vmatpush1.msra.mxu0 0.0
  %8951 = vmatprep.subr.mxu0 0.0
  %8952 = vmatpush1.msra.mxu0 0.0
  %8953 = vmatprep.subr.mxu0 0.0
  %8954 = vmatpush1.msra.mxu0 0.0
  %8955 = vmatprep.subr.mxu0 0.0
  %8956 = vmatpush1.msra.mxu0 0.0
  %8957 = vmatprep.mubr.f32.mxu0 0.0
  %8958 = vmatmul.mubr.f32.gmra.mrb[0].mxu0 %v8869
  %v8959 = vpop.f32.mrb[0].mxu0
  %v8960 = vadd.f32 %v8891, %v8959
  %v8961 = vpop.f32.mrb[0].mxu0
  %8962 = vdwg.mxu0
  %8963 = vst [vmem:[%s13] sm:$0xff] %v8960
  // Predicated region
  $region54: #{query_encode_forward.2} parent=0 // pred_check
    _
  $region55: #{query_encode_forward.2} parent=0 // pred_check_branch
    %8965 = sbr.rel (0) target = $region57
  $region56: #{query_encode_forward.2} parent=0 // pred_region
    _
  $region57: #{query_encode_forward.2} parent=0 // pred_fallthru
    _
  // Predicated region
  $region58: #{query_encode_forward.2} parent=0 // pred_check
    _
  $region59: #{query_encode_forward.2} parent=0 // pred_check_branch
    %8967 = sbr.rel (0) target = $region61
  $region60: #{query_encode_forward.2} parent=0 // pred_region
    _
  $region61: #{query_encode_forward.2} parent=0 // pred_fallthru
    _

</llo_original>
